<compile_context>
chip_gen: v7x
topology: tpu7x:2x2x1
jax: 0.10.0
libtpu: 0.0.40
codegen_flags: <defaults>
</compile_context>

<pallas_src>
import math

import jax
import jax.numpy as jnp
import numpy as np
from jax.experimental import pallas as pl
from jax.experimental.pallas import tpu as pltpu


# ----------------------------------------------------------------------------
# Fused DeepTime kernel
# ----------------------------------------------------------------------------
def _make_deeptime_kernel(lookback_len, horizon_len, layer_size):
    L, H, D = lookback_len, horizon_len, layer_size
    d1 = D + 1

    def kernel(reg_ref, coords_ref, bf_ref, *refs):
        # refs layout: n_layers * (W, bias, ln_gamma, ln_beta), y_flat, out
        y_ref = refs[-2]          # (L, B*n_out)
        out_ref = refs[-1]        # (H, B*n_out)
        layer_refs = refs[:-2]

        # ---- INR: Gaussian Fourier features (in_feats == 1) ------------------
        t = coords_ref[...]                                   # (T, 1)
        # einsum('...tn,nd->...td') with n == 1  ==  broadcast multiply
        proj = (2.0 * math.pi) * (t * bf_ref[...])            # (T, F/2)
        h = jnp.concatenate([jnp.sin(proj), jnp.cos(proj)], axis=-1)   # (T, F)

        # ---- [Linear -> ReLU -> LayerNorm] x inr_layers ----------------------
        # DEFAULT MXU precision (review: HIGHEST forces the 6-pass bf16 path).
        for i in range(0, len(layer_refs), 4):
            w_ref, b_ref, g_ref, be_ref = layer_refs[i:i + 4]
            h = jnp.dot(h, w_ref[...],
                        preferred_element_type=jnp.float32) + b_ref[...]
            h = jnp.maximum(h, 0.0)      # ReLU (dropout is identity in eval)
            mu = jnp.mean(h, axis=-1, keepdims=True)
            var = jnp.mean((h - mu) ** 2, axis=-1, keepdims=True)
            h = (h - mu) * jax.lax.rsqrt(var + 1e-5) * g_ref[...] + be_ref[...]

        lookback = h[:L]                                      # (L, D) shared over batch
        horizon = h[L:]                                       # (H, D)

        # ---- Ridge normal equations (n_samples >= n_dim branch) --------------
        # Xa is shared across the batch, so A is computed exactly once.
        xa = jnp.concatenate([lookback, jnp.ones((L, 1), jnp.float32)],
                             axis=-1)                         # (L, D+1)
        dn = (((0,), (0,)), ((), ()))                         # contract over L
        gram = jax.lax.dot_general(xa, xa, dn,
                                   preferred_element_type=jnp.float32,
                                   precision=jax.lax.Precision.HIGHEST)
        ii = jax.lax.broadcasted_iota(jnp.int32, (d1, d1), 0)
        jj = jax.lax.broadcasted_iota(jnp.int32, (d1, d1), 1)
        eye = jnp.where(ii == jj, 1.0, 0.0)
        a = gram + reg_ref[0] * eye                           # (d1, d1)
        # Batch folded into the lane axis: one lane-dense matmul for all b.
        bm = jax.lax.dot_general(xa, y_ref[...], dn,
                                 preferred_element_type=jnp.float32,
                                 precision=jax.lax.Precision.HIGHEST)   # (d1, B*n_out)

        # ---- In-kernel solve: Gauss-Jordan on the SPD system -----------------
        # A is SPD (Gram + reg*I), so no pivoting is needed.  d1 is small and
        # static -> fully unrolled, masked-reduction row/col extraction keeps
        # every op a plain VPU/XLU primitive.
        row_iota = jax.lax.broadcasted_iota(jnp.int32, (d1, 1), 0)   # (d1, 1)
        col_iota = jax.lax.broadcasted_iota(jnp.int32, (1, d1), 1)   # (1, d1)
        for k in range(d1):
            e_row = jnp.where(row_iota == k, 1.0, 0.0)               # (d1, 1)
            e_col = jnp.where(col_iota == k, 1.0, 0.0)               # (1, d1)
            row_a = jnp.sum(a * e_row, axis=0, keepdims=True)        # a[k, :]
            row_b = jnp.sum(bm * e_row, axis=0, keepdims=True)       # bm[k, :]
            pivot = jnp.sum(row_a * e_col, axis=1, keepdims=True)    # a[k, k]
            inv_p = 1.0 / pivot
            col_a = jnp.sum(a * e_col, axis=1, keepdims=True)        # a[:, k]
            factor = col_a - e_row                                   # (d1, 1)
            a = a - factor * (row_a * inv_p)
            bm = bm - factor * (row_b * inv_p)
        weights = bm                                          # (d1, B*n_out) = A^-1 Bm

        # ---- Forecast: single lane-dense matmul, bias folded via ones column -
        ha = jnp.concatenate([horizon, jnp.ones((H, 1), jnp.float32)],
                             axis=-1)                         # (H, D+1)
        out_ref[...] = jnp.dot(ha, weights,
                               preferred_element_type=jnp.float32)   # (H, B*n_out)

    return kernel


# ----------------------------------------------------------------------------
# DeepTime forward wrapper
# ----------------------------------------------------------------------------
def deeptime_forward(params, x, prediction_length, layer_size):
    # TODO(synk): only the y_time is None path (datetime_feats == 0) is implemented.
    B, L, n_out = x.shape
    H = prediction_length
    D = layer_size
    d1 = D + 1
    T = L + H
    # TODO(synk): n_samples < n_dim ridge branch not implemented (not hit at demo shapes).
    assert L >= d1, "only the n_samples >= n_dim ridge branch is implemented"

    coords = jnp.linspace(0.0, 1.0, T, dtype=jnp.float32).reshape(T, 1)
    reg = jax.nn.softplus(params["ridge_lambda"]).reshape(1).astype(jnp.float32)
    # Fold the batch into the lane axis: (B, L, n_out) -> (L, B*n_out).
    y_flat = jnp.transpose(x, (1, 0, 2)).reshape(L, B * n_out)

    flat = []
    for (w, b, g, be) in params["inr_layers"]:
        flat += [w, b, g, be]

    vmem = pl.BlockSpec(memory_space=pltpu.MemorySpace.VMEM)
    smem = pl.BlockSpec(memory_space=pltpu.MemorySpace.SMEM)
    n_tensor_inputs = 2 + len(flat) + 1          # coords, fourier_B, layers..., y_flat

    # TODO(synk): for production DeepTime sizes (n_fourier_feats=4096, long T) the
    # INR part should be tiled over T with (8,128)-aligned blocks; at demo scale a
    # single grid-free call minimizes launch/DMA overhead.
    preds_flat = pl.pallas_call(
        _make_deeptime_kernel(L, H, D),
        out_shape=jax.ShapeDtypeStruct((H, B * n_out), jnp.float32),
        in_specs=[smem] + [vmem] * n_tensor_inputs,
        out_specs=vmem,
    )(reg, coords, params["fourier_B"], *flat, y_flat)

    # (H, B*n_out) -> (B, H, n_out); cheap wrapper-side layout plumbing.
    return jnp.transpose(preds_flat.reshape(H, B, n_out), (1, 0, 2))


# ----------------------------------------------------------------------------
# Pure-JAX reference (sanity check only)
# ----------------------------------------------------------------------------
def deeptime_reference(params, x, prediction_length, layer_size):
    B, L, n_out = x.shape
    T = L + prediction_length
    coords = jnp.linspace(0.0, 1.0, T, dtype=jnp.float32).reshape(T, 1)
    proj = 2.0 * math.pi * (coords @ params["fourier_B"])
    h = jnp.concatenate([jnp.sin(proj), jnp.cos(proj)], axis=-1)
    for (w, b, g, be) in params["inr_layers"]:
        h = jnp.maximum(h @ w + b, 0.0)
        mu = h.mean(-1, keepdims=True)
        var = ((h - mu) ** 2).mean(-1, keepdims=True)
        h = (h - mu) / jnp.sqrt(var + 1e-5) * g + be
    lookback, horizon = h[:L], h[L:]
    reg = jax.nn.softplus(params["ridge_lambda"])
    xa = jnp.concatenate([lookback, jnp.ones((L, 1), jnp.float32)], axis=-1)
    A = xa.T @ xa + reg * jnp.eye(xa.shape[1], dtype=jnp.float32)
    Bm = jnp.einsum('ld,blo->bdo', xa, x)
    weights = jnp.linalg.solve(jnp.broadcast_to(A, (B,) + A.shape), Bm)
    w, b = weights[:, :-1], weights[:, -1:]
    return jnp.einsum('td,bdo->bto', horizon, w) + b


# ----------------------------------------------------------------------------
# Deterministic parameter initialization (shapes from DeepTime.__init__)
# ----------------------------------------------------------------------------
def init_params(key, datetime_feats, layer_size, inr_layers, n_fourier_feats, scales):
    in_feats = datetime_feats + 1
    n_scale_feats = n_fourier_feats // (2 * len(scales))
    assert n_scale_feats * 2 * len(scales) == n_fourier_feats
    keys = jax.random.split(key, 1 + 2 * inr_layers)
    fourier_b = jnp.concatenate(
        [jax.random.normal(keys[0], (in_feats, n_scale_feats), jnp.float32) * s
         for s in scales], axis=1)                                   # (in_feats, F/2)
    layers = []
    in_size = n_fourier_feats
    for i in range(inr_layers):
        kw, kb = keys[1 + 2 * i], keys[2 + 2 * i]
        w = jax.random.normal(kw, (in_size, layer_size), jnp.float32) / math.sqrt(in_size)
        b = jax.random.normal(kb, (1, layer_size), jnp.float32) * 0.01
        g = jnp.ones((1, layer_size), jnp.float32)
        be = jnp.zeros((1, layer_size), jnp.float32)
        layers.append((w, b, g, be))
        in_size = layer_size
    return {"fourier_B": fourier_b,
            "inr_layers": layers,
            "ridge_lambda": jnp.array(0.0, jnp.float32)}


if __name__ == "__main__":
    key = jax.random.PRNGKey(0)
    B, lookback_len, n_out = 2, 40, 4
    prediction_length = 8
    layer_size = 32
    inr_layers = 2
    n_fourier_feats = 32
    scales = [1.0, 10.0]
    datetime_feats = 0

    pkey, xkey = jax.random.split(key)
    params = init_params(pkey, datetime_feats, layer_size, inr_layers,
                         n_fourier_feats, scales)
    x = jax.random.normal(xkey, (B, lookback_len, n_out), jnp.float32)

    preds = deeptime_forward(params, x, prediction_length, layer_size)
    preds = jax.block_until_ready(preds)
    assert preds.shape == (B, prediction_length, n_out)

    ref = deeptime_reference(params, x, prediction_length, layer_size)
    np.testing.assert_allclose(np.asarray(preds), np.asarray(ref),
                               rtol=2e-2, atol=2e-2)

    print("KERNEL_OK")
</pallas_src>

<mosaic_0001>
module attributes {stable_mosaic.version = 11 : i64} {
  func.func @kernel(%arg0: memref<1xf32, #tpu.memory_space<smem>>, %arg1: memref<48x1xf32, #tpu.memory_space<vmem>>, %arg2: memref<1x16xf32, #tpu.memory_space<vmem>>, %arg3: memref<32x32xf32, #tpu.memory_space<vmem>>, %arg4: memref<1x32xf32, #tpu.memory_space<vmem>>, %arg5: memref<1x32xf32, #tpu.memory_space<vmem>>, %arg6: memref<1x32xf32, #tpu.memory_space<vmem>>, %arg7: memref<32x32xf32, #tpu.memory_space<vmem>>, %arg8: memref<1x32xf32, #tpu.memory_space<vmem>>, %arg9: memref<1x32xf32, #tpu.memory_space<vmem>>, %arg10: memref<1x32xf32, #tpu.memory_space<vmem>>, %arg11: memref<40x8xf32, #tpu.memory_space<vmem>>, %arg12: memref<8x8xf32, #tpu.memory_space<vmem>>) attributes {dimension_semantics = [], scalar_prefetch = 0 : i64, scratch_operands = 0 : i64, tpu.core_type = #tpu.core_type<tc>} {
    %c0 = arith.constant 0 : index
    %c0_0 = arith.constant 0 : index
    %0 = vector.load %arg1[%c0, %c0_0] : memref<48x1xf32, #tpu.memory_space<vmem>>, vector<48x1xf32>
    %c0_1 = arith.constant 0 : index
    %c0_2 = arith.constant 0 : index
    %1 = vector.load %arg2[%c0_1, %c0_2] : memref<1x16xf32, #tpu.memory_space<vmem>>, vector<1x16xf32>
    %2 = vector.broadcast %0 : vector<48x1xf32> to vector<48x16xf32>
    %3 = vector.broadcast %1 : vector<1x16xf32> to vector<48x16xf32>
    %4 = arith.mulf %2, %3 : vector<48x16xf32>
    %cst = arith.constant 6.28318548 : f32
    %5 = vector.broadcast %cst : f32 to vector<48x16xf32>
    %6 = arith.mulf %5, %4 : vector<48x16xf32>
    %7 = math.sin %6 : vector<48x16xf32>
    %8 = math.cos %6 : vector<48x16xf32>
    %9 = tpu.concatenate %7, %8 in 1 : vector<48x16xf32>, vector<48x16xf32> -> vector<48x32xf32>
    %c0_3 = arith.constant 0 : index
    %c0_4 = arith.constant 0 : index
    %10 = vector.load %arg3[%c0_3, %c0_4] : memref<32x32xf32, #tpu.memory_space<vmem>>, vector<32x32xf32>
    %cst_5 = arith.constant dense<0.000000e+00> : vector<48x32xf32>
    %11 = tpu.matmul %9, %10, %cst_5 {dimension_numbers = #tpu.dot_dimension_numbers<[1], [0], [0], [1], [0, 0, 1, 1], [], []>} : vector<48x32xf32>, vector<32x32xf32>, vector<48x32xf32> -> vector<48x32xf32>
    %c0_6 = arith.constant 0 : index
    %c0_7 = arith.constant 0 : index
    %12 = vector.load %arg4[%c0_6, %c0_7] : memref<1x32xf32, #tpu.memory_space<vmem>>, vector<1x32xf32>
    %13 = vector.broadcast %12 : vector<1x32xf32> to vector<48x32xf32>
    %14 = arith.addf %11, %13 : vector<48x32xf32>
    %cst_8 = arith.constant 0.000000e+00 : f32
    %15 = vector.broadcast %cst_8 : f32 to vector<48x32xf32>
    %16 = arith.maximumf %14, %15 : vector<48x32xf32>
    %cst_9 = arith.constant dense<0.000000e+00> : vector<48xf32>
    %17 = vector.multi_reduction <add>, %16, %cst_9 [1] : vector<48x32xf32> to vector<48xf32>
    %18 = vector.shape_cast %17 : vector<48xf32> to vector<48x1xf32>
    %cst_10 = arith.constant 3.200000e+01 : f32
    %19 = vector.broadcast %cst_10 : f32 to vector<48x1xf32>
    %20 = arith.divf %18, %19 : vector<48x1xf32>
    %21 = vector.broadcast %20 : vector<48x1xf32> to vector<48x32xf32>
    %22 = arith.subf %16, %21 : vector<48x32xf32>
    %23 = arith.mulf %22, %22 : vector<48x32xf32>
    %cst_11 = arith.constant dense<0.000000e+00> : vector<48xf32>
    %24 = vector.multi_reduction <add>, %23, %cst_11 [1] : vector<48x32xf32> to vector<48xf32>
    %25 = vector.shape_cast %24 : vector<48xf32> to vector<48x1xf32>
    %cst_12 = arith.constant 3.200000e+01 : f32
    %26 = vector.broadcast %cst_12 : f32 to vector<48x1xf32>
    %27 = arith.divf %25, %26 : vector<48x1xf32>
    %28 = vector.broadcast %20 : vector<48x1xf32> to vector<48x32xf32>
    %29 = arith.subf %16, %28 : vector<48x32xf32>
    %cst_13 = arith.constant 9.99999974E-6 : f32
    %30 = vector.broadcast %cst_13 : f32 to vector<48x1xf32>
    %31 = arith.addf %27, %30 : vector<48x1xf32>
    %32 = math.rsqrt %31 : vector<48x1xf32>
    %33 = vector.broadcast %32 : vector<48x1xf32> to vector<48x32xf32>
    %34 = arith.mulf %29, %33 : vector<48x32xf32>
    %c0_14 = arith.constant 0 : index
    %c0_15 = arith.constant 0 : index
    %35 = vector.load %arg5[%c0_14, %c0_15] : memref<1x32xf32, #tpu.memory_space<vmem>>, vector<1x32xf32>
    %36 = vector.broadcast %35 : vector<1x32xf32> to vector<48x32xf32>
    %37 = arith.mulf %34, %36 : vector<48x32xf32>
    %c0_16 = arith.constant 0 : index
    %c0_17 = arith.constant 0 : index
    %38 = vector.load %arg6[%c0_16, %c0_17] : memref<1x32xf32, #tpu.memory_space<vmem>>, vector<1x32xf32>
    %39 = vector.broadcast %38 : vector<1x32xf32> to vector<48x32xf32>
    %40 = arith.addf %37, %39 : vector<48x32xf32>
    %c0_18 = arith.constant 0 : index
    %c0_19 = arith.constant 0 : index
    %41 = vector.load %arg7[%c0_18, %c0_19] : memref<32x32xf32, #tpu.memory_space<vmem>>, vector<32x32xf32>
    %cst_20 = arith.constant dense<0.000000e+00> : vector<48x32xf32>
    %42 = tpu.matmul %40, %41, %cst_20 {dimension_numbers = #tpu.dot_dimension_numbers<[1], [0], [0], [1], [0, 0, 1, 1], [], []>} : vector<48x32xf32>, vector<32x32xf32>, vector<48x32xf32> -> vector<48x32xf32>
    %c0_21 = arith.constant 0 : index
    %c0_22 = arith.constant 0 : index
    %43 = vector.load %arg8[%c0_21, %c0_22] : memref<1x32xf32, #tpu.memory_space<vmem>>, vector<1x32xf32>
    %44 = vector.broadcast %43 : vector<1x32xf32> to vector<48x32xf32>
    %45 = arith.addf %42, %44 : vector<48x32xf32>
    %cst_23 = arith.constant 0.000000e+00 : f32
    %46 = vector.broadcast %cst_23 : f32 to vector<48x32xf32>
    %47 = arith.maximumf %45, %46 : vector<48x32xf32>
    %cst_24 = arith.constant dense<0.000000e+00> : vector<48xf32>
    %48 = vector.multi_reduction <add>, %47, %cst_24 [1] : vector<48x32xf32> to vector<48xf32>
    %49 = vector.shape_cast %48 : vector<48xf32> to vector<48x1xf32>
    %cst_25 = arith.constant 3.200000e+01 : f32
    %50 = vector.broadcast %cst_25 : f32 to vector<48x1xf32>
    %51 = arith.divf %49, %50 : vector<48x1xf32>
    %52 = vector.broadcast %51 : vector<48x1xf32> to vector<48x32xf32>
    %53 = arith.subf %47, %52 : vector<48x32xf32>
    %54 = arith.mulf %53, %53 : vector<48x32xf32>
    %cst_26 = arith.constant dense<0.000000e+00> : vector<48xf32>
    %55 = vector.multi_reduction <add>, %54, %cst_26 [1] : vector<48x32xf32> to vector<48xf32>
    %56 = vector.shape_cast %55 : vector<48xf32> to vector<48x1xf32>
    %cst_27 = arith.constant 3.200000e+01 : f32
    %57 = vector.broadcast %cst_27 : f32 to vector<48x1xf32>
    %58 = arith.divf %56, %57 : vector<48x1xf32>
    %59 = vector.broadcast %51 : vector<48x1xf32> to vector<48x32xf32>
    %60 = arith.subf %47, %59 : vector<48x32xf32>
    %cst_28 = arith.constant 9.99999974E-6 : f32
    %61 = vector.broadcast %cst_28 : f32 to vector<48x1xf32>
    %62 = arith.addf %58, %61 : vector<48x1xf32>
    %63 = math.rsqrt %62 : vector<48x1xf32>
    %64 = vector.broadcast %63 : vector<48x1xf32> to vector<48x32xf32>
    %65 = arith.mulf %60, %64 : vector<48x32xf32>
    %c0_29 = arith.constant 0 : index
    %c0_30 = arith.constant 0 : index
    %66 = vector.load %arg9[%c0_29, %c0_30] : memref<1x32xf32, #tpu.memory_space<vmem>>, vector<1x32xf32>
    %67 = vector.broadcast %66 : vector<1x32xf32> to vector<48x32xf32>
    %68 = arith.mulf %65, %67 : vector<48x32xf32>
    %c0_31 = arith.constant 0 : index
    %c0_32 = arith.constant 0 : index
    %69 = vector.load %arg10[%c0_31, %c0_32] : memref<1x32xf32, #tpu.memory_space<vmem>>, vector<1x32xf32>
    %70 = vector.broadcast %69 : vector<1x32xf32> to vector<48x32xf32>
    %71 = arith.addf %68, %70 : vector<48x32xf32>
    %72 = vector.extract_strided_slice %71 {offsets = [0, 0], sizes = [40, 32], strides = [1, 1]} : vector<48x32xf32> to vector<40x32xf32>
    %73 = vector.extract_strided_slice %71 {offsets = [40, 0], sizes = [8, 32], strides = [1, 1]} : vector<48x32xf32> to vector<8x32xf32>
    %cst_33 = arith.constant 1.000000e+00 : f32
    %74 = vector.broadcast %cst_33 : f32 to vector<40x1xf32>
    %75 = tpu.concatenate %72, %74 in 1 : vector<40x32xf32>, vector<40x1xf32> -> vector<40x33xf32>
    %cst_34 = arith.constant dense<0.000000e+00> : vector<33x33xf32>
    %76 = tpu.matmul %75, %75, %cst_34 {dimension_numbers = #tpu.dot_dimension_numbers<[0], [0], [1], [1], [0, 1, 1, 1], [], []>, precision = #tpu.contract_precision<fp32>} : vector<40x33xf32>, vector<40x33xf32>, vector<33x33xf32> -> vector<33x33xf32>
    %77 = tpu.iota {dimensions = array<i32: 0>} : vector<33x33xi32>
    %78 = tpu.iota {dimensions = array<i32: 1>} : vector<33x33xi32>
    %79 = arith.cmpi eq, %77, %78 : vector<33x33xi32>
    %cst_35 = arith.constant 1.000000e+00 : f32
    %cst_36 = arith.constant 0.000000e+00 : f32
    %80 = vector.broadcast %cst_35 : f32 to vector<33x33xf32>
    %81 = vector.broadcast %cst_36 : f32 to vector<33x33xf32>
    %82 = arith.select %79, %80, %81 : vector<33x33xi1>, vector<33x33xf32>
    %c0_37 = arith.constant 0 : index
    %83 = memref.load %arg0[%c0_37] : memref<1xf32, #tpu.memory_space<smem>>
    %84 = vector.broadcast %83 : f32 to vector<33x33xf32>
    %85 = arith.mulf %84, %82 : vector<33x33xf32>
    %86 = arith.addf %76, %85 : vector<33x33xf32>
    %c0_38 = arith.constant 0 : index
    %c0_39 = arith.constant 0 : index
    %87 = vector.load %arg11[%c0_38, %c0_39] : memref<40x8xf32, #tpu.memory_space<vmem>>, vector<40x8xf32>
    %cst_40 = arith.constant dense<0.000000e+00> : vector<33x8xf32>
    %88 = tpu.matmul %75, %87, %cst_40 {dimension_numbers = #tpu.dot_dimension_numbers<[0], [0], [1], [1], [0, 1, 1, 1], [], []>, precision = #tpu.contract_precision<fp32>} : vector<40x33xf32>, vector<40x8xf32>, vector<33x8xf32> -> vector<33x8xf32>
    %89 = tpu.iota {dimensions = array<i32: 0>} : vector<33x1xi32>
    %90 = tpu.iota {dimensions = array<i32: 1>} : vector<1x33xi32>
    %c0_i32 = arith.constant 0 : i32
    %91 = vector.broadcast %c0_i32 : i32 to vector<33x1xi32>
    %92 = arith.cmpi eq, %89, %91 : vector<33x1xi32>
    %cst_41 = arith.constant 1.000000e+00 : f32
    %cst_42 = arith.constant 0.000000e+00 : f32
    %93 = vector.broadcast %cst_41 : f32 to vector<33x1xf32>
    %94 = vector.broadcast %cst_42 : f32 to vector<33x1xf32>
    %95 = arith.select %92, %93, %94 : vector<33x1xi1>, vector<33x1xf32>
    %c0_i32_43 = arith.constant 0 : i32
    %96 = vector.broadcast %c0_i32_43 : i32 to vector<1x33xi32>
    %97 = arith.cmpi eq, %90, %96 : vector<1x33xi32>
    %cst_44 = arith.constant 1.000000e+00 : f32
    %cst_45 = arith.constant 0.000000e+00 : f32
    %98 = vector.broadcast %cst_44 : f32 to vector<1x33xf32>
    %99 = vector.broadcast %cst_45 : f32 to vector<1x33xf32>
    %100 = arith.select %97, %98, %99 : vector<1x33xi1>, vector<1x33xf32>
    %101 = vector.broadcast %95 : vector<33x1xf32> to vector<33x33xf32>
    %102 = arith.mulf %86, %101 : vector<33x33xf32>
    %cst_46 = arith.constant dense<0.000000e+00> : vector<33xf32>
    %103 = vector.multi_reduction <add>, %102, %cst_46 [0] : vector<33x33xf32> to vector<33xf32>
    %104 = vector.shape_cast %103 : vector<33xf32> to vector<1x33xf32>
    %105 = vector.broadcast %95 : vector<33x1xf32> to vector<33x8xf32>
    %106 = arith.mulf %88, %105 : vector<33x8xf32>
    %cst_47 = arith.constant dense<0.000000e+00> : vector<8xf32>
    %107 = vector.multi_reduction <add>, %106, %cst_47 [0] : vector<33x8xf32> to vector<8xf32>
    %108 = vector.shape_cast %107 : vector<8xf32> to vector<1x8xf32>
    %109 = arith.mulf %104, %100 : vector<1x33xf32>
    %cst_48 = arith.constant dense<0.000000e+00> : vector<1xf32>
    %110 = vector.multi_reduction <add>, %109, %cst_48 [1] : vector<1x33xf32> to vector<1xf32>
    %111 = vector.shape_cast %110 : vector<1xf32> to vector<1x1xf32>
    %cst_49 = arith.constant 1.000000e+00 : f32
    %112 = vector.broadcast %cst_49 : f32 to vector<1x1xf32>
    %113 = arith.divf %112, %111 : vector<1x1xf32>
    %114 = vector.broadcast %100 : vector<1x33xf32> to vector<33x33xf32>
    %115 = arith.mulf %86, %114 : vector<33x33xf32>
    %cst_50 = arith.constant dense<0.000000e+00> : vector<33xf32>
    %116 = vector.multi_reduction <add>, %115, %cst_50 [1] : vector<33x33xf32> to vector<33xf32>
    %117 = vector.shape_cast %116 : vector<33xf32> to vector<33x1xf32>
    %118 = arith.subf %117, %95 : vector<33x1xf32>
    %119 = vector.broadcast %113 : vector<1x1xf32> to vector<1x33xf32>
    %120 = arith.mulf %104, %119 : vector<1x33xf32>
    %121 = vector.broadcast %118 : vector<33x1xf32> to vector<33x33xf32>
    %122 = vector.broadcast %120 : vector<1x33xf32> to vector<33x33xf32>
    %123 = arith.mulf %121, %122 : vector<33x33xf32>
    %124 = arith.subf %86, %123 : vector<33x33xf32>
    %125 = vector.broadcast %113 : vector<1x1xf32> to vector<1x8xf32>
    %126 = arith.mulf %108, %125 : vector<1x8xf32>
    %127 = vector.broadcast %118 : vector<33x1xf32> to vector<33x8xf32>
    %128 = vector.broadcast %126 : vector<1x8xf32> to vector<33x8xf32>
    %129 = arith.mulf %127, %128 : vector<33x8xf32>
    %130 = arith.subf %88, %129 : vector<33x8xf32>
    %c1_i32 = arith.constant 1 : i32
    %131 = vector.broadcast %c1_i32 : i32 to vector<33x1xi32>
    %132 = arith.cmpi eq, %89, %131 : vector<33x1xi32>
    %cst_51 = arith.constant 1.000000e+00 : f32
    %cst_52 = arith.constant 0.000000e+00 : f32
    %133 = vector.broadcast %cst_51 : f32 to vector<33x1xf32>
    %134 = vector.broadcast %cst_52 : f32 to vector<33x1xf32>
    %135 = arith.select %132, %133, %134 : vector<33x1xi1>, vector<33x1xf32>
    %c1_i32_53 = arith.constant 1 : i32
    %136 = vector.broadcast %c1_i32_53 : i32 to vector<1x33xi32>
    %137 = arith.cmpi eq, %90, %136 : vector<1x33xi32>
    %cst_54 = arith.constant 1.000000e+00 : f32
    %cst_55 = arith.constant 0.000000e+00 : f32
    %138 = vector.broadcast %cst_54 : f32 to vector<1x33xf32>
    %139 = vector.broadcast %cst_55 : f32 to vector<1x33xf32>
    %140 = arith.select %137, %138, %139 : vector<1x33xi1>, vector<1x33xf32>
    %141 = vector.broadcast %135 : vector<33x1xf32> to vector<33x33xf32>
    %142 = arith.mulf %124, %141 : vector<33x33xf32>
    %cst_56 = arith.constant dense<0.000000e+00> : vector<33xf32>
    %143 = vector.multi_reduction <add>, %142, %cst_56 [0] : vector<33x33xf32> to vector<33xf32>
    %144 = vector.shape_cast %143 : vector<33xf32> to vector<1x33xf32>
    %145 = vector.broadcast %135 : vector<33x1xf32> to vector<33x8xf32>
    %146 = arith.mulf %130, %145 : vector<33x8xf32>
    %cst_57 = arith.constant dense<0.000000e+00> : vector<8xf32>
    %147 = vector.multi_reduction <add>, %146, %cst_57 [0] : vector<33x8xf32> to vector<8xf32>
    %148 = vector.shape_cast %147 : vector<8xf32> to vector<1x8xf32>
    %149 = arith.mulf %144, %140 : vector<1x33xf32>
    %cst_58 = arith.constant dense<0.000000e+00> : vector<1xf32>
    %150 = vector.multi_reduction <add>, %149, %cst_58 [1] : vector<1x33xf32> to vector<1xf32>
    %151 = vector.shape_cast %150 : vector<1xf32> to vector<1x1xf32>
    %cst_59 = arith.constant 1.000000e+00 : f32
    %152 = vector.broadcast %cst_59 : f32 to vector<1x1xf32>
    %153 = arith.divf %152, %151 : vector<1x1xf32>
    %154 = vector.broadcast %140 : vector<1x33xf32> to vector<33x33xf32>
    %155 = arith.mulf %124, %154 : vector<33x33xf32>
    %cst_60 = arith.constant dense<0.000000e+00> : vector<33xf32>
    %156 = vector.multi_reduction <add>, %155, %cst_60 [1] : vector<33x33xf32> to vector<33xf32>
    %157 = vector.shape_cast %156 : vector<33xf32> to vector<33x1xf32>
    %158 = arith.subf %157, %135 : vector<33x1xf32>
    %159 = vector.broadcast %153 : vector<1x1xf32> to vector<1x33xf32>
    %160 = arith.mulf %144, %159 : vector<1x33xf32>
    %161 = vector.broadcast %158 : vector<33x1xf32> to vector<33x33xf32>
    %162 = vector.broadcast %160 : vector<1x33xf32> to vector<33x33xf32>
    %163 = arith.mulf %161, %162 : vector<33x33xf32>
    %164 = arith.subf %124, %163 : vector<33x33xf32>
    %165 = vector.broadcast %153 : vector<1x1xf32> to vector<1x8xf32>
    %166 = arith.mulf %148, %165 : vector<1x8xf32>
    %167 = vector.broadcast %158 : vector<33x1xf32> to vector<33x8xf32>
    %168 = vector.broadcast %166 : vector<1x8xf32> to vector<33x8xf32>
    %169 = arith.mulf %167, %168 : vector<33x8xf32>
    %170 = arith.subf %130, %169 : vector<33x8xf32>
    %c2_i32 = arith.constant 2 : i32
    %171 = vector.broadcast %c2_i32 : i32 to vector<33x1xi32>
    %172 = arith.cmpi eq, %89, %171 : vector<33x1xi32>
    %cst_61 = arith.constant 1.000000e+00 : f32
    %cst_62 = arith.constant 0.000000e+00 : f32
    %173 = vector.broadcast %cst_61 : f32 to vector<33x1xf32>
    %174 = vector.broadcast %cst_62 : f32 to vector<33x1xf32>
    %175 = arith.select %172, %173, %174 : vector<33x1xi1>, vector<33x1xf32>
    %c2_i32_63 = arith.constant 2 : i32
    %176 = vector.broadcast %c2_i32_63 : i32 to vector<1x33xi32>
    %177 = arith.cmpi eq, %90, %176 : vector<1x33xi32>
    %cst_64 = arith.constant 1.000000e+00 : f32
    %cst_65 = arith.constant 0.000000e+00 : f32
    %178 = vector.broadcast %cst_64 : f32 to vector<1x33xf32>
    %179 = vector.broadcast %cst_65 : f32 to vector<1x33xf32>
    %180 = arith.select %177, %178, %179 : vector<1x33xi1>, vector<1x33xf32>
    %181 = vector.broadcast %175 : vector<33x1xf32> to vector<33x33xf32>
    %182 = arith.mulf %164, %181 : vector<33x33xf32>
    %cst_66 = arith.constant dense<0.000000e+00> : vector<33xf32>
    %183 = vector.multi_reduction <add>, %182, %cst_66 [0] : vector<33x33xf32> to vector<33xf32>
    %184 = vector.shape_cast %183 : vector<33xf32> to vector<1x33xf32>
    %185 = vector.broadcast %175 : vector<33x1xf32> to vector<33x8xf32>
    %186 = arith.mulf %170, %185 : vector<33x8xf32>
    %cst_67 = arith.constant dense<0.000000e+00> : vector<8xf32>
    %187 = vector.multi_reduction <add>, %186, %cst_67 [0] : vector<33x8xf32> to vector<8xf32>
    %188 = vector.shape_cast %187 : vector<8xf32> to vector<1x8xf32>
    %189 = arith.mulf %184, %180 : vector<1x33xf32>
    %cst_68 = arith.constant dense<0.000000e+00> : vector<1xf32>
    %190 = vector.multi_reduction <add>, %189, %cst_68 [1] : vector<1x33xf32> to vector<1xf32>
    %191 = vector.shape_cast %190 : vector<1xf32> to vector<1x1xf32>
    %cst_69 = arith.constant 1.000000e+00 : f32
    %192 = vector.broadcast %cst_69 : f32 to vector<1x1xf32>
    %193 = arith.divf %192, %191 : vector<1x1xf32>
    %194 = vector.broadcast %180 : vector<1x33xf32> to vector<33x33xf32>
    %195 = arith.mulf %164, %194 : vector<33x33xf32>
    %cst_70 = arith.constant dense<0.000000e+00> : vector<33xf32>
    %196 = vector.multi_reduction <add>, %195, %cst_70 [1] : vector<33x33xf32> to vector<33xf32>
    %197 = vector.shape_cast %196 : vector<33xf32> to vector<33x1xf32>
    %198 = arith.subf %197, %175 : vector<33x1xf32>
    %199 = vector.broadcast %193 : vector<1x1xf32> to vector<1x33xf32>
    %200 = arith.mulf %184, %199 : vector<1x33xf32>
    %201 = vector.broadcast %198 : vector<33x1xf32> to vector<33x33xf32>
    %202 = vector.broadcast %200 : vector<1x33xf32> to vector<33x33xf32>
    %203 = arith.mulf %201, %202 : vector<33x33xf32>
    %204 = arith.subf %164, %203 : vector<33x33xf32>
    %205 = vector.broadcast %193 : vector<1x1xf32> to vector<1x8xf32>
    %206 = arith.mulf %188, %205 : vector<1x8xf32>
    %207 = vector.broadcast %198 : vector<33x1xf32> to vector<33x8xf32>
    %208 = vector.broadcast %206 : vector<1x8xf32> to vector<33x8xf32>
    %209 = arith.mulf %207, %208 : vector<33x8xf32>
    %210 = arith.subf %170, %209 : vector<33x8xf32>
    %c3_i32 = arith.constant 3 : i32
    %211 = vector.broadcast %c3_i32 : i32 to vector<33x1xi32>
    %212 = arith.cmpi eq, %89, %211 : vector<33x1xi32>
    %cst_71 = arith.constant 1.000000e+00 : f32
    %cst_72 = arith.constant 0.000000e+00 : f32
    %213 = vector.broadcast %cst_71 : f32 to vector<33x1xf32>
    %214 = vector.broadcast %cst_72 : f32 to vector<33x1xf32>
    %215 = arith.select %212, %213, %214 : vector<33x1xi1>, vector<33x1xf32>
    %c3_i32_73 = arith.constant 3 : i32
    %216 = vector.broadcast %c3_i32_73 : i32 to vector<1x33xi32>
    %217 = arith.cmpi eq, %90, %216 : vector<1x33xi32>
    %cst_74 = arith.constant 1.000000e+00 : f32
    %cst_75 = arith.constant 0.000000e+00 : f32
    %218 = vector.broadcast %cst_74 : f32 to vector<1x33xf32>
    %219 = vector.broadcast %cst_75 : f32 to vector<1x33xf32>
    %220 = arith.select %217, %218, %219 : vector<1x33xi1>, vector<1x33xf32>
    %221 = vector.broadcast %215 : vector<33x1xf32> to vector<33x33xf32>
    %222 = arith.mulf %204, %221 : vector<33x33xf32>
    %cst_76 = arith.constant dense<0.000000e+00> : vector<33xf32>
    %223 = vector.multi_reduction <add>, %222, %cst_76 [0] : vector<33x33xf32> to vector<33xf32>
    %224 = vector.shape_cast %223 : vector<33xf32> to vector<1x33xf32>
    %225 = vector.broadcast %215 : vector<33x1xf32> to vector<33x8xf32>
    %226 = arith.mulf %210, %225 : vector<33x8xf32>
    %cst_77 = arith.constant dense<0.000000e+00> : vector<8xf32>
    %227 = vector.multi_reduction <add>, %226, %cst_77 [0] : vector<33x8xf32> to vector<8xf32>
    %228 = vector.shape_cast %227 : vector<8xf32> to vector<1x8xf32>
    %229 = arith.mulf %224, %220 : vector<1x33xf32>
    %cst_78 = arith.constant dense<0.000000e+00> : vector<1xf32>
    %230 = vector.multi_reduction <add>, %229, %cst_78 [1] : vector<1x33xf32> to vector<1xf32>
    %231 = vector.shape_cast %230 : vector<1xf32> to vector<1x1xf32>
    %cst_79 = arith.constant 1.000000e+00 : f32
    %232 = vector.broadcast %cst_79 : f32 to vector<1x1xf32>
    %233 = arith.divf %232, %231 : vector<1x1xf32>
    %234 = vector.broadcast %220 : vector<1x33xf32> to vector<33x33xf32>
    %235 = arith.mulf %204, %234 : vector<33x33xf32>
    %cst_80 = arith.constant dense<0.000000e+00> : vector<33xf32>
    %236 = vector.multi_reduction <add>, %235, %cst_80 [1] : vector<33x33xf32> to vector<33xf32>
    %237 = vector.shape_cast %236 : vector<33xf32> to vector<33x1xf32>
    %238 = arith.subf %237, %215 : vector<33x1xf32>
    %239 = vector.broadcast %233 : vector<1x1xf32> to vector<1x33xf32>
    %240 = arith.mulf %224, %239 : vector<1x33xf32>
    %241 = vector.broadcast %238 : vector<33x1xf32> to vector<33x33xf32>
    %242 = vector.broadcast %240 : vector<1x33xf32> to vector<33x33xf32>
    %243 = arith.mulf %241, %242 : vector<33x33xf32>
    %244 = arith.subf %204, %243 : vector<33x33xf32>
    %245 = vector.broadcast %233 : vector<1x1xf32> to vector<1x8xf32>
    %246 = arith.mulf %228, %245 : vector<1x8xf32>
    %247 = vector.broadcast %238 : vector<33x1xf32> to vector<33x8xf32>
    %248 = vector.broadcast %246 : vector<1x8xf32> to vector<33x8xf32>
    %249 = arith.mulf %247, %248 : vector<33x8xf32>
    %250 = arith.subf %210, %249 : vector<33x8xf32>
    %c4_i32 = arith.constant 4 : i32
    %251 = vector.broadcast %c4_i32 : i32 to vector<33x1xi32>
    %252 = arith.cmpi eq, %89, %251 : vector<33x1xi32>
    %cst_81 = arith.constant 1.000000e+00 : f32
    %cst_82 = arith.constant 0.000000e+00 : f32
    %253 = vector.broadcast %cst_81 : f32 to vector<33x1xf32>
    %254 = vector.broadcast %cst_82 : f32 to vector<33x1xf32>
    %255 = arith.select %252, %253, %254 : vector<33x1xi1>, vector<33x1xf32>
    %c4_i32_83 = arith.constant 4 : i32
    %256 = vector.broadcast %c4_i32_83 : i32 to vector<1x33xi32>
    %257 = arith.cmpi eq, %90, %256 : vector<1x33xi32>
    %cst_84 = arith.constant 1.000000e+00 : f32
    %cst_85 = arith.constant 0.000000e+00 : f32
    %258 = vector.broadcast %cst_84 : f32 to vector<1x33xf32>
    %259 = vector.broadcast %cst_85 : f32 to vector<1x33xf32>
    %260 = arith.select %257, %258, %259 : vector<1x33xi1>, vector<1x33xf32>
    %261 = vector.broadcast %255 : vector<33x1xf32> to vector<33x33xf32>
    %262 = arith.mulf %244, %261 : vector<33x33xf32>
    %cst_86 = arith.constant dense<0.000000e+00> : vector<33xf32>
    %263 = vector.multi_reduction <add>, %262, %cst_86 [0] : vector<33x33xf32> to vector<33xf32>
    %264 = vector.shape_cast %263 : vector<33xf32> to vector<1x33xf32>
    %265 = vector.broadcast %255 : vector<33x1xf32> to vector<33x8xf32>
    %266 = arith.mulf %250, %265 : vector<33x8xf32>
    %cst_87 = arith.constant dense<0.000000e+00> : vector<8xf32>
    %267 = vector.multi_reduction <add>, %266, %cst_87 [0] : vector<33x8xf32> to vector<8xf32>
    %268 = vector.shape_cast %267 : vector<8xf32> to vector<1x8xf32>
    %269 = arith.mulf %264, %260 : vector<1x33xf32>
    %cst_88 = arith.constant dense<0.000000e+00> : vector<1xf32>
    %270 = vector.multi_reduction <add>, %269, %cst_88 [1] : vector<1x33xf32> to vector<1xf32>
    %271 = vector.shape_cast %270 : vector<1xf32> to vector<1x1xf32>
    %cst_89 = arith.constant 1.000000e+00 : f32
    %272 = vector.broadcast %cst_89 : f32 to vector<1x1xf32>
    %273 = arith.divf %272, %271 : vector<1x1xf32>
    %274 = vector.broadcast %260 : vector<1x33xf32> to vector<33x33xf32>
    %275 = arith.mulf %244, %274 : vector<33x33xf32>
    %cst_90 = arith.constant dense<0.000000e+00> : vector<33xf32>
    %276 = vector.multi_reduction <add>, %275, %cst_90 [1] : vector<33x33xf32> to vector<33xf32>
    %277 = vector.shape_cast %276 : vector<33xf32> to vector<33x1xf32>
    %278 = arith.subf %277, %255 : vector<33x1xf32>
    %279 = vector.broadcast %273 : vector<1x1xf32> to vector<1x33xf32>
    %280 = arith.mulf %264, %279 : vector<1x33xf32>
    %281 = vector.broadcast %278 : vector<33x1xf32> to vector<33x33xf32>
    %282 = vector.broadcast %280 : vector<1x33xf32> to vector<33x33xf32>
    %283 = arith.mulf %281, %282 : vector<33x33xf32>
    %284 = arith.subf %244, %283 : vector<33x33xf32>
    %285 = vector.broadcast %273 : vector<1x1xf32> to vector<1x8xf32>
    %286 = arith.mulf %268, %285 : vector<1x8xf32>
    %287 = vector.broadcast %278 : vector<33x1xf32> to vector<33x8xf32>
    %288 = vector.broadcast %286 : vector<1x8xf32> to vector<33x8xf32>
    %289 = arith.mulf %287, %288 : vector<33x8xf32>
    %290 = arith.subf %250, %289 : vector<33x8xf32>
    %c5_i32 = arith.constant 5 : i32
    %291 = vector.broadcast %c5_i32 : i32 to vector<33x1xi32>
    %292 = arith.cmpi eq, %89, %291 : vector<33x1xi32>
    %cst_91 = arith.constant 1.000000e+00 : f32
    %cst_92 = arith.constant 0.000000e+00 : f32
    %293 = vector.broadcast %cst_91 : f32 to vector<33x1xf32>
    %294 = vector.broadcast %cst_92 : f32 to vector<33x1xf32>
    %295 = arith.select %292, %293, %294 : vector<33x1xi1>, vector<33x1xf32>
    %c5_i32_93 = arith.constant 5 : i32
    %296 = vector.broadcast %c5_i32_93 : i32 to vector<1x33xi32>
    %297 = arith.cmpi eq, %90, %296 : vector<1x33xi32>
    %cst_94 = arith.constant 1.000000e+00 : f32
    %cst_95 = arith.constant 0.000000e+00 : f32
    %298 = vector.broadcast %cst_94 : f32 to vector<1x33xf32>
    %299 = vector.broadcast %cst_95 : f32 to vector<1x33xf32>
    %300 = arith.select %297, %298, %299 : vector<1x33xi1>, vector<1x33xf32>
    %301 = vector.broadcast %295 : vector<33x1xf32> to vector<33x33xf32>
    %302 = arith.mulf %284, %301 : vector<33x33xf32>
    %cst_96 = arith.constant dense<0.000000e+00> : vector<33xf32>
    %303 = vector.multi_reduction <add>, %302, %cst_96 [0] : vector<33x33xf32> to vector<33xf32>
    %304 = vector.shape_cast %303 : vector<33xf32> to vector<1x33xf32>
    %305 = vector.broadcast %295 : vector<33x1xf32> to vector<33x8xf32>
    %306 = arith.mulf %290, %305 : vector<33x8xf32>
    %cst_97 = arith.constant dense<0.000000e+00> : vector<8xf32>
    %307 = vector.multi_reduction <add>, %306, %cst_97 [0] : vector<33x8xf32> to vector<8xf32>
    %308 = vector.shape_cast %307 : vector<8xf32> to vector<1x8xf32>
    %309 = arith.mulf %304, %300 : vector<1x33xf32>
    %cst_98 = arith.constant dense<0.000000e+00> : vector<1xf32>
    %310 = vector.multi_reduction <add>, %309, %cst_98 [1] : vector<1x33xf32> to vector<1xf32>
    %311 = vector.shape_cast %310 : vector<1xf32> to vector<1x1xf32>
    %cst_99 = arith.constant 1.000000e+00 : f32
    %312 = vector.broadcast %cst_99 : f32 to vector<1x1xf32>
    %313 = arith.divf %312, %311 : vector<1x1xf32>
    %314 = vector.broadcast %300 : vector<1x33xf32> to vector<33x33xf32>
    %315 = arith.mulf %284, %314 : vector<33x33xf32>
    %cst_100 = arith.constant dense<0.000000e+00> : vector<33xf32>
    %316 = vector.multi_reduction <add>, %315, %cst_100 [1] : vector<33x33xf32> to vector<33xf32>
    %317 = vector.shape_cast %316 : vector<33xf32> to vector<33x1xf32>
    %318 = arith.subf %317, %295 : vector<33x1xf32>
    %319 = vector.broadcast %313 : vector<1x1xf32> to vector<1x33xf32>
    %320 = arith.mulf %304, %319 : vector<1x33xf32>
    %321 = vector.broadcast %318 : vector<33x1xf32> to vector<33x33xf32>
    %322 = vector.broadcast %320 : vector<1x33xf32> to vector<33x33xf32>
    %323 = arith.mulf %321, %322 : vector<33x33xf32>
    %324 = arith.subf %284, %323 : vector<33x33xf32>
    %325 = vector.broadcast %313 : vector<1x1xf32> to vector<1x8xf32>
    %326 = arith.mulf %308, %325 : vector<1x8xf32>
    %327 = vector.broadcast %318 : vector<33x1xf32> to vector<33x8xf32>
    %328 = vector.broadcast %326 : vector<1x8xf32> to vector<33x8xf32>
    %329 = arith.mulf %327, %328 : vector<33x8xf32>
    %330 = arith.subf %290, %329 : vector<33x8xf32>
    %c6_i32 = arith.constant 6 : i32
    %331 = vector.broadcast %c6_i32 : i32 to vector<33x1xi32>
    %332 = arith.cmpi eq, %89, %331 : vector<33x1xi32>
    %cst_101 = arith.constant 1.000000e+00 : f32
    %cst_102 = arith.constant 0.000000e+00 : f32
    %333 = vector.broadcast %cst_101 : f32 to vector<33x1xf32>
    %334 = vector.broadcast %cst_102 : f32 to vector<33x1xf32>
    %335 = arith.select %332, %333, %334 : vector<33x1xi1>, vector<33x1xf32>
    %c6_i32_103 = arith.constant 6 : i32
    %336 = vector.broadcast %c6_i32_103 : i32 to vector<1x33xi32>
    %337 = arith.cmpi eq, %90, %336 : vector<1x33xi32>
    %cst_104 = arith.constant 1.000000e+00 : f32
    %cst_105 = arith.constant 0.000000e+00 : f32
    %338 = vector.broadcast %cst_104 : f32 to vector<1x33xf32>
    %339 = vector.broadcast %cst_105 : f32 to vector<1x33xf32>
    %340 = arith.select %337, %338, %339 : vector<1x33xi1>, vector<1x33xf32>
    %341 = vector.broadcast %335 : vector<33x1xf32> to vector<33x33xf32>
    %342 = arith.mulf %324, %341 : vector<33x33xf32>
    %cst_106 = arith.constant dense<0.000000e+00> : vector<33xf32>
    %343 = vector.multi_reduction <add>, %342, %cst_106 [0] : vector<33x33xf32> to vector<33xf32>
    %344 = vector.shape_cast %343 : vector<33xf32> to vector<1x33xf32>
    %345 = vector.broadcast %335 : vector<33x1xf32> to vector<33x8xf32>
    %346 = arith.mulf %330, %345 : vector<33x8xf32>
    %cst_107 = arith.constant dense<0.000000e+00> : vector<8xf32>
    %347 = vector.multi_reduction <add>, %346, %cst_107 [0] : vector<33x8xf32> to vector<8xf32>
    %348 = vector.shape_cast %347 : vector<8xf32> to vector<1x8xf32>
    %349 = arith.mulf %344, %340 : vector<1x33xf32>
    %cst_108 = arith.constant dense<0.000000e+00> : vector<1xf32>
    %350 = vector.multi_reduction <add>, %349, %cst_108 [1] : vector<1x33xf32> to vector<1xf32>
    %351 = vector.shape_cast %350 : vector<1xf32> to vector<1x1xf32>
    %cst_109 = arith.constant 1.000000e+00 : f32
    %352 = vector.broadcast %cst_109 : f32 to vector<1x1xf32>
    %353 = arith.divf %352, %351 : vector<1x1xf32>
    %354 = vector.broadcast %340 : vector<1x33xf32> to vector<33x33xf32>
    %355 = arith.mulf %324, %354 : vector<33x33xf32>
    %cst_110 = arith.constant dense<0.000000e+00> : vector<33xf32>
    %356 = vector.multi_reduction <add>, %355, %cst_110 [1] : vector<33x33xf32> to vector<33xf32>
    %357 = vector.shape_cast %356 : vector<33xf32> to vector<33x1xf32>
    %358 = arith.subf %357, %335 : vector<33x1xf32>
    %359 = vector.broadcast %353 : vector<1x1xf32> to vector<1x33xf32>
    %360 = arith.mulf %344, %359 : vector<1x33xf32>
    %361 = vector.broadcast %358 : vector<33x1xf32> to vector<33x33xf32>
    %362 = vector.broadcast %360 : vector<1x33xf32> to vector<33x33xf32>
    %363 = arith.mulf %361, %362 : vector<33x33xf32>
    %364 = arith.subf %324, %363 : vector<33x33xf32>
    %365 = vector.broadcast %353 : vector<1x1xf32> to vector<1x8xf32>
    %366 = arith.mulf %348, %365 : vector<1x8xf32>
    %367 = vector.broadcast %358 : vector<33x1xf32> to vector<33x8xf32>
    %368 = vector.broadcast %366 : vector<1x8xf32> to vector<33x8xf32>
    %369 = arith.mulf %367, %368 : vector<33x8xf32>
    %370 = arith.subf %330, %369 : vector<33x8xf32>
    %c7_i32 = arith.constant 7 : i32
    %371 = vector.broadcast %c7_i32 : i32 to vector<33x1xi32>
    %372 = arith.cmpi eq, %89, %371 : vector<33x1xi32>
    %cst_111 = arith.constant 1.000000e+00 : f32
    %cst_112 = arith.constant 0.000000e+00 : f32
    %373 = vector.broadcast %cst_111 : f32 to vector<33x1xf32>
    %374 = vector.broadcast %cst_112 : f32 to vector<33x1xf32>
    %375 = arith.select %372, %373, %374 : vector<33x1xi1>, vector<33x1xf32>
    %c7_i32_113 = arith.constant 7 : i32
    %376 = vector.broadcast %c7_i32_113 : i32 to vector<1x33xi32>
    %377 = arith.cmpi eq, %90, %376 : vector<1x33xi32>
    %cst_114 = arith.constant 1.000000e+00 : f32
    %cst_115 = arith.constant 0.000000e+00 : f32
    %378 = vector.broadcast %cst_114 : f32 to vector<1x33xf32>
    %379 = vector.broadcast %cst_115 : f32 to vector<1x33xf32>
    %380 = arith.select %377, %378, %379 : vector<1x33xi1>, vector<1x33xf32>
    %381 = vector.broadcast %375 : vector<33x1xf32> to vector<33x33xf32>
    %382 = arith.mulf %364, %381 : vector<33x33xf32>
    %cst_116 = arith.constant dense<0.000000e+00> : vector<33xf32>
    %383 = vector.multi_reduction <add>, %382, %cst_116 [0] : vector<33x33xf32> to vector<33xf32>
    %384 = vector.shape_cast %383 : vector<33xf32> to vector<1x33xf32>
    %385 = vector.broadcast %375 : vector<33x1xf32> to vector<33x8xf32>
    %386 = arith.mulf %370, %385 : vector<33x8xf32>
    %cst_117 = arith.constant dense<0.000000e+00> : vector<8xf32>
    %387 = vector.multi_reduction <add>, %386, %cst_117 [0] : vector<33x8xf32> to vector<8xf32>
    %388 = vector.shape_cast %387 : vector<8xf32> to vector<1x8xf32>
    %389 = arith.mulf %384, %380 : vector<1x33xf32>
    %cst_118 = arith.constant dense<0.000000e+00> : vector<1xf32>
    %390 = vector.multi_reduction <add>, %389, %cst_118 [1] : vector<1x33xf32> to vector<1xf32>
    %391 = vector.shape_cast %390 : vector<1xf32> to vector<1x1xf32>
    %cst_119 = arith.constant 1.000000e+00 : f32
    %392 = vector.broadcast %cst_119 : f32 to vector<1x1xf32>
    %393 = arith.divf %392, %391 : vector<1x1xf32>
    %394 = vector.broadcast %380 : vector<1x33xf32> to vector<33x33xf32>
    %395 = arith.mulf %364, %394 : vector<33x33xf32>
    %cst_120 = arith.constant dense<0.000000e+00> : vector<33xf32>
    %396 = vector.multi_reduction <add>, %395, %cst_120 [1] : vector<33x33xf32> to vector<33xf32>
    %397 = vector.shape_cast %396 : vector<33xf32> to vector<33x1xf32>
    %398 = arith.subf %397, %375 : vector<33x1xf32>
    %399 = vector.broadcast %393 : vector<1x1xf32> to vector<1x33xf32>
    %400 = arith.mulf %384, %399 : vector<1x33xf32>
    %401 = vector.broadcast %398 : vector<33x1xf32> to vector<33x33xf32>
    %402 = vector.broadcast %400 : vector<1x33xf32> to vector<33x33xf32>
    %403 = arith.mulf %401, %402 : vector<33x33xf32>
    %404 = arith.subf %364, %403 : vector<33x33xf32>
    %405 = vector.broadcast %393 : vector<1x1xf32> to vector<1x8xf32>
    %406 = arith.mulf %388, %405 : vector<1x8xf32>
    %407 = vector.broadcast %398 : vector<33x1xf32> to vector<33x8xf32>
    %408 = vector.broadcast %406 : vector<1x8xf32> to vector<33x8xf32>
    %409 = arith.mulf %407, %408 : vector<33x8xf32>
    %410 = arith.subf %370, %409 : vector<33x8xf32>
    %c8_i32 = arith.constant 8 : i32
    %411 = vector.broadcast %c8_i32 : i32 to vector<33x1xi32>
    %412 = arith.cmpi eq, %89, %411 : vector<33x1xi32>
    %cst_121 = arith.constant 1.000000e+00 : f32
    %cst_122 = arith.constant 0.000000e+00 : f32
    %413 = vector.broadcast %cst_121 : f32 to vector<33x1xf32>
    %414 = vector.broadcast %cst_122 : f32 to vector<33x1xf32>
    %415 = arith.select %412, %413, %414 : vector<33x1xi1>, vector<33x1xf32>
    %c8_i32_123 = arith.constant 8 : i32
    %416 = vector.broadcast %c8_i32_123 : i32 to vector<1x33xi32>
    %417 = arith.cmpi eq, %90, %416 : vector<1x33xi32>
    %cst_124 = arith.constant 1.000000e+00 : f32
    %cst_125 = arith.constant 0.000000e+00 : f32
    %418 = vector.broadcast %cst_124 : f32 to vector<1x33xf32>
    %419 = vector.broadcast %cst_125 : f32 to vector<1x33xf32>
    %420 = arith.select %417, %418, %419 : vector<1x33xi1>, vector<1x33xf32>
    %421 = vector.broadcast %415 : vector<33x1xf32> to vector<33x33xf32>
    %422 = arith.mulf %404, %421 : vector<33x33xf32>
    %cst_126 = arith.constant dense<0.000000e+00> : vector<33xf32>
    %423 = vector.multi_reduction <add>, %422, %cst_126 [0] : vector<33x33xf32> to vector<33xf32>
    %424 = vector.shape_cast %423 : vector<33xf32> to vector<1x33xf32>
    %425 = vector.broadcast %415 : vector<33x1xf32> to vector<33x8xf32>
    %426 = arith.mulf %410, %425 : vector<33x8xf32>
    %cst_127 = arith.constant dense<0.000000e+00> : vector<8xf32>
    %427 = vector.multi_reduction <add>, %426, %cst_127 [0] : vector<33x8xf32> to vector<8xf32>
    %428 = vector.shape_cast %427 : vector<8xf32> to vector<1x8xf32>
    %429 = arith.mulf %424, %420 : vector<1x33xf32>
    %cst_128 = arith.constant dense<0.000000e+00> : vector<1xf32>
    %430 = vector.multi_reduction <add>, %429, %cst_128 [1] : vector<1x33xf32> to vector<1xf32>
    %431 = vector.shape_cast %430 : vector<1xf32> to vector<1x1xf32>
    %cst_129 = arith.constant 1.000000e+00 : f32
    %432 = vector.broadcast %cst_129 : f32 to vector<1x1xf32>
    %433 = arith.divf %432, %431 : vector<1x1xf32>
    %434 = vector.broadcast %420 : vector<1x33xf32> to vector<33x33xf32>
    %435 = arith.mulf %404, %434 : vector<33x33xf32>
    %cst_130 = arith.constant dense<0.000000e+00> : vector<33xf32>
    %436 = vector.multi_reduction <add>, %435, %cst_130 [1] : vector<33x33xf32> to vector<33xf32>
    %437 = vector.shape_cast %436 : vector<33xf32> to vector<33x1xf32>
    %438 = arith.subf %437, %415 : vector<33x1xf32>
    %439 = vector.broadcast %433 : vector<1x1xf32> to vector<1x33xf32>
    %440 = arith.mulf %424, %439 : vector<1x33xf32>
    %441 = vector.broadcast %438 : vector<33x1xf32> to vector<33x33xf32>
    %442 = vector.broadcast %440 : vector<1x33xf32> to vector<33x33xf32>
    %443 = arith.mulf %441, %442 : vector<33x33xf32>
    %444 = arith.subf %404, %443 : vector<33x33xf32>
    %445 = vector.broadcast %433 : vector<1x1xf32> to vector<1x8xf32>
    %446 = arith.mulf %428, %445 : vector<1x8xf32>
    %447 = vector.broadcast %438 : vector<33x1xf32> to vector<33x8xf32>
    %448 = vector.broadcast %446 : vector<1x8xf32> to vector<33x8xf32>
    %449 = arith.mulf %447, %448 : vector<33x8xf32>
    %450 = arith.subf %410, %449 : vector<33x8xf32>
    %c9_i32 = arith.constant 9 : i32
    %451 = vector.broadcast %c9_i32 : i32 to vector<33x1xi32>
    %452 = arith.cmpi eq, %89, %451 : vector<33x1xi32>
    %cst_131 = arith.constant 1.000000e+00 : f32
    %cst_132 = arith.constant 0.000000e+00 : f32
    %453 = vector.broadcast %cst_131 : f32 to vector<33x1xf32>
    %454 = vector.broadcast %cst_132 : f32 to vector<33x1xf32>
    %455 = arith.select %452, %453, %454 : vector<33x1xi1>, vector<33x1xf32>
    %c9_i32_133 = arith.constant 9 : i32
    %456 = vector.broadcast %c9_i32_133 : i32 to vector<1x33xi32>
    %457 = arith.cmpi eq, %90, %456 : vector<1x33xi32>
    %cst_134 = arith.constant 1.000000e+00 : f32
    %cst_135 = arith.constant 0.000000e+00 : f32
    %458 = vector.broadcast %cst_134 : f32 to vector<1x33xf32>
    %459 = vector.broadcast %cst_135 : f32 to vector<1x33xf32>
    %460 = arith.select %457, %458, %459 : vector<1x33xi1>, vector<1x33xf32>
    %461 = vector.broadcast %455 : vector<33x1xf32> to vector<33x33xf32>
    %462 = arith.mulf %444, %461 : vector<33x33xf32>
    %cst_136 = arith.constant dense<0.000000e+00> : vector<33xf32>
    %463 = vector.multi_reduction <add>, %462, %cst_136 [0] : vector<33x33xf32> to vector<33xf32>
    %464 = vector.shape_cast %463 : vector<33xf32> to vector<1x33xf32>
    %465 = vector.broadcast %455 : vector<33x1xf32> to vector<33x8xf32>
    %466 = arith.mulf %450, %465 : vector<33x8xf32>
    %cst_137 = arith.constant dense<0.000000e+00> : vector<8xf32>
    %467 = vector.multi_reduction <add>, %466, %cst_137 [0] : vector<33x8xf32> to vector<8xf32>
    %468 = vector.shape_cast %467 : vector<8xf32> to vector<1x8xf32>
    %469 = arith.mulf %464, %460 : vector<1x33xf32>
    %cst_138 = arith.constant dense<0.000000e+00> : vector<1xf32>
    %470 = vector.multi_reduction <add>, %469, %cst_138 [1] : vector<1x33xf32> to vector<1xf32>
    %471 = vector.shape_cast %470 : vector<1xf32> to vector<1x1xf32>
    %cst_139 = arith.constant 1.000000e+00 : f32
    %472 = vector.broadcast %cst_139 : f32 to vector<1x1xf32>
    %473 = arith.divf %472, %471 : vector<1x1xf32>
    %474 = vector.broadcast %460 : vector<1x33xf32> to vector<33x33xf32>
    %475 = arith.mulf %444, %474 : vector<33x33xf32>
    %cst_140 = arith.constant dense<0.000000e+00> : vector<33xf32>
    %476 = vector.multi_reduction <add>, %475, %cst_140 [1] : vector<33x33xf32> to vector<33xf32>
    %477 = vector.shape_cast %476 : vector<33xf32> to vector<33x1xf32>
    %478 = arith.subf %477, %455 : vector<33x1xf32>
    %479 = vector.broadcast %473 : vector<1x1xf32> to vector<1x33xf32>
    %480 = arith.mulf %464, %479 : vector<1x33xf32>
    %481 = vector.broadcast %478 : vector<33x1xf32> to vector<33x33xf32>
    %482 = vector.broadcast %480 : vector<1x33xf32> to vector<33x33xf32>
    %483 = arith.mulf %481, %482 : vector<33x33xf32>
    %484 = arith.subf %444, %483 : vector<33x33xf32>
    %485 = vector.broadcast %473 : vector<1x1xf32> to vector<1x8xf32>
    %486 = arith.mulf %468, %485 : vector<1x8xf32>
    %487 = vector.broadcast %478 : vector<33x1xf32> to vector<33x8xf32>
    %488 = vector.broadcast %486 : vector<1x8xf32> to vector<33x8xf32>
    %489 = arith.mulf %487, %488 : vector<33x8xf32>
    %490 = arith.subf %450, %489 : vector<33x8xf32>
    %c10_i32 = arith.constant 10 : i32
    %491 = vector.broadcast %c10_i32 : i32 to vector<33x1xi32>
    %492 = arith.cmpi eq, %89, %491 : vector<33x1xi32>
    %cst_141 = arith.constant 1.000000e+00 : f32
    %cst_142 = arith.constant 0.000000e+00 : f32
    %493 = vector.broadcast %cst_141 : f32 to vector<33x1xf32>
    %494 = vector.broadcast %cst_142 : f32 to vector<33x1xf32>
    %495 = arith.select %492, %493, %494 : vector<33x1xi1>, vector<33x1xf32>
    %c10_i32_143 = arith.constant 10 : i32
    %496 = vector.broadcast %c10_i32_143 : i32 to vector<1x33xi32>
    %497 = arith.cmpi eq, %90, %496 : vector<1x33xi32>
    %cst_144 = arith.constant 1.000000e+00 : f32
    %cst_145 = arith.constant 0.000000e+00 : f32
    %498 = vector.broadcast %cst_144 : f32 to vector<1x33xf32>
    %499 = vector.broadcast %cst_145 : f32 to vector<1x33xf32>
    %500 = arith.select %497, %498, %499 : vector<1x33xi1>, vector<1x33xf32>
    %501 = vector.broadcast %495 : vector<33x1xf32> to vector<33x33xf32>
    %502 = arith.mulf %484, %501 : vector<33x33xf32>
    %cst_146 = arith.constant dense<0.000000e+00> : vector<33xf32>
    %503 = vector.multi_reduction <add>, %502, %cst_146 [0] : vector<33x33xf32> to vector<33xf32>
    %504 = vector.shape_cast %503 : vector<33xf32> to vector<1x33xf32>
    %505 = vector.broadcast %495 : vector<33x1xf32> to vector<33x8xf32>
    %506 = arith.mulf %490, %505 : vector<33x8xf32>
    %cst_147 = arith.constant dense<0.000000e+00> : vector<8xf32>
    %507 = vector.multi_reduction <add>, %506, %cst_147 [0] : vector<33x8xf32> to vector<8xf32>
    %508 = vector.shape_cast %507 : vector<8xf32> to vector<1x8xf32>
    %509 = arith.mulf %504, %500 : vector<1x33xf32>
    %cst_148 = arith.constant dense<0.000000e+00> : vector<1xf32>
    %510 = vector.multi_reduction <add>, %509, %cst_148 [1] : vector<1x33xf32> to vector<1xf32>
    %511 = vector.shape_cast %510 : vector<1xf32> to vector<1x1xf32>
    %cst_149 = arith.constant 1.000000e+00 : f32
    %512 = vector.broadcast %cst_149 : f32 to vector<1x1xf32>
    %513 = arith.divf %512, %511 : vector<1x1xf32>
    %514 = vector.broadcast %500 : vector<1x33xf32> to vector<33x33xf32>
    %515 = arith.mulf %484, %514 : vector<33x33xf32>
    %cst_150 = arith.constant dense<0.000000e+00> : vector<33xf32>
    %516 = vector.multi_reduction <add>, %515, %cst_150 [1] : vector<33x33xf32> to vector<33xf32>
    %517 = vector.shape_cast %516 : vector<33xf32> to vector<33x1xf32>
    %518 = arith.subf %517, %495 : vector<33x1xf32>
    %519 = vector.broadcast %513 : vector<1x1xf32> to vector<1x33xf32>
    %520 = arith.mulf %504, %519 : vector<1x33xf32>
    %521 = vector.broadcast %518 : vector<33x1xf32> to vector<33x33xf32>
    %522 = vector.broadcast %520 : vector<1x33xf32> to vector<33x33xf32>
    %523 = arith.mulf %521, %522 : vector<33x33xf32>
    %524 = arith.subf %484, %523 : vector<33x33xf32>
    %525 = vector.broadcast %513 : vector<1x1xf32> to vector<1x8xf32>
    %526 = arith.mulf %508, %525 : vector<1x8xf32>
    %527 = vector.broadcast %518 : vector<33x1xf32> to vector<33x8xf32>
    %528 = vector.broadcast %526 : vector<1x8xf32> to vector<33x8xf32>
    %529 = arith.mulf %527, %528 : vector<33x8xf32>
    %530 = arith.subf %490, %529 : vector<33x8xf32>
    %c11_i32 = arith.constant 11 : i32
    %531 = vector.broadcast %c11_i32 : i32 to vector<33x1xi32>
    %532 = arith.cmpi eq, %89, %531 : vector<33x1xi32>
    %cst_151 = arith.constant 1.000000e+00 : f32
    %cst_152 = arith.constant 0.000000e+00 : f32
    %533 = vector.broadcast %cst_151 : f32 to vector<33x1xf32>
    %534 = vector.broadcast %cst_152 : f32 to vector<33x1xf32>
    %535 = arith.select %532, %533, %534 : vector<33x1xi1>, vector<33x1xf32>
    %c11_i32_153 = arith.constant 11 : i32
    %536 = vector.broadcast %c11_i32_153 : i32 to vector<1x33xi32>
    %537 = arith.cmpi eq, %90, %536 : vector<1x33xi32>
    %cst_154 = arith.constant 1.000000e+00 : f32
    %cst_155 = arith.constant 0.000000e+00 : f32
    %538 = vector.broadcast %cst_154 : f32 to vector<1x33xf32>
    %539 = vector.broadcast %cst_155 : f32 to vector<1x33xf32>
    %540 = arith.select %537, %538, %539 : vector<1x33xi1>, vector<1x33xf32>
    %541 = vector.broadcast %535 : vector<33x1xf32> to vector<33x33xf32>
    %542 = arith.mulf %524, %541 : vector<33x33xf32>
    %cst_156 = arith.constant dense<0.000000e+00> : vector<33xf32>
    %543 = vector.multi_reduction <add>, %542, %cst_156 [0] : vector<33x33xf32> to vector<33xf32>
    %544 = vector.shape_cast %543 : vector<33xf32> to vector<1x33xf32>
    %545 = vector.broadcast %535 : vector<33x1xf32> to vector<33x8xf32>
    %546 = arith.mulf %530, %545 : vector<33x8xf32>
    %cst_157 = arith.constant dense<0.000000e+00> : vector<8xf32>
    %547 = vector.multi_reduction <add>, %546, %cst_157 [0] : vector<33x8xf32> to vector<8xf32>
    %548 = vector.shape_cast %547 : vector<8xf32> to vector<1x8xf32>
    %549 = arith.mulf %544, %540 : vector<1x33xf32>
    %cst_158 = arith.constant dense<0.000000e+00> : vector<1xf32>
    %550 = vector.multi_reduction <add>, %549, %cst_158 [1] : vector<1x33xf32> to vector<1xf32>
    %551 = vector.shape_cast %550 : vector<1xf32> to vector<1x1xf32>
    %cst_159 = arith.constant 1.000000e+00 : f32
    %552 = vector.broadcast %cst_159 : f32 to vector<1x1xf32>
    %553 = arith.divf %552, %551 : vector<1x1xf32>
    %554 = vector.broadcast %540 : vector<1x33xf32> to vector<33x33xf32>
    %555 = arith.mulf %524, %554 : vector<33x33xf32>
    %cst_160 = arith.constant dense<0.000000e+00> : vector<33xf32>
    %556 = vector.multi_reduction <add>, %555, %cst_160 [1] : vector<33x33xf32> to vector<33xf32>
    %557 = vector.shape_cast %556 : vector<33xf32> to vector<33x1xf32>
    %558 = arith.subf %557, %535 : vector<33x1xf32>
    %559 = vector.broadcast %553 : vector<1x1xf32> to vector<1x33xf32>
    %560 = arith.mulf %544, %559 : vector<1x33xf32>
    %561 = vector.broadcast %558 : vector<33x1xf32> to vector<33x33xf32>
    %562 = vector.broadcast %560 : vector<1x33xf32> to vector<33x33xf32>
    %563 = arith.mulf %561, %562 : vector<33x33xf32>
    %564 = arith.subf %524, %563 : vector<33x33xf32>
    %565 = vector.broadcast %553 : vector<1x1xf32> to vector<1x8xf32>
    %566 = arith.mulf %548, %565 : vector<1x8xf32>
    %567 = vector.broadcast %558 : vector<33x1xf32> to vector<33x8xf32>
    %568 = vector.broadcast %566 : vector<1x8xf32> to vector<33x8xf32>
    %569 = arith.mulf %567, %568 : vector<33x8xf32>
    %570 = arith.subf %530, %569 : vector<33x8xf32>
    %c12_i32 = arith.constant 12 : i32
    %571 = vector.broadcast %c12_i32 : i32 to vector<33x1xi32>
    %572 = arith.cmpi eq, %89, %571 : vector<33x1xi32>
    %cst_161 = arith.constant 1.000000e+00 : f32
    %cst_162 = arith.constant 0.000000e+00 : f32
    %573 = vector.broadcast %cst_161 : f32 to vector<33x1xf32>
    %574 = vector.broadcast %cst_162 : f32 to vector<33x1xf32>
    %575 = arith.select %572, %573, %574 : vector<33x1xi1>, vector<33x1xf32>
    %c12_i32_163 = arith.constant 12 : i32
    %576 = vector.broadcast %c12_i32_163 : i32 to vector<1x33xi32>
    %577 = arith.cmpi eq, %90, %576 : vector<1x33xi32>
    %cst_164 = arith.constant 1.000000e+00 : f32
    %cst_165 = arith.constant 0.000000e+00 : f32
    %578 = vector.broadcast %cst_164 : f32 to vector<1x33xf32>
    %579 = vector.broadcast %cst_165 : f32 to vector<1x33xf32>
    %580 = arith.select %577, %578, %579 : vector<1x33xi1>, vector<1x33xf32>
    %581 = vector.broadcast %575 : vector<33x1xf32> to vector<33x33xf32>
    %582 = arith.mulf %564, %581 : vector<33x33xf32>
    %cst_166 = arith.constant dense<0.000000e+00> : vector<33xf32>
    %583 = vector.multi_reduction <add>, %582, %cst_166 [0] : vector<33x33xf32> to vector<33xf32>
    %584 = vector.shape_cast %583 : vector<33xf32> to vector<1x33xf32>
    %585 = vector.broadcast %575 : vector<33x1xf32> to vector<33x8xf32>
    %586 = arith.mulf %570, %585 : vector<33x8xf32>
    %cst_167 = arith.constant dense<0.000000e+00> : vector<8xf32>
    %587 = vector.multi_reduction <add>, %586, %cst_167 [0] : vector<33x8xf32> to vector<8xf32>
    %588 = vector.shape_cast %587 : vector<8xf32> to vector<1x8xf32>
    %589 = arith.mulf %584, %580 : vector<1x33xf32>
    %cst_168 = arith.constant dense<0.000000e+00> : vector<1xf32>
    %590 = vector.multi_reduction <add>, %589, %cst_168 [1] : vector<1x33xf32> to vector<1xf32>
    %591 = vector.shape_cast %590 : vector<1xf32> to vector<1x1xf32>
    %cst_169 = arith.constant 1.000000e+00 : f32
    %592 = vector.broadcast %cst_169 : f32 to vector<1x1xf32>
    %593 = arith.divf %592, %591 : vector<1x1xf32>
    %594 = vector.broadcast %580 : vector<1x33xf32> to vector<33x33xf32>
    %595 = arith.mulf %564, %594 : vector<33x33xf32>
    %cst_170 = arith.constant dense<0.000000e+00> : vector<33xf32>
    %596 = vector.multi_reduction <add>, %595, %cst_170 [1] : vector<33x33xf32> to vector<33xf32>
    %597 = vector.shape_cast %596 : vector<33xf32> to vector<33x1xf32>
    %598 = arith.subf %597, %575 : vector<33x1xf32>
    %599 = vector.broadcast %593 : vector<1x1xf32> to vector<1x33xf32>
    %600 = arith.mulf %584, %599 : vector<1x33xf32>
    %601 = vector.broadcast %598 : vector<33x1xf32> to vector<33x33xf32>
    %602 = vector.broadcast %600 : vector<1x33xf32> to vector<33x33xf32>
    %603 = arith.mulf %601, %602 : vector<33x33xf32>
    %604 = arith.subf %564, %603 : vector<33x33xf32>
    %605 = vector.broadcast %593 : vector<1x1xf32> to vector<1x8xf32>
    %606 = arith.mulf %588, %605 : vector<1x8xf32>
    %607 = vector.broadcast %598 : vector<33x1xf32> to vector<33x8xf32>
    %608 = vector.broadcast %606 : vector<1x8xf32> to vector<33x8xf32>
    %609 = arith.mulf %607, %608 : vector<33x8xf32>
    %610 = arith.subf %570, %609 : vector<33x8xf32>
    %c13_i32 = arith.constant 13 : i32
    %611 = vector.broadcast %c13_i32 : i32 to vector<33x1xi32>
    %612 = arith.cmpi eq, %89, %611 : vector<33x1xi32>
    %cst_171 = arith.constant 1.000000e+00 : f32
    %cst_172 = arith.constant 0.000000e+00 : f32
    %613 = vector.broadcast %cst_171 : f32 to vector<33x1xf32>
    %614 = vector.broadcast %cst_172 : f32 to vector<33x1xf32>
    %615 = arith.select %612, %613, %614 : vector<33x1xi1>, vector<33x1xf32>
    %c13_i32_173 = arith.constant 13 : i32
    %616 = vector.broadcast %c13_i32_173 : i32 to vector<1x33xi32>
    %617 = arith.cmpi eq, %90, %616 : vector<1x33xi32>
    %cst_174 = arith.constant 1.000000e+00 : f32
    %cst_175 = arith.constant 0.000000e+00 : f32
    %618 = vector.broadcast %cst_174 : f32 to vector<1x33xf32>
    %619 = vector.broadcast %cst_175 : f32 to vector<1x33xf32>
    %620 = arith.select %617, %618, %619 : vector<1x33xi1>, vector<1x33xf32>
    %621 = vector.broadcast %615 : vector<33x1xf32> to vector<33x33xf32>
    %622 = arith.mulf %604, %621 : vector<33x33xf32>
    %cst_176 = arith.constant dense<0.000000e+00> : vector<33xf32>
    %623 = vector.multi_reduction <add>, %622, %cst_176 [0] : vector<33x33xf32> to vector<33xf32>
    %624 = vector.shape_cast %623 : vector<33xf32> to vector<1x33xf32>
    %625 = vector.broadcast %615 : vector<33x1xf32> to vector<33x8xf32>
    %626 = arith.mulf %610, %625 : vector<33x8xf32>
    %cst_177 = arith.constant dense<0.000000e+00> : vector<8xf32>
    %627 = vector.multi_reduction <add>, %626, %cst_177 [0] : vector<33x8xf32> to vector<8xf32>
    %628 = vector.shape_cast %627 : vector<8xf32> to vector<1x8xf32>
    %629 = arith.mulf %624, %620 : vector<1x33xf32>
    %cst_178 = arith.constant dense<0.000000e+00> : vector<1xf32>
    %630 = vector.multi_reduction <add>, %629, %cst_178 [1] : vector<1x33xf32> to vector<1xf32>
    %631 = vector.shape_cast %630 : vector<1xf32> to vector<1x1xf32>
    %cst_179 = arith.constant 1.000000e+00 : f32
    %632 = vector.broadcast %cst_179 : f32 to vector<1x1xf32>
    %633 = arith.divf %632, %631 : vector<1x1xf32>
    %634 = vector.broadcast %620 : vector<1x33xf32> to vector<33x33xf32>
    %635 = arith.mulf %604, %634 : vector<33x33xf32>
    %cst_180 = arith.constant dense<0.000000e+00> : vector<33xf32>
    %636 = vector.multi_reduction <add>, %635, %cst_180 [1] : vector<33x33xf32> to vector<33xf32>
    %637 = vector.shape_cast %636 : vector<33xf32> to vector<33x1xf32>
    %638 = arith.subf %637, %615 : vector<33x1xf32>
    %639 = vector.broadcast %633 : vector<1x1xf32> to vector<1x33xf32>
    %640 = arith.mulf %624, %639 : vector<1x33xf32>
    %641 = vector.broadcast %638 : vector<33x1xf32> to vector<33x33xf32>
    %642 = vector.broadcast %640 : vector<1x33xf32> to vector<33x33xf32>
    %643 = arith.mulf %641, %642 : vector<33x33xf32>
    %644 = arith.subf %604, %643 : vector<33x33xf32>
    %645 = vector.broadcast %633 : vector<1x1xf32> to vector<1x8xf32>
    %646 = arith.mulf %628, %645 : vector<1x8xf32>
    %647 = vector.broadcast %638 : vector<33x1xf32> to vector<33x8xf32>
    %648 = vector.broadcast %646 : vector<1x8xf32> to vector<33x8xf32>
    %649 = arith.mulf %647, %648 : vector<33x8xf32>
    %650 = arith.subf %610, %649 : vector<33x8xf32>
    %c14_i32 = arith.constant 14 : i32
    %651 = vector.broadcast %c14_i32 : i32 to vector<33x1xi32>
    %652 = arith.cmpi eq, %89, %651 : vector<33x1xi32>
    %cst_181 = arith.constant 1.000000e+00 : f32
    %cst_182 = arith.constant 0.000000e+00 : f32
    %653 = vector.broadcast %cst_181 : f32 to vector<33x1xf32>
    %654 = vector.broadcast %cst_182 : f32 to vector<33x1xf32>
    %655 = arith.select %652, %653, %654 : vector<33x1xi1>, vector<33x1xf32>
    %c14_i32_183 = arith.constant 14 : i32
    %656 = vector.broadcast %c14_i32_183 : i32 to vector<1x33xi32>
    %657 = arith.cmpi eq, %90, %656 : vector<1x33xi32>
    %cst_184 = arith.constant 1.000000e+00 : f32
    %cst_185 = arith.constant 0.000000e+00 : f32
    %658 = vector.broadcast %cst_184 : f32 to vector<1x33xf32>
    %659 = vector.broadcast %cst_185 : f32 to vector<1x33xf32>
    %660 = arith.select %657, %658, %659 : vector<1x33xi1>, vector<1x33xf32>
    %661 = vector.broadcast %655 : vector<33x1xf32> to vector<33x33xf32>
    %662 = arith.mulf %644, %661 : vector<33x33xf32>
    %cst_186 = arith.constant dense<0.000000e+00> : vector<33xf32>
    %663 = vector.multi_reduction <add>, %662, %cst_186 [0] : vector<33x33xf32> to vector<33xf32>
    %664 = vector.shape_cast %663 : vector<33xf32> to vector<1x33xf32>
    %665 = vector.broadcast %655 : vector<33x1xf32> to vector<33x8xf32>
    %666 = arith.mulf %650, %665 : vector<33x8xf32>
    %cst_187 = arith.constant dense<0.000000e+00> : vector<8xf32>
    %667 = vector.multi_reduction <add>, %666, %cst_187 [0] : vector<33x8xf32> to vector<8xf32>
    %668 = vector.shape_cast %667 : vector<8xf32> to vector<1x8xf32>
    %669 = arith.mulf %664, %660 : vector<1x33xf32>
    %cst_188 = arith.constant dense<0.000000e+00> : vector<1xf32>
    %670 = vector.multi_reduction <add>, %669, %cst_188 [1] : vector<1x33xf32> to vector<1xf32>
    %671 = vector.shape_cast %670 : vector<1xf32> to vector<1x1xf32>
    %cst_189 = arith.constant 1.000000e+00 : f32
    %672 = vector.broadcast %cst_189 : f32 to vector<1x1xf32>
    %673 = arith.divf %672, %671 : vector<1x1xf32>
    %674 = vector.broadcast %660 : vector<1x33xf32> to vector<33x33xf32>
    %675 = arith.mulf %644, %674 : vector<33x33xf32>
    %cst_190 = arith.constant dense<0.000000e+00> : vector<33xf32>
    %676 = vector.multi_reduction <add>, %675, %cst_190 [1] : vector<33x33xf32> to vector<33xf32>
    %677 = vector.shape_cast %676 : vector<33xf32> to vector<33x1xf32>
    %678 = arith.subf %677, %655 : vector<33x1xf32>
    %679 = vector.broadcast %673 : vector<1x1xf32> to vector<1x33xf32>
    %680 = arith.mulf %664, %679 : vector<1x33xf32>
    %681 = vector.broadcast %678 : vector<33x1xf32> to vector<33x33xf32>
    %682 = vector.broadcast %680 : vector<1x33xf32> to vector<33x33xf32>
    %683 = arith.mulf %681, %682 : vector<33x33xf32>
    %684 = arith.subf %644, %683 : vector<33x33xf32>
    %685 = vector.broadcast %673 : vector<1x1xf32> to vector<1x8xf32>
    %686 = arith.mulf %668, %685 : vector<1x8xf32>
    %687 = vector.broadcast %678 : vector<33x1xf32> to vector<33x8xf32>
    %688 = vector.broadcast %686 : vector<1x8xf32> to vector<33x8xf32>
    %689 = arith.mulf %687, %688 : vector<33x8xf32>
    %690 = arith.subf %650, %689 : vector<33x8xf32>
    %c15_i32 = arith.constant 15 : i32
    %691 = vector.broadcast %c15_i32 : i32 to vector<33x1xi32>
    %692 = arith.cmpi eq, %89, %691 : vector<33x1xi32>
    %cst_191 = arith.constant 1.000000e+00 : f32
    %cst_192 = arith.constant 0.000000e+00 : f32
    %693 = vector.broadcast %cst_191 : f32 to vector<33x1xf32>
    %694 = vector.broadcast %cst_192 : f32 to vector<33x1xf32>
    %695 = arith.select %692, %693, %694 : vector<33x1xi1>, vector<33x1xf32>
    %c15_i32_193 = arith.constant 15 : i32
    %696 = vector.broadcast %c15_i32_193 : i32 to vector<1x33xi32>
    %697 = arith.cmpi eq, %90, %696 : vector<1x33xi32>
    %cst_194 = arith.constant 1.000000e+00 : f32
    %cst_195 = arith.constant 0.000000e+00 : f32
    %698 = vector.broadcast %cst_194 : f32 to vector<1x33xf32>
    %699 = vector.broadcast %cst_195 : f32 to vector<1x33xf32>
    %700 = arith.select %697, %698, %699 : vector<1x33xi1>, vector<1x33xf32>
    %701 = vector.broadcast %695 : vector<33x1xf32> to vector<33x33xf32>
    %702 = arith.mulf %684, %701 : vector<33x33xf32>
    %cst_196 = arith.constant dense<0.000000e+00> : vector<33xf32>
    %703 = vector.multi_reduction <add>, %702, %cst_196 [0] : vector<33x33xf32> to vector<33xf32>
    %704 = vector.shape_cast %703 : vector<33xf32> to vector<1x33xf32>
    %705 = vector.broadcast %695 : vector<33x1xf32> to vector<33x8xf32>
    %706 = arith.mulf %690, %705 : vector<33x8xf32>
    %cst_197 = arith.constant dense<0.000000e+00> : vector<8xf32>
    %707 = vector.multi_reduction <add>, %706, %cst_197 [0] : vector<33x8xf32> to vector<8xf32>
    %708 = vector.shape_cast %707 : vector<8xf32> to vector<1x8xf32>
    %709 = arith.mulf %704, %700 : vector<1x33xf32>
    %cst_198 = arith.constant dense<0.000000e+00> : vector<1xf32>
    %710 = vector.multi_reduction <add>, %709, %cst_198 [1] : vector<1x33xf32> to vector<1xf32>
    %711 = vector.shape_cast %710 : vector<1xf32> to vector<1x1xf32>
    %cst_199 = arith.constant 1.000000e+00 : f32
    %712 = vector.broadcast %cst_199 : f32 to vector<1x1xf32>
    %713 = arith.divf %712, %711 : vector<1x1xf32>
    %714 = vector.broadcast %700 : vector<1x33xf32> to vector<33x33xf32>
    %715 = arith.mulf %684, %714 : vector<33x33xf32>
    %cst_200 = arith.constant dense<0.000000e+00> : vector<33xf32>
    %716 = vector.multi_reduction <add>, %715, %cst_200 [1] : vector<33x33xf32> to vector<33xf32>
    %717 = vector.shape_cast %716 : vector<33xf32> to vector<33x1xf32>
    %718 = arith.subf %717, %695 : vector<33x1xf32>
    %719 = vector.broadcast %713 : vector<1x1xf32> to vector<1x33xf32>
    %720 = arith.mulf %704, %719 : vector<1x33xf32>
    %721 = vector.broadcast %718 : vector<33x1xf32> to vector<33x33xf32>
    %722 = vector.broadcast %720 : vector<1x33xf32> to vector<33x33xf32>
    %723 = arith.mulf %721, %722 : vector<33x33xf32>
    %724 = arith.subf %684, %723 : vector<33x33xf32>
    %725 = vector.broadcast %713 : vector<1x1xf32> to vector<1x8xf32>
    %726 = arith.mulf %708, %725 : vector<1x8xf32>
    %727 = vector.broadcast %718 : vector<33x1xf32> to vector<33x8xf32>
    %728 = vector.broadcast %726 : vector<1x8xf32> to vector<33x8xf32>
    %729 = arith.mulf %727, %728 : vector<33x8xf32>
    %730 = arith.subf %690, %729 : vector<33x8xf32>
    %c16_i32 = arith.constant 16 : i32
    %731 = vector.broadcast %c16_i32 : i32 to vector<33x1xi32>
    %732 = arith.cmpi eq, %89, %731 : vector<33x1xi32>
    %cst_201 = arith.constant 1.000000e+00 : f32
    %cst_202 = arith.constant 0.000000e+00 : f32
    %733 = vector.broadcast %cst_201 : f32 to vector<33x1xf32>
    %734 = vector.broadcast %cst_202 : f32 to vector<33x1xf32>
    %735 = arith.select %732, %733, %734 : vector<33x1xi1>, vector<33x1xf32>
    %c16_i32_203 = arith.constant 16 : i32
    %736 = vector.broadcast %c16_i32_203 : i32 to vector<1x33xi32>
    %737 = arith.cmpi eq, %90, %736 : vector<1x33xi32>
    %cst_204 = arith.constant 1.000000e+00 : f32
    %cst_205 = arith.constant 0.000000e+00 : f32
    %738 = vector.broadcast %cst_204 : f32 to vector<1x33xf32>
    %739 = vector.broadcast %cst_205 : f32 to vector<1x33xf32>
    %740 = arith.select %737, %738, %739 : vector<1x33xi1>, vector<1x33xf32>
    %741 = vector.broadcast %735 : vector<33x1xf32> to vector<33x33xf32>
    %742 = arith.mulf %724, %741 : vector<33x33xf32>
    %cst_206 = arith.constant dense<0.000000e+00> : vector<33xf32>
    %743 = vector.multi_reduction <add>, %742, %cst_206 [0] : vector<33x33xf32> to vector<33xf32>
    %744 = vector.shape_cast %743 : vector<33xf32> to vector<1x33xf32>
    %745 = vector.broadcast %735 : vector<33x1xf32> to vector<33x8xf32>
    %746 = arith.mulf %730, %745 : vector<33x8xf32>
    %cst_207 = arith.constant dense<0.000000e+00> : vector<8xf32>
    %747 = vector.multi_reduction <add>, %746, %cst_207 [0] : vector<33x8xf32> to vector<8xf32>
    %748 = vector.shape_cast %747 : vector<8xf32> to vector<1x8xf32>
    %749 = arith.mulf %744, %740 : vector<1x33xf32>
    %cst_208 = arith.constant dense<0.000000e+00> : vector<1xf32>
    %750 = vector.multi_reduction <add>, %749, %cst_208 [1] : vector<1x33xf32> to vector<1xf32>
    %751 = vector.shape_cast %750 : vector<1xf32> to vector<1x1xf32>
    %cst_209 = arith.constant 1.000000e+00 : f32
    %752 = vector.broadcast %cst_209 : f32 to vector<1x1xf32>
    %753 = arith.divf %752, %751 : vector<1x1xf32>
    %754 = vector.broadcast %740 : vector<1x33xf32> to vector<33x33xf32>
    %755 = arith.mulf %724, %754 : vector<33x33xf32>
    %cst_210 = arith.constant dense<0.000000e+00> : vector<33xf32>
    %756 = vector.multi_reduction <add>, %755, %cst_210 [1] : vector<33x33xf32> to vector<33xf32>
    %757 = vector.shape_cast %756 : vector<33xf32> to vector<33x1xf32>
    %758 = arith.subf %757, %735 : vector<33x1xf32>
    %759 = vector.broadcast %753 : vector<1x1xf32> to vector<1x33xf32>
    %760 = arith.mulf %744, %759 : vector<1x33xf32>
    %761 = vector.broadcast %758 : vector<33x1xf32> to vector<33x33xf32>
    %762 = vector.broadcast %760 : vector<1x33xf32> to vector<33x33xf32>
    %763 = arith.mulf %761, %762 : vector<33x33xf32>
    %764 = arith.subf %724, %763 : vector<33x33xf32>
    %765 = vector.broadcast %753 : vector<1x1xf32> to vector<1x8xf32>
    %766 = arith.mulf %748, %765 : vector<1x8xf32>
    %767 = vector.broadcast %758 : vector<33x1xf32> to vector<33x8xf32>
    %768 = vector.broadcast %766 : vector<1x8xf32> to vector<33x8xf32>
    %769 = arith.mulf %767, %768 : vector<33x8xf32>
    %770 = arith.subf %730, %769 : vector<33x8xf32>
    %c17_i32 = arith.constant 17 : i32
    %771 = vector.broadcast %c17_i32 : i32 to vector<33x1xi32>
    %772 = arith.cmpi eq, %89, %771 : vector<33x1xi32>
    %cst_211 = arith.constant 1.000000e+00 : f32
    %cst_212 = arith.constant 0.000000e+00 : f32
    %773 = vector.broadcast %cst_211 : f32 to vector<33x1xf32>
    %774 = vector.broadcast %cst_212 : f32 to vector<33x1xf32>
    %775 = arith.select %772, %773, %774 : vector<33x1xi1>, vector<33x1xf32>
    %c17_i32_213 = arith.constant 17 : i32
    %776 = vector.broadcast %c17_i32_213 : i32 to vector<1x33xi32>
    %777 = arith.cmpi eq, %90, %776 : vector<1x33xi32>
    %cst_214 = arith.constant 1.000000e+00 : f32
    %cst_215 = arith.constant 0.000000e+00 : f32
    %778 = vector.broadcast %cst_214 : f32 to vector<1x33xf32>
    %779 = vector.broadcast %cst_215 : f32 to vector<1x33xf32>
    %780 = arith.select %777, %778, %779 : vector<1x33xi1>, vector<1x33xf32>
    %781 = vector.broadcast %775 : vector<33x1xf32> to vector<33x33xf32>
    %782 = arith.mulf %764, %781 : vector<33x33xf32>
    %cst_216 = arith.constant dense<0.000000e+00> : vector<33xf32>
    %783 = vector.multi_reduction <add>, %782, %cst_216 [0] : vector<33x33xf32> to vector<33xf32>
    %784 = vector.shape_cast %783 : vector<33xf32> to vector<1x33xf32>
    %785 = vector.broadcast %775 : vector<33x1xf32> to vector<33x8xf32>
    %786 = arith.mulf %770, %785 : vector<33x8xf32>
    %cst_217 = arith.constant dense<0.000000e+00> : vector<8xf32>
    %787 = vector.multi_reduction <add>, %786, %cst_217 [0] : vector<33x8xf32> to vector<8xf32>
    %788 = vector.shape_cast %787 : vector<8xf32> to vector<1x8xf32>
    %789 = arith.mulf %784, %780 : vector<1x33xf32>
    %cst_218 = arith.constant dense<0.000000e+00> : vector<1xf32>
    %790 = vector.multi_reduction <add>, %789, %cst_218 [1] : vector<1x33xf32> to vector<1xf32>
    %791 = vector.shape_cast %790 : vector<1xf32> to vector<1x1xf32>
    %cst_219 = arith.constant 1.000000e+00 : f32
    %792 = vector.broadcast %cst_219 : f32 to vector<1x1xf32>
    %793 = arith.divf %792, %791 : vector<1x1xf32>
    %794 = vector.broadcast %780 : vector<1x33xf32> to vector<33x33xf32>
    %795 = arith.mulf %764, %794 : vector<33x33xf32>
    %cst_220 = arith.constant dense<0.000000e+00> : vector<33xf32>
    %796 = vector.multi_reduction <add>, %795, %cst_220 [1] : vector<33x33xf32> to vector<33xf32>
    %797 = vector.shape_cast %796 : vector<33xf32> to vector<33x1xf32>
    %798 = arith.subf %797, %775 : vector<33x1xf32>
    %799 = vector.broadcast %793 : vector<1x1xf32> to vector<1x33xf32>
    %800 = arith.mulf %784, %799 : vector<1x33xf32>
    %801 = vector.broadcast %798 : vector<33x1xf32> to vector<33x33xf32>
    %802 = vector.broadcast %800 : vector<1x33xf32> to vector<33x33xf32>
    %803 = arith.mulf %801, %802 : vector<33x33xf32>
    %804 = arith.subf %764, %803 : vector<33x33xf32>
    %805 = vector.broadcast %793 : vector<1x1xf32> to vector<1x8xf32>
    %806 = arith.mulf %788, %805 : vector<1x8xf32>
    %807 = vector.broadcast %798 : vector<33x1xf32> to vector<33x8xf32>
    %808 = vector.broadcast %806 : vector<1x8xf32> to vector<33x8xf32>
    %809 = arith.mulf %807, %808 : vector<33x8xf32>
    %810 = arith.subf %770, %809 : vector<33x8xf32>
    %c18_i32 = arith.constant 18 : i32
    %811 = vector.broadcast %c18_i32 : i32 to vector<33x1xi32>
    %812 = arith.cmpi eq, %89, %811 : vector<33x1xi32>
    %cst_221 = arith.constant 1.000000e+00 : f32
    %cst_222 = arith.constant 0.000000e+00 : f32
    %813 = vector.broadcast %cst_221 : f32 to vector<33x1xf32>
    %814 = vector.broadcast %cst_222 : f32 to vector<33x1xf32>
    %815 = arith.select %812, %813, %814 : vector<33x1xi1>, vector<33x1xf32>
    %c18_i32_223 = arith.constant 18 : i32
    %816 = vector.broadcast %c18_i32_223 : i32 to vector<1x33xi32>
    %817 = arith.cmpi eq, %90, %816 : vector<1x33xi32>
    %cst_224 = arith.constant 1.000000e+00 : f32
    %cst_225 = arith.constant 0.000000e+00 : f32
    %818 = vector.broadcast %cst_224 : f32 to vector<1x33xf32>
    %819 = vector.broadcast %cst_225 : f32 to vector<1x33xf32>
    %820 = arith.select %817, %818, %819 : vector<1x33xi1>, vector<1x33xf32>
    %821 = vector.broadcast %815 : vector<33x1xf32> to vector<33x33xf32>
    %822 = arith.mulf %804, %821 : vector<33x33xf32>
    %cst_226 = arith.constant dense<0.000000e+00> : vector<33xf32>
    %823 = vector.multi_reduction <add>, %822, %cst_226 [0] : vector<33x33xf32> to vector<33xf32>
    %824 = vector.shape_cast %823 : vector<33xf32> to vector<1x33xf32>
    %825 = vector.broadcast %815 : vector<33x1xf32> to vector<33x8xf32>
    %826 = arith.mulf %810, %825 : vector<33x8xf32>
    %cst_227 = arith.constant dense<0.000000e+00> : vector<8xf32>
    %827 = vector.multi_reduction <add>, %826, %cst_227 [0] : vector<33x8xf32> to vector<8xf32>
    %828 = vector.shape_cast %827 : vector<8xf32> to vector<1x8xf32>
    %829 = arith.mulf %824, %820 : vector<1x33xf32>
    %cst_228 = arith.constant dense<0.000000e+00> : vector<1xf32>
    %830 = vector.multi_reduction <add>, %829, %cst_228 [1] : vector<1x33xf32> to vector<1xf32>
    %831 = vector.shape_cast %830 : vector<1xf32> to vector<1x1xf32>
    %cst_229 = arith.constant 1.000000e+00 : f32
    %832 = vector.broadcast %cst_229 : f32 to vector<1x1xf32>
    %833 = arith.divf %832, %831 : vector<1x1xf32>
    %834 = vector.broadcast %820 : vector<1x33xf32> to vector<33x33xf32>
    %835 = arith.mulf %804, %834 : vector<33x33xf32>
    %cst_230 = arith.constant dense<0.000000e+00> : vector<33xf32>
    %836 = vector.multi_reduction <add>, %835, %cst_230 [1] : vector<33x33xf32> to vector<33xf32>
    %837 = vector.shape_cast %836 : vector<33xf32> to vector<33x1xf32>
    %838 = arith.subf %837, %815 : vector<33x1xf32>
    %839 = vector.broadcast %833 : vector<1x1xf32> to vector<1x33xf32>
    %840 = arith.mulf %824, %839 : vector<1x33xf32>
    %841 = vector.broadcast %838 : vector<33x1xf32> to vector<33x33xf32>
    %842 = vector.broadcast %840 : vector<1x33xf32> to vector<33x33xf32>
    %843 = arith.mulf %841, %842 : vector<33x33xf32>
    %844 = arith.subf %804, %843 : vector<33x33xf32>
    %845 = vector.broadcast %833 : vector<1x1xf32> to vector<1x8xf32>
    %846 = arith.mulf %828, %845 : vector<1x8xf32>
    %847 = vector.broadcast %838 : vector<33x1xf32> to vector<33x8xf32>
    %848 = vector.broadcast %846 : vector<1x8xf32> to vector<33x8xf32>
    %849 = arith.mulf %847, %848 : vector<33x8xf32>
    %850 = arith.subf %810, %849 : vector<33x8xf32>
    %c19_i32 = arith.constant 19 : i32
    %851 = vector.broadcast %c19_i32 : i32 to vector<33x1xi32>
    %852 = arith.cmpi eq, %89, %851 : vector<33x1xi32>
    %cst_231 = arith.constant 1.000000e+00 : f32
    %cst_232 = arith.constant 0.000000e+00 : f32
    %853 = vector.broadcast %cst_231 : f32 to vector<33x1xf32>
    %854 = vector.broadcast %cst_232 : f32 to vector<33x1xf32>
    %855 = arith.select %852, %853, %854 : vector<33x1xi1>, vector<33x1xf32>
    %c19_i32_233 = arith.constant 19 : i32
    %856 = vector.broadcast %c19_i32_233 : i32 to vector<1x33xi32>
    %857 = arith.cmpi eq, %90, %856 : vector<1x33xi32>
    %cst_234 = arith.constant 1.000000e+00 : f32
    %cst_235 = arith.constant 0.000000e+00 : f32
    %858 = vector.broadcast %cst_234 : f32 to vector<1x33xf32>
    %859 = vector.broadcast %cst_235 : f32 to vector<1x33xf32>
    %860 = arith.select %857, %858, %859 : vector<1x33xi1>, vector<1x33xf32>
    %861 = vector.broadcast %855 : vector<33x1xf32> to vector<33x33xf32>
    %862 = arith.mulf %844, %861 : vector<33x33xf32>
    %cst_236 = arith.constant dense<0.000000e+00> : vector<33xf32>
    %863 = vector.multi_reduction <add>, %862, %cst_236 [0] : vector<33x33xf32> to vector<33xf32>
    %864 = vector.shape_cast %863 : vector<33xf32> to vector<1x33xf32>
    %865 = vector.broadcast %855 : vector<33x1xf32> to vector<33x8xf32>
    %866 = arith.mulf %850, %865 : vector<33x8xf32>
    %cst_237 = arith.constant dense<0.000000e+00> : vector<8xf32>
    %867 = vector.multi_reduction <add>, %866, %cst_237 [0] : vector<33x8xf32> to vector<8xf32>
    %868 = vector.shape_cast %867 : vector<8xf32> to vector<1x8xf32>
    %869 = arith.mulf %864, %860 : vector<1x33xf32>
    %cst_238 = arith.constant dense<0.000000e+00> : vector<1xf32>
    %870 = vector.multi_reduction <add>, %869, %cst_238 [1] : vector<1x33xf32> to vector<1xf32>
    %871 = vector.shape_cast %870 : vector<1xf32> to vector<1x1xf32>
    %cst_239 = arith.constant 1.000000e+00 : f32
    %872 = vector.broadcast %cst_239 : f32 to vector<1x1xf32>
    %873 = arith.divf %872, %871 : vector<1x1xf32>
    %874 = vector.broadcast %860 : vector<1x33xf32> to vector<33x33xf32>
    %875 = arith.mulf %844, %874 : vector<33x33xf32>
    %cst_240 = arith.constant dense<0.000000e+00> : vector<33xf32>
    %876 = vector.multi_reduction <add>, %875, %cst_240 [1] : vector<33x33xf32> to vector<33xf32>
    %877 = vector.shape_cast %876 : vector<33xf32> to vector<33x1xf32>
    %878 = arith.subf %877, %855 : vector<33x1xf32>
    %879 = vector.broadcast %873 : vector<1x1xf32> to vector<1x33xf32>
    %880 = arith.mulf %864, %879 : vector<1x33xf32>
    %881 = vector.broadcast %878 : vector<33x1xf32> to vector<33x33xf32>
    %882 = vector.broadcast %880 : vector<1x33xf32> to vector<33x33xf32>
    %883 = arith.mulf %881, %882 : vector<33x33xf32>
    %884 = arith.subf %844, %883 : vector<33x33xf32>
    %885 = vector.broadcast %873 : vector<1x1xf32> to vector<1x8xf32>
    %886 = arith.mulf %868, %885 : vector<1x8xf32>
    %887 = vector.broadcast %878 : vector<33x1xf32> to vector<33x8xf32>
    %888 = vector.broadcast %886 : vector<1x8xf32> to vector<33x8xf32>
    %889 = arith.mulf %887, %888 : vector<33x8xf32>
    %890 = arith.subf %850, %889 : vector<33x8xf32>
    %c20_i32 = arith.constant 20 : i32
    %891 = vector.broadcast %c20_i32 : i32 to vector<33x1xi32>
    %892 = arith.cmpi eq, %89, %891 : vector<33x1xi32>
    %cst_241 = arith.constant 1.000000e+00 : f32
    %cst_242 = arith.constant 0.000000e+00 : f32
    %893 = vector.broadcast %cst_241 : f32 to vector<33x1xf32>
    %894 = vector.broadcast %cst_242 : f32 to vector<33x1xf32>
    %895 = arith.select %892, %893, %894 : vector<33x1xi1>, vector<33x1xf32>
    %c20_i32_243 = arith.constant 20 : i32
    %896 = vector.broadcast %c20_i32_243 : i32 to vector<1x33xi32>
    %897 = arith.cmpi eq, %90, %896 : vector<1x33xi32>
    %cst_244 = arith.constant 1.000000e+00 : f32
    %cst_245 = arith.constant 0.000000e+00 : f32
    %898 = vector.broadcast %cst_244 : f32 to vector<1x33xf32>
    %899 = vector.broadcast %cst_245 : f32 to vector<1x33xf32>
    %900 = arith.select %897, %898, %899 : vector<1x33xi1>, vector<1x33xf32>
    %901 = vector.broadcast %895 : vector<33x1xf32> to vector<33x33xf32>
    %902 = arith.mulf %884, %901 : vector<33x33xf32>
    %cst_246 = arith.constant dense<0.000000e+00> : vector<33xf32>
    %903 = vector.multi_reduction <add>, %902, %cst_246 [0] : vector<33x33xf32> to vector<33xf32>
    %904 = vector.shape_cast %903 : vector<33xf32> to vector<1x33xf32>
    %905 = vector.broadcast %895 : vector<33x1xf32> to vector<33x8xf32>
    %906 = arith.mulf %890, %905 : vector<33x8xf32>
    %cst_247 = arith.constant dense<0.000000e+00> : vector<8xf32>
    %907 = vector.multi_reduction <add>, %906, %cst_247 [0] : vector<33x8xf32> to vector<8xf32>
    %908 = vector.shape_cast %907 : vector<8xf32> to vector<1x8xf32>
    %909 = arith.mulf %904, %900 : vector<1x33xf32>
    %cst_248 = arith.constant dense<0.000000e+00> : vector<1xf32>
    %910 = vector.multi_reduction <add>, %909, %cst_248 [1] : vector<1x33xf32> to vector<1xf32>
    %911 = vector.shape_cast %910 : vector<1xf32> to vector<1x1xf32>
    %cst_249 = arith.constant 1.000000e+00 : f32
    %912 = vector.broadcast %cst_249 : f32 to vector<1x1xf32>
    %913 = arith.divf %912, %911 : vector<1x1xf32>
    %914 = vector.broadcast %900 : vector<1x33xf32> to vector<33x33xf32>
    %915 = arith.mulf %884, %914 : vector<33x33xf32>
    %cst_250 = arith.constant dense<0.000000e+00> : vector<33xf32>
    %916 = vector.multi_reduction <add>, %915, %cst_250 [1] : vector<33x33xf32> to vector<33xf32>
    %917 = vector.shape_cast %916 : vector<33xf32> to vector<33x1xf32>
    %918 = arith.subf %917, %895 : vector<33x1xf32>
    %919 = vector.broadcast %913 : vector<1x1xf32> to vector<1x33xf32>
    %920 = arith.mulf %904, %919 : vector<1x33xf32>
    %921 = vector.broadcast %918 : vector<33x1xf32> to vector<33x33xf32>
    %922 = vector.broadcast %920 : vector<1x33xf32> to vector<33x33xf32>
    %923 = arith.mulf %921, %922 : vector<33x33xf32>
    %924 = arith.subf %884, %923 : vector<33x33xf32>
    %925 = vector.broadcast %913 : vector<1x1xf32> to vector<1x8xf32>
    %926 = arith.mulf %908, %925 : vector<1x8xf32>
    %927 = vector.broadcast %918 : vector<33x1xf32> to vector<33x8xf32>
    %928 = vector.broadcast %926 : vector<1x8xf32> to vector<33x8xf32>
    %929 = arith.mulf %927, %928 : vector<33x8xf32>
    %930 = arith.subf %890, %929 : vector<33x8xf32>
    %c21_i32 = arith.constant 21 : i32
    %931 = vector.broadcast %c21_i32 : i32 to vector<33x1xi32>
    %932 = arith.cmpi eq, %89, %931 : vector<33x1xi32>
    %cst_251 = arith.constant 1.000000e+00 : f32
    %cst_252 = arith.constant 0.000000e+00 : f32
    %933 = vector.broadcast %cst_251 : f32 to vector<33x1xf32>
    %934 = vector.broadcast %cst_252 : f32 to vector<33x1xf32>
    %935 = arith.select %932, %933, %934 : vector<33x1xi1>, vector<33x1xf32>
    %c21_i32_253 = arith.constant 21 : i32
    %936 = vector.broadcast %c21_i32_253 : i32 to vector<1x33xi32>
    %937 = arith.cmpi eq, %90, %936 : vector<1x33xi32>
    %cst_254 = arith.constant 1.000000e+00 : f32
    %cst_255 = arith.constant 0.000000e+00 : f32
    %938 = vector.broadcast %cst_254 : f32 to vector<1x33xf32>
    %939 = vector.broadcast %cst_255 : f32 to vector<1x33xf32>
    %940 = arith.select %937, %938, %939 : vector<1x33xi1>, vector<1x33xf32>
    %941 = vector.broadcast %935 : vector<33x1xf32> to vector<33x33xf32>
    %942 = arith.mulf %924, %941 : vector<33x33xf32>
    %cst_256 = arith.constant dense<0.000000e+00> : vector<33xf32>
    %943 = vector.multi_reduction <add>, %942, %cst_256 [0] : vector<33x33xf32> to vector<33xf32>
    %944 = vector.shape_cast %943 : vector<33xf32> to vector<1x33xf32>
    %945 = vector.broadcast %935 : vector<33x1xf32> to vector<33x8xf32>
    %946 = arith.mulf %930, %945 : vector<33x8xf32>
    %cst_257 = arith.constant dense<0.000000e+00> : vector<8xf32>
    %947 = vector.multi_reduction <add>, %946, %cst_257 [0] : vector<33x8xf32> to vector<8xf32>
    %948 = vector.shape_cast %947 : vector<8xf32> to vector<1x8xf32>
    %949 = arith.mulf %944, %940 : vector<1x33xf32>
    %cst_258 = arith.constant dense<0.000000e+00> : vector<1xf32>
    %950 = vector.multi_reduction <add>, %949, %cst_258 [1] : vector<1x33xf32> to vector<1xf32>
    %951 = vector.shape_cast %950 : vector<1xf32> to vector<1x1xf32>
    %cst_259 = arith.constant 1.000000e+00 : f32
    %952 = vector.broadcast %cst_259 : f32 to vector<1x1xf32>
    %953 = arith.divf %952, %951 : vector<1x1xf32>
    %954 = vector.broadcast %940 : vector<1x33xf32> to vector<33x33xf32>
    %955 = arith.mulf %924, %954 : vector<33x33xf32>
    %cst_260 = arith.constant dense<0.000000e+00> : vector<33xf32>
    %956 = vector.multi_reduction <add>, %955, %cst_260 [1] : vector<33x33xf32> to vector<33xf32>
    %957 = vector.shape_cast %956 : vector<33xf32> to vector<33x1xf32>
    %958 = arith.subf %957, %935 : vector<33x1xf32>
    %959 = vector.broadcast %953 : vector<1x1xf32> to vector<1x33xf32>
    %960 = arith.mulf %944, %959 : vector<1x33xf32>
    %961 = vector.broadcast %958 : vector<33x1xf32> to vector<33x33xf32>
    %962 = vector.broadcast %960 : vector<1x33xf32> to vector<33x33xf32>
    %963 = arith.mulf %961, %962 : vector<33x33xf32>
    %964 = arith.subf %924, %963 : vector<33x33xf32>
    %965 = vector.broadcast %953 : vector<1x1xf32> to vector<1x8xf32>
    %966 = arith.mulf %948, %965 : vector<1x8xf32>
    %967 = vector.broadcast %958 : vector<33x1xf32> to vector<33x8xf32>
    %968 = vector.broadcast %966 : vector<1x8xf32> to vector<33x8xf32>
    %969 = arith.mulf %967, %968 : vector<33x8xf32>
    %970 = arith.subf %930, %969 : vector<33x8xf32>
    %c22_i32 = arith.constant 22 : i32
    %971 = vector.broadcast %c22_i32 : i32 to vector<33x1xi32>
    %972 = arith.cmpi eq, %89, %971 : vector<33x1xi32>
    %cst_261 = arith.constant 1.000000e+00 : f32
    %cst_262 = arith.constant 0.000000e+00 : f32
    %973 = vector.broadcast %cst_261 : f32 to vector<33x1xf32>
    %974 = vector.broadcast %cst_262 : f32 to vector<33x1xf32>
    %975 = arith.select %972, %973, %974 : vector<33x1xi1>, vector<33x1xf32>
    %c22_i32_263 = arith.constant 22 : i32
    %976 = vector.broadcast %c22_i32_263 : i32 to vector<1x33xi32>
    %977 = arith.cmpi eq, %90, %976 : vector<1x33xi32>
    %cst_264 = arith.constant 1.000000e+00 : f32
    %cst_265 = arith.constant 0.000000e+00 : f32
    %978 = vector.broadcast %cst_264 : f32 to vector<1x33xf32>
    %979 = vector.broadcast %cst_265 : f32 to vector<1x33xf32>
    %980 = arith.select %977, %978, %979 : vector<1x33xi1>, vector<1x33xf32>
    %981 = vector.broadcast %975 : vector<33x1xf32> to vector<33x33xf32>
    %982 = arith.mulf %964, %981 : vector<33x33xf32>
    %cst_266 = arith.constant dense<0.000000e+00> : vector<33xf32>
    %983 = vector.multi_reduction <add>, %982, %cst_266 [0] : vector<33x33xf32> to vector<33xf32>
    %984 = vector.shape_cast %983 : vector<33xf32> to vector<1x33xf32>
    %985 = vector.broadcast %975 : vector<33x1xf32> to vector<33x8xf32>
    %986 = arith.mulf %970, %985 : vector<33x8xf32>
    %cst_267 = arith.constant dense<0.000000e+00> : vector<8xf32>
    %987 = vector.multi_reduction <add>, %986, %cst_267 [0] : vector<33x8xf32> to vector<8xf32>
    %988 = vector.shape_cast %987 : vector<8xf32> to vector<1x8xf32>
    %989 = arith.mulf %984, %980 : vector<1x33xf32>
    %cst_268 = arith.constant dense<0.000000e+00> : vector<1xf32>
    %990 = vector.multi_reduction <add>, %989, %cst_268 [1] : vector<1x33xf32> to vector<1xf32>
    %991 = vector.shape_cast %990 : vector<1xf32> to vector<1x1xf32>
    %cst_269 = arith.constant 1.000000e+00 : f32
    %992 = vector.broadcast %cst_269 : f32 to vector<1x1xf32>
    %993 = arith.divf %992, %991 : vector<1x1xf32>
    %994 = vector.broadcast %980 : vector<1x33xf32> to vector<33x33xf32>
    %995 = arith.mulf %964, %994 : vector<33x33xf32>
    %cst_270 = arith.constant dense<0.000000e+00> : vector<33xf32>
    %996 = vector.multi_reduction <add>, %995, %cst_270 [1] : vector<33x33xf32> to vector<33xf32>
    %997 = vector.shape_cast %996 : vector<33xf32> to vector<33x1xf32>
    %998 = arith.subf %997, %975 : vector<33x1xf32>
    %999 = vector.broadcast %993 : vector<1x1xf32> to vector<1x33xf32>
    %1000 = arith.mulf %984, %999 : vector<1x33xf32>
    %1001 = vector.broadcast %998 : vector<33x1xf32> to vector<33x33xf32>
    %1002 = vector.broadcast %1000 : vector<1x33xf32> to vector<33x33xf32>
    %1003 = arith.mulf %1001, %1002 : vector<33x33xf32>
    %1004 = arith.subf %964, %1003 : vector<33x33xf32>
    %1005 = vector.broadcast %993 : vector<1x1xf32> to vector<1x8xf32>
    %1006 = arith.mulf %988, %1005 : vector<1x8xf32>
    %1007 = vector.broadcast %998 : vector<33x1xf32> to vector<33x8xf32>
    %1008 = vector.broadcast %1006 : vector<1x8xf32> to vector<33x8xf32>
    %1009 = arith.mulf %1007, %1008 : vector<33x8xf32>
    %1010 = arith.subf %970, %1009 : vector<33x8xf32>
    %c23_i32 = arith.constant 23 : i32
    %1011 = vector.broadcast %c23_i32 : i32 to vector<33x1xi32>
    %1012 = arith.cmpi eq, %89, %1011 : vector<33x1xi32>
    %cst_271 = arith.constant 1.000000e+00 : f32
    %cst_272 = arith.constant 0.000000e+00 : f32
    %1013 = vector.broadcast %cst_271 : f32 to vector<33x1xf32>
    %1014 = vector.broadcast %cst_272 : f32 to vector<33x1xf32>
    %1015 = arith.select %1012, %1013, %1014 : vector<33x1xi1>, vector<33x1xf32>
    %c23_i32_273 = arith.constant 23 : i32
    %1016 = vector.broadcast %c23_i32_273 : i32 to vector<1x33xi32>
    %1017 = arith.cmpi eq, %90, %1016 : vector<1x33xi32>
    %cst_274 = arith.constant 1.000000e+00 : f32
    %cst_275 = arith.constant 0.000000e+00 : f32
    %1018 = vector.broadcast %cst_274 : f32 to vector<1x33xf32>
    %1019 = vector.broadcast %cst_275 : f32 to vector<1x33xf32>
    %1020 = arith.select %1017, %1018, %1019 : vector<1x33xi1>, vector<1x33xf32>
    %1021 = vector.broadcast %1015 : vector<33x1xf32> to vector<33x33xf32>
    %1022 = arith.mulf %1004, %1021 : vector<33x33xf32>
    %cst_276 = arith.constant dense<0.000000e+00> : vector<33xf32>
    %1023 = vector.multi_reduction <add>, %1022, %cst_276 [0] : vector<33x33xf32> to vector<33xf32>
    %1024 = vector.shape_cast %1023 : vector<33xf32> to vector<1x33xf32>
    %1025 = vector.broadcast %1015 : vector<33x1xf32> to vector<33x8xf32>
    %1026 = arith.mulf %1010, %1025 : vector<33x8xf32>
    %cst_277 = arith.constant dense<0.000000e+00> : vector<8xf32>
    %1027 = vector.multi_reduction <add>, %1026, %cst_277 [0] : vector<33x8xf32> to vector<8xf32>
    %1028 = vector.shape_cast %1027 : vector<8xf32> to vector<1x8xf32>
    %1029 = arith.mulf %1024, %1020 : vector<1x33xf32>
    %cst_278 = arith.constant dense<0.000000e+00> : vector<1xf32>
    %1030 = vector.multi_reduction <add>, %1029, %cst_278 [1] : vector<1x33xf32> to vector<1xf32>
    %1031 = vector.shape_cast %1030 : vector<1xf32> to vector<1x1xf32>
    %cst_279 = arith.constant 1.000000e+00 : f32
    %1032 = vector.broadcast %cst_279 : f32 to vector<1x1xf32>
    %1033 = arith.divf %1032, %1031 : vector<1x1xf32>
    %1034 = vector.broadcast %1020 : vector<1x33xf32> to vector<33x33xf32>
    %1035 = arith.mulf %1004, %1034 : vector<33x33xf32>
    %cst_280 = arith.constant dense<0.000000e+00> : vector<33xf32>
    %1036 = vector.multi_reduction <add>, %1035, %cst_280 [1] : vector<33x33xf32> to vector<33xf32>
    %1037 = vector.shape_cast %1036 : vector<33xf32> to vector<33x1xf32>
    %1038 = arith.subf %1037, %1015 : vector<33x1xf32>
    %1039 = vector.broadcast %1033 : vector<1x1xf32> to vector<1x33xf32>
    %1040 = arith.mulf %1024, %1039 : vector<1x33xf32>
    %1041 = vector.broadcast %1038 : vector<33x1xf32> to vector<33x33xf32>
    %1042 = vector.broadcast %1040 : vector<1x33xf32> to vector<33x33xf32>
    %1043 = arith.mulf %1041, %1042 : vector<33x33xf32>
    %1044 = arith.subf %1004, %1043 : vector<33x33xf32>
    %1045 = vector.broadcast %1033 : vector<1x1xf32> to vector<1x8xf32>
    %1046 = arith.mulf %1028, %1045 : vector<1x8xf32>
    %1047 = vector.broadcast %1038 : vector<33x1xf32> to vector<33x8xf32>
    %1048 = vector.broadcast %1046 : vector<1x8xf32> to vector<33x8xf32>
    %1049 = arith.mulf %1047, %1048 : vector<33x8xf32>
    %1050 = arith.subf %1010, %1049 : vector<33x8xf32>
    %c24_i32 = arith.constant 24 : i32
    %1051 = vector.broadcast %c24_i32 : i32 to vector<33x1xi32>
    %1052 = arith.cmpi eq, %89, %1051 : vector<33x1xi32>
    %cst_281 = arith.constant 1.000000e+00 : f32
    %cst_282 = arith.constant 0.000000e+00 : f32
    %1053 = vector.broadcast %cst_281 : f32 to vector<33x1xf32>
    %1054 = vector.broadcast %cst_282 : f32 to vector<33x1xf32>
    %1055 = arith.select %1052, %1053, %1054 : vector<33x1xi1>, vector<33x1xf32>
    %c24_i32_283 = arith.constant 24 : i32
    %1056 = vector.broadcast %c24_i32_283 : i32 to vector<1x33xi32>
    %1057 = arith.cmpi eq, %90, %1056 : vector<1x33xi32>
    %cst_284 = arith.constant 1.000000e+00 : f32
    %cst_285 = arith.constant 0.000000e+00 : f32
    %1058 = vector.broadcast %cst_284 : f32 to vector<1x33xf32>
    %1059 = vector.broadcast %cst_285 : f32 to vector<1x33xf32>
    %1060 = arith.select %1057, %1058, %1059 : vector<1x33xi1>, vector<1x33xf32>
    %1061 = vector.broadcast %1055 : vector<33x1xf32> to vector<33x33xf32>
    %1062 = arith.mulf %1044, %1061 : vector<33x33xf32>
    %cst_286 = arith.constant dense<0.000000e+00> : vector<33xf32>
    %1063 = vector.multi_reduction <add>, %1062, %cst_286 [0] : vector<33x33xf32> to vector<33xf32>
    %1064 = vector.shape_cast %1063 : vector<33xf32> to vector<1x33xf32>
    %1065 = vector.broadcast %1055 : vector<33x1xf32> to vector<33x8xf32>
    %1066 = arith.mulf %1050, %1065 : vector<33x8xf32>
    %cst_287 = arith.constant dense<0.000000e+00> : vector<8xf32>
    %1067 = vector.multi_reduction <add>, %1066, %cst_287 [0] : vector<33x8xf32> to vector<8xf32>
    %1068 = vector.shape_cast %1067 : vector<8xf32> to vector<1x8xf32>
    %1069 = arith.mulf %1064, %1060 : vector<1x33xf32>
    %cst_288 = arith.constant dense<0.000000e+00> : vector<1xf32>
    %1070 = vector.multi_reduction <add>, %1069, %cst_288 [1] : vector<1x33xf32> to vector<1xf32>
    %1071 = vector.shape_cast %1070 : vector<1xf32> to vector<1x1xf32>
    %cst_289 = arith.constant 1.000000e+00 : f32
    %1072 = vector.broadcast %cst_289 : f32 to vector<1x1xf32>
    %1073 = arith.divf %1072, %1071 : vector<1x1xf32>
    %1074 = vector.broadcast %1060 : vector<1x33xf32> to vector<33x33xf32>
    %1075 = arith.mulf %1044, %1074 : vector<33x33xf32>
    %cst_290 = arith.constant dense<0.000000e+00> : vector<33xf32>
    %1076 = vector.multi_reduction <add>, %1075, %cst_290 [1] : vector<33x33xf32> to vector<33xf32>
    %1077 = vector.shape_cast %1076 : vector<33xf32> to vector<33x1xf32>
    %1078 = arith.subf %1077, %1055 : vector<33x1xf32>
    %1079 = vector.broadcast %1073 : vector<1x1xf32> to vector<1x33xf32>
    %1080 = arith.mulf %1064, %1079 : vector<1x33xf32>
    %1081 = vector.broadcast %1078 : vector<33x1xf32> to vector<33x33xf32>
    %1082 = vector.broadcast %1080 : vector<1x33xf32> to vector<33x33xf32>
    %1083 = arith.mulf %1081, %1082 : vector<33x33xf32>
    %1084 = arith.subf %1044, %1083 : vector<33x33xf32>
    %1085 = vector.broadcast %1073 : vector<1x1xf32> to vector<1x8xf32>
    %1086 = arith.mulf %1068, %1085 : vector<1x8xf32>
    %1087 = vector.broadcast %1078 : vector<33x1xf32> to vector<33x8xf32>
    %1088 = vector.broadcast %1086 : vector<1x8xf32> to vector<33x8xf32>
    %1089 = arith.mulf %1087, %1088 : vector<33x8xf32>
    %1090 = arith.subf %1050, %1089 : vector<33x8xf32>
    %c25_i32 = arith.constant 25 : i32
    %1091 = vector.broadcast %c25_i32 : i32 to vector<33x1xi32>
    %1092 = arith.cmpi eq, %89, %1091 : vector<33x1xi32>
    %cst_291 = arith.constant 1.000000e+00 : f32
    %cst_292 = arith.constant 0.000000e+00 : f32
    %1093 = vector.broadcast %cst_291 : f32 to vector<33x1xf32>
    %1094 = vector.broadcast %cst_292 : f32 to vector<33x1xf32>
    %1095 = arith.select %1092, %1093, %1094 : vector<33x1xi1>, vector<33x1xf32>
    %c25_i32_293 = arith.constant 25 : i32
    %1096 = vector.broadcast %c25_i32_293 : i32 to vector<1x33xi32>
    %1097 = arith.cmpi eq, %90, %1096 : vector<1x33xi32>
    %cst_294 = arith.constant 1.000000e+00 : f32
    %cst_295 = arith.constant 0.000000e+00 : f32
    %1098 = vector.broadcast %cst_294 : f32 to vector<1x33xf32>
    %1099 = vector.broadcast %cst_295 : f32 to vector<1x33xf32>
    %1100 = arith.select %1097, %1098, %1099 : vector<1x33xi1>, vector<1x33xf32>
    %1101 = vector.broadcast %1095 : vector<33x1xf32> to vector<33x33xf32>
    %1102 = arith.mulf %1084, %1101 : vector<33x33xf32>
    %cst_296 = arith.constant dense<0.000000e+00> : vector<33xf32>
    %1103 = vector.multi_reduction <add>, %1102, %cst_296 [0] : vector<33x33xf32> to vector<33xf32>
    %1104 = vector.shape_cast %1103 : vector<33xf32> to vector<1x33xf32>
    %1105 = vector.broadcast %1095 : vector<33x1xf32> to vector<33x8xf32>
    %1106 = arith.mulf %1090, %1105 : vector<33x8xf32>
    %cst_297 = arith.constant dense<0.000000e+00> : vector<8xf32>
    %1107 = vector.multi_reduction <add>, %1106, %cst_297 [0] : vector<33x8xf32> to vector<8xf32>
    %1108 = vector.shape_cast %1107 : vector<8xf32> to vector<1x8xf32>
    %1109 = arith.mulf %1104, %1100 : vector<1x33xf32>
    %cst_298 = arith.constant dense<0.000000e+00> : vector<1xf32>
    %1110 = vector.multi_reduction <add>, %1109, %cst_298 [1] : vector<1x33xf32> to vector<1xf32>
    %1111 = vector.shape_cast %1110 : vector<1xf32> to vector<1x1xf32>
    %cst_299 = arith.constant 1.000000e+00 : f32
    %1112 = vector.broadcast %cst_299 : f32 to vector<1x1xf32>
    %1113 = arith.divf %1112, %1111 : vector<1x1xf32>
    %1114 = vector.broadcast %1100 : vector<1x33xf32> to vector<33x33xf32>
    %1115 = arith.mulf %1084, %1114 : vector<33x33xf32>
    %cst_300 = arith.constant dense<0.000000e+00> : vector<33xf32>
    %1116 = vector.multi_reduction <add>, %1115, %cst_300 [1] : vector<33x33xf32> to vector<33xf32>
    %1117 = vector.shape_cast %1116 : vector<33xf32> to vector<33x1xf32>
    %1118 = arith.subf %1117, %1095 : vector<33x1xf32>
    %1119 = vector.broadcast %1113 : vector<1x1xf32> to vector<1x33xf32>
    %1120 = arith.mulf %1104, %1119 : vector<1x33xf32>
    %1121 = vector.broadcast %1118 : vector<33x1xf32> to vector<33x33xf32>
    %1122 = vector.broadcast %1120 : vector<1x33xf32> to vector<33x33xf32>
    %1123 = arith.mulf %1121, %1122 : vector<33x33xf32>
    %1124 = arith.subf %1084, %1123 : vector<33x33xf32>
    %1125 = vector.broadcast %1113 : vector<1x1xf32> to vector<1x8xf32>
    %1126 = arith.mulf %1108, %1125 : vector<1x8xf32>
    %1127 = vector.broadcast %1118 : vector<33x1xf32> to vector<33x8xf32>
    %1128 = vector.broadcast %1126 : vector<1x8xf32> to vector<33x8xf32>
    %1129 = arith.mulf %1127, %1128 : vector<33x8xf32>
    %1130 = arith.subf %1090, %1129 : vector<33x8xf32>
    %c26_i32 = arith.constant 26 : i32
    %1131 = vector.broadcast %c26_i32 : i32 to vector<33x1xi32>
    %1132 = arith.cmpi eq, %89, %1131 : vector<33x1xi32>
    %cst_301 = arith.constant 1.000000e+00 : f32
    %cst_302 = arith.constant 0.000000e+00 : f32
    %1133 = vector.broadcast %cst_301 : f32 to vector<33x1xf32>
    %1134 = vector.broadcast %cst_302 : f32 to vector<33x1xf32>
    %1135 = arith.select %1132, %1133, %1134 : vector<33x1xi1>, vector<33x1xf32>
    %c26_i32_303 = arith.constant 26 : i32
    %1136 = vector.broadcast %c26_i32_303 : i32 to vector<1x33xi32>
    %1137 = arith.cmpi eq, %90, %1136 : vector<1x33xi32>
    %cst_304 = arith.constant 1.000000e+00 : f32
    %cst_305 = arith.constant 0.000000e+00 : f32
    %1138 = vector.broadcast %cst_304 : f32 to vector<1x33xf32>
    %1139 = vector.broadcast %cst_305 : f32 to vector<1x33xf32>
    %1140 = arith.select %1137, %1138, %1139 : vector<1x33xi1>, vector<1x33xf32>
    %1141 = vector.broadcast %1135 : vector<33x1xf32> to vector<33x33xf32>
    %1142 = arith.mulf %1124, %1141 : vector<33x33xf32>
    %cst_306 = arith.constant dense<0.000000e+00> : vector<33xf32>
    %1143 = vector.multi_reduction <add>, %1142, %cst_306 [0] : vector<33x33xf32> to vector<33xf32>
    %1144 = vector.shape_cast %1143 : vector<33xf32> to vector<1x33xf32>
    %1145 = vector.broadcast %1135 : vector<33x1xf32> to vector<33x8xf32>
    %1146 = arith.mulf %1130, %1145 : vector<33x8xf32>
    %cst_307 = arith.constant dense<0.000000e+00> : vector<8xf32>
    %1147 = vector.multi_reduction <add>, %1146, %cst_307 [0] : vector<33x8xf32> to vector<8xf32>
    %1148 = vector.shape_cast %1147 : vector<8xf32> to vector<1x8xf32>
    %1149 = arith.mulf %1144, %1140 : vector<1x33xf32>
    %cst_308 = arith.constant dense<0.000000e+00> : vector<1xf32>
    %1150 = vector.multi_reduction <add>, %1149, %cst_308 [1] : vector<1x33xf32> to vector<1xf32>
    %1151 = vector.shape_cast %1150 : vector<1xf32> to vector<1x1xf32>
    %cst_309 = arith.constant 1.000000e+00 : f32
    %1152 = vector.broadcast %cst_309 : f32 to vector<1x1xf32>
    %1153 = arith.divf %1152, %1151 : vector<1x1xf32>
    %1154 = vector.broadcast %1140 : vector<1x33xf32> to vector<33x33xf32>
    %1155 = arith.mulf %1124, %1154 : vector<33x33xf32>
    %cst_310 = arith.constant dense<0.000000e+00> : vector<33xf32>
    %1156 = vector.multi_reduction <add>, %1155, %cst_310 [1] : vector<33x33xf32> to vector<33xf32>
    %1157 = vector.shape_cast %1156 : vector<33xf32> to vector<33x1xf32>
    %1158 = arith.subf %1157, %1135 : vector<33x1xf32>
    %1159 = vector.broadcast %1153 : vector<1x1xf32> to vector<1x33xf32>
    %1160 = arith.mulf %1144, %1159 : vector<1x33xf32>
    %1161 = vector.broadcast %1158 : vector<33x1xf32> to vector<33x33xf32>
    %1162 = vector.broadcast %1160 : vector<1x33xf32> to vector<33x33xf32>
    %1163 = arith.mulf %1161, %1162 : vector<33x33xf32>
    %1164 = arith.subf %1124, %1163 : vector<33x33xf32>
    %1165 = vector.broadcast %1153 : vector<1x1xf32> to vector<1x8xf32>
    %1166 = arith.mulf %1148, %1165 : vector<1x8xf32>
    %1167 = vector.broadcast %1158 : vector<33x1xf32> to vector<33x8xf32>
    %1168 = vector.broadcast %1166 : vector<1x8xf32> to vector<33x8xf32>
    %1169 = arith.mulf %1167, %1168 : vector<33x8xf32>
    %1170 = arith.subf %1130, %1169 : vector<33x8xf32>
    %c27_i32 = arith.constant 27 : i32
    %1171 = vector.broadcast %c27_i32 : i32 to vector<33x1xi32>
    %1172 = arith.cmpi eq, %89, %1171 : vector<33x1xi32>
    %cst_311 = arith.constant 1.000000e+00 : f32
    %cst_312 = arith.constant 0.000000e+00 : f32
    %1173 = vector.broadcast %cst_311 : f32 to vector<33x1xf32>
    %1174 = vector.broadcast %cst_312 : f32 to vector<33x1xf32>
    %1175 = arith.select %1172, %1173, %1174 : vector<33x1xi1>, vector<33x1xf32>
    %c27_i32_313 = arith.constant 27 : i32
    %1176 = vector.broadcast %c27_i32_313 : i32 to vector<1x33xi32>
    %1177 = arith.cmpi eq, %90, %1176 : vector<1x33xi32>
    %cst_314 = arith.constant 1.000000e+00 : f32
    %cst_315 = arith.constant 0.000000e+00 : f32
    %1178 = vector.broadcast %cst_314 : f32 to vector<1x33xf32>
    %1179 = vector.broadcast %cst_315 : f32 to vector<1x33xf32>
    %1180 = arith.select %1177, %1178, %1179 : vector<1x33xi1>, vector<1x33xf32>
    %1181 = vector.broadcast %1175 : vector<33x1xf32> to vector<33x33xf32>
    %1182 = arith.mulf %1164, %1181 : vector<33x33xf32>
    %cst_316 = arith.constant dense<0.000000e+00> : vector<33xf32>
    %1183 = vector.multi_reduction <add>, %1182, %cst_316 [0] : vector<33x33xf32> to vector<33xf32>
    %1184 = vector.shape_cast %1183 : vector<33xf32> to vector<1x33xf32>
    %1185 = vector.broadcast %1175 : vector<33x1xf32> to vector<33x8xf32>
    %1186 = arith.mulf %1170, %1185 : vector<33x8xf32>
    %cst_317 = arith.constant dense<0.000000e+00> : vector<8xf32>
    %1187 = vector.multi_reduction <add>, %1186, %cst_317 [0] : vector<33x8xf32> to vector<8xf32>
    %1188 = vector.shape_cast %1187 : vector<8xf32> to vector<1x8xf32>
    %1189 = arith.mulf %1184, %1180 : vector<1x33xf32>
    %cst_318 = arith.constant dense<0.000000e+00> : vector<1xf32>
    %1190 = vector.multi_reduction <add>, %1189, %cst_318 [1] : vector<1x33xf32> to vector<1xf32>
    %1191 = vector.shape_cast %1190 : vector<1xf32> to vector<1x1xf32>
    %cst_319 = arith.constant 1.000000e+00 : f32
    %1192 = vector.broadcast %cst_319 : f32 to vector<1x1xf32>
    %1193 = arith.divf %1192, %1191 : vector<1x1xf32>
    %1194 = vector.broadcast %1180 : vector<1x33xf32> to vector<33x33xf32>
    %1195 = arith.mulf %1164, %1194 : vector<33x33xf32>
    %cst_320 = arith.constant dense<0.000000e+00> : vector<33xf32>
    %1196 = vector.multi_reduction <add>, %1195, %cst_320 [1] : vector<33x33xf32> to vector<33xf32>
    %1197 = vector.shape_cast %1196 : vector<33xf32> to vector<33x1xf32>
    %1198 = arith.subf %1197, %1175 : vector<33x1xf32>
    %1199 = vector.broadcast %1193 : vector<1x1xf32> to vector<1x33xf32>
    %1200 = arith.mulf %1184, %1199 : vector<1x33xf32>
    %1201 = vector.broadcast %1198 : vector<33x1xf32> to vector<33x33xf32>
    %1202 = vector.broadcast %1200 : vector<1x33xf32> to vector<33x33xf32>
    %1203 = arith.mulf %1201, %1202 : vector<33x33xf32>
    %1204 = arith.subf %1164, %1203 : vector<33x33xf32>
    %1205 = vector.broadcast %1193 : vector<1x1xf32> to vector<1x8xf32>
    %1206 = arith.mulf %1188, %1205 : vector<1x8xf32>
    %1207 = vector.broadcast %1198 : vector<33x1xf32> to vector<33x8xf32>
    %1208 = vector.broadcast %1206 : vector<1x8xf32> to vector<33x8xf32>
    %1209 = arith.mulf %1207, %1208 : vector<33x8xf32>
    %1210 = arith.subf %1170, %1209 : vector<33x8xf32>
    %c28_i32 = arith.constant 28 : i32
    %1211 = vector.broadcast %c28_i32 : i32 to vector<33x1xi32>
    %1212 = arith.cmpi eq, %89, %1211 : vector<33x1xi32>
    %cst_321 = arith.constant 1.000000e+00 : f32
    %cst_322 = arith.constant 0.000000e+00 : f32
    %1213 = vector.broadcast %cst_321 : f32 to vector<33x1xf32>
    %1214 = vector.broadcast %cst_322 : f32 to vector<33x1xf32>
    %1215 = arith.select %1212, %1213, %1214 : vector<33x1xi1>, vector<33x1xf32>
    %c28_i32_323 = arith.constant 28 : i32
    %1216 = vector.broadcast %c28_i32_323 : i32 to vector<1x33xi32>
    %1217 = arith.cmpi eq, %90, %1216 : vector<1x33xi32>
    %cst_324 = arith.constant 1.000000e+00 : f32
    %cst_325 = arith.constant 0.000000e+00 : f32
    %1218 = vector.broadcast %cst_324 : f32 to vector<1x33xf32>
    %1219 = vector.broadcast %cst_325 : f32 to vector<1x33xf32>
    %1220 = arith.select %1217, %1218, %1219 : vector<1x33xi1>, vector<1x33xf32>
    %1221 = vector.broadcast %1215 : vector<33x1xf32> to vector<33x33xf32>
    %1222 = arith.mulf %1204, %1221 : vector<33x33xf32>
    %cst_326 = arith.constant dense<0.000000e+00> : vector<33xf32>
    %1223 = vector.multi_reduction <add>, %1222, %cst_326 [0] : vector<33x33xf32> to vector<33xf32>
    %1224 = vector.shape_cast %1223 : vector<33xf32> to vector<1x33xf32>
    %1225 = vector.broadcast %1215 : vector<33x1xf32> to vector<33x8xf32>
    %1226 = arith.mulf %1210, %1225 : vector<33x8xf32>
    %cst_327 = arith.constant dense<0.000000e+00> : vector<8xf32>
    %1227 = vector.multi_reduction <add>, %1226, %cst_327 [0] : vector<33x8xf32> to vector<8xf32>
    %1228 = vector.shape_cast %1227 : vector<8xf32> to vector<1x8xf32>
    %1229 = arith.mulf %1224, %1220 : vector<1x33xf32>
    %cst_328 = arith.constant dense<0.000000e+00> : vector<1xf32>
    %1230 = vector.multi_reduction <add>, %1229, %cst_328 [1] : vector<1x33xf32> to vector<1xf32>
    %1231 = vector.shape_cast %1230 : vector<1xf32> to vector<1x1xf32>
    %cst_329 = arith.constant 1.000000e+00 : f32
    %1232 = vector.broadcast %cst_329 : f32 to vector<1x1xf32>
    %1233 = arith.divf %1232, %1231 : vector<1x1xf32>
    %1234 = vector.broadcast %1220 : vector<1x33xf32> to vector<33x33xf32>
    %1235 = arith.mulf %1204, %1234 : vector<33x33xf32>
    %cst_330 = arith.constant dense<0.000000e+00> : vector<33xf32>
    %1236 = vector.multi_reduction <add>, %1235, %cst_330 [1] : vector<33x33xf32> to vector<33xf32>
    %1237 = vector.shape_cast %1236 : vector<33xf32> to vector<33x1xf32>
    %1238 = arith.subf %1237, %1215 : vector<33x1xf32>
    %1239 = vector.broadcast %1233 : vector<1x1xf32> to vector<1x33xf32>
    %1240 = arith.mulf %1224, %1239 : vector<1x33xf32>
    %1241 = vector.broadcast %1238 : vector<33x1xf32> to vector<33x33xf32>
    %1242 = vector.broadcast %1240 : vector<1x33xf32> to vector<33x33xf32>
    %1243 = arith.mulf %1241, %1242 : vector<33x33xf32>
    %1244 = arith.subf %1204, %1243 : vector<33x33xf32>
    %1245 = vector.broadcast %1233 : vector<1x1xf32> to vector<1x8xf32>
    %1246 = arith.mulf %1228, %1245 : vector<1x8xf32>
    %1247 = vector.broadcast %1238 : vector<33x1xf32> to vector<33x8xf32>
    %1248 = vector.broadcast %1246 : vector<1x8xf32> to vector<33x8xf32>
    %1249 = arith.mulf %1247, %1248 : vector<33x8xf32>
    %1250 = arith.subf %1210, %1249 : vector<33x8xf32>
    %c29_i32 = arith.constant 29 : i32
    %1251 = vector.broadcast %c29_i32 : i32 to vector<33x1xi32>
    %1252 = arith.cmpi eq, %89, %1251 : vector<33x1xi32>
    %cst_331 = arith.constant 1.000000e+00 : f32
    %cst_332 = arith.constant 0.000000e+00 : f32
    %1253 = vector.broadcast %cst_331 : f32 to vector<33x1xf32>
    %1254 = vector.broadcast %cst_332 : f32 to vector<33x1xf32>
    %1255 = arith.select %1252, %1253, %1254 : vector<33x1xi1>, vector<33x1xf32>
    %c29_i32_333 = arith.constant 29 : i32
    %1256 = vector.broadcast %c29_i32_333 : i32 to vector<1x33xi32>
    %1257 = arith.cmpi eq, %90, %1256 : vector<1x33xi32>
    %cst_334 = arith.constant 1.000000e+00 : f32
    %cst_335 = arith.constant 0.000000e+00 : f32
    %1258 = vector.broadcast %cst_334 : f32 to vector<1x33xf32>
    %1259 = vector.broadcast %cst_335 : f32 to vector<1x33xf32>
    %1260 = arith.select %1257, %1258, %1259 : vector<1x33xi1>, vector<1x33xf32>
    %1261 = vector.broadcast %1255 : vector<33x1xf32> to vector<33x33xf32>
    %1262 = arith.mulf %1244, %1261 : vector<33x33xf32>
    %cst_336 = arith.constant dense<0.000000e+00> : vector<33xf32>
    %1263 = vector.multi_reduction <add>, %1262, %cst_336 [0] : vector<33x33xf32> to vector<33xf32>
    %1264 = vector.shape_cast %1263 : vector<33xf32> to vector<1x33xf32>
    %1265 = vector.broadcast %1255 : vector<33x1xf32> to vector<33x8xf32>
    %1266 = arith.mulf %1250, %1265 : vector<33x8xf32>
    %cst_337 = arith.constant dense<0.000000e+00> : vector<8xf32>
    %1267 = vector.multi_reduction <add>, %1266, %cst_337 [0] : vector<33x8xf32> to vector<8xf32>
    %1268 = vector.shape_cast %1267 : vector<8xf32> to vector<1x8xf32>
    %1269 = arith.mulf %1264, %1260 : vector<1x33xf32>
    %cst_338 = arith.constant dense<0.000000e+00> : vector<1xf32>
    %1270 = vector.multi_reduction <add>, %1269, %cst_338 [1] : vector<1x33xf32> to vector<1xf32>
    %1271 = vector.shape_cast %1270 : vector<1xf32> to vector<1x1xf32>
    %cst_339 = arith.constant 1.000000e+00 : f32
    %1272 = vector.broadcast %cst_339 : f32 to vector<1x1xf32>
    %1273 = arith.divf %1272, %1271 : vector<1x1xf32>
    %1274 = vector.broadcast %1260 : vector<1x33xf32> to vector<33x33xf32>
    %1275 = arith.mulf %1244, %1274 : vector<33x33xf32>
    %cst_340 = arith.constant dense<0.000000e+00> : vector<33xf32>
    %1276 = vector.multi_reduction <add>, %1275, %cst_340 [1] : vector<33x33xf32> to vector<33xf32>
    %1277 = vector.shape_cast %1276 : vector<33xf32> to vector<33x1xf32>
    %1278 = arith.subf %1277, %1255 : vector<33x1xf32>
    %1279 = vector.broadcast %1273 : vector<1x1xf32> to vector<1x33xf32>
    %1280 = arith.mulf %1264, %1279 : vector<1x33xf32>
    %1281 = vector.broadcast %1278 : vector<33x1xf32> to vector<33x33xf32>
    %1282 = vector.broadcast %1280 : vector<1x33xf32> to vector<33x33xf32>
    %1283 = arith.mulf %1281, %1282 : vector<33x33xf32>
    %1284 = arith.subf %1244, %1283 : vector<33x33xf32>
    %1285 = vector.broadcast %1273 : vector<1x1xf32> to vector<1x8xf32>
    %1286 = arith.mulf %1268, %1285 : vector<1x8xf32>
    %1287 = vector.broadcast %1278 : vector<33x1xf32> to vector<33x8xf32>
    %1288 = vector.broadcast %1286 : vector<1x8xf32> to vector<33x8xf32>
    %1289 = arith.mulf %1287, %1288 : vector<33x8xf32>
    %1290 = arith.subf %1250, %1289 : vector<33x8xf32>
    %c30_i32 = arith.constant 30 : i32
    %1291 = vector.broadcast %c30_i32 : i32 to vector<33x1xi32>
    %1292 = arith.cmpi eq, %89, %1291 : vector<33x1xi32>
    %cst_341 = arith.constant 1.000000e+00 : f32
    %cst_342 = arith.constant 0.000000e+00 : f32
    %1293 = vector.broadcast %cst_341 : f32 to vector<33x1xf32>
    %1294 = vector.broadcast %cst_342 : f32 to vector<33x1xf32>
    %1295 = arith.select %1292, %1293, %1294 : vector<33x1xi1>, vector<33x1xf32>
    %c30_i32_343 = arith.constant 30 : i32
    %1296 = vector.broadcast %c30_i32_343 : i32 to vector<1x33xi32>
    %1297 = arith.cmpi eq, %90, %1296 : vector<1x33xi32>
    %cst_344 = arith.constant 1.000000e+00 : f32
    %cst_345 = arith.constant 0.000000e+00 : f32
    %1298 = vector.broadcast %cst_344 : f32 to vector<1x33xf32>
    %1299 = vector.broadcast %cst_345 : f32 to vector<1x33xf32>
    %1300 = arith.select %1297, %1298, %1299 : vector<1x33xi1>, vector<1x33xf32>
    %1301 = vector.broadcast %1295 : vector<33x1xf32> to vector<33x33xf32>
    %1302 = arith.mulf %1284, %1301 : vector<33x33xf32>
    %cst_346 = arith.constant dense<0.000000e+00> : vector<33xf32>
    %1303 = vector.multi_reduction <add>, %1302, %cst_346 [0] : vector<33x33xf32> to vector<33xf32>
    %1304 = vector.shape_cast %1303 : vector<33xf32> to vector<1x33xf32>
    %1305 = vector.broadcast %1295 : vector<33x1xf32> to vector<33x8xf32>
    %1306 = arith.mulf %1290, %1305 : vector<33x8xf32>
    %cst_347 = arith.constant dense<0.000000e+00> : vector<8xf32>
    %1307 = vector.multi_reduction <add>, %1306, %cst_347 [0] : vector<33x8xf32> to vector<8xf32>
    %1308 = vector.shape_cast %1307 : vector<8xf32> to vector<1x8xf32>
    %1309 = arith.mulf %1304, %1300 : vector<1x33xf32>
    %cst_348 = arith.constant dense<0.000000e+00> : vector<1xf32>
    %1310 = vector.multi_reduction <add>, %1309, %cst_348 [1] : vector<1x33xf32> to vector<1xf32>
    %1311 = vector.shape_cast %1310 : vector<1xf32> to vector<1x1xf32>
    %cst_349 = arith.constant 1.000000e+00 : f32
    %1312 = vector.broadcast %cst_349 : f32 to vector<1x1xf32>
    %1313 = arith.divf %1312, %1311 : vector<1x1xf32>
    %1314 = vector.broadcast %1300 : vector<1x33xf32> to vector<33x33xf32>
    %1315 = arith.mulf %1284, %1314 : vector<33x33xf32>
    %cst_350 = arith.constant dense<0.000000e+00> : vector<33xf32>
    %1316 = vector.multi_reduction <add>, %1315, %cst_350 [1] : vector<33x33xf32> to vector<33xf32>
    %1317 = vector.shape_cast %1316 : vector<33xf32> to vector<33x1xf32>
    %1318 = arith.subf %1317, %1295 : vector<33x1xf32>
    %1319 = vector.broadcast %1313 : vector<1x1xf32> to vector<1x33xf32>
    %1320 = arith.mulf %1304, %1319 : vector<1x33xf32>
    %1321 = vector.broadcast %1318 : vector<33x1xf32> to vector<33x33xf32>
    %1322 = vector.broadcast %1320 : vector<1x33xf32> to vector<33x33xf32>
    %1323 = arith.mulf %1321, %1322 : vector<33x33xf32>
    %1324 = arith.subf %1284, %1323 : vector<33x33xf32>
    %1325 = vector.broadcast %1313 : vector<1x1xf32> to vector<1x8xf32>
    %1326 = arith.mulf %1308, %1325 : vector<1x8xf32>
    %1327 = vector.broadcast %1318 : vector<33x1xf32> to vector<33x8xf32>
    %1328 = vector.broadcast %1326 : vector<1x8xf32> to vector<33x8xf32>
    %1329 = arith.mulf %1327, %1328 : vector<33x8xf32>
    %1330 = arith.subf %1290, %1329 : vector<33x8xf32>
    %c31_i32 = arith.constant 31 : i32
    %1331 = vector.broadcast %c31_i32 : i32 to vector<33x1xi32>
    %1332 = arith.cmpi eq, %89, %1331 : vector<33x1xi32>
    %cst_351 = arith.constant 1.000000e+00 : f32
    %cst_352 = arith.constant 0.000000e+00 : f32
    %1333 = vector.broadcast %cst_351 : f32 to vector<33x1xf32>
    %1334 = vector.broadcast %cst_352 : f32 to vector<33x1xf32>
    %1335 = arith.select %1332, %1333, %1334 : vector<33x1xi1>, vector<33x1xf32>
    %c31_i32_353 = arith.constant 31 : i32
    %1336 = vector.broadcast %c31_i32_353 : i32 to vector<1x33xi32>
    %1337 = arith.cmpi eq, %90, %1336 : vector<1x33xi32>
    %cst_354 = arith.constant 1.000000e+00 : f32
    %cst_355 = arith.constant 0.000000e+00 : f32
    %1338 = vector.broadcast %cst_354 : f32 to vector<1x33xf32>
    %1339 = vector.broadcast %cst_355 : f32 to vector<1x33xf32>
    %1340 = arith.select %1337, %1338, %1339 : vector<1x33xi1>, vector<1x33xf32>
    %1341 = vector.broadcast %1335 : vector<33x1xf32> to vector<33x33xf32>
    %1342 = arith.mulf %1324, %1341 : vector<33x33xf32>
    %cst_356 = arith.constant dense<0.000000e+00> : vector<33xf32>
    %1343 = vector.multi_reduction <add>, %1342, %cst_356 [0] : vector<33x33xf32> to vector<33xf32>
    %1344 = vector.shape_cast %1343 : vector<33xf32> to vector<1x33xf32>
    %1345 = vector.broadcast %1335 : vector<33x1xf32> to vector<33x8xf32>
    %1346 = arith.mulf %1330, %1345 : vector<33x8xf32>
    %cst_357 = arith.constant dense<0.000000e+00> : vector<8xf32>
    %1347 = vector.multi_reduction <add>, %1346, %cst_357 [0] : vector<33x8xf32> to vector<8xf32>
    %1348 = vector.shape_cast %1347 : vector<8xf32> to vector<1x8xf32>
    %1349 = arith.mulf %1344, %1340 : vector<1x33xf32>
    %cst_358 = arith.constant dense<0.000000e+00> : vector<1xf32>
    %1350 = vector.multi_reduction <add>, %1349, %cst_358 [1] : vector<1x33xf32> to vector<1xf32>
    %1351 = vector.shape_cast %1350 : vector<1xf32> to vector<1x1xf32>
    %cst_359 = arith.constant 1.000000e+00 : f32
    %1352 = vector.broadcast %cst_359 : f32 to vector<1x1xf32>
    %1353 = arith.divf %1352, %1351 : vector<1x1xf32>
    %1354 = vector.broadcast %1340 : vector<1x33xf32> to vector<33x33xf32>
    %1355 = arith.mulf %1324, %1354 : vector<33x33xf32>
    %cst_360 = arith.constant dense<0.000000e+00> : vector<33xf32>
    %1356 = vector.multi_reduction <add>, %1355, %cst_360 [1] : vector<33x33xf32> to vector<33xf32>
    %1357 = vector.shape_cast %1356 : vector<33xf32> to vector<33x1xf32>
    %1358 = arith.subf %1357, %1335 : vector<33x1xf32>
    %1359 = vector.broadcast %1353 : vector<1x1xf32> to vector<1x33xf32>
    %1360 = arith.mulf %1344, %1359 : vector<1x33xf32>
    %1361 = vector.broadcast %1358 : vector<33x1xf32> to vector<33x33xf32>
    %1362 = vector.broadcast %1360 : vector<1x33xf32> to vector<33x33xf32>
    %1363 = arith.mulf %1361, %1362 : vector<33x33xf32>
    %1364 = arith.subf %1324, %1363 : vector<33x33xf32>
    %1365 = vector.broadcast %1353 : vector<1x1xf32> to vector<1x8xf32>
    %1366 = arith.mulf %1348, %1365 : vector<1x8xf32>
    %1367 = vector.broadcast %1358 : vector<33x1xf32> to vector<33x8xf32>
    %1368 = vector.broadcast %1366 : vector<1x8xf32> to vector<33x8xf32>
    %1369 = arith.mulf %1367, %1368 : vector<33x8xf32>
    %1370 = arith.subf %1330, %1369 : vector<33x8xf32>
    %c32_i32 = arith.constant 32 : i32
    %1371 = vector.broadcast %c32_i32 : i32 to vector<33x1xi32>
    %1372 = arith.cmpi eq, %89, %1371 : vector<33x1xi32>
    %cst_361 = arith.constant 1.000000e+00 : f32
    %cst_362 = arith.constant 0.000000e+00 : f32
    %1373 = vector.broadcast %cst_361 : f32 to vector<33x1xf32>
    %1374 = vector.broadcast %cst_362 : f32 to vector<33x1xf32>
    %1375 = arith.select %1372, %1373, %1374 : vector<33x1xi1>, vector<33x1xf32>
    %c32_i32_363 = arith.constant 32 : i32
    %1376 = vector.broadcast %c32_i32_363 : i32 to vector<1x33xi32>
    %1377 = arith.cmpi eq, %90, %1376 : vector<1x33xi32>
    %cst_364 = arith.constant 1.000000e+00 : f32
    %cst_365 = arith.constant 0.000000e+00 : f32
    %1378 = vector.broadcast %cst_364 : f32 to vector<1x33xf32>
    %1379 = vector.broadcast %cst_365 : f32 to vector<1x33xf32>
    %1380 = arith.select %1377, %1378, %1379 : vector<1x33xi1>, vector<1x33xf32>
    %1381 = vector.broadcast %1375 : vector<33x1xf32> to vector<33x33xf32>
    %1382 = arith.mulf %1364, %1381 : vector<33x33xf32>
    %cst_366 = arith.constant dense<0.000000e+00> : vector<33xf32>
    %1383 = vector.multi_reduction <add>, %1382, %cst_366 [0] : vector<33x33xf32> to vector<33xf32>
    %1384 = vector.shape_cast %1383 : vector<33xf32> to vector<1x33xf32>
    %1385 = vector.broadcast %1375 : vector<33x1xf32> to vector<33x8xf32>
    %1386 = arith.mulf %1370, %1385 : vector<33x8xf32>
    %cst_367 = arith.constant dense<0.000000e+00> : vector<8xf32>
    %1387 = vector.multi_reduction <add>, %1386, %cst_367 [0] : vector<33x8xf32> to vector<8xf32>
    %1388 = vector.shape_cast %1387 : vector<8xf32> to vector<1x8xf32>
    %1389 = arith.mulf %1384, %1380 : vector<1x33xf32>
    %cst_368 = arith.constant dense<0.000000e+00> : vector<1xf32>
    %1390 = vector.multi_reduction <add>, %1389, %cst_368 [1] : vector<1x33xf32> to vector<1xf32>
    %1391 = vector.shape_cast %1390 : vector<1xf32> to vector<1x1xf32>
    %cst_369 = arith.constant 1.000000e+00 : f32
    %1392 = vector.broadcast %cst_369 : f32 to vector<1x1xf32>
    %1393 = arith.divf %1392, %1391 : vector<1x1xf32>
    %1394 = vector.broadcast %1380 : vector<1x33xf32> to vector<33x33xf32>
    %1395 = arith.mulf %1364, %1394 : vector<33x33xf32>
    %cst_370 = arith.constant dense<0.000000e+00> : vector<33xf32>
    %1396 = vector.multi_reduction <add>, %1395, %cst_370 [1] : vector<33x33xf32> to vector<33xf32>
    %1397 = vector.shape_cast %1396 : vector<33xf32> to vector<33x1xf32>
    %1398 = arith.subf %1397, %1375 : vector<33x1xf32>
    %1399 = vector.broadcast %1393 : vector<1x1xf32> to vector<1x8xf32>
    %1400 = arith.mulf %1388, %1399 : vector<1x8xf32>
    %1401 = vector.broadcast %1398 : vector<33x1xf32> to vector<33x8xf32>
    %1402 = vector.broadcast %1400 : vector<1x8xf32> to vector<33x8xf32>
    %1403 = arith.mulf %1401, %1402 : vector<33x8xf32>
    %1404 = arith.subf %1370, %1403 : vector<33x8xf32>
    %cst_371 = arith.constant 1.000000e+00 : f32
    %1405 = vector.broadcast %cst_371 : f32 to vector<8x1xf32>
    %1406 = tpu.concatenate %73, %1405 in 1 : vector<8x32xf32>, vector<8x1xf32> -> vector<8x33xf32>
    %cst_372 = arith.constant dense<0.000000e+00> : vector<8x8xf32>
    %1407 = tpu.matmul %1406, %1404, %cst_372 {dimension_numbers = #tpu.dot_dimension_numbers<[1], [0], [0], [1], [0, 0, 1, 1], [], []>} : vector<8x33xf32>, vector<33x8xf32>, vector<8x8xf32> -> vector<8x8xf32>
    %c0_373 = arith.constant 0 : index
    %c0_374 = arith.constant 0 : index
    %1408 = vector.load %arg12[%c0_373, %c0_374] : memref<8x8xf32, #tpu.memory_space<vmem>>, vector<8x8xf32>
    tpu.vector_store %arg12[%c0_373, %c0_374], %1407 {strides = array<i32>} : memref<8x8xf32, #tpu.memory_space<vmem>>, vector<8x8xf32>,
    return
  }
}

</mosaic_0001>

<llo_original>
// kernel: tpu_custom_call.1
$region0: #{tpu_custom_call.1}
  #allocation0 [shape = 'u32[]', space=smem, size = 0x4, offset = 0x4, fixed_abs, tag = 'smem constant byte address 0x4 - core index']
  #allocation1 [shape = 'u32[144,128]{1,0:T(1,128)}', space=vmem, size = 0x12000, scoped, tag = 'internal scratch']
  #allocation2 [shape = 'f32[1]{0:T(128)S(6)}', space=smem, size = 0x200, scoped, tag = 'scoped memory for tpu_custom_call.1']
  %s0 = inlined_call_operand.<no memory space> [shape: f32[1], index: 0, kind: input, shape index: {}]
  %s1 = inlined_call_operand.vmem [shape: f32[48,1], index: 1, kind: input, shape index: {}]
  %s2 = inlined_call_operand.vmem [shape: f32[1,16], index: 2, kind: input, shape index: {}]
  %s3 = inlined_call_operand.vmem [shape: f32[32,32], index: 3, kind: input, shape index: {}]
  %s4 = inlined_call_operand.vmem [shape: f32[1,32], index: 4, kind: input, shape index: {}]
  %s5 = inlined_call_operand.vmem [shape: f32[1,32], index: 5, kind: input, shape index: {}]
  %s6 = inlined_call_operand.vmem [shape: f32[1,32], index: 6, kind: input, shape index: {}]
  %s7 = inlined_call_operand.vmem [shape: f32[32,32], index: 7, kind: input, shape index: {}]
  %s8 = inlined_call_operand.vmem [shape: f32[1,32], index: 8, kind: input, shape index: {}]
  %s9 = inlined_call_operand.vmem [shape: f32[1,32], index: 9, kind: input, shape index: {}]
  %s10 = inlined_call_operand.vmem [shape: f32[1,32], index: 10, kind: input, shape index: {}]
  %s11 = inlined_call_operand.vmem [shape: f32[40,8], index: 11, kind: input, shape index: {}]
  %s12 = inlined_call_operand.hbm [shape: f32[8,8], index: 12, kind: output, shape index: {}]
  %s13 = sld [smem:[#allocation0]]
  $region58: #{tpu_custom_call.1} parent=0
    _
  %s15 = ssub.s32 1, %s13
  %s16 = scalar_select 0, %s15, %s13
  %17 = sst [smem:[#allocation2]] %s0
  $region1: #{tpu_custom_call.1} parent=0
    #allocation3 [shape = 'u8[4096]{0}', space=vmem, size = 0x1000, scoped, tag = 'output window, operand 0, single buffered']
    #allocation4 [shape = 's32[1]{0}', space=sflag, size = 0x4, scoped, tag = 'scoped memory for tpu_custom_call.1']
    %18 = vsyncpa [#allocation4], 0
    // Predicated region
    $region2: #{tpu_custom_call.1} parent=1 // pred_check
      _
    $region3: #{tpu_custom_call.1} parent=1 // pred_check_branch
      %20 = sbr.rel (0) target = $region5
    $region4: #{tpu_custom_call.1} parent=1 // pred_region
      _
    $region5: #{tpu_custom_call.1} parent=1 // pred_fallthru
      _
    // Predicated region
    $region6: #{tpu_custom_call.1} parent=1 // pred_check
      _
    $region7: #{tpu_custom_call.1} parent=1 // pred_check_branch
      %22 = sbr.rel (0) target = $region9
    $region8: #{tpu_custom_call.1} parent=1 // pred_region
      _
    $region9: #{tpu_custom_call.1} parent=1 // pred_fallthru
      _
    // Predicated region
    $region10: #{tpu_custom_call.1} parent=1 // pred_check
      _
    $region11: #{tpu_custom_call.1} parent=1 // pred_check_branch
      %24 = sbr.rel (0) target = $region13
    $region12: #{tpu_custom_call.1} parent=1 // pred_region
      _
    $region13: #{tpu_custom_call.1} parent=1 // pred_fallthru
      _
    // Predicated region
    $region14: #{tpu_custom_call.1} parent=1 // pred_check
      _
    $region15: #{tpu_custom_call.1} parent=1 // pred_check_branch
      %26 = sbr.rel (0) target = $region17
    $region16: #{tpu_custom_call.1} parent=1 // pred_region
      _
    $region17: #{tpu_custom_call.1} parent=1 // pred_fallthru
      _
    // Predicated region
    $region18: #{tpu_custom_call.1} parent=1 // pred_check
      _
    $region19: #{tpu_custom_call.1} parent=1 // pred_check_branch
      %28 = sbr.rel (0) target = $region21
    $region20: #{tpu_custom_call.1} parent=1 // pred_region
      _
    $region21: #{tpu_custom_call.1} parent=1 // pred_fallthru
      _
    // Predicated region
    $region22: #{tpu_custom_call.1} parent=1 // pred_check
      _
    $region23: #{tpu_custom_call.1} parent=1 // pred_check_branch
      %30 = sbr.rel (0) target = $region25
    $region24: #{tpu_custom_call.1} parent=1 // pred_region
      _
    $region25: #{tpu_custom_call.1} parent=1 // pred_fallthru
      _
    // Predicated region
    $region26: #{tpu_custom_call.1} parent=1 // pred_check
      _
    $region27: #{tpu_custom_call.1} parent=1 // pred_check_branch
      %32 = sbr.rel (0) target = $region29
    $region28: #{tpu_custom_call.1} parent=1 // pred_region
      _
    $region29: #{tpu_custom_call.1} parent=1 // pred_fallthru
      _
    // Predicated region
    $region30: #{tpu_custom_call.1} parent=1 // pred_check
      _
    $region31: #{tpu_custom_call.1} parent=1 // pred_check_branch
      %34 = sbr.rel (0) target = $region33
    $region32: #{tpu_custom_call.1} parent=1 // pred_region
      _
    $region33: #{tpu_custom_call.1} parent=1 // pred_fallthru
      _
    // Predicated region
    $region34: #{tpu_custom_call.1} parent=1 // pred_check
      _
    $region35: #{tpu_custom_call.1} parent=1 // pred_check_branch
      %36 = sbr.rel (0) target = $region37
    $region36: #{tpu_custom_call.1} parent=1 // pred_region
      _
    $region37: #{tpu_custom_call.1} parent=1 // pred_fallthru
      _
    // Predicated region
    $region38: #{tpu_custom_call.1} parent=1 // pred_check
      _
    $region39: #{tpu_custom_call.1} parent=1 // pred_check_branch
      %38 = sbr.rel (0) target = $region41
    $region40: #{tpu_custom_call.1} parent=1 // pred_region
      _
    $region41: #{tpu_custom_call.1} parent=1 // pred_fallthru
      _
    // Predicated region
    $region42: #{tpu_custom_call.1} parent=1 // pred_check
      _
    $region43: #{tpu_custom_call.1} parent=1 // pred_check_branch
      %40 = sbr.rel (0) target = $region45
    $region44: #{tpu_custom_call.1} parent=1 // pred_region
      _
    $region45: #{tpu_custom_call.1} parent=1 // pred_fallthru
      _
    // Predicated region
    $region46: #{tpu_custom_call.1} parent=1 // pred_check
      _
    $region47: #{tpu_custom_call.1} parent=1 // pred_check_branch
      %42 = sbr.rel (0) target = $region49
    $region48: #{tpu_custom_call.1} parent=1 // pred_region
      _
    $region49: #{tpu_custom_call.1} parent=1 // pred_fallthru
      _
    %v43 = vld [vmem:[%s1] sm:$0xff]
    %v44 = vld [vmem:[%s1 + $0x8] sm:$0xff]
    %v45 = vld [vmem:[%s1 + $0x10] sm:$0xff]
    %v46 = vld [vmem:[%s1 + $0x18] sm:$0xff]
    %v47 = vld [vmem:[%s1 + $0x20] sm:$0xff]
    %v48 = vld [vmem:[%s1 + $0x28] sm:$0xff]
    %v49 = vld [vmem:[%s2] sm:$0x1]
    %51 = vset.pattern.permute.xlu0 0
    %52 = vperm.xlu0 %51, %v43
    %v53 = vpop.permute.xlu0 %52
    %56 = vset.pattern.permute.xlu0 0
    %57 = vperm.xlu0 %56, %v44
    %v58 = vpop.permute.xlu0 %57
    %61 = vset.pattern.permute.xlu0 0
    %62 = vperm.xlu0 %61, %v45
    %v63 = vpop.permute.xlu0 %62
    %66 = vset.pattern.permute.xlu0 0
    %67 = vperm.xlu0 %66, %v46
    %v68 = vpop.permute.xlu0 %67
    %71 = vset.pattern.permute.xlu0 0
    %72 = vperm.xlu0 %71, %v47
    %v73 = vpop.permute.xlu0 %72
    %76 = vset.pattern.permute.xlu0 0
    %77 = vperm.xlu0 %76, %v48
    %v78 = vpop.permute.xlu0 %77
    %v81 = vlaneseq
    %v82 = vshrl.u32 %v81, 7
    %v83 = vsub.s32 0, %v82
    %v84 = vrot.slane %v49, %v83
    %v86 = vmul.f32 %v53, %v84
    %v87 = vmul.f32 %v58, %v84
    %v88 = vmul.f32 %v63, %v84
    %v89 = vmul.f32 %v68, %v84
    %v90 = vmul.f32 %v73, %v84
    %v91 = vmul.f32 %v78, %v84
    %v92 = vmul.f32 %v86, 6.2831855
    %v93 = vmul.f32 %v87, 6.2831855
    %v94 = vmul.f32 %v88, 6.2831855
    %v95 = vmul.f32 %v89, 6.2831855
    %v96 = vmul.f32 %v90, 6.2831855
    %v97 = vmul.f32 %v91, 6.2831855
    %v98 = vand.u32 2147483647, %v92
    %vm99 = vcmp.le.f32.partialorder %v98, 0.7853982
    %vm100 = vcmp.lt.s32.totalorder %v92, 0
    %v101 = vand.u32 %v92, 2139095040
    %v102 = vshrl.u32 %v101, 23
    %v103 = vsub.s32 %v102, 127
    %v104 = vand.u32 2147483647, %v92
    %v105 = vand.u32 %v104, 8388607
    %v106 = vor.u32 %v105, 8388608
    %v107 = vsub.s32 0, %v106
    %v108 = vadd.s32 %v103, 1
    %vm109 = vcmp.gt.s32.totalorder %v108, 0
    %v110 = vsel %vm109, %v108, 0
    %v111 = vshrl.u32 %v110, 5
    %v112 = vand.u32 %v110, 31
    %v113 = vsub.s32 32, %v112
    %v114 = vshrl.u32 683565275, %v113
    %v115 = vshll.u32 683565275, %v112
    %v116 = vshrl.u32 2475754826, %v113
    %v117 = vor.u32 %v115, %v116
    %v118 = vshll.u32 2475754826, %v112
    %v119 = vshrl.u32 2131351028, %v113
    %v120 = vor.u32 %v118, %v119
    %v121 = vshll.u32 2131351028, %v112
    %v122 = vshrl.u32 2102212464, %v113
    %v123 = vor.u32 %v121, %v122
    %v124 = vshll.u32 2102212464, %v112
    %v125 = vshrl.u32 920167782, %v113
    %v126 = vor.u32 %v124, %v125
    %v127 = vshll.u32 920167782, %v112
    %v128 = vshrl.u32 1326507024, %v113
    %v129 = vor.u32 %v127, %v128
    %vm130 = vcmp.lt.s32.totalorder %v111, 1
    %vm131 = vcmp.lt.s32.totalorder %v111, 2
    %vm132 = vcmp.lt.s32.totalorder %v111, 3
    %vm133 = vcmp.lt.s32.totalorder %v111, 4
    %v134 = vsel %vm130, %v114, %v117
    %v135 = vsel %vm133, %v123, 2102212464
    %v136 = vsel %vm132, %v120, %v135
    %v137 = vsel %vm131, %v134, %v136
    %v138 = vsel %vm130, %v117, %v120
    %v139 = vsel %vm133, %v126, 920167782
    %v140 = vsel %vm132, %v123, %v139
    %v141 = vsel %vm131, %v138, %v140
    %v142 = vsel %vm130, %v120, %v123
    %v143 = vsel %vm133, %v129, 1326507024
    %v144 = vsel %vm132, %v126, %v143
    %v145 = vsel %vm131, %v142, %v144
    %v146 = vshll.u32 %v106, 8
    %v147 = vmul.u32.u64.compose %v146, %v145
    %v148 = vextract.low.u32 %v147
    %v149 = vextract.high.u32 %v147
    %v150 = vmul.u32.u64.compose %v146, %v141
    %v151 = vextract.low.u32 %v150
    %v152 = vextract.high.u32 %v150
    %v153 = vmul.u32 %v146, %v137
    %v154 = vadd.s32 %v149, %v151
    %vm155 = vc.u32 %v149, %v151
    %v156 = vadd.s32 %v152, 1
    %v157 = vsel %vm155, %v156, %v152
    %v158 = vadd.s32 %v153, %v157
    %v159 = vadd.s32 %v158, 536870912
    %v160 = vshrl.u32 %v159, 30
    %v161 = vshll.u32 %v160, 30
    %v162 = vsub.s32 %v158, %v161
    %vm163 = vcmp.lt.s32.totalorder %v162, 0
    %v164 = vsub.s32 0, %v162
    %v165 = vsel %vm163, %v164, %v162
    %v166 = vclz %v165
    %v167 = vsub.s32 %v166, 2
    %vm168 = vcmp.gt.s32.totalorder 0, %v167
    %v169 = vsel %vm168, 0, %v167
    %v170 = vsub.s32 32, %v169
    %v171 = vshll.u32 %v162, %v169
    %v172 = vshrl.u32 %v154, %v170
    %v173 = vor.u32 %v171, %v172
    %v174 = vsub.s32 4294967266, %v169
    %v175 = vadd.s32 %v174, 127
    %v176 = vshll.u32 %v175, 23
    %v177 = vor.u32 4788187, %v176
    %v178 = vand.u32 2147483647, %v177
    %v180 = vcvt.s32.f32 %v173
    %v181 = vmul.f32 %v180, %v178
    %v182 = vxor.u32 %v181, 2147483648
    %v183 = vsel %vm100, %v182, %v181
    %v184 = vsub.s32 4, %v160
    %v185 = vsel %vm100, %v184, %v160
    %v186 = vsel %vm99, %v92, %v183
    %v187 = vsel %vm99, 0, %v185
    %v188 = vcosq.f32.pop %v186
    %v189 = vsinq.f32.pop %v186
    %vm190 = vweird.f32 %v92
    %v191 = vadd.s32 %v187, 3
    %v192 = vand.u32 %v191, 3
    %vm193 = vcmp.lt.s32.totalorder %v192, 2
    %vm194 = vcmp.eq.s32.totalorder %v192, 0
    %v195 = vxor.u32 %v189, 2147483648
    %v196 = vsel %vm194, %v188, %v195
    %vm197 = vcmp.eq.s32.totalorder %v192, 2
    %v198 = vxor.u32 %v188, 2147483648
    %v199 = vsel %vm197, %v198, %v189
    %v200 = vsel %vm193, %v196, %v199
    %v201 = vsel %vm190, nan, %v200
    %v202 = vand.u32 2147483647, %v93
    %vm203 = vcmp.le.f32.partialorder %v202, 0.7853982
    %vm204 = vcmp.lt.s32.totalorder %v93, 0
    %v205 = vand.u32 %v93, 2139095040
    %v206 = vshrl.u32 %v205, 23
    %v207 = vsub.s32 %v206, 127
    %v208 = vand.u32 2147483647, %v93
    %v209 = vand.u32 %v208, 8388607
    %v210 = vor.u32 %v209, 8388608
    %v211 = vsub.s32 0, %v210
    %v212 = vadd.s32 %v207, 1
    %vm213 = vcmp.gt.s32.totalorder %v212, 0
    %v214 = vsel %vm213, %v212, 0
    %v215 = vshrl.u32 %v214, 5
    %v216 = vand.u32 %v214, 31
    %v217 = vsub.s32 32, %v216
    %v218 = vshrl.u32 683565275, %v217
    %v219 = vshll.u32 683565275, %v216
    %v220 = vshrl.u32 2475754826, %v217
    %v221 = vor.u32 %v219, %v220
    %v222 = vshll.u32 2475754826, %v216
    %v223 = vshrl.u32 2131351028, %v217
    %v224 = vor.u32 %v222, %v223
    %v225 = vshll.u32 2131351028, %v216
    %v226 = vshrl.u32 2102212464, %v217
    %v227 = vor.u32 %v225, %v226
    %v228 = vshll.u32 2102212464, %v216
    %v229 = vshrl.u32 920167782, %v217
    %v230 = vor.u32 %v228, %v229
    %v231 = vshll.u32 920167782, %v216
    %v232 = vshrl.u32 1326507024, %v217
    %v233 = vor.u32 %v231, %v232
    %vm234 = vcmp.lt.s32.totalorder %v215, 1
    %vm235 = vcmp.lt.s32.totalorder %v215, 2
    %vm236 = vcmp.lt.s32.totalorder %v215, 3
    %vm237 = vcmp.lt.s32.totalorder %v215, 4
    %v238 = vsel %vm234, %v218, %v221
    %v239 = vsel %vm237, %v227, 2102212464
    %v240 = vsel %vm236, %v224, %v239
    %v241 = vsel %vm235, %v238, %v240
    %v242 = vsel %vm234, %v221, %v224
    %v243 = vsel %vm237, %v230, 920167782
    %v244 = vsel %vm236, %v227, %v243
    %v245 = vsel %vm235, %v242, %v244
    %v246 = vsel %vm234, %v224, %v227
    %v247 = vsel %vm237, %v233, 1326507024
    %v248 = vsel %vm236, %v230, %v247
    %v249 = vsel %vm235, %v246, %v248
    %v250 = vshll.u32 %v210, 8
    %v251 = vmul.u32.u64.compose %v250, %v249
    %v252 = vextract.low.u32 %v251
    %v253 = vextract.high.u32 %v251
    %v254 = vmul.u32.u64.compose %v250, %v245
    %v255 = vextract.low.u32 %v254
    %v256 = vextract.high.u32 %v254
    %v257 = vmul.u32 %v250, %v241
    %v258 = vadd.s32 %v253, %v255
    %vm259 = vc.u32 %v253, %v255
    %v260 = vadd.s32 %v256, 1
    %v261 = vsel %vm259, %v260, %v256
    %v262 = vadd.s32 %v257, %v261
    %v263 = vadd.s32 %v262, 536870912
    %v264 = vshrl.u32 %v263, 30
    %v265 = vshll.u32 %v264, 30
    %v266 = vsub.s32 %v262, %v265
    %vm267 = vcmp.lt.s32.totalorder %v266, 0
    %v268 = vsub.s32 0, %v266
    %v269 = vsel %vm267, %v268, %v266
    %v270 = vclz %v269
    %v271 = vsub.s32 %v270, 2
    %vm272 = vcmp.gt.s32.totalorder 0, %v271
    %v273 = vsel %vm272, 0, %v271
    %v274 = vsub.s32 32, %v273
    %v275 = vshll.u32 %v266, %v273
    %v276 = vshrl.u32 %v258, %v274
    %v277 = vor.u32 %v275, %v276
    %v278 = vsub.s32 4294967266, %v273
    %v279 = vadd.s32 %v278, 127
    %v280 = vshll.u32 %v279, 23
    %v281 = vor.u32 4788187, %v280
    %v282 = vand.u32 2147483647, %v281
    %v284 = vcvt.s32.f32 %v277
    %v285 = vmul.f32 %v284, %v282
    %v286 = vxor.u32 %v285, 2147483648
    %v287 = vsel %vm204, %v286, %v285
    %v288 = vsub.s32 4, %v264
    %v289 = vsel %vm204, %v288, %v264
    %v290 = vsel %vm203, %v93, %v287
    %v291 = vsel %vm203, 0, %v289
    %v292 = vcosq.f32.pop %v290
    %v293 = vsinq.f32.pop %v290
    %vm294 = vweird.f32 %v93
    %v295 = vadd.s32 %v291, 3
    %v296 = vand.u32 %v295, 3
    %vm297 = vcmp.lt.s32.totalorder %v296, 2
    %vm298 = vcmp.eq.s32.totalorder %v296, 0
    %v299 = vxor.u32 %v293, 2147483648
    %v300 = vsel %vm298, %v292, %v299
    %vm301 = vcmp.eq.s32.totalorder %v296, 2
    %v302 = vxor.u32 %v292, 2147483648
    %v303 = vsel %vm301, %v302, %v293
    %v304 = vsel %vm297, %v300, %v303
    %v305 = vsel %vm294, nan, %v304
    %v306 = vand.u32 2147483647, %v94
    %vm307 = vcmp.le.f32.partialorder %v306, 0.7853982
    %vm308 = vcmp.lt.s32.totalorder %v94, 0
    %v309 = vand.u32 %v94, 2139095040
    %v310 = vshrl.u32 %v309, 23
    %v311 = vsub.s32 %v310, 127
    %v312 = vand.u32 2147483647, %v94
    %v313 = vand.u32 %v312, 8388607
    %v314 = vor.u32 %v313, 8388608
    %v315 = vsub.s32 0, %v314
    %v316 = vadd.s32 %v311, 1
    %vm317 = vcmp.gt.s32.totalorder %v316, 0
    %v318 = vsel %vm317, %v316, 0
    %v319 = vshrl.u32 %v318, 5
    %v320 = vand.u32 %v318, 31
    %v321 = vsub.s32 32, %v320
    %v322 = vshrl.u32 683565275, %v321
    %v323 = vshll.u32 683565275, %v320
    %v324 = vshrl.u32 2475754826, %v321
    %v325 = vor.u32 %v323, %v324
    %v326 = vshll.u32 2475754826, %v320
    %v327 = vshrl.u32 2131351028, %v321
    %v328 = vor.u32 %v326, %v327
    %v329 = vshll.u32 2131351028, %v320
    %v330 = vshrl.u32 2102212464, %v321
    %v331 = vor.u32 %v329, %v330
    %v332 = vshll.u32 2102212464, %v320
    %v333 = vshrl.u32 920167782, %v321
    %v334 = vor.u32 %v332, %v333
    %v335 = vshll.u32 920167782, %v320
    %v336 = vshrl.u32 1326507024, %v321
    %v337 = vor.u32 %v335, %v336
    %vm338 = vcmp.lt.s32.totalorder %v319, 1
    %vm339 = vcmp.lt.s32.totalorder %v319, 2
    %vm340 = vcmp.lt.s32.totalorder %v319, 3
    %vm341 = vcmp.lt.s32.totalorder %v319, 4
    %v342 = vsel %vm338, %v322, %v325
    %v343 = vsel %vm341, %v331, 2102212464
    %v344 = vsel %vm340, %v328, %v343
    %v345 = vsel %vm339, %v342, %v344
    %v346 = vsel %vm338, %v325, %v328
    %v347 = vsel %vm341, %v334, 920167782
    %v348 = vsel %vm340, %v331, %v347
    %v349 = vsel %vm339, %v346, %v348
    %v350 = vsel %vm338, %v328, %v331
    %v351 = vsel %vm341, %v337, 1326507024
    %v352 = vsel %vm340, %v334, %v351
    %v353 = vsel %vm339, %v350, %v352
    %v354 = vshll.u32 %v314, 8
    %v355 = vmul.u32.u64.compose %v354, %v353
    %v356 = vextract.low.u32 %v355
    %v357 = vextract.high.u32 %v355
    %v358 = vmul.u32.u64.compose %v354, %v349
    %v359 = vextract.low.u32 %v358
    %v360 = vextract.high.u32 %v358
    %v361 = vmul.u32 %v354, %v345
    %v362 = vadd.s32 %v357, %v359
    %vm363 = vc.u32 %v357, %v359
    %v364 = vadd.s32 %v360, 1
    %v365 = vsel %vm363, %v364, %v360
    %v366 = vadd.s32 %v361, %v365
    %v367 = vadd.s32 %v366, 536870912
    %v368 = vshrl.u32 %v367, 30
    %v369 = vshll.u32 %v368, 30
    %v370 = vsub.s32 %v366, %v369
    %vm371 = vcmp.lt.s32.totalorder %v370, 0
    %v372 = vsub.s32 0, %v370
    %v373 = vsel %vm371, %v372, %v370
    %v374 = vclz %v373
    %v375 = vsub.s32 %v374, 2
    %vm376 = vcmp.gt.s32.totalorder 0, %v375
    %v377 = vsel %vm376, 0, %v375
    %v378 = vsub.s32 32, %v377
    %v379 = vshll.u32 %v370, %v377
    %v380 = vshrl.u32 %v362, %v378
    %v381 = vor.u32 %v379, %v380
    %v382 = vsub.s32 4294967266, %v377
    %v383 = vadd.s32 %v382, 127
    %v384 = vshll.u32 %v383, 23
    %v385 = vor.u32 4788187, %v384
    %v386 = vand.u32 2147483647, %v385
    %v388 = vcvt.s32.f32 %v381
    %v389 = vmul.f32 %v388, %v386
    %v390 = vxor.u32 %v389, 2147483648
    %v391 = vsel %vm308, %v390, %v389
    %v392 = vsub.s32 4, %v368
    %v393 = vsel %vm308, %v392, %v368
    %v394 = vsel %vm307, %v94, %v391
    %v395 = vsel %vm307, 0, %v393
    %v396 = vcosq.f32.pop %v394
    %v397 = vsinq.f32.pop %v394
    %vm398 = vweird.f32 %v94
    %v399 = vadd.s32 %v395, 3
    %v400 = vand.u32 %v399, 3
    %vm401 = vcmp.lt.s32.totalorder %v400, 2
    %vm402 = vcmp.eq.s32.totalorder %v400, 0
    %v403 = vxor.u32 %v397, 2147483648
    %v404 = vsel %vm402, %v396, %v403
    %vm405 = vcmp.eq.s32.totalorder %v400, 2
    %v406 = vxor.u32 %v396, 2147483648
    %v407 = vsel %vm405, %v406, %v397
    %v408 = vsel %vm401, %v404, %v407
    %v409 = vsel %vm398, nan, %v408
    %v410 = vand.u32 2147483647, %v95
    %vm411 = vcmp.le.f32.partialorder %v410, 0.7853982
    %vm412 = vcmp.lt.s32.totalorder %v95, 0
    %v413 = vand.u32 %v95, 2139095040
    %v414 = vshrl.u32 %v413, 23
    %v415 = vsub.s32 %v414, 127
    %v416 = vand.u32 2147483647, %v95
    %v417 = vand.u32 %v416, 8388607
    %v418 = vor.u32 %v417, 8388608
    %v419 = vsub.s32 0, %v418
    %v420 = vadd.s32 %v415, 1
    %vm421 = vcmp.gt.s32.totalorder %v420, 0
    %v422 = vsel %vm421, %v420, 0
    %v423 = vshrl.u32 %v422, 5
    %v424 = vand.u32 %v422, 31
    %v425 = vsub.s32 32, %v424
    %v426 = vshrl.u32 683565275, %v425
    %v427 = vshll.u32 683565275, %v424
    %v428 = vshrl.u32 2475754826, %v425
    %v429 = vor.u32 %v427, %v428
    %v430 = vshll.u32 2475754826, %v424
    %v431 = vshrl.u32 2131351028, %v425
    %v432 = vor.u32 %v430, %v431
    %v433 = vshll.u32 2131351028, %v424
    %v434 = vshrl.u32 2102212464, %v425
    %v435 = vor.u32 %v433, %v434
    %v436 = vshll.u32 2102212464, %v424
    %v437 = vshrl.u32 920167782, %v425
    %v438 = vor.u32 %v436, %v437
    %v439 = vshll.u32 920167782, %v424
    %v440 = vshrl.u32 1326507024, %v425
    %v441 = vor.u32 %v439, %v440
    %vm442 = vcmp.lt.s32.totalorder %v423, 1
    %vm443 = vcmp.lt.s32.totalorder %v423, 2
    %vm444 = vcmp.lt.s32.totalorder %v423, 3
    %vm445 = vcmp.lt.s32.totalorder %v423, 4
    %v446 = vsel %vm442, %v426, %v429
    %v447 = vsel %vm445, %v435, 2102212464
    %v448 = vsel %vm444, %v432, %v447
    %v449 = vsel %vm443, %v446, %v448
    %v450 = vsel %vm442, %v429, %v432
    %v451 = vsel %vm445, %v438, 920167782
    %v452 = vsel %vm444, %v435, %v451
    %v453 = vsel %vm443, %v450, %v452
    %v454 = vsel %vm442, %v432, %v435
    %v455 = vsel %vm445, %v441, 1326507024
    %v456 = vsel %vm444, %v438, %v455
    %v457 = vsel %vm443, %v454, %v456
    %v458 = vshll.u32 %v418, 8
    %v459 = vmul.u32.u64.compose %v458, %v457
    %v460 = vextract.low.u32 %v459
    %v461 = vextract.high.u32 %v459
    %v462 = vmul.u32.u64.compose %v458, %v453
    %v463 = vextract.low.u32 %v462
    %v464 = vextract.high.u32 %v462
    %v465 = vmul.u32 %v458, %v449
    %v466 = vadd.s32 %v461, %v463
    %vm467 = vc.u32 %v461, %v463
    %v468 = vadd.s32 %v464, 1
    %v469 = vsel %vm467, %v468, %v464
    %v470 = vadd.s32 %v465, %v469
    %v471 = vadd.s32 %v470, 536870912
    %v472 = vshrl.u32 %v471, 30
    %v473 = vshll.u32 %v472, 30
    %v474 = vsub.s32 %v470, %v473
    %vm475 = vcmp.lt.s32.totalorder %v474, 0
    %v476 = vsub.s32 0, %v474
    %v477 = vsel %vm475, %v476, %v474
    %v478 = vclz %v477
    %v479 = vsub.s32 %v478, 2
    %vm480 = vcmp.gt.s32.totalorder 0, %v479
    %v481 = vsel %vm480, 0, %v479
    %v482 = vsub.s32 32, %v481
    %v483 = vshll.u32 %v474, %v481
    %v484 = vshrl.u32 %v466, %v482
    %v485 = vor.u32 %v483, %v484
    %v486 = vsub.s32 4294967266, %v481
    %v487 = vadd.s32 %v486, 127
    %v488 = vshll.u32 %v487, 23
    %v489 = vor.u32 4788187, %v488
    %v490 = vand.u32 2147483647, %v489
    %v492 = vcvt.s32.f32 %v485
    %v493 = vmul.f32 %v492, %v490
    %v494 = vxor.u32 %v493, 2147483648
    %v495 = vsel %vm412, %v494, %v493
    %v496 = vsub.s32 4, %v472
    %v497 = vsel %vm412, %v496, %v472
    %v498 = vsel %vm411, %v95, %v495
    %v499 = vsel %vm411, 0, %v497
    %v500 = vcosq.f32.pop %v498
    %v501 = vsinq.f32.pop %v498
    %vm502 = vweird.f32 %v95
    %v503 = vadd.s32 %v499, 3
    %v504 = vand.u32 %v503, 3
    %vm505 = vcmp.lt.s32.totalorder %v504, 2
    %vm506 = vcmp.eq.s32.totalorder %v504, 0
    %v507 = vxor.u32 %v501, 2147483648
    %v508 = vsel %vm506, %v500, %v507
    %vm509 = vcmp.eq.s32.totalorder %v504, 2
    %v510 = vxor.u32 %v500, 2147483648
    %v511 = vsel %vm509, %v510, %v501
    %v512 = vsel %vm505, %v508, %v511
    %v513 = vsel %vm502, nan, %v512
    %v514 = vand.u32 2147483647, %v96
    %vm515 = vcmp.le.f32.partialorder %v514, 0.7853982
    %vm516 = vcmp.lt.s32.totalorder %v96, 0
    %v517 = vand.u32 %v96, 2139095040
    %v518 = vshrl.u32 %v517, 23
    %v519 = vsub.s32 %v518, 127
    %v520 = vand.u32 2147483647, %v96
    %v521 = vand.u32 %v520, 8388607
    %v522 = vor.u32 %v521, 8388608
    %v523 = vsub.s32 0, %v522
    %v524 = vadd.s32 %v519, 1
    %vm525 = vcmp.gt.s32.totalorder %v524, 0
    %v526 = vsel %vm525, %v524, 0
    %v527 = vshrl.u32 %v526, 5
    %v528 = vand.u32 %v526, 31
    %v529 = vsub.s32 32, %v528
    %v530 = vshrl.u32 683565275, %v529
    %v531 = vshll.u32 683565275, %v528
    %v532 = vshrl.u32 2475754826, %v529
    %v533 = vor.u32 %v531, %v532
    %v534 = vshll.u32 2475754826, %v528
    %v535 = vshrl.u32 2131351028, %v529
    %v536 = vor.u32 %v534, %v535
    %v537 = vshll.u32 2131351028, %v528
    %v538 = vshrl.u32 2102212464, %v529
    %v539 = vor.u32 %v537, %v538
    %v540 = vshll.u32 2102212464, %v528
    %v541 = vshrl.u32 920167782, %v529
    %v542 = vor.u32 %v540, %v541
    %v543 = vshll.u32 920167782, %v528
    %v544 = vshrl.u32 1326507024, %v529
    %v545 = vor.u32 %v543, %v544
    %vm546 = vcmp.lt.s32.totalorder %v527, 1
    %vm547 = vcmp.lt.s32.totalorder %v527, 2
    %vm548 = vcmp.lt.s32.totalorder %v527, 3
    %vm549 = vcmp.lt.s32.totalorder %v527, 4
    %v550 = vsel %vm546, %v530, %v533
    %v551 = vsel %vm549, %v539, 2102212464
    %v552 = vsel %vm548, %v536, %v551
    %v553 = vsel %vm547, %v550, %v552
    %v554 = vsel %vm546, %v533, %v536
    %v555 = vsel %vm549, %v542, 920167782
    %v556 = vsel %vm548, %v539, %v555
    %v557 = vsel %vm547, %v554, %v556
    %v558 = vsel %vm546, %v536, %v539
    %v559 = vsel %vm549, %v545, 1326507024
    %v560 = vsel %vm548, %v542, %v559
    %v561 = vsel %vm547, %v558, %v560
    %v562 = vshll.u32 %v522, 8
    %v563 = vmul.u32.u64.compose %v562, %v561
    %v564 = vextract.low.u32 %v563
    %v565 = vextract.high.u32 %v563
    %v566 = vmul.u32.u64.compose %v562, %v557
    %v567 = vextract.low.u32 %v566
    %v568 = vextract.high.u32 %v566
    %v569 = vmul.u32 %v562, %v553
    %v570 = vadd.s32 %v565, %v567
    %vm571 = vc.u32 %v565, %v567
    %v572 = vadd.s32 %v568, 1
    %v573 = vsel %vm571, %v572, %v568
    %v574 = vadd.s32 %v569, %v573
    %v575 = vadd.s32 %v574, 536870912
    %v576 = vshrl.u32 %v575, 30
    %v577 = vshll.u32 %v576, 30
    %v578 = vsub.s32 %v574, %v577
    %vm579 = vcmp.lt.s32.totalorder %v578, 0
    %v580 = vsub.s32 0, %v578
    %v581 = vsel %vm579, %v580, %v578
    %v582 = vclz %v581
    %v583 = vsub.s32 %v582, 2
    %vm584 = vcmp.gt.s32.totalorder 0, %v583
    %v585 = vsel %vm584, 0, %v583
    %v586 = vsub.s32 32, %v585
    %v587 = vshll.u32 %v578, %v585
    %v588 = vshrl.u32 %v570, %v586
    %v589 = vor.u32 %v587, %v588
    %v590 = vsub.s32 4294967266, %v585
    %v591 = vadd.s32 %v590, 127
    %v592 = vshll.u32 %v591, 23
    %v593 = vor.u32 4788187, %v592
    %v594 = vand.u32 2147483647, %v593
    %v596 = vcvt.s32.f32 %v589
    %v597 = vmul.f32 %v596, %v594
    %v598 = vxor.u32 %v597, 2147483648
    %v599 = vsel %vm516, %v598, %v597
    %v600 = vsub.s32 4, %v576
    %v601 = vsel %vm516, %v600, %v576
    %v602 = vsel %vm515, %v96, %v599
    %v603 = vsel %vm515, 0, %v601
    %v604 = vcosq.f32.pop %v602
    %v605 = vsinq.f32.pop %v602
    %vm606 = vweird.f32 %v96
    %v607 = vadd.s32 %v603, 3
    %v608 = vand.u32 %v607, 3
    %vm609 = vcmp.lt.s32.totalorder %v608, 2
    %vm610 = vcmp.eq.s32.totalorder %v608, 0
    %v611 = vxor.u32 %v605, 2147483648
    %v612 = vsel %vm610, %v604, %v611
    %vm613 = vcmp.eq.s32.totalorder %v608, 2
    %v614 = vxor.u32 %v604, 2147483648
    %v615 = vsel %vm613, %v614, %v605
    %v616 = vsel %vm609, %v612, %v615
    %v617 = vsel %vm606, nan, %v616
    %v618 = vand.u32 2147483647, %v97
    %vm619 = vcmp.le.f32.partialorder %v618, 0.7853982
    %vm620 = vcmp.lt.s32.totalorder %v97, 0
    %v621 = vand.u32 %v97, 2139095040
    %v622 = vshrl.u32 %v621, 23
    %v623 = vsub.s32 %v622, 127
    %v624 = vand.u32 2147483647, %v97
    %v625 = vand.u32 %v624, 8388607
    %v626 = vor.u32 %v625, 8388608
    %v627 = vsub.s32 0, %v626
    %v628 = vadd.s32 %v623, 1
    %vm629 = vcmp.gt.s32.totalorder %v628, 0
    %v630 = vsel %vm629, %v628, 0
    %v631 = vshrl.u32 %v630, 5
    %v632 = vand.u32 %v630, 31
    %v633 = vsub.s32 32, %v632
    %v634 = vshrl.u32 683565275, %v633
    %v635 = vshll.u32 683565275, %v632
    %v636 = vshrl.u32 2475754826, %v633
    %v637 = vor.u32 %v635, %v636
    %v638 = vshll.u32 2475754826, %v632
    %v639 = vshrl.u32 2131351028, %v633
    %v640 = vor.u32 %v638, %v639
    %v641 = vshll.u32 2131351028, %v632
    %v642 = vshrl.u32 2102212464, %v633
    %v643 = vor.u32 %v641, %v642
    %v644 = vshll.u32 2102212464, %v632
    %v645 = vshrl.u32 920167782, %v633
    %v646 = vor.u32 %v644, %v645
    %v647 = vshll.u32 920167782, %v632
    %v648 = vshrl.u32 1326507024, %v633
    %v649 = vor.u32 %v647, %v648
    %vm650 = vcmp.lt.s32.totalorder %v631, 1
    %vm651 = vcmp.lt.s32.totalorder %v631, 2
    %vm652 = vcmp.lt.s32.totalorder %v631, 3
    %vm653 = vcmp.lt.s32.totalorder %v631, 4
    %v654 = vsel %vm650, %v634, %v637
    %v655 = vsel %vm653, %v643, 2102212464
    %v656 = vsel %vm652, %v640, %v655
    %v657 = vsel %vm651, %v654, %v656
    %v658 = vsel %vm650, %v637, %v640
    %v659 = vsel %vm653, %v646, 920167782
    %v660 = vsel %vm652, %v643, %v659
    %v661 = vsel %vm651, %v658, %v660
    %v662 = vsel %vm650, %v640, %v643
    %v663 = vsel %vm653, %v649, 1326507024
    %v664 = vsel %vm652, %v646, %v663
    %v665 = vsel %vm651, %v662, %v664
    %v666 = vshll.u32 %v626, 8
    %v667 = vmul.u32.u64.compose %v666, %v665
    %v668 = vextract.low.u32 %v667
    %v669 = vextract.high.u32 %v667
    %v670 = vmul.u32.u64.compose %v666, %v661
    %v671 = vextract.low.u32 %v670
    %v672 = vextract.high.u32 %v670
    %v673 = vmul.u32 %v666, %v657
    %v674 = vadd.s32 %v669, %v671
    %vm675 = vc.u32 %v669, %v671
    %v676 = vadd.s32 %v672, 1
    %v677 = vsel %vm675, %v676, %v672
    %v678 = vadd.s32 %v673, %v677
    %v679 = vadd.s32 %v678, 536870912
    %v680 = vshrl.u32 %v679, 30
    %v681 = vshll.u32 %v680, 30
    %v682 = vsub.s32 %v678, %v681
    %vm683 = vcmp.lt.s32.totalorder %v682, 0
    %v684 = vsub.s32 0, %v682
    %v685 = vsel %vm683, %v684, %v682
    %v686 = vclz %v685
    %v687 = vsub.s32 %v686, 2
    %vm688 = vcmp.gt.s32.totalorder 0, %v687
    %v689 = vsel %vm688, 0, %v687
    %v690 = vsub.s32 32, %v689
    %v691 = vshll.u32 %v682, %v689
    %v692 = vshrl.u32 %v674, %v690
    %v693 = vor.u32 %v691, %v692
    %v694 = vsub.s32 4294967266, %v689
    %v695 = vadd.s32 %v694, 127
    %v696 = vshll.u32 %v695, 23
    %v697 = vor.u32 4788187, %v696
    %v698 = vand.u32 2147483647, %v697
    %v700 = vcvt.s32.f32 %v693
    %v701 = vmul.f32 %v700, %v698
    %v702 = vxor.u32 %v701, 2147483648
    %v703 = vsel %vm620, %v702, %v701
    %v704 = vsub.s32 4, %v680
    %v705 = vsel %vm620, %v704, %v680
    %v706 = vsel %vm619, %v97, %v703
    %v707 = vsel %vm619, 0, %v705
    %v708 = vcosq.f32.pop %v706
    %v709 = vsinq.f32.pop %v706
    %vm710 = vweird.f32 %v97
    %v711 = vadd.s32 %v707, 3
    %v712 = vand.u32 %v711, 3
    %vm713 = vcmp.lt.s32.totalorder %v712, 2
    %vm714 = vcmp.eq.s32.totalorder %v712, 0
    %v715 = vxor.u32 %v709, 2147483648
    %v716 = vsel %vm714, %v708, %v715
    %vm717 = vcmp.eq.s32.totalorder %v712, 2
    %v718 = vxor.u32 %v708, 2147483648
    %v719 = vsel %vm717, %v718, %v709
    %v720 = vsel %vm713, %v716, %v719
    %v721 = vsel %vm710, nan, %v720
    %v722 = vand.u32 2147483647, %v92
    %vm723 = vcmp.le.f32.partialorder %v722, 0.7853982
    %vm724 = vcmp.lt.s32.totalorder %v92, 0
    %v725 = vand.u32 %v92, 2139095040
    %v726 = vshrl.u32 %v725, 23
    %v727 = vsub.s32 %v726, 127
    %v728 = vand.u32 2147483647, %v92
    %v729 = vand.u32 %v728, 8388607
    %v730 = vor.u32 %v729, 8388608
    %v731 = vsub.s32 0, %v730
    %v732 = vadd.s32 %v727, 1
    %vm733 = vcmp.gt.s32.totalorder %v732, 0
    %v734 = vsel %vm733, %v732, 0
    %v735 = vshrl.u32 %v734, 5
    %v736 = vand.u32 %v734, 31
    %v737 = vsub.s32 32, %v736
    %v738 = vshrl.u32 683565275, %v737
    %v739 = vshll.u32 683565275, %v736
    %v740 = vshrl.u32 2475754826, %v737
    %v741 = vor.u32 %v739, %v740
    %v742 = vshll.u32 2475754826, %v736
    %v743 = vshrl.u32 2131351028, %v737
    %v744 = vor.u32 %v742, %v743
    %v745 = vshll.u32 2131351028, %v736
    %v746 = vshrl.u32 2102212464, %v737
    %v747 = vor.u32 %v745, %v746
    %v748 = vshll.u32 2102212464, %v736
    %v749 = vshrl.u32 920167782, %v737
    %v750 = vor.u32 %v748, %v749
    %v751 = vshll.u32 920167782, %v736
    %v752 = vshrl.u32 1326507024, %v737
    %v753 = vor.u32 %v751, %v752
    %vm754 = vcmp.lt.s32.totalorder %v735, 1
    %vm755 = vcmp.lt.s32.totalorder %v735, 2
    %vm756 = vcmp.lt.s32.totalorder %v735, 3
    %vm757 = vcmp.lt.s32.totalorder %v735, 4
    %v758 = vsel %vm754, %v738, %v741
    %v759 = vsel %vm757, %v747, 2102212464
    %v760 = vsel %vm756, %v744, %v759
    %v761 = vsel %vm755, %v758, %v760
    %v762 = vsel %vm754, %v741, %v744
    %v763 = vsel %vm757, %v750, 920167782
    %v764 = vsel %vm756, %v747, %v763
    %v765 = vsel %vm755, %v762, %v764
    %v766 = vsel %vm754, %v744, %v747
    %v767 = vsel %vm757, %v753, 1326507024
    %v768 = vsel %vm756, %v750, %v767
    %v769 = vsel %vm755, %v766, %v768
    %v770 = vshll.u32 %v730, 8
    %v771 = vmul.u32.u64.compose %v770, %v769
    %v772 = vextract.low.u32 %v771
    %v773 = vextract.high.u32 %v771
    %v774 = vmul.u32.u64.compose %v770, %v765
    %v775 = vextract.low.u32 %v774
    %v776 = vextract.high.u32 %v774
    %v777 = vmul.u32 %v770, %v761
    %v778 = vadd.s32 %v773, %v775
    %vm779 = vc.u32 %v773, %v775
    %v780 = vadd.s32 %v776, 1
    %v781 = vsel %vm779, %v780, %v776
    %v782 = vadd.s32 %v777, %v781
    %v783 = vadd.s32 %v782, 536870912
    %v784 = vshrl.u32 %v783, 30
    %v785 = vshll.u32 %v784, 30
    %v786 = vsub.s32 %v782, %v785
    %vm787 = vcmp.lt.s32.totalorder %v786, 0
    %v788 = vsub.s32 0, %v786
    %v789 = vsel %vm787, %v788, %v786
    %v790 = vclz %v789
    %v791 = vsub.s32 %v790, 2
    %vm792 = vcmp.gt.s32.totalorder 0, %v791
    %v793 = vsel %vm792, 0, %v791
    %v794 = vsub.s32 32, %v793
    %v795 = vshll.u32 %v786, %v793
    %v796 = vshrl.u32 %v778, %v794
    %v797 = vor.u32 %v795, %v796
    %v798 = vsub.s32 4294967266, %v793
    %v799 = vadd.s32 %v798, 127
    %v800 = vshll.u32 %v799, 23
    %v801 = vor.u32 4788187, %v800
    %v802 = vand.u32 2147483647, %v801
    %v804 = vcvt.s32.f32 %v797
    %v805 = vmul.f32 %v804, %v802
    %v806 = vxor.u32 %v805, 2147483648
    %v807 = vsel %vm724, %v806, %v805
    %v808 = vsub.s32 4, %v784
    %v809 = vsel %vm724, %v808, %v784
    %v810 = vsel %vm723, %v92, %v807
    %v811 = vsel %vm723, 0, %v809
    %v812 = vcosq.f32.pop %v810
    %v813 = vsinq.f32.pop %v810
    %vm814 = vweird.f32 %v92
    %v815 = vand.u32 %v811, 3
    %vm816 = vcmp.lt.s32.totalorder %v815, 2
    %vm817 = vcmp.eq.s32.totalorder %v815, 0
    %v818 = vxor.u32 %v813, 2147483648
    %v819 = vsel %vm817, %v812, %v818
    %vm820 = vcmp.eq.s32.totalorder %v815, 2
    %v821 = vxor.u32 %v812, 2147483648
    %v822 = vsel %vm820, %v821, %v813
    %v823 = vsel %vm816, %v819, %v822
    %v824 = vsel %vm814, nan, %v823
    %v825 = vand.u32 2147483647, %v93
    %vm826 = vcmp.le.f32.partialorder %v825, 0.7853982
    %vm827 = vcmp.lt.s32.totalorder %v93, 0
    %v828 = vand.u32 %v93, 2139095040
    %v829 = vshrl.u32 %v828, 23
    %v830 = vsub.s32 %v829, 127
    %v831 = vand.u32 2147483647, %v93
    %v832 = vand.u32 %v831, 8388607
    %v833 = vor.u32 %v832, 8388608
    %v834 = vsub.s32 0, %v833
    %v835 = vadd.s32 %v830, 1
    %vm836 = vcmp.gt.s32.totalorder %v835, 0
    %v837 = vsel %vm836, %v835, 0
    %v838 = vshrl.u32 %v837, 5
    %v839 = vand.u32 %v837, 31
    %v840 = vsub.s32 32, %v839
    %v841 = vshrl.u32 683565275, %v840
    %v842 = vshll.u32 683565275, %v839
    %v843 = vshrl.u32 2475754826, %v840
    %v844 = vor.u32 %v842, %v843
    %v845 = vshll.u32 2475754826, %v839
    %v846 = vshrl.u32 2131351028, %v840
    %v847 = vor.u32 %v845, %v846
    %v848 = vshll.u32 2131351028, %v839
    %v849 = vshrl.u32 2102212464, %v840
    %v850 = vor.u32 %v848, %v849
    %v851 = vshll.u32 2102212464, %v839
    %v852 = vshrl.u32 920167782, %v840
    %v853 = vor.u32 %v851, %v852
    %v854 = vshll.u32 920167782, %v839
    %v855 = vshrl.u32 1326507024, %v840
    %v856 = vor.u32 %v854, %v855
    %vm857 = vcmp.lt.s32.totalorder %v838, 1
    %vm858 = vcmp.lt.s32.totalorder %v838, 2
    %vm859 = vcmp.lt.s32.totalorder %v838, 3
    %vm860 = vcmp.lt.s32.totalorder %v838, 4
    %v861 = vsel %vm857, %v841, %v844
    %v862 = vsel %vm860, %v850, 2102212464
    %v863 = vsel %vm859, %v847, %v862
    %v864 = vsel %vm858, %v861, %v863
    %v865 = vsel %vm857, %v844, %v847
    %v866 = vsel %vm860, %v853, 920167782
    %v867 = vsel %vm859, %v850, %v866
    %v868 = vsel %vm858, %v865, %v867
    %v869 = vsel %vm857, %v847, %v850
    %v870 = vsel %vm860, %v856, 1326507024
    %v871 = vsel %vm859, %v853, %v870
    %v872 = vsel %vm858, %v869, %v871
    %v873 = vshll.u32 %v833, 8
    %v874 = vmul.u32.u64.compose %v873, %v872
    %v875 = vextract.low.u32 %v874
    %v876 = vextract.high.u32 %v874
    %v877 = vmul.u32.u64.compose %v873, %v868
    %v878 = vextract.low.u32 %v877
    %v879 = vextract.high.u32 %v877
    %v880 = vmul.u32 %v873, %v864
    %v881 = vadd.s32 %v876, %v878
    %vm882 = vc.u32 %v876, %v878
    %v883 = vadd.s32 %v879, 1
    %v884 = vsel %vm882, %v883, %v879
    %v885 = vadd.s32 %v880, %v884
    %v886 = vadd.s32 %v885, 536870912
    %v887 = vshrl.u32 %v886, 30
    %v888 = vshll.u32 %v887, 30
    %v889 = vsub.s32 %v885, %v888
    %vm890 = vcmp.lt.s32.totalorder %v889, 0
    %v891 = vsub.s32 0, %v889
    %v892 = vsel %vm890, %v891, %v889
    %v893 = vclz %v892
    %v894 = vsub.s32 %v893, 2
    %vm895 = vcmp.gt.s32.totalorder 0, %v894
    %v896 = vsel %vm895, 0, %v894
    %v897 = vsub.s32 32, %v896
    %v898 = vshll.u32 %v889, %v896
    %v899 = vshrl.u32 %v881, %v897
    %v900 = vor.u32 %v898, %v899
    %v901 = vsub.s32 4294967266, %v896
    %v902 = vadd.s32 %v901, 127
    %v903 = vshll.u32 %v902, 23
    %v904 = vor.u32 4788187, %v903
    %v905 = vand.u32 2147483647, %v904
    %v907 = vcvt.s32.f32 %v900
    %v908 = vmul.f32 %v907, %v905
    %v909 = vxor.u32 %v908, 2147483648
    %v910 = vsel %vm827, %v909, %v908
    %v911 = vsub.s32 4, %v887
    %v912 = vsel %vm827, %v911, %v887
    %v913 = vsel %vm826, %v93, %v910
    %v914 = vsel %vm826, 0, %v912
    %v915 = vcosq.f32.pop %v913
    %v916 = vsinq.f32.pop %v913
    %vm917 = vweird.f32 %v93
    %v918 = vand.u32 %v914, 3
    %vm919 = vcmp.lt.s32.totalorder %v918, 2
    %vm920 = vcmp.eq.s32.totalorder %v918, 0
    %v921 = vxor.u32 %v916, 2147483648
    %v922 = vsel %vm920, %v915, %v921
    %vm923 = vcmp.eq.s32.totalorder %v918, 2
    %v924 = vxor.u32 %v915, 2147483648
    %v925 = vsel %vm923, %v924, %v916
    %v926 = vsel %vm919, %v922, %v925
    %v927 = vsel %vm917, nan, %v926
    %v928 = vand.u32 2147483647, %v94
    %vm929 = vcmp.le.f32.partialorder %v928, 0.7853982
    %vm930 = vcmp.lt.s32.totalorder %v94, 0
    %v931 = vand.u32 %v94, 2139095040
    %v932 = vshrl.u32 %v931, 23
    %v933 = vsub.s32 %v932, 127
    %v934 = vand.u32 2147483647, %v94
    %v935 = vand.u32 %v934, 8388607
    %v936 = vor.u32 %v935, 8388608
    %v937 = vsub.s32 0, %v936
    %v938 = vadd.s32 %v933, 1
    %vm939 = vcmp.gt.s32.totalorder %v938, 0
    %v940 = vsel %vm939, %v938, 0
    %v941 = vshrl.u32 %v940, 5
    %v942 = vand.u32 %v940, 31
    %v943 = vsub.s32 32, %v942
    %v944 = vshrl.u32 683565275, %v943
    %v945 = vshll.u32 683565275, %v942
    %v946 = vshrl.u32 2475754826, %v943
    %v947 = vor.u32 %v945, %v946
    %v948 = vshll.u32 2475754826, %v942
    %v949 = vshrl.u32 2131351028, %v943
    %v950 = vor.u32 %v948, %v949
    %v951 = vshll.u32 2131351028, %v942
    %v952 = vshrl.u32 2102212464, %v943
    %v953 = vor.u32 %v951, %v952
    %v954 = vshll.u32 2102212464, %v942
    %v955 = vshrl.u32 920167782, %v943
    %v956 = vor.u32 %v954, %v955
    %v957 = vshll.u32 920167782, %v942
    %v958 = vshrl.u32 1326507024, %v943
    %v959 = vor.u32 %v957, %v958
    %vm960 = vcmp.lt.s32.totalorder %v941, 1
    %vm961 = vcmp.lt.s32.totalorder %v941, 2
    %vm962 = vcmp.lt.s32.totalorder %v941, 3
    %vm963 = vcmp.lt.s32.totalorder %v941, 4
    %v964 = vsel %vm960, %v944, %v947
    %v965 = vsel %vm963, %v953, 2102212464
    %v966 = vsel %vm962, %v950, %v965
    %v967 = vsel %vm961, %v964, %v966
    %v968 = vsel %vm960, %v947, %v950
    %v969 = vsel %vm963, %v956, 920167782
    %v970 = vsel %vm962, %v953, %v969
    %v971 = vsel %vm961, %v968, %v970
    %v972 = vsel %vm960, %v950, %v953
    %v973 = vsel %vm963, %v959, 1326507024
    %v974 = vsel %vm962, %v956, %v973
    %v975 = vsel %vm961, %v972, %v974
    %v976 = vshll.u32 %v936, 8
    %v977 = vmul.u32.u64.compose %v976, %v975
    %v978 = vextract.low.u32 %v977
    %v979 = vextract.high.u32 %v977
    %v980 = vmul.u32.u64.compose %v976, %v971
    %v981 = vextract.low.u32 %v980
    %v982 = vextract.high.u32 %v980
    %v983 = vmul.u32 %v976, %v967
    %v984 = vadd.s32 %v979, %v981
    %vm985 = vc.u32 %v979, %v981
    %v986 = vadd.s32 %v982, 1
    %v987 = vsel %vm985, %v986, %v982
    %v988 = vadd.s32 %v983, %v987
    %v989 = vadd.s32 %v988, 536870912
    %v990 = vshrl.u32 %v989, 30
    %v991 = vshll.u32 %v990, 30
    %v992 = vsub.s32 %v988, %v991
    %vm993 = vcmp.lt.s32.totalorder %v992, 0
    %v994 = vsub.s32 0, %v992
    %v995 = vsel %vm993, %v994, %v992
    %v996 = vclz %v995
    %v997 = vsub.s32 %v996, 2
    %vm998 = vcmp.gt.s32.totalorder 0, %v997
    %v999 = vsel %vm998, 0, %v997
    %v1000 = vsub.s32 32, %v999
    %v1001 = vshll.u32 %v992, %v999
    %v1002 = vshrl.u32 %v984, %v1000
    %v1003 = vor.u32 %v1001, %v1002
    %v1004 = vsub.s32 4294967266, %v999
    %v1005 = vadd.s32 %v1004, 127
    %v1006 = vshll.u32 %v1005, 23
    %v1007 = vor.u32 4788187, %v1006
    %v1008 = vand.u32 2147483647, %v1007
    %v1010 = vcvt.s32.f32 %v1003
    %v1011 = vmul.f32 %v1010, %v1008
    %v1012 = vxor.u32 %v1011, 2147483648
    %v1013 = vsel %vm930, %v1012, %v1011
    %v1014 = vsub.s32 4, %v990
    %v1015 = vsel %vm930, %v1014, %v990
    %v1016 = vsel %vm929, %v94, %v1013
    %v1017 = vsel %vm929, 0, %v1015
    %v1018 = vcosq.f32.pop %v1016
    %v1019 = vsinq.f32.pop %v1016
    %vm1020 = vweird.f32 %v94
    %v1021 = vand.u32 %v1017, 3
    %vm1022 = vcmp.lt.s32.totalorder %v1021, 2
    %vm1023 = vcmp.eq.s32.totalorder %v1021, 0
    %v1024 = vxor.u32 %v1019, 2147483648
    %v1025 = vsel %vm1023, %v1018, %v1024
    %vm1026 = vcmp.eq.s32.totalorder %v1021, 2
    %v1027 = vxor.u32 %v1018, 2147483648
    %v1028 = vsel %vm1026, %v1027, %v1019
    %v1029 = vsel %vm1022, %v1025, %v1028
    %v1030 = vsel %vm1020, nan, %v1029
    %v1031 = vand.u32 2147483647, %v95
    %vm1032 = vcmp.le.f32.partialorder %v1031, 0.7853982
    %vm1033 = vcmp.lt.s32.totalorder %v95, 0
    %v1034 = vand.u32 %v95, 2139095040
    %v1035 = vshrl.u32 %v1034, 23
    %v1036 = vsub.s32 %v1035, 127
    %v1037 = vand.u32 2147483647, %v95
    %v1038 = vand.u32 %v1037, 8388607
    %v1039 = vor.u32 %v1038, 8388608
    %v1040 = vsub.s32 0, %v1039
    %v1041 = vadd.s32 %v1036, 1
    %vm1042 = vcmp.gt.s32.totalorder %v1041, 0
    %v1043 = vsel %vm1042, %v1041, 0
    %v1044 = vshrl.u32 %v1043, 5
    %v1045 = vand.u32 %v1043, 31
    %v1046 = vsub.s32 32, %v1045
    %v1047 = vshrl.u32 683565275, %v1046
    %v1048 = vshll.u32 683565275, %v1045
    %v1049 = vshrl.u32 2475754826, %v1046
    %v1050 = vor.u32 %v1048, %v1049
    %v1051 = vshll.u32 2475754826, %v1045
    %v1052 = vshrl.u32 2131351028, %v1046
    %v1053 = vor.u32 %v1051, %v1052
    %v1054 = vshll.u32 2131351028, %v1045
    %v1055 = vshrl.u32 2102212464, %v1046
    %v1056 = vor.u32 %v1054, %v1055
    %v1057 = vshll.u32 2102212464, %v1045
    %v1058 = vshrl.u32 920167782, %v1046
    %v1059 = vor.u32 %v1057, %v1058
    %v1060 = vshll.u32 920167782, %v1045
    %v1061 = vshrl.u32 1326507024, %v1046
    %v1062 = vor.u32 %v1060, %v1061
    %vm1063 = vcmp.lt.s32.totalorder %v1044, 1
    %vm1064 = vcmp.lt.s32.totalorder %v1044, 2
    %vm1065 = vcmp.lt.s32.totalorder %v1044, 3
    %vm1066 = vcmp.lt.s32.totalorder %v1044, 4
    %v1067 = vsel %vm1063, %v1047, %v1050
    %v1068 = vsel %vm1066, %v1056, 2102212464
    %v1069 = vsel %vm1065, %v1053, %v1068
    %v1070 = vsel %vm1064, %v1067, %v1069
    %v1071 = vsel %vm1063, %v1050, %v1053
    %v1072 = vsel %vm1066, %v1059, 920167782
    %v1073 = vsel %vm1065, %v1056, %v1072
    %v1074 = vsel %vm1064, %v1071, %v1073
    %v1075 = vsel %vm1063, %v1053, %v1056
    %v1076 = vsel %vm1066, %v1062, 1326507024
    %v1077 = vsel %vm1065, %v1059, %v1076
    %v1078 = vsel %vm1064, %v1075, %v1077
    %v1079 = vshll.u32 %v1039, 8
    %v1080 = vmul.u32.u64.compose %v1079, %v1078
    %v1081 = vextract.low.u32 %v1080
    %v1082 = vextract.high.u32 %v1080
    %v1083 = vmul.u32.u64.compose %v1079, %v1074
    %v1084 = vextract.low.u32 %v1083
    %v1085 = vextract.high.u32 %v1083
    %v1086 = vmul.u32 %v1079, %v1070
    %v1087 = vadd.s32 %v1082, %v1084
    %vm1088 = vc.u32 %v1082, %v1084
    %v1089 = vadd.s32 %v1085, 1
    %v1090 = vsel %vm1088, %v1089, %v1085
    %v1091 = vadd.s32 %v1086, %v1090
    %v1092 = vadd.s32 %v1091, 536870912
    %v1093 = vshrl.u32 %v1092, 30
    %v1094 = vshll.u32 %v1093, 30
    %v1095 = vsub.s32 %v1091, %v1094
    %vm1096 = vcmp.lt.s32.totalorder %v1095, 0
    %v1097 = vsub.s32 0, %v1095
    %v1098 = vsel %vm1096, %v1097, %v1095
    %v1099 = vclz %v1098
    %v1100 = vsub.s32 %v1099, 2
    %vm1101 = vcmp.gt.s32.totalorder 0, %v1100
    %v1102 = vsel %vm1101, 0, %v1100
    %v1103 = vsub.s32 32, %v1102
    %v1104 = vshll.u32 %v1095, %v1102
    %v1105 = vshrl.u32 %v1087, %v1103
    %v1106 = vor.u32 %v1104, %v1105
    %v1107 = vsub.s32 4294967266, %v1102
    %v1108 = vadd.s32 %v1107, 127
    %v1109 = vshll.u32 %v1108, 23
    %v1110 = vor.u32 4788187, %v1109
    %v1111 = vand.u32 2147483647, %v1110
    %v1113 = vcvt.s32.f32 %v1106
    %v1114 = vmul.f32 %v1113, %v1111
    %v1115 = vxor.u32 %v1114, 2147483648
    %v1116 = vsel %vm1033, %v1115, %v1114
    %v1117 = vsub.s32 4, %v1093
    %v1118 = vsel %vm1033, %v1117, %v1093
    %v1119 = vsel %vm1032, %v95, %v1116
    %v1120 = vsel %vm1032, 0, %v1118
    %v1121 = vcosq.f32.pop %v1119
    %v1122 = vsinq.f32.pop %v1119
    %vm1123 = vweird.f32 %v95
    %v1124 = vand.u32 %v1120, 3
    %vm1125 = vcmp.lt.s32.totalorder %v1124, 2
    %vm1126 = vcmp.eq.s32.totalorder %v1124, 0
    %v1127 = vxor.u32 %v1122, 2147483648
    %v1128 = vsel %vm1126, %v1121, %v1127
    %vm1129 = vcmp.eq.s32.totalorder %v1124, 2
    %v1130 = vxor.u32 %v1121, 2147483648
    %v1131 = vsel %vm1129, %v1130, %v1122
    %v1132 = vsel %vm1125, %v1128, %v1131
    %v1133 = vsel %vm1123, nan, %v1132
    %v1134 = vand.u32 2147483647, %v96
    %vm1135 = vcmp.le.f32.partialorder %v1134, 0.7853982
    %vm1136 = vcmp.lt.s32.totalorder %v96, 0
    %v1137 = vand.u32 %v96, 2139095040
    %v1138 = vshrl.u32 %v1137, 23
    %v1139 = vsub.s32 %v1138, 127
    %v1140 = vand.u32 2147483647, %v96
    %v1141 = vand.u32 %v1140, 8388607
    %v1142 = vor.u32 %v1141, 8388608
    %v1143 = vsub.s32 0, %v1142
    %v1144 = vadd.s32 %v1139, 1
    %vm1145 = vcmp.gt.s32.totalorder %v1144, 0
    %v1146 = vsel %vm1145, %v1144, 0
    %v1147 = vshrl.u32 %v1146, 5
    %v1148 = vand.u32 %v1146, 31
    %v1149 = vsub.s32 32, %v1148
    %v1150 = vshrl.u32 683565275, %v1149
    %v1151 = vshll.u32 683565275, %v1148
    %v1152 = vshrl.u32 2475754826, %v1149
    %v1153 = vor.u32 %v1151, %v1152
    %v1154 = vshll.u32 2475754826, %v1148
    %v1155 = vshrl.u32 2131351028, %v1149
    %v1156 = vor.u32 %v1154, %v1155
    %v1157 = vshll.u32 2131351028, %v1148
    %v1158 = vshrl.u32 2102212464, %v1149
    %v1159 = vor.u32 %v1157, %v1158
    %v1160 = vshll.u32 2102212464, %v1148
    %v1161 = vshrl.u32 920167782, %v1149
    %v1162 = vor.u32 %v1160, %v1161
    %v1163 = vshll.u32 920167782, %v1148
    %v1164 = vshrl.u32 1326507024, %v1149
    %v1165 = vor.u32 %v1163, %v1164
    %vm1166 = vcmp.lt.s32.totalorder %v1147, 1
    %vm1167 = vcmp.lt.s32.totalorder %v1147, 2
    %vm1168 = vcmp.lt.s32.totalorder %v1147, 3
    %vm1169 = vcmp.lt.s32.totalorder %v1147, 4
    %v1170 = vsel %vm1166, %v1150, %v1153
    %v1171 = vsel %vm1169, %v1159, 2102212464
    %v1172 = vsel %vm1168, %v1156, %v1171
    %v1173 = vsel %vm1167, %v1170, %v1172
    %v1174 = vsel %vm1166, %v1153, %v1156
    %v1175 = vsel %vm1169, %v1162, 920167782
    %v1176 = vsel %vm1168, %v1159, %v1175
    %v1177 = vsel %vm1167, %v1174, %v1176
    %v1178 = vsel %vm1166, %v1156, %v1159
    %v1179 = vsel %vm1169, %v1165, 1326507024
    %v1180 = vsel %vm1168, %v1162, %v1179
    %v1181 = vsel %vm1167, %v1178, %v1180
    %v1182 = vshll.u32 %v1142, 8
    %v1183 = vmul.u32.u64.compose %v1182, %v1181
    %v1184 = vextract.low.u32 %v1183
    %v1185 = vextract.high.u32 %v1183
    %v1186 = vmul.u32.u64.compose %v1182, %v1177
    %v1187 = vextract.low.u32 %v1186
    %v1188 = vextract.high.u32 %v1186
    %v1189 = vmul.u32 %v1182, %v1173
    %v1190 = vadd.s32 %v1185, %v1187
    %vm1191 = vc.u32 %v1185, %v1187
    %v1192 = vadd.s32 %v1188, 1
    %v1193 = vsel %vm1191, %v1192, %v1188
    %v1194 = vadd.s32 %v1189, %v1193
    %v1195 = vadd.s32 %v1194, 536870912
    %v1196 = vshrl.u32 %v1195, 30
    %v1197 = vshll.u32 %v1196, 30
    %v1198 = vsub.s32 %v1194, %v1197
    %vm1199 = vcmp.lt.s32.totalorder %v1198, 0
    %v1200 = vsub.s32 0, %v1198
    %v1201 = vsel %vm1199, %v1200, %v1198
    %v1202 = vclz %v1201
    %v1203 = vsub.s32 %v1202, 2
    %vm1204 = vcmp.gt.s32.totalorder 0, %v1203
    %v1205 = vsel %vm1204, 0, %v1203
    %v1206 = vsub.s32 32, %v1205
    %v1207 = vshll.u32 %v1198, %v1205
    %v1208 = vshrl.u32 %v1190, %v1206
    %v1209 = vor.u32 %v1207, %v1208
    %v1210 = vsub.s32 4294967266, %v1205
    %v1211 = vadd.s32 %v1210, 127
    %v1212 = vshll.u32 %v1211, 23
    %v1213 = vor.u32 4788187, %v1212
    %v1214 = vand.u32 2147483647, %v1213
    %v1216 = vcvt.s32.f32 %v1209
    %v1217 = vmul.f32 %v1216, %v1214
    %v1218 = vxor.u32 %v1217, 2147483648
    %v1219 = vsel %vm1136, %v1218, %v1217
    %v1220 = vsub.s32 4, %v1196
    %v1221 = vsel %vm1136, %v1220, %v1196
    %v1222 = vsel %vm1135, %v96, %v1219
    %v1223 = vsel %vm1135, 0, %v1221
    %v1224 = vcosq.f32.pop %v1222
    %v1225 = vsinq.f32.pop %v1222
    %vm1226 = vweird.f32 %v96
    %v1227 = vand.u32 %v1223, 3
    %vm1228 = vcmp.lt.s32.totalorder %v1227, 2
    %vm1229 = vcmp.eq.s32.totalorder %v1227, 0
    %v1230 = vxor.u32 %v1225, 2147483648
    %v1231 = vsel %vm1229, %v1224, %v1230
    %vm1232 = vcmp.eq.s32.totalorder %v1227, 2
    %v1233 = vxor.u32 %v1224, 2147483648
    %v1234 = vsel %vm1232, %v1233, %v1225
    %v1235 = vsel %vm1228, %v1231, %v1234
    %v1236 = vsel %vm1226, nan, %v1235
    %v1237 = vand.u32 2147483647, %v97
    %vm1238 = vcmp.le.f32.partialorder %v1237, 0.7853982
    %vm1239 = vcmp.lt.s32.totalorder %v97, 0
    %v1240 = vand.u32 %v97, 2139095040
    %v1241 = vshrl.u32 %v1240, 23
    %v1242 = vsub.s32 %v1241, 127
    %v1243 = vand.u32 2147483647, %v97
    %v1244 = vand.u32 %v1243, 8388607
    %v1245 = vor.u32 %v1244, 8388608
    %v1246 = vsub.s32 0, %v1245
    %v1247 = vadd.s32 %v1242, 1
    %vm1248 = vcmp.gt.s32.totalorder %v1247, 0
    %v1249 = vsel %vm1248, %v1247, 0
    %v1250 = vshrl.u32 %v1249, 5
    %v1251 = vand.u32 %v1249, 31
    %v1252 = vsub.s32 32, %v1251
    %v1253 = vshrl.u32 683565275, %v1252
    %v1254 = vshll.u32 683565275, %v1251
    %v1255 = vshrl.u32 2475754826, %v1252
    %v1256 = vor.u32 %v1254, %v1255
    %v1257 = vshll.u32 2475754826, %v1251
    %v1258 = vshrl.u32 2131351028, %v1252
    %v1259 = vor.u32 %v1257, %v1258
    %v1260 = vshll.u32 2131351028, %v1251
    %v1261 = vshrl.u32 2102212464, %v1252
    %v1262 = vor.u32 %v1260, %v1261
    %v1263 = vshll.u32 2102212464, %v1251
    %v1264 = vshrl.u32 920167782, %v1252
    %v1265 = vor.u32 %v1263, %v1264
    %v1266 = vshll.u32 920167782, %v1251
    %v1267 = vshrl.u32 1326507024, %v1252
    %v1268 = vor.u32 %v1266, %v1267
    %vm1269 = vcmp.lt.s32.totalorder %v1250, 1
    %vm1270 = vcmp.lt.s32.totalorder %v1250, 2
    %vm1271 = vcmp.lt.s32.totalorder %v1250, 3
    %vm1272 = vcmp.lt.s32.totalorder %v1250, 4
    %v1273 = vsel %vm1269, %v1253, %v1256
    %v1274 = vsel %vm1272, %v1262, 2102212464
    %v1275 = vsel %vm1271, %v1259, %v1274
    %v1276 = vsel %vm1270, %v1273, %v1275
    %v1277 = vsel %vm1269, %v1256, %v1259
    %v1278 = vsel %vm1272, %v1265, 920167782
    %v1279 = vsel %vm1271, %v1262, %v1278
    %v1280 = vsel %vm1270, %v1277, %v1279
    %v1281 = vsel %vm1269, %v1259, %v1262
    %v1282 = vsel %vm1272, %v1268, 1326507024
    %v1283 = vsel %vm1271, %v1265, %v1282
    %v1284 = vsel %vm1270, %v1281, %v1283
    %v1285 = vshll.u32 %v1245, 8
    %v1286 = vmul.u32.u64.compose %v1285, %v1284
    %v1287 = vextract.low.u32 %v1286
    %v1288 = vextract.high.u32 %v1286
    %v1289 = vmul.u32.u64.compose %v1285, %v1280
    %v1290 = vextract.low.u32 %v1289
    %v1291 = vextract.high.u32 %v1289
    %v1292 = vmul.u32 %v1285, %v1276
    %v1293 = vadd.s32 %v1288, %v1290
    %vm1294 = vc.u32 %v1288, %v1290
    %v1295 = vadd.s32 %v1291, 1
    %v1296 = vsel %vm1294, %v1295, %v1291
    %v1297 = vadd.s32 %v1292, %v1296
    %v1298 = vadd.s32 %v1297, 536870912
    %v1299 = vshrl.u32 %v1298, 30
    %v1300 = vshll.u32 %v1299, 30
    %v1301 = vsub.s32 %v1297, %v1300
    %vm1302 = vcmp.lt.s32.totalorder %v1301, 0
    %v1303 = vsub.s32 0, %v1301
    %v1304 = vsel %vm1302, %v1303, %v1301
    %v1305 = vclz %v1304
    %v1306 = vsub.s32 %v1305, 2
    %vm1307 = vcmp.gt.s32.totalorder 0, %v1306
    %v1308 = vsel %vm1307, 0, %v1306
    %v1309 = vsub.s32 32, %v1308
    %v1310 = vshll.u32 %v1301, %v1308
    %v1311 = vshrl.u32 %v1293, %v1309
    %v1312 = vor.u32 %v1310, %v1311
    %v1313 = vsub.s32 4294967266, %v1308
    %v1314 = vadd.s32 %v1313, 127
    %v1315 = vshll.u32 %v1314, 23
    %v1316 = vor.u32 4788187, %v1315
    %v1317 = vand.u32 2147483647, %v1316
    %v1319 = vcvt.s32.f32 %v1312
    %v1320 = vmul.f32 %v1319, %v1317
    %v1321 = vxor.u32 %v1320, 2147483648
    %v1322 = vsel %vm1239, %v1321, %v1320
    %v1323 = vsub.s32 4, %v1299
    %v1324 = vsel %vm1239, %v1323, %v1299
    %v1325 = vsel %vm1238, %v97, %v1322
    %v1326 = vsel %vm1238, 0, %v1324
    %v1327 = vcosq.f32.pop %v1325
    %v1328 = vsinq.f32.pop %v1325
    %vm1329 = vweird.f32 %v97
    %v1330 = vand.u32 %v1326, 3
    %vm1331 = vcmp.lt.s32.totalorder %v1330, 2
    %vm1332 = vcmp.eq.s32.totalorder %v1330, 0
    %v1333 = vxor.u32 %v1328, 2147483648
    %v1334 = vsel %vm1332, %v1327, %v1333
    %vm1335 = vcmp.eq.s32.totalorder %v1330, 2
    %v1336 = vxor.u32 %v1327, 2147483648
    %v1337 = vsel %vm1335, %v1336, %v1328
    %v1338 = vsel %vm1331, %v1334, %v1337
    %v1339 = vsel %vm1329, nan, %v1338
    %1346 = vrot.lane.b32.xlu0 %v824, 16
    %v1347 = vpop.permute.xlu0 %1346
    %1348 = vrot.lane.b32.xlu0 %v927, 16
    %v1349 = vpop.permute.xlu0 %1348
    %1350 = vrot.lane.b32.xlu0 %v1030, 16
    %v1351 = vpop.permute.xlu0 %1350
    %1352 = vrot.lane.b32.xlu0 %v1133, 16
    %v1353 = vpop.permute.xlu0 %1352
    %1354 = vrot.lane.b32.xlu0 %v1236, 16
    %v1355 = vpop.permute.xlu0 %1354
    %1356 = vrot.lane.b32.xlu0 %v1339, 16
    %v1357 = vpop.permute.xlu0 %1356
    %vm1364 = vcmask 130048
    %v1365 = vsel %vm1364, %v201, %v1347
    %v1366 = vsel %vm1364, %v305, %v1349
    %v1367 = vsel %vm1364, %v409, %v1351
    %v1368 = vsel %vm1364, %v513, %v1353
    %v1369 = vsel %vm1364, %v617, %v1355
    %v1370 = vsel %vm1364, %v721, %v1357
    %v1371 = vld [vmem:[%s3] sm:$0xff]
    %v1372 = vld [vmem:[%s3 + $0x8] sm:$0xff]
    %v1373 = vld [vmem:[%s3 + $0x10] sm:$0xff]
    %v1374 = vld [vmem:[%s3 + $0x18] sm:$0xff]
    %v1375 = vld [vmem:[%s4] sm:$0x1]
    %v1377 = vlaneseq
    %v1378 = vshrl.u32 %v1377, 7
    %v1379 = vsub.s32 0, %v1378
    %v1380 = vrot.slane %v1375, %v1379
    %vm1382 = vcmask 261120
    %v1384 = vsel %vm1382, %v1365, 0
    %v1387 = vsel %vm1382, %v1366, 0
    %v1390 = vsel %vm1382, %v1367, 0
    %v1393 = vsel %vm1382, %v1368, 0
    %v1396 = vsel %vm1382, %v1369, 0
    %v1399 = vsel %vm1382, %v1370, 0
    %1401 = vmatprep.subr.mxu0 0.0
    %1402 = vmatpush1.msra.mxu0 %v1371
    %1403 = vmatprep.subr.mxu0 0.0
    %1404 = vmatpush1.msra.mxu0 %v1372
    %1405 = vmatprep.subr.mxu0 0.0
    %1406 = vmatpush1.msra.mxu0 %v1373
    %1407 = vmatprep.subr.mxu0 0.0
    %1408 = vmatpush1.msra.mxu0 %v1374
    %1409 = vmatprep.subr.mxu0 0.0
    %1410 = vmatpush1.msra.mxu0 0.0
    %1411 = vmatprep.subr.mxu0 0.0
    %1412 = vmatpush1.msra.mxu0 0.0
    %1413 = vmatprep.subr.mxu0 0.0
    %1414 = vmatpush1.msra.mxu0 0.0
    %1415 = vmatprep.subr.mxu0 0.0
    %1416 = vmatpush1.msra.mxu0 0.0
    %1417 = vmatprep.subr.mxu0 0.0
    %1418 = vmatpush1.msra.mxu0 0.0
    %1419 = vmatprep.subr.mxu0 0.0
    %1420 = vmatpush1.msra.mxu0 0.0
    %1421 = vmatprep.subr.mxu0 0.0
    %1422 = vmatpush1.msra.mxu0 0.0
    %1423 = vmatprep.subr.mxu0 0.0
    %1424 = vmatpush1.msra.mxu0 0.0
    %1425 = vmatprep.subr.mxu0 0.0
    %1426 = vmatpush1.msra.mxu0 0.0
    %1427 = vmatprep.subr.mxu0 0.0
    %1428 = vmatpush1.msra.mxu0 0.0
    %1429 = vmatprep.subr.mxu0 0.0
    %1430 = vmatpush1.msra.mxu0 0.0
    %1431 = vmatprep.subr.mxu0 0.0
    %1432 = vmatpush1.msra.mxu0 0.0
    %1433 = vmatprep.subr.mxu0 0.0
    %1434 = vmatpush1.msra.mxu0 0.0
    %1435 = vmatprep.subr.mxu0 0.0
    %1436 = vmatpush1.msra.mxu0 0.0
    %1437 = vmatprep.subr.mxu0 0.0
    %1438 = vmatpush1.msra.mxu0 0.0
    %1439 = vmatprep.subr.mxu0 0.0
    %1440 = vmatpush1.msra.mxu0 0.0
    %1441 = vmatprep.subr.mxu0 0.0
    %1442 = vmatpush1.msra.mxu0 0.0
    %1443 = vmatprep.subr.mxu0 0.0
    %1444 = vmatpush1.msra.mxu0 0.0
    %1445 = vmatprep.subr.mxu0 0.0
    %1446 = vmatpush1.msra.mxu0 0.0
    %1447 = vmatprep.subr.mxu0 0.0
    %1448 = vmatpush1.msra.mxu0 0.0
    %1449 = vmatprep.subr.mxu0 0.0
    %1450 = vmatpush1.msra.mxu0 0.0
    %1451 = vmatprep.subr.mxu0 0.0
    %1452 = vmatpush1.msra.mxu0 0.0
    %1453 = vmatprep.subr.mxu0 0.0
    %1454 = vmatpush1.msra.mxu0 0.0
    %1455 = vmatprep.subr.mxu0 0.0
    %1456 = vmatpush1.msra.mxu0 0.0
    %1457 = vmatprep.subr.mxu0 0.0
    %1458 = vmatpush1.msra.mxu0 0.0
    %1459 = vmatprep.subr.mxu0 0.0
    %1460 = vmatpush1.msra.mxu0 0.0
    %1461 = vmatprep.subr.mxu0 0.0
    %1462 = vmatpush1.msra.mxu0 0.0
    %1463 = vmatprep.subr.mxu0 0.0
    %1464 = vmatpush1.msra.mxu0 0.0
    %1465 = vmatprep.mubr.f32.mxu0 0.0
    %1466 = vmatmul.mubr.f32.gmra.mrb[0].mxu0 %v1384
    %v1467 = vpop.f32.mrb[0].mxu0
    %v1468 = vadd.f32 %v1380, %v1467
    %v1469 = vpop.f32.mrb[0].mxu0
    %1470 = vmatprep.mubr.f32.mxu0 0.0
    %1471 = vmatmul.mubr.f32.gmra.mrb[0].mxu0 %v1387
    %v1472 = vpop.f32.mrb[0].mxu0
    %v1473 = vadd.f32 %v1380, %v1472
    %v1474 = vpop.f32.mrb[0].mxu0
    %1475 = vmatprep.mubr.f32.mxu0 0.0
    %1476 = vmatmul.mubr.f32.gmra.mrb[0].mxu0 %v1390
    %v1477 = vpop.f32.mrb[0].mxu0
    %v1478 = vadd.f32 %v1380, %v1477
    %v1479 = vpop.f32.mrb[0].mxu0
    %1480 = vmatprep.mubr.f32.mxu0 0.0
    %1481 = vmatmul.mubr.f32.gmra.mrb[0].mxu0 %v1393
    %v1482 = vpop.f32.mrb[0].mxu0
    %v1483 = vadd.f32 %v1380, %v1482
    %v1484 = vpop.f32.mrb[0].mxu0
    %1485 = vmatprep.mubr.f32.mxu0 0.0
    %1486 = vmatmul.mubr.f32.gmra.mrb[0].mxu0 %v1396
    %v1487 = vpop.f32.mrb[0].mxu0
    %v1488 = vadd.f32 %v1380, %v1487
    %v1489 = vpop.f32.mrb[0].mxu0
    %1490 = vmatprep.mubr.f32.mxu0 0.0
    %1491 = vmatmul.mubr.f32.gmra.mrb[0].mxu0 %v1399
    %v1492 = vpop.f32.mrb[0].mxu0
    %v1493 = vadd.f32 %v1380, %v1492
    %v1494 = vpop.f32.mrb[0].mxu0
    %1495 = vdwg.mxu0
    %v1496 = vmax.f32 %v1468, 0.0
    %v1497 = vmax.f32 %v1473, 0.0
    %v1498 = vmax.f32 %v1478, 0.0
    %v1499 = vmax.f32 %v1483, 0.0
    %v1500 = vmax.f32 %v1488, 0.0
    %v1501 = vmax.f32 %v1493, 0.0
    %v1502 = vsel %vm1382, %v1496, 0.0
    %1503 = vadd.xlane.f32.xlu0 %v1502
    %v1504 = vpop.xlane.xlu0 %1503
    %v1505 = vsel %vm1382, %v1497, 0.0
    %1506 = vadd.xlane.f32.xlu0 %v1505
    %v1507 = vpop.xlane.xlu0 %1506
    %v1508 = vsel %vm1382, %v1498, 0.0
    %1509 = vadd.xlane.f32.xlu0 %v1508
    %v1510 = vpop.xlane.xlu0 %1509
    %v1511 = vsel %vm1382, %v1499, 0.0
    %1512 = vadd.xlane.f32.xlu0 %v1511
    %v1513 = vpop.xlane.xlu0 %1512
    %v1514 = vsel %vm1382, %v1500, 0.0
    %1515 = vadd.xlane.f32.xlu0 %v1514
    %v1516 = vpop.xlane.xlu0 %1515
    %v1517 = vsel %vm1382, %v1501, 0.0
    %1518 = vadd.xlane.f32.xlu0 %v1517
    %v1519 = vpop.xlane.xlu0 %1518
    %v1520 = vrcp.pop 32.0
    %v1521 = vmul.f32 %v1504, %v1520
    %v1522 = vmul.f32 %v1507, %v1520
    %v1523 = vmul.f32 %v1510, %v1520
    %v1524 = vmul.f32 %v1513, %v1520
    %v1525 = vmul.f32 %v1516, %v1520
    %v1526 = vmul.f32 %v1519, %v1520
    %v1527 = vsub.f32 %v1496, %v1521
    %v1528 = vsub.f32 %v1497, %v1522
    %v1529 = vsub.f32 %v1498, %v1523
    %v1530 = vsub.f32 %v1499, %v1524
    %v1531 = vsub.f32 %v1500, %v1525
    %v1532 = vsub.f32 %v1501, %v1526
    %v1533 = vmul.f32 %v1527, %v1527
    %v1534 = vmul.f32 %v1528, %v1528
    %v1535 = vmul.f32 %v1529, %v1529
    %v1536 = vmul.f32 %v1530, %v1530
    %v1537 = vmul.f32 %v1531, %v1531
    %v1538 = vmul.f32 %v1532, %v1532
    %v1539 = vsel %vm1382, %v1533, 0.0
    %1540 = vadd.xlane.f32.xlu0 %v1539
    %v1541 = vpop.xlane.xlu0 %1540
    %v1542 = vsel %vm1382, %v1534, 0.0
    %1543 = vadd.xlane.f32.xlu0 %v1542
    %v1544 = vpop.xlane.xlu0 %1543
    %v1545 = vsel %vm1382, %v1535, 0.0
    %1546 = vadd.xlane.f32.xlu0 %v1545
    %v1547 = vpop.xlane.xlu0 %1546
    %v1548 = vsel %vm1382, %v1536, 0.0
    %1549 = vadd.xlane.f32.xlu0 %v1548
    %v1550 = vpop.xlane.xlu0 %1549
    %v1551 = vsel %vm1382, %v1537, 0.0
    %1552 = vadd.xlane.f32.xlu0 %v1551
    %v1553 = vpop.xlane.xlu0 %1552
    %v1554 = vsel %vm1382, %v1538, 0.0
    %1555 = vadd.xlane.f32.xlu0 %v1554
    %v1556 = vpop.xlane.xlu0 %1555
    %v1557 = vmul.f32 %v1541, %v1520
    %v1558 = vmul.f32 %v1544, %v1520
    %v1559 = vmul.f32 %v1547, %v1520
    %v1560 = vmul.f32 %v1550, %v1520
    %v1561 = vmul.f32 %v1553, %v1520
    %v1562 = vmul.f32 %v1556, %v1520
    %v1563 = vadd.f32 %v1557, 1e-05
    %v1564 = vadd.f32 %v1558, 1e-05
    %v1565 = vadd.f32 %v1559, 1e-05
    %v1566 = vadd.f32 %v1560, 1e-05
    %v1567 = vadd.f32 %v1561, 1e-05
    %v1568 = vadd.f32 %v1562, 1e-05
    %v1569 = vrsqrt.pop %v1563
    %v1570 = vrsqrt.pop %v1564
    %v1571 = vrsqrt.pop %v1565
    %v1572 = vrsqrt.pop %v1566
    %v1573 = vrsqrt.pop %v1567
    %v1574 = vrsqrt.pop %v1568
    %v1575 = vmul.f32 %v1527, %v1569
    %v1576 = vmul.f32 %v1528, %v1570
    %v1577 = vmul.f32 %v1529, %v1571
    %v1578 = vmul.f32 %v1530, %v1572
    %v1579 = vmul.f32 %v1531, %v1573
    %v1580 = vmul.f32 %v1532, %v1574
    %v1581 = vld [vmem:[%s5] sm:$0x1]
    %v1583 = vlaneseq
    %v1584 = vshrl.u32 %v1583, 7
    %v1585 = vsub.s32 0, %v1584
    %v1586 = vrot.slane %v1581, %v1585
    %v1588 = vmul.f32 %v1575, %v1586
    %v1589 = vmul.f32 %v1576, %v1586
    %v1590 = vmul.f32 %v1577, %v1586
    %v1591 = vmul.f32 %v1578, %v1586
    %v1592 = vmul.f32 %v1579, %v1586
    %v1593 = vmul.f32 %v1580, %v1586
    %v1594 = vld [vmem:[%s6] sm:$0x1]
    %v1596 = vlaneseq
    %v1597 = vshrl.u32 %v1596, 7
    %v1598 = vsub.s32 0, %v1597
    %v1599 = vrot.slane %v1594, %v1598
    %v1601 = vadd.f32 %v1588, %v1599
    %v1602 = vadd.f32 %v1589, %v1599
    %v1603 = vadd.f32 %v1590, %v1599
    %v1604 = vadd.f32 %v1591, %v1599
    %v1605 = vadd.f32 %v1592, %v1599
    %v1606 = vadd.f32 %v1593, %v1599
    %v1607 = vld [vmem:[%s7] sm:$0xff]
    %v1608 = vld [vmem:[%s7 + $0x8] sm:$0xff]
    %v1609 = vld [vmem:[%s7 + $0x10] sm:$0xff]
    %v1610 = vld [vmem:[%s7 + $0x18] sm:$0xff]
    %v1611 = vld [vmem:[%s8] sm:$0x1]
    %v1613 = vlaneseq
    %v1614 = vshrl.u32 %v1613, 7
    %v1615 = vsub.s32 0, %v1614
    %v1616 = vrot.slane %v1611, %v1615
    %v1619 = vsel %vm1382, %v1601, 0
    %v1622 = vsel %vm1382, %v1602, 0
    %v1625 = vsel %vm1382, %v1603, 0
    %v1628 = vsel %vm1382, %v1604, 0
    %v1631 = vsel %vm1382, %v1605, 0
    %v1634 = vsel %vm1382, %v1606, 0
    %1636 = vmatprep.subr.mxu0 0.0
    %1637 = vmatpush1.msra.mxu0 %v1607
    %1638 = vmatprep.subr.mxu0 0.0
    %1639 = vmatpush1.msra.mxu0 %v1608
    %1640 = vmatprep.subr.mxu0 0.0
    %1641 = vmatpush1.msra.mxu0 %v1609
    %1642 = vmatprep.subr.mxu0 0.0
    %1643 = vmatpush1.msra.mxu0 %v1610
    %1644 = vmatprep.subr.mxu0 0.0
    %1645 = vmatpush1.msra.mxu0 0.0
    %1646 = vmatprep.subr.mxu0 0.0
    %1647 = vmatpush1.msra.mxu0 0.0
    %1648 = vmatprep.subr.mxu0 0.0
    %1649 = vmatpush1.msra.mxu0 0.0
    %1650 = vmatprep.subr.mxu0 0.0
    %1651 = vmatpush1.msra.mxu0 0.0
    %1652 = vmatprep.subr.mxu0 0.0
    %1653 = vmatpush1.msra.mxu0 0.0
    %1654 = vmatprep.subr.mxu0 0.0
    %1655 = vmatpush1.msra.mxu0 0.0
    %1656 = vmatprep.subr.mxu0 0.0
    %1657 = vmatpush1.msra.mxu0 0.0
    %1658 = vmatprep.subr.mxu0 0.0
    %1659 = vmatpush1.msra.mxu0 0.0
    %1660 = vmatprep.subr.mxu0 0.0
    %1661 = vmatpush1.msra.mxu0 0.0
    %1662 = vmatprep.subr.mxu0 0.0
    %1663 = vmatpush1.msra.mxu0 0.0
    %1664 = vmatprep.subr.mxu0 0.0
    %1665 = vmatpush1.msra.mxu0 0.0
    %1666 = vmatprep.subr.mxu0 0.0
    %1667 = vmatpush1.msra.mxu0 0.0
    %1668 = vmatprep.subr.mxu0 0.0
    %1669 = vmatpush1.msra.mxu0 0.0
    %1670 = vmatprep.subr.mxu0 0.0
    %1671 = vmatpush1.msra.mxu0 0.0
    %1672 = vmatprep.subr.mxu0 0.0
    %1673 = vmatpush1.msra.mxu0 0.0
    %1674 = vmatprep.subr.mxu0 0.0
    %1675 = vmatpush1.msra.mxu0 0.0
    %1676 = vmatprep.subr.mxu0 0.0
    %1677 = vmatpush1.msra.mxu0 0.0
    %1678 = vmatprep.subr.mxu0 0.0
    %1679 = vmatpush1.msra.mxu0 0.0
    %1680 = vmatprep.subr.mxu0 0.0
    %1681 = vmatpush1.msra.mxu0 0.0
    %1682 = vmatprep.subr.mxu0 0.0
    %1683 = vmatpush1.msra.mxu0 0.0
    %1684 = vmatprep.subr.mxu0 0.0
    %1685 = vmatpush1.msra.mxu0 0.0
    %1686 = vmatprep.subr.mxu0 0.0
    %1687 = vmatpush1.msra.mxu0 0.0
    %1688 = vmatprep.subr.mxu0 0.0
    %1689 = vmatpush1.msra.mxu0 0.0
    %1690 = vmatprep.subr.mxu0 0.0
    %1691 = vmatpush1.msra.mxu0 0.0
    %1692 = vmatprep.subr.mxu0 0.0
    %1693 = vmatpush1.msra.mxu0 0.0
    %1694 = vmatprep.subr.mxu0 0.0
    %1695 = vmatpush1.msra.mxu0 0.0
    %1696 = vmatprep.subr.mxu0 0.0
    %1697 = vmatpush1.msra.mxu0 0.0
    %1698 = vmatprep.subr.mxu0 0.0
    %1699 = vmatpush1.msra.mxu0 0.0
    %1700 = vmatprep.mubr.f32.mxu0 0.0
    %1701 = vmatmul.mubr.f32.gmra.mrb[0].mxu0 %v1619
    %v1702 = vpop.f32.mrb[0].mxu0
    %v1703 = vadd.f32 %v1616, %v1702
    %v1704 = vpop.f32.mrb[0].mxu0
    %1705 = vmatprep.mubr.f32.mxu0 0.0
    %1706 = vmatmul.mubr.f32.gmra.mrb[0].mxu0 %v1622
    %v1707 = vpop.f32.mrb[0].mxu0
    %v1708 = vadd.f32 %v1616, %v1707
    %v1709 = vpop.f32.mrb[0].mxu0
    %1710 = vmatprep.mubr.f32.mxu0 0.0
    %1711 = vmatmul.mubr.f32.gmra.mrb[0].mxu0 %v1625
    %v1712 = vpop.f32.mrb[0].mxu0
    %v1713 = vadd.f32 %v1616, %v1712
    %v1714 = vpop.f32.mrb[0].mxu0
    %1715 = vmatprep.mubr.f32.mxu0 0.0
    %1716 = vmatmul.mubr.f32.gmra.mrb[0].mxu0 %v1628
    %v1717 = vpop.f32.mrb[0].mxu0
    %v1718 = vadd.f32 %v1616, %v1717
    %v1719 = vpop.f32.mrb[0].mxu0
    %1720 = vmatprep.mubr.f32.mxu0 0.0
    %1721 = vmatmul.mubr.f32.gmra.mrb[0].mxu0 %v1631
    %v1722 = vpop.f32.mrb[0].mxu0
    %v1723 = vadd.f32 %v1616, %v1722
    %v1724 = vpop.f32.mrb[0].mxu0
    %1725 = vmatprep.mubr.f32.mxu0 0.0
    %1726 = vmatmul.mubr.f32.gmra.mrb[0].mxu0 %v1634
    %v1727 = vpop.f32.mrb[0].mxu0
    %v1728 = vadd.f32 %v1616, %v1727
    %v1729 = vpop.f32.mrb[0].mxu0
    %1730 = vdwg.mxu0
    %v1731 = vmax.f32 %v1703, 0.0
    %v1732 = vmax.f32 %v1708, 0.0
    %v1733 = vmax.f32 %v1713, 0.0
    %v1734 = vmax.f32 %v1718, 0.0
    %v1735 = vmax.f32 %v1723, 0.0
    %v1736 = vmax.f32 %v1728, 0.0
    %v1737 = vsel %vm1382, %v1731, 0.0
    %1738 = vadd.xlane.f32.xlu0 %v1737
    %v1739 = vpop.xlane.xlu0 %1738
    %v1740 = vsel %vm1382, %v1732, 0.0
    %1741 = vadd.xlane.f32.xlu0 %v1740
    %v1742 = vpop.xlane.xlu0 %1741
    %v1743 = vsel %vm1382, %v1733, 0.0
    %1744 = vadd.xlane.f32.xlu0 %v1743
    %v1745 = vpop.xlane.xlu0 %1744
    %v1746 = vsel %vm1382, %v1734, 0.0
    %1747 = vadd.xlane.f32.xlu0 %v1746
    %v1748 = vpop.xlane.xlu0 %1747
    %v1749 = vsel %vm1382, %v1735, 0.0
    %1750 = vadd.xlane.f32.xlu0 %v1749
    %v1751 = vpop.xlane.xlu0 %1750
    %v1752 = vsel %vm1382, %v1736, 0.0
    %1753 = vadd.xlane.f32.xlu0 %v1752
    %v1754 = vpop.xlane.xlu0 %1753
    %v1755 = vmul.f32 %v1739, %v1520
    %v1756 = vmul.f32 %v1742, %v1520
    %v1757 = vmul.f32 %v1745, %v1520
    %v1758 = vmul.f32 %v1748, %v1520
    %v1759 = vmul.f32 %v1751, %v1520
    %v1760 = vmul.f32 %v1754, %v1520
    %v1761 = vsub.f32 %v1731, %v1755
    %v1762 = vsub.f32 %v1732, %v1756
    %v1763 = vsub.f32 %v1733, %v1757
    %v1764 = vsub.f32 %v1734, %v1758
    %v1765 = vsub.f32 %v1735, %v1759
    %v1766 = vsub.f32 %v1736, %v1760
    %v1767 = vmul.f32 %v1761, %v1761
    %v1768 = vmul.f32 %v1762, %v1762
    %v1769 = vmul.f32 %v1763, %v1763
    %v1770 = vmul.f32 %v1764, %v1764
    %v1771 = vmul.f32 %v1765, %v1765
    %v1772 = vmul.f32 %v1766, %v1766
    %v1773 = vsel %vm1382, %v1767, 0.0
    %1774 = vadd.xlane.f32.xlu0 %v1773
    %v1775 = vpop.xlane.xlu0 %1774
    %v1776 = vsel %vm1382, %v1768, 0.0
    %1777 = vadd.xlane.f32.xlu0 %v1776
    %v1778 = vpop.xlane.xlu0 %1777
    %v1779 = vsel %vm1382, %v1769, 0.0
    %1780 = vadd.xlane.f32.xlu0 %v1779
    %v1781 = vpop.xlane.xlu0 %1780
    %v1782 = vsel %vm1382, %v1770, 0.0
    %1783 = vadd.xlane.f32.xlu0 %v1782
    %v1784 = vpop.xlane.xlu0 %1783
    %v1785 = vsel %vm1382, %v1771, 0.0
    %1786 = vadd.xlane.f32.xlu0 %v1785
    %v1787 = vpop.xlane.xlu0 %1786
    %v1788 = vsel %vm1382, %v1772, 0.0
    %1789 = vadd.xlane.f32.xlu0 %v1788
    %v1790 = vpop.xlane.xlu0 %1789
    %v1791 = vmul.f32 %v1775, %v1520
    %v1792 = vmul.f32 %v1778, %v1520
    %v1793 = vmul.f32 %v1781, %v1520
    %v1794 = vmul.f32 %v1784, %v1520
    %v1795 = vmul.f32 %v1787, %v1520
    %v1796 = vmul.f32 %v1790, %v1520
    %v1797 = vadd.f32 %v1791, 1e-05
    %v1798 = vadd.f32 %v1792, 1e-05
    %v1799 = vadd.f32 %v1793, 1e-05
    %v1800 = vadd.f32 %v1794, 1e-05
    %v1801 = vadd.f32 %v1795, 1e-05
    %v1802 = vadd.f32 %v1796, 1e-05
    %v1803 = vrsqrt.pop %v1797
    %v1804 = vrsqrt.pop %v1798
    %v1805 = vrsqrt.pop %v1799
    %v1806 = vrsqrt.pop %v1800
    %v1807 = vrsqrt.pop %v1801
    %v1808 = vrsqrt.pop %v1802
    %v1809 = vmul.f32 %v1761, %v1803
    %v1810 = vmul.f32 %v1762, %v1804
    %v1811 = vmul.f32 %v1763, %v1805
    %v1812 = vmul.f32 %v1764, %v1806
    %v1813 = vmul.f32 %v1765, %v1807
    %v1814 = vmul.f32 %v1766, %v1808
    %v1815 = vld [vmem:[%s9] sm:$0x1]
    %v1817 = vlaneseq
    %v1818 = vshrl.u32 %v1817, 7
    %v1819 = vsub.s32 0, %v1818
    %v1820 = vrot.slane %v1815, %v1819
    %v1822 = vmul.f32 %v1809, %v1820
    %v1823 = vmul.f32 %v1810, %v1820
    %v1824 = vmul.f32 %v1811, %v1820
    %v1825 = vmul.f32 %v1812, %v1820
    %v1826 = vmul.f32 %v1813, %v1820
    %v1827 = vmul.f32 %v1814, %v1820
    %v1828 = vld [vmem:[%s10] sm:$0x1]
    %v1830 = vlaneseq
    %v1831 = vshrl.u32 %v1830, 7
    %v1832 = vsub.s32 0, %v1831
    %v1833 = vrot.slane %v1828, %v1832
    %v1835 = vadd.f32 %v1822, %v1833
    %v1836 = vadd.f32 %v1823, %v1833
    %v1837 = vadd.f32 %v1824, %v1833
    %v1838 = vadd.f32 %v1825, %v1833
    %v1839 = vadd.f32 %v1826, %v1833
    %v1840 = vadd.f32 %v1827, %v1833
    %v1841 = vsel %vm1382, %v1835, 1.0
    %v1842 = vsel %vm1382, %v1836, 1.0
    %v1843 = vsel %vm1382, %v1837, 1.0
    %v1844 = vsel %vm1382, %v1838, 1.0
    %v1845 = vsel %vm1382, %v1839, 1.0
    %v1846 = vlaneseq
    %v1847 = vshrl.u32 %v1846, 7
    %v1848 = vadd.s32 %v1847, 8
    %v1849 = vadd.s32 %v1847, 16
    %v1850 = vadd.s32 %v1847, 24
    %v1851 = vadd.s32 %v1847, 32
    %v1852 = vlaneseq
    %v1853 = vand.u32 %v1852, 127
    %vm1854 = vcmp.eq.s32.totalorder %v1847, %v1853
    %vm1855 = vcmp.eq.s32.totalorder %v1848, %v1853
    %vm1856 = vcmp.eq.s32.totalorder %v1849, %v1853
    %vm1857 = vcmp.eq.s32.totalorder %v1850, %v1853
    %vm1858 = vcmp.eq.s32.totalorder %v1851, %v1853
    %v1859 = vsel %vm1854, 1.0, 0.0
    %v1860 = vsel %vm1855, 1.0, 0.0
    %v1861 = vsel %vm1856, 1.0, 0.0
    %v1862 = vsel %vm1857, 1.0, 0.0
    %v1863 = vsel %vm1858, 1.0, 0.0
    %s1864 = sld [smem:[#allocation2]]
    %v1865 = vstv %s1864
    %v1866 = vmul.f32 %v1865, %v1859
    %v1867 = vmul.f32 %v1865, %v1860
    %v1868 = vmul.f32 %v1865, %v1861
    %v1869 = vmul.f32 %v1865, %v1862
    %v1870 = vmul.f32 %v1865, %v1863
    %1871 = vxpose.xlu0.b32.start [1/16] %v1841, 128
    %1872 = vxpose.xlu0.b32.cont [2/16] %v1842, 128
    %1873 = vxpose.xlu0.b32.cont [3/16] %v1843, 128
    %1874 = vxpose.xlu0.b32.cont [4/16] %v1844, 128
    %1875 = vxpose.xlu0.b32.cont [5/16] %v1845, 128
    %1876 = vxpose.xlu0.b32.cont [6/16] 0.0, 128
    %1877 = vxpose.xlu0.b32.cont [7/16] 0.0, 128
    %1878 = vxpose.xlu0.b32.cont [8/16] 0.0, 128
    %1879 = vxpose.xlu0.b32.cont [9/16] 0.0, 128
    %1880 = vxpose.xlu0.b32.cont [10/16] 0.0, 128
    %1881 = vxpose.xlu0.b32.cont [11/16] 0.0, 128
    %1882 = vxpose.xlu0.b32.cont [12/16] 0.0, 128
    %1883 = vxpose.xlu0.b32.cont [13/16] 0.0, 128
    %1884 = vxpose.xlu0.b32.cont [14/16] 0.0, 128
    %1885 = vxpose.xlu0.b32.cont [15/16] 0.0, 128
    %1886 = vxpose.xlu0.b32.end [16/16] 0.0, 128
    %v1887 = vpop.trf.xlu0
    %v1888 = vpop.trf.xlu0
    %v1889 = vpop.trf.xlu0
    %v1890 = vpop.trf.xlu0
    %v1891 = vpop.trf.xlu0
    %v1892 = vpop.trf.xlu0
    %v1893 = vpop.trf.xlu0
    %v1894 = vpop.trf.xlu0
    %v1895 = vpop.trf.xlu0
    %v1896 = vpop.trf.xlu0
    %v1897 = vpop.trf.xlu0
    %v1898 = vpop.trf.xlu0
    %v1899 = vpop.trf.xlu0
    %v1900 = vpop.trf.xlu0
    %v1901 = vpop.trf.xlu0
    %v1902 = vpop.trf.xlu0
    %vm1903 = vcmask 326656
    %v1905 = vsel %vm1903, %v1887, 0
    %v1908 = vsel %vm1903, %v1888, 0
    %v1911 = vsel %vm1903, %v1889, 0
    %v1914 = vsel %vm1903, %v1890, 0
    %v1917 = vsel %vm1903, %v1891, 0
    %1919 = vmatprep.subr.mxu0 0.0
    %v1920 = vand.u32 %v1841, 4294901760
    %1921 = vmatpush1.msra.mxu0 %v1920
    %1922 = vmatprep.subr.mxu0 0.0
    %v1923 = vand.u32 %v1842, 4294901760
    %1924 = vmatpush1.msra.mxu0 %v1923
    %1925 = vmatprep.subr.mxu0 0.0
    %v1926 = vand.u32 %v1843, 4294901760
    %1927 = vmatpush1.msra.mxu0 %v1926
    %1928 = vmatprep.subr.mxu0 0.0
    %v1929 = vand.u32 %v1844, 4294901760
    %1930 = vmatpush1.msra.mxu0 %v1929
    %1931 = vmatprep.subr.mxu0 0.0
    %v1932 = vand.u32 %v1845, 4294901760
    %1933 = vmatpush1.msra.mxu0 %v1932
    %1934 = vmatprep.subr.mxu0 0.0
    %1935 = vmatpush1.msra.mxu0 0.0
    %1936 = vmatprep.subr.mxu0 0.0
    %1937 = vmatpush1.msra.mxu0 0.0
    %1938 = vmatprep.subr.mxu0 0.0
    %1939 = vmatpush1.msra.mxu0 0.0
    %1940 = vmatprep.subr.mxu0 0.0
    %1941 = vmatpush1.msra.mxu0 0.0
    %1942 = vmatprep.subr.mxu0 0.0
    %1943 = vmatpush1.msra.mxu0 0.0
    %1944 = vmatprep.subr.mxu0 0.0
    %1945 = vmatpush1.msra.mxu0 0.0
    %1946 = vmatprep.subr.mxu0 0.0
    %1947 = vmatpush1.msra.mxu0 0.0
    %1948 = vmatprep.subr.mxu0 0.0
    %1949 = vmatpush1.msra.mxu0 0.0
    %1950 = vmatprep.subr.mxu0 0.0
    %1951 = vmatpush1.msra.mxu0 0.0
    %1952 = vmatprep.subr.mxu0 0.0
    %1953 = vmatpush1.msra.mxu0 0.0
    %1954 = vmatprep.subr.mxu0 0.0
    %1955 = vmatpush1.msra.mxu0 0.0
    %1956 = vmatprep.subr.mxu0 0.0
    %1957 = vmatpush1.msra.mxu0 0.0
    %1958 = vmatprep.subr.mxu0 0.0
    %1959 = vmatpush1.msra.mxu0 0.0
    %1960 = vmatprep.subr.mxu0 0.0
    %1961 = vmatpush1.msra.mxu0 0.0
    %1962 = vmatprep.subr.mxu0 0.0
    %1963 = vmatpush1.msra.mxu0 0.0
    %1964 = vmatprep.subr.mxu0 0.0
    %1965 = vmatpush1.msra.mxu0 0.0
    %1966 = vmatprep.subr.mxu0 0.0
    %1967 = vmatpush1.msra.mxu0 0.0
    %1968 = vmatprep.subr.mxu0 0.0
    %1969 = vmatpush1.msra.mxu0 0.0
    %1970 = vmatprep.subr.mxu0 0.0
    %1971 = vmatpush1.msra.mxu0 0.0
    %1972 = vmatprep.subr.mxu0 0.0
    %1973 = vmatpush1.msra.mxu0 0.0
    %1974 = vmatprep.subr.mxu0 0.0
    %1975 = vmatpush1.msra.mxu0 0.0
    %1976 = vmatprep.subr.mxu0 0.0
    %1977 = vmatpush1.msra.mxu0 0.0
    %1978 = vmatprep.subr.mxu0 0.0
    %1979 = vmatpush1.msra.mxu0 0.0
    %1980 = vmatprep.subr.mxu0 0.0
    %1981 = vmatpush1.msra.mxu0 0.0
    %1982 = vmatprep.subr.mxu0 0.0
    %1983 = vmatpush1.msra.mxu0 0.0
    %1984 = vmatprep.subr.mxu0 0.0
    %1985 = vmatpush1.msra.mxu0 0.0
    %1986 = vmatprep.subr.mxu0 0.0
    %1987 = vmatpush1.msra.mxu0 0.0
    %1988 = vmatprep.mubr.f32.mxu0 0.0
    %v1989 = vand.u32 %v1905, 4294901760
    %v1990 = vsub.f32 %v1905, %v1989
    %v1991 = vand.u32 %v1990, 4294901760
    %v1992 = vsub.f32 %v1990, %v1991
    %v1993 = vand.u32 %v1992, 4294901760
    %1994 = vmatmul.mubr.f32.gmra.mrb[0].mxu0 %v1993
    %v1995 = vpop.f32.mrb[0].mxu0
    %v1996 = vadd.f32 %v1866, %v1995
    %v1997 = vpop.f32.mrb[0].mxu0
    %1998 = vmatprep.mubr.f32.mxu0 0.0
    %v1999 = vand.u32 %v1908, 4294901760
    %v2000 = vsub.f32 %v1908, %v1999
    %v2001 = vand.u32 %v2000, 4294901760
    %v2002 = vsub.f32 %v2000, %v2001
    %v2003 = vand.u32 %v2002, 4294901760
    %2004 = vmatmul.mubr.f32.gmra.mrb[0].mxu0 %v2003
    %v2005 = vpop.f32.mrb[0].mxu0
    %v2006 = vadd.f32 %v1867, %v2005
    %v2007 = vpop.f32.mrb[0].mxu0
    %2008 = vmatprep.mubr.f32.mxu0 0.0
    %v2009 = vand.u32 %v1911, 4294901760
    %v2010 = vsub.f32 %v1911, %v2009
    %v2011 = vand.u32 %v2010, 4294901760
    %v2012 = vsub.f32 %v2010, %v2011
    %v2013 = vand.u32 %v2012, 4294901760
    %2014 = vmatmul.mubr.f32.gmra.mrb[0].mxu0 %v2013
    %v2015 = vpop.f32.mrb[0].mxu0
    %v2016 = vadd.f32 %v1868, %v2015
    %v2017 = vpop.f32.mrb[0].mxu0
    %2018 = vmatprep.mubr.f32.mxu0 0.0
    %v2019 = vand.u32 %v1914, 4294901760
    %v2020 = vsub.f32 %v1914, %v2019
    %v2021 = vand.u32 %v2020, 4294901760
    %v2022 = vsub.f32 %v2020, %v2021
    %v2023 = vand.u32 %v2022, 4294901760
    %2024 = vmatmul.mubr.f32.gmra.mrb[0].mxu0 %v2023
    %v2025 = vpop.f32.mrb[0].mxu0
    %v2026 = vadd.f32 %v1869, %v2025
    %v2027 = vpop.f32.mrb[0].mxu0
    %2028 = vmatprep.mubr.f32.mxu0 0.0
    %v2029 = vand.u32 %v1917, 4294901760
    %v2030 = vsub.f32 %v1917, %v2029
    %v2031 = vand.u32 %v2030, 4294901760
    %v2032 = vsub.f32 %v2030, %v2031
    %v2033 = vand.u32 %v2032, 4294901760
    %2034 = vmatmul.mubr.f32.gmra.mrb[0].mxu0 %v2033
    %v2035 = vpop.f32.mrb[0].mxu0
    %v2036 = vadd.f32 %v1870, %v2035
    %v2037 = vpop.f32.mrb[0].mxu0
    %2038 = vdwg.mxu0
    %2039 = vmatprep.subr.mxu0 0.0
    %v2040 = vand.u32 %v1841, 4294901760
    %v2041 = vsub.f32 %v1841, %v2040
    %v2042 = vand.u32 %v2041, 4294901760
    %v2043 = vsub.f32 %v2041, %v2042
    %v2044 = vand.u32 %v2043, 4294901760
    %2045 = vmatpush1.msra.mxu0 %v2044
    %2046 = vmatprep.subr.mxu0 0.0
    %v2047 = vand.u32 %v1842, 4294901760
    %v2048 = vsub.f32 %v1842, %v2047
    %v2049 = vand.u32 %v2048, 4294901760
    %v2050 = vsub.f32 %v2048, %v2049
    %v2051 = vand.u32 %v2050, 4294901760
    %2052 = vmatpush1.msra.mxu0 %v2051
    %2053 = vmatprep.subr.mxu0 0.0
    %v2054 = vand.u32 %v1843, 4294901760
    %v2055 = vsub.f32 %v1843, %v2054
    %v2056 = vand.u32 %v2055, 4294901760
    %v2057 = vsub.f32 %v2055, %v2056
    %v2058 = vand.u32 %v2057, 4294901760
    %2059 = vmatpush1.msra.mxu0 %v2058
    %2060 = vmatprep.subr.mxu0 0.0
    %v2061 = vand.u32 %v1844, 4294901760
    %v2062 = vsub.f32 %v1844, %v2061
    %v2063 = vand.u32 %v2062, 4294901760
    %v2064 = vsub.f32 %v2062, %v2063
    %v2065 = vand.u32 %v2064, 4294901760
    %2066 = vmatpush1.msra.mxu0 %v2065
    %2067 = vmatprep.subr.mxu0 0.0
    %v2068 = vand.u32 %v1845, 4294901760
    %v2069 = vsub.f32 %v1845, %v2068
    %v2070 = vand.u32 %v2069, 4294901760
    %v2071 = vsub.f32 %v2069, %v2070
    %v2072 = vand.u32 %v2071, 4294901760
    %2073 = vmatpush1.msra.mxu0 %v2072
    %2074 = vmatprep.subr.mxu0 0.0
    %2075 = vmatpush1.msra.mxu0 0.0
    %2076 = vmatprep.subr.mxu0 0.0
    %2077 = vmatpush1.msra.mxu0 0.0
    %2078 = vmatprep.subr.mxu0 0.0
    %2079 = vmatpush1.msra.mxu0 0.0
    %2080 = vmatprep.subr.mxu0 0.0
    %2081 = vmatpush1.msra.mxu0 0.0
    %2082 = vmatprep.subr.mxu0 0.0
    %2083 = vmatpush1.msra.mxu0 0.0
    %2084 = vmatprep.subr.mxu0 0.0
    %2085 = vmatpush1.msra.mxu0 0.0
    %2086 = vmatprep.subr.mxu0 0.0
    %2087 = vmatpush1.msra.mxu0 0.0
    %2088 = vmatprep.subr.mxu0 0.0
    %2089 = vmatpush1.msra.mxu0 0.0
    %2090 = vmatprep.subr.mxu0 0.0
    %2091 = vmatpush1.msra.mxu0 0.0
    %2092 = vmatprep.subr.mxu0 0.0
    %2093 = vmatpush1.msra.mxu0 0.0
    %2094 = vmatprep.subr.mxu0 0.0
    %2095 = vmatpush1.msra.mxu0 0.0
    %2096 = vmatprep.subr.mxu0 0.0
    %2097 = vmatpush1.msra.mxu0 0.0
    %2098 = vmatprep.subr.mxu0 0.0
    %2099 = vmatpush1.msra.mxu0 0.0
    %2100 = vmatprep.subr.mxu0 0.0
    %2101 = vmatpush1.msra.mxu0 0.0
    %2102 = vmatprep.subr.mxu0 0.0
    %2103 = vmatpush1.msra.mxu0 0.0
    %2104 = vmatprep.subr.mxu0 0.0
    %2105 = vmatpush1.msra.mxu0 0.0
    %2106 = vmatprep.subr.mxu0 0.0
    %2107 = vmatpush1.msra.mxu0 0.0
    %2108 = vmatprep.subr.mxu0 0.0
    %2109 = vmatpush1.msra.mxu0 0.0
    %2110 = vmatprep.subr.mxu0 0.0
    %2111 = vmatpush1.msra.mxu0 0.0
    %2112 = vmatprep.subr.mxu0 0.0
    %2113 = vmatpush1.msra.mxu0 0.0
    %2114 = vmatprep.subr.mxu0 0.0
    %2115 = vmatpush1.msra.mxu0 0.0
    %2116 = vmatprep.subr.mxu0 0.0
    %2117 = vmatpush1.msra.mxu0 0.0
    %2118 = vmatprep.subr.mxu0 0.0
    %2119 = vmatpush1.msra.mxu0 0.0
    %2120 = vmatprep.subr.mxu0 0.0
    %2121 = vmatpush1.msra.mxu0 0.0
    %2122 = vmatprep.subr.mxu0 0.0
    %2123 = vmatpush1.msra.mxu0 0.0
    %2124 = vmatprep.subr.mxu0 0.0
    %2125 = vmatpush1.msra.mxu0 0.0
    %2126 = vmatprep.subr.mxu0 0.0
    %2127 = vmatpush1.msra.mxu0 0.0
    %2128 = vmatprep.mubr.f32.mxu0 0.0
    %v2129 = vand.u32 %v1905, 4294901760
    %2130 = vmatmul.mubr.f32.gmra.mrb[0].mxu0 %v2129
    %v2131 = vpop.f32.mrb[0].mxu0
    %v2132 = vadd.f32 %v1996, %v2131
    %v2133 = vpop.f32.mrb[0].mxu0
    %2134 = vmatprep.mubr.f32.mxu0 0.0
    %v2135 = vand.u32 %v1908, 4294901760
    %2136 = vmatmul.mubr.f32.gmra.mrb[0].mxu0 %v2135
    %v2137 = vpop.f32.mrb[0].mxu0
    %v2138 = vadd.f32 %v2006, %v2137
    %v2139 = vpop.f32.mrb[0].mxu0
    %2140 = vmatprep.mubr.f32.mxu0 0.0
    %v2141 = vand.u32 %v1911, 4294901760
    %2142 = vmatmul.mubr.f32.gmra.mrb[0].mxu0 %v2141
    %v2143 = vpop.f32.mrb[0].mxu0
    %v2144 = vadd.f32 %v2016, %v2143
    %v2145 = vpop.f32.mrb[0].mxu0
    %2146 = vmatprep.mubr.f32.mxu0 0.0
    %v2147 = vand.u32 %v1914, 4294901760
    %2148 = vmatmul.mubr.f32.gmra.mrb[0].mxu0 %v2147
    %v2149 = vpop.f32.mrb[0].mxu0
    %v2150 = vadd.f32 %v2026, %v2149
    %v2151 = vpop.f32.mrb[0].mxu0
    %2152 = vmatprep.mubr.f32.mxu0 0.0
    %v2153 = vand.u32 %v1917, 4294901760
    %2154 = vmatmul.mubr.f32.gmra.mrb[0].mxu0 %v2153
    %v2155 = vpop.f32.mrb[0].mxu0
    %v2156 = vadd.f32 %v2036, %v2155
    %v2157 = vpop.f32.mrb[0].mxu0
    %2158 = vdwg.mxu0
    %2159 = vmatprep.subr.mxu0 0.0
    %v2160 = vand.u32 %v1841, 4294901760
    %v2161 = vsub.f32 %v1841, %v2160
    %2162 = vmatpush1.msra.mxu0 %v2161
    %2163 = vmatprep.subr.mxu0 0.0
    %v2164 = vand.u32 %v1842, 4294901760
    %v2165 = vsub.f32 %v1842, %v2164
    %2166 = vmatpush1.msra.mxu0 %v2165
    %2167 = vmatprep.subr.mxu0 0.0
    %v2168 = vand.u32 %v1843, 4294901760
    %v2169 = vsub.f32 %v1843, %v2168
    %2170 = vmatpush1.msra.mxu0 %v2169
    %2171 = vmatprep.subr.mxu0 0.0
    %v2172 = vand.u32 %v1844, 4294901760
    %v2173 = vsub.f32 %v1844, %v2172
    %2174 = vmatpush1.msra.mxu0 %v2173
    %2175 = vmatprep.subr.mxu0 0.0
    %v2176 = vand.u32 %v1845, 4294901760
    %v2177 = vsub.f32 %v1845, %v2176
    %2178 = vmatpush1.msra.mxu0 %v2177
    %2179 = vmatprep.subr.mxu0 0.0
    %2180 = vmatpush1.msra.mxu0 0.0
    %2181 = vmatprep.subr.mxu0 0.0
    %2182 = vmatpush1.msra.mxu0 0.0
    %2183 = vmatprep.subr.mxu0 0.0
    %2184 = vmatpush1.msra.mxu0 0.0
    %2185 = vmatprep.subr.mxu0 0.0
    %2186 = vmatpush1.msra.mxu0 0.0
    %2187 = vmatprep.subr.mxu0 0.0
    %2188 = vmatpush1.msra.mxu0 0.0
    %2189 = vmatprep.subr.mxu0 0.0
    %2190 = vmatpush1.msra.mxu0 0.0
    %2191 = vmatprep.subr.mxu0 0.0
    %2192 = vmatpush1.msra.mxu0 0.0
    %2193 = vmatprep.subr.mxu0 0.0
    %2194 = vmatpush1.msra.mxu0 0.0
    %2195 = vmatprep.subr.mxu0 0.0
    %2196 = vmatpush1.msra.mxu0 0.0
    %2197 = vmatprep.subr.mxu0 0.0
    %2198 = vmatpush1.msra.mxu0 0.0
    %2199 = vmatprep.subr.mxu0 0.0
    %2200 = vmatpush1.msra.mxu0 0.0
    %2201 = vmatprep.subr.mxu0 0.0
    %2202 = vmatpush1.msra.mxu0 0.0
    %2203 = vmatprep.subr.mxu0 0.0
    %2204 = vmatpush1.msra.mxu0 0.0
    %2205 = vmatprep.subr.mxu0 0.0
    %2206 = vmatpush1.msra.mxu0 0.0
    %2207 = vmatprep.subr.mxu0 0.0
    %2208 = vmatpush1.msra.mxu0 0.0
    %2209 = vmatprep.subr.mxu0 0.0
    %2210 = vmatpush1.msra.mxu0 0.0
    %2211 = vmatprep.subr.mxu0 0.0
    %2212 = vmatpush1.msra.mxu0 0.0
    %2213 = vmatprep.subr.mxu0 0.0
    %2214 = vmatpush1.msra.mxu0 0.0
    %2215 = vmatprep.subr.mxu0 0.0
    %2216 = vmatpush1.msra.mxu0 0.0
    %2217 = vmatprep.subr.mxu0 0.0
    %2218 = vmatpush1.msra.mxu0 0.0
    %2219 = vmatprep.subr.mxu0 0.0
    %2220 = vmatpush1.msra.mxu0 0.0
    %2221 = vmatprep.subr.mxu0 0.0
    %2222 = vmatpush1.msra.mxu0 0.0
    %2223 = vmatprep.subr.mxu0 0.0
    %2224 = vmatpush1.msra.mxu0 0.0
    %2225 = vmatprep.subr.mxu0 0.0
    %2226 = vmatpush1.msra.mxu0 0.0
    %2227 = vmatprep.subr.mxu0 0.0
    %2228 = vmatpush1.msra.mxu0 0.0
    %2229 = vmatprep.subr.mxu0 0.0
    %2230 = vmatpush1.msra.mxu0 0.0
    %2231 = vmatprep.subr.mxu0 0.0
    %2232 = vmatpush1.msra.mxu0 0.0
    %2233 = vmatprep.mubr.f32.mxu0 0.0
    %v2234 = vand.u32 %v1905, 4294901760
    %v2235 = vsub.f32 %v1905, %v2234
    %2236 = vmatmul.mubr.f32.gmra.mrb[0].mxu0 %v2235
    %v2237 = vpop.f32.mrb[0].mxu0
    %v2238 = vadd.f32 %v2132, %v2237
    %v2239 = vpop.f32.mrb[0].mxu0
    %2240 = vmatprep.mubr.f32.mxu0 0.0
    %v2241 = vand.u32 %v1908, 4294901760
    %v2242 = vsub.f32 %v1908, %v2241
    %2243 = vmatmul.mubr.f32.gmra.mrb[0].mxu0 %v2242
    %v2244 = vpop.f32.mrb[0].mxu0
    %v2245 = vadd.f32 %v2138, %v2244
    %v2246 = vpop.f32.mrb[0].mxu0
    %2247 = vmatprep.mubr.f32.mxu0 0.0
    %v2248 = vand.u32 %v1911, 4294901760
    %v2249 = vsub.f32 %v1911, %v2248
    %2250 = vmatmul.mubr.f32.gmra.mrb[0].mxu0 %v2249
    %v2251 = vpop.f32.mrb[0].mxu0
    %v2252 = vadd.f32 %v2144, %v2251
    %v2253 = vpop.f32.mrb[0].mxu0
    %2254 = vmatprep.mubr.f32.mxu0 0.0
    %v2255 = vand.u32 %v1914, 4294901760
    %v2256 = vsub.f32 %v1914, %v2255
    %2257 = vmatmul.mubr.f32.gmra.mrb[0].mxu0 %v2256
    %v2258 = vpop.f32.mrb[0].mxu0
    %v2259 = vadd.f32 %v2150, %v2258
    %v2260 = vpop.f32.mrb[0].mxu0
    %2261 = vmatprep.mubr.f32.mxu0 0.0
    %v2262 = vand.u32 %v1917, 4294901760
    %v2263 = vsub.f32 %v1917, %v2262
    %2264 = vmatmul.mubr.f32.gmra.mrb[0].mxu0 %v2263
    %v2265 = vpop.f32.mrb[0].mxu0
    %v2266 = vadd.f32 %v2156, %v2265
    %v2267 = vpop.f32.mrb[0].mxu0
    %2268 = vdwg.mxu0
    %2269 = vmatprep.subr.mxu0 0.0
    %v2270 = vand.u32 %v1841, 4294901760
    %2271 = vmatpush1.msra.mxu0 %v2270
    %2272 = vmatprep.subr.mxu0 0.0
    %v2273 = vand.u32 %v1842, 4294901760
    %2274 = vmatpush1.msra.mxu0 %v2273
    %2275 = vmatprep.subr.mxu0 0.0
    %v2276 = vand.u32 %v1843, 4294901760
    %2277 = vmatpush1.msra.mxu0 %v2276
    %2278 = vmatprep.subr.mxu0 0.0
    %v2279 = vand.u32 %v1844, 4294901760
    %2280 = vmatpush1.msra.mxu0 %v2279
    %2281 = vmatprep.subr.mxu0 0.0
    %v2282 = vand.u32 %v1845, 4294901760
    %2283 = vmatpush1.msra.mxu0 %v2282
    %2284 = vmatprep.subr.mxu0 0.0
    %2285 = vmatpush1.msra.mxu0 0.0
    %2286 = vmatprep.subr.mxu0 0.0
    %2287 = vmatpush1.msra.mxu0 0.0
    %2288 = vmatprep.subr.mxu0 0.0
    %2289 = vmatpush1.msra.mxu0 0.0
    %2290 = vmatprep.subr.mxu0 0.0
    %2291 = vmatpush1.msra.mxu0 0.0
    %2292 = vmatprep.subr.mxu0 0.0
    %2293 = vmatpush1.msra.mxu0 0.0
    %2294 = vmatprep.subr.mxu0 0.0
    %2295 = vmatpush1.msra.mxu0 0.0
    %2296 = vmatprep.subr.mxu0 0.0
    %2297 = vmatpush1.msra.mxu0 0.0
    %2298 = vmatprep.subr.mxu0 0.0
    %2299 = vmatpush1.msra.mxu0 0.0
    %2300 = vmatprep.subr.mxu0 0.0
    %2301 = vmatpush1.msra.mxu0 0.0
    %2302 = vmatprep.subr.mxu0 0.0
    %2303 = vmatpush1.msra.mxu0 0.0
    %2304 = vmatprep.subr.mxu0 0.0
    %2305 = vmatpush1.msra.mxu0 0.0
    %2306 = vmatprep.subr.mxu0 0.0
    %2307 = vmatpush1.msra.mxu0 0.0
    %2308 = vmatprep.subr.mxu0 0.0
    %2309 = vmatpush1.msra.mxu0 0.0
    %2310 = vmatprep.subr.mxu0 0.0
    %2311 = vmatpush1.msra.mxu0 0.0
    %2312 = vmatprep.subr.mxu0 0.0
    %2313 = vmatpush1.msra.mxu0 0.0
    %2314 = vmatprep.subr.mxu0 0.0
    %2315 = vmatpush1.msra.mxu0 0.0
    %2316 = vmatprep.subr.mxu0 0.0
    %2317 = vmatpush1.msra.mxu0 0.0
    %2318 = vmatprep.subr.mxu0 0.0
    %2319 = vmatpush1.msra.mxu0 0.0
    %2320 = vmatprep.subr.mxu0 0.0
    %2321 = vmatpush1.msra.mxu0 0.0
    %2322 = vmatprep.subr.mxu0 0.0
    %2323 = vmatpush1.msra.mxu0 0.0
    %2324 = vmatprep.subr.mxu0 0.0
    %2325 = vmatpush1.msra.mxu0 0.0
    %2326 = vmatprep.subr.mxu0 0.0
    %2327 = vmatpush1.msra.mxu0 0.0
    %2328 = vmatprep.subr.mxu0 0.0
    %2329 = vmatpush1.msra.mxu0 0.0
    %2330 = vmatprep.subr.mxu0 0.0
    %2331 = vmatpush1.msra.mxu0 0.0
    %2332 = vmatprep.subr.mxu0 0.0
    %2333 = vmatpush1.msra.mxu0 0.0
    %2334 = vmatprep.subr.mxu0 0.0
    %2335 = vmatpush1.msra.mxu0 0.0
    %2336 = vmatprep.subr.mxu0 0.0
    %2337 = vmatpush1.msra.mxu0 0.0
    %2338 = vmatprep.mubr.f32.mxu0 0.0
    %v2339 = vand.u32 %v1905, 4294901760
    %v2340 = vsub.f32 %v1905, %v2339
    %v2341 = vand.u32 %v2340, 4294901760
    %2342 = vmatmul.mubr.f32.gmra.mrb[0].mxu0 %v2341
    %v2343 = vpop.f32.mrb[0].mxu0
    %v2344 = vadd.f32 %v2238, %v2343
    %v2345 = vpop.f32.mrb[0].mxu0
    %2346 = vmatprep.mubr.f32.mxu0 0.0
    %v2347 = vand.u32 %v1908, 4294901760
    %v2348 = vsub.f32 %v1908, %v2347
    %v2349 = vand.u32 %v2348, 4294901760
    %2350 = vmatmul.mubr.f32.gmra.mrb[0].mxu0 %v2349
    %v2351 = vpop.f32.mrb[0].mxu0
    %v2352 = vadd.f32 %v2245, %v2351
    %v2353 = vpop.f32.mrb[0].mxu0
    %2354 = vmatprep.mubr.f32.mxu0 0.0
    %v2355 = vand.u32 %v1911, 4294901760
    %v2356 = vsub.f32 %v1911, %v2355
    %v2357 = vand.u32 %v2356, 4294901760
    %2358 = vmatmul.mubr.f32.gmra.mrb[0].mxu0 %v2357
    %v2359 = vpop.f32.mrb[0].mxu0
    %v2360 = vadd.f32 %v2252, %v2359
    %v2361 = vpop.f32.mrb[0].mxu0
    %2362 = vmatprep.mubr.f32.mxu0 0.0
    %v2363 = vand.u32 %v1914, 4294901760
    %v2364 = vsub.f32 %v1914, %v2363
    %v2365 = vand.u32 %v2364, 4294901760
    %2366 = vmatmul.mubr.f32.gmra.mrb[0].mxu0 %v2365
    %v2367 = vpop.f32.mrb[0].mxu0
    %v2368 = vadd.f32 %v2259, %v2367
    %v2369 = vpop.f32.mrb[0].mxu0
    %2370 = vmatprep.mubr.f32.mxu0 0.0
    %v2371 = vand.u32 %v1917, 4294901760
    %v2372 = vsub.f32 %v1917, %v2371
    %v2373 = vand.u32 %v2372, 4294901760
    %2374 = vmatmul.mubr.f32.gmra.mrb[0].mxu0 %v2373
    %v2375 = vpop.f32.mrb[0].mxu0
    %v2376 = vadd.f32 %v2266, %v2375
    %v2377 = vpop.f32.mrb[0].mxu0
    %2378 = vdwg.mxu0
    %2379 = vmatprep.subr.mxu0 0.0
    %v2380 = vand.u32 %v1841, 4294901760
    %v2381 = vsub.f32 %v1841, %v2380
    %v2382 = vand.u32 %v2381, 4294901760
    %2383 = vmatpush1.msra.mxu0 %v2382
    %2384 = vmatprep.subr.mxu0 0.0
    %v2385 = vand.u32 %v1842, 4294901760
    %v2386 = vsub.f32 %v1842, %v2385
    %v2387 = vand.u32 %v2386, 4294901760
    %2388 = vmatpush1.msra.mxu0 %v2387
    %2389 = vmatprep.subr.mxu0 0.0
    %v2390 = vand.u32 %v1843, 4294901760
    %v2391 = vsub.f32 %v1843, %v2390
    %v2392 = vand.u32 %v2391, 4294901760
    %2393 = vmatpush1.msra.mxu0 %v2392
    %2394 = vmatprep.subr.mxu0 0.0
    %v2395 = vand.u32 %v1844, 4294901760
    %v2396 = vsub.f32 %v1844, %v2395
    %v2397 = vand.u32 %v2396, 4294901760
    %2398 = vmatpush1.msra.mxu0 %v2397
    %2399 = vmatprep.subr.mxu0 0.0
    %v2400 = vand.u32 %v1845, 4294901760
    %v2401 = vsub.f32 %v1845, %v2400
    %v2402 = vand.u32 %v2401, 4294901760
    %2403 = vmatpush1.msra.mxu0 %v2402
    %2404 = vmatprep.subr.mxu0 0.0
    %2405 = vmatpush1.msra.mxu0 0.0
    %2406 = vmatprep.subr.mxu0 0.0
    %2407 = vmatpush1.msra.mxu0 0.0
    %2408 = vmatprep.subr.mxu0 0.0
    %2409 = vmatpush1.msra.mxu0 0.0
    %2410 = vmatprep.subr.mxu0 0.0
    %2411 = vmatpush1.msra.mxu0 0.0
    %2412 = vmatprep.subr.mxu0 0.0
    %2413 = vmatpush1.msra.mxu0 0.0
    %2414 = vmatprep.subr.mxu0 0.0
    %2415 = vmatpush1.msra.mxu0 0.0
    %2416 = vmatprep.subr.mxu0 0.0
    %2417 = vmatpush1.msra.mxu0 0.0
    %2418 = vmatprep.subr.mxu0 0.0
    %2419 = vmatpush1.msra.mxu0 0.0
    %2420 = vmatprep.subr.mxu0 0.0
    %2421 = vmatpush1.msra.mxu0 0.0
    %2422 = vmatprep.subr.mxu0 0.0
    %2423 = vmatpush1.msra.mxu0 0.0
    %2424 = vmatprep.subr.mxu0 0.0
    %2425 = vmatpush1.msra.mxu0 0.0
    %2426 = vmatprep.subr.mxu0 0.0
    %2427 = vmatpush1.msra.mxu0 0.0
    %2428 = vmatprep.subr.mxu0 0.0
    %2429 = vmatpush1.msra.mxu0 0.0
    %2430 = vmatprep.subr.mxu0 0.0
    %2431 = vmatpush1.msra.mxu0 0.0
    %2432 = vmatprep.subr.mxu0 0.0
    %2433 = vmatpush1.msra.mxu0 0.0
    %2434 = vmatprep.subr.mxu0 0.0
    %2435 = vmatpush1.msra.mxu0 0.0
    %2436 = vmatprep.subr.mxu0 0.0
    %2437 = vmatpush1.msra.mxu0 0.0
    %2438 = vmatprep.subr.mxu0 0.0
    %2439 = vmatpush1.msra.mxu0 0.0
    %2440 = vmatprep.subr.mxu0 0.0
    %2441 = vmatpush1.msra.mxu0 0.0
    %2442 = vmatprep.subr.mxu0 0.0
    %2443 = vmatpush1.msra.mxu0 0.0
    %2444 = vmatprep.subr.mxu0 0.0
    %2445 = vmatpush1.msra.mxu0 0.0
    %2446 = vmatprep.subr.mxu0 0.0
    %2447 = vmatpush1.msra.mxu0 0.0
    %2448 = vmatprep.subr.mxu0 0.0
    %2449 = vmatpush1.msra.mxu0 0.0
    %2450 = vmatprep.subr.mxu0 0.0
    %2451 = vmatpush1.msra.mxu0 0.0
    %2452 = vmatprep.subr.mxu0 0.0
    %2453 = vmatpush1.msra.mxu0 0.0
    %2454 = vmatprep.subr.mxu0 0.0
    %2455 = vmatpush1.msra.mxu0 0.0
    %2456 = vmatprep.subr.mxu0 0.0
    %2457 = vmatpush1.msra.mxu0 0.0
    %2458 = vmatprep.mubr.f32.mxu0 0.0
    %v2459 = vand.u32 %v1905, 4294901760
    %2460 = vmatmul.mubr.f32.gmra.mrb[0].mxu0 %v2459
    %v2461 = vpop.f32.mrb[0].mxu0
    %v2462 = vadd.f32 %v2344, %v2461
    %v2463 = vpop.f32.mrb[0].mxu0
    %2464 = vmatprep.mubr.f32.mxu0 0.0
    %v2465 = vand.u32 %v1908, 4294901760
    %2466 = vmatmul.mubr.f32.gmra.mrb[0].mxu0 %v2465
    %v2467 = vpop.f32.mrb[0].mxu0
    %v2468 = vadd.f32 %v2352, %v2467
    %v2469 = vpop.f32.mrb[0].mxu0
    %2470 = vmatprep.mubr.f32.mxu0 0.0
    %v2471 = vand.u32 %v1911, 4294901760
    %2472 = vmatmul.mubr.f32.gmra.mrb[0].mxu0 %v2471
    %v2473 = vpop.f32.mrb[0].mxu0
    %v2474 = vadd.f32 %v2360, %v2473
    %v2475 = vpop.f32.mrb[0].mxu0
    %2476 = vmatprep.mubr.f32.mxu0 0.0
    %v2477 = vand.u32 %v1914, 4294901760
    %2478 = vmatmul.mubr.f32.gmra.mrb[0].mxu0 %v2477
    %v2479 = vpop.f32.mrb[0].mxu0
    %v2480 = vadd.f32 %v2368, %v2479
    %v2481 = vpop.f32.mrb[0].mxu0
    %2482 = vmatprep.mubr.f32.mxu0 0.0
    %v2483 = vand.u32 %v1917, 4294901760
    %2484 = vmatmul.mubr.f32.gmra.mrb[0].mxu0 %v2483
    %v2485 = vpop.f32.mrb[0].mxu0
    %v2486 = vadd.f32 %v2376, %v2485
    %v2487 = vpop.f32.mrb[0].mxu0
    %2488 = vdwg.mxu0
    %2489 = vmatprep.subr.mxu0 0.0
    %v2490 = vand.u32 %v1841, 4294901760
    %2491 = vmatpush1.msra.mxu0 %v2490
    %2492 = vmatprep.subr.mxu0 0.0
    %v2493 = vand.u32 %v1842, 4294901760
    %2494 = vmatpush1.msra.mxu0 %v2493
    %2495 = vmatprep.subr.mxu0 0.0
    %v2496 = vand.u32 %v1843, 4294901760
    %2497 = vmatpush1.msra.mxu0 %v2496
    %2498 = vmatprep.subr.mxu0 0.0
    %v2499 = vand.u32 %v1844, 4294901760
    %2500 = vmatpush1.msra.mxu0 %v2499
    %2501 = vmatprep.subr.mxu0 0.0
    %v2502 = vand.u32 %v1845, 4294901760
    %2503 = vmatpush1.msra.mxu0 %v2502
    %2504 = vmatprep.subr.mxu0 0.0
    %2505 = vmatpush1.msra.mxu0 0.0
    %2506 = vmatprep.subr.mxu0 0.0
    %2507 = vmatpush1.msra.mxu0 0.0
    %2508 = vmatprep.subr.mxu0 0.0
    %2509 = vmatpush1.msra.mxu0 0.0
    %2510 = vmatprep.subr.mxu0 0.0
    %2511 = vmatpush1.msra.mxu0 0.0
    %2512 = vmatprep.subr.mxu0 0.0
    %2513 = vmatpush1.msra.mxu0 0.0
    %2514 = vmatprep.subr.mxu0 0.0
    %2515 = vmatpush1.msra.mxu0 0.0
    %2516 = vmatprep.subr.mxu0 0.0
    %2517 = vmatpush1.msra.mxu0 0.0
    %2518 = vmatprep.subr.mxu0 0.0
    %2519 = vmatpush1.msra.mxu0 0.0
    %2520 = vmatprep.subr.mxu0 0.0
    %2521 = vmatpush1.msra.mxu0 0.0
    %2522 = vmatprep.subr.mxu0 0.0
    %2523 = vmatpush1.msra.mxu0 0.0
    %2524 = vmatprep.subr.mxu0 0.0
    %2525 = vmatpush1.msra.mxu0 0.0
    %2526 = vmatprep.subr.mxu0 0.0
    %2527 = vmatpush1.msra.mxu0 0.0
    %2528 = vmatprep.subr.mxu0 0.0
    %2529 = vmatpush1.msra.mxu0 0.0
    %2530 = vmatprep.subr.mxu0 0.0
    %2531 = vmatpush1.msra.mxu0 0.0
    %2532 = vmatprep.subr.mxu0 0.0
    %2533 = vmatpush1.msra.mxu0 0.0
    %2534 = vmatprep.subr.mxu0 0.0
    %2535 = vmatpush1.msra.mxu0 0.0
    %2536 = vmatprep.subr.mxu0 0.0
    %2537 = vmatpush1.msra.mxu0 0.0
    %2538 = vmatprep.subr.mxu0 0.0
    %2539 = vmatpush1.msra.mxu0 0.0
    %2540 = vmatprep.subr.mxu0 0.0
    %2541 = vmatpush1.msra.mxu0 0.0
    %2542 = vmatprep.subr.mxu0 0.0
    %2543 = vmatpush1.msra.mxu0 0.0
    %2544 = vmatprep.subr.mxu0 0.0
    %2545 = vmatpush1.msra.mxu0 0.0
    %2546 = vmatprep.subr.mxu0 0.0
    %2547 = vmatpush1.msra.mxu0 0.0
    %2548 = vmatprep.subr.mxu0 0.0
    %2549 = vmatpush1.msra.mxu0 0.0
    %2550 = vmatprep.subr.mxu0 0.0
    %2551 = vmatpush1.msra.mxu0 0.0
    %2552 = vmatprep.subr.mxu0 0.0
    %2553 = vmatpush1.msra.mxu0 0.0
    %2554 = vmatprep.subr.mxu0 0.0
    %2555 = vmatpush1.msra.mxu0 0.0
    %2556 = vmatprep.subr.mxu0 0.0
    %2557 = vmatpush1.msra.mxu0 0.0
    %2558 = vmatprep.mubr.f32.mxu0 0.0
    %v2559 = vand.u32 %v1905, 4294901760
    %2560 = vmatmul.mubr.f32.gmra.mrb[0].mxu0 %v2559
    %v2561 = vpop.f32.mrb[0].mxu0
    %v2562 = vadd.f32 %v2462, %v2561
    %v2563 = vpop.f32.mrb[0].mxu0
    %2564 = vmatprep.mubr.f32.mxu0 0.0
    %v2565 = vand.u32 %v1908, 4294901760
    %2566 = vmatmul.mubr.f32.gmra.mrb[0].mxu0 %v2565
    %v2567 = vpop.f32.mrb[0].mxu0
    %v2568 = vadd.f32 %v2468, %v2567
    %v2569 = vpop.f32.mrb[0].mxu0
    %2570 = vmatprep.mubr.f32.mxu0 0.0
    %v2571 = vand.u32 %v1911, 4294901760
    %2572 = vmatmul.mubr.f32.gmra.mrb[0].mxu0 %v2571
    %v2573 = vpop.f32.mrb[0].mxu0
    %v2574 = vadd.f32 %v2474, %v2573
    %v2575 = vpop.f32.mrb[0].mxu0
    %2576 = vmatprep.mubr.f32.mxu0 0.0
    %v2577 = vand.u32 %v1914, 4294901760
    %2578 = vmatmul.mubr.f32.gmra.mrb[0].mxu0 %v2577
    %v2579 = vpop.f32.mrb[0].mxu0
    %v2580 = vadd.f32 %v2480, %v2579
    %v2581 = vpop.f32.mrb[0].mxu0
    %2582 = vmatprep.mubr.f32.mxu0 0.0
    %v2583 = vand.u32 %v1917, 4294901760
    %2584 = vmatmul.mubr.f32.gmra.mrb[0].mxu0 %v2583
    %v2585 = vpop.f32.mrb[0].mxu0
    %v2586 = vadd.f32 %v2486, %v2585
    %v2587 = vpop.f32.mrb[0].mxu0
    %2588 = vdwg.mxu0
    %v2589 = vld [vmem:[%s11] sm:$0xff]
    %v2590 = vld [vmem:[%s11 + $0x8] sm:$0xff]
    %v2591 = vld [vmem:[%s11 + $0x10] sm:$0xff]
    %v2592 = vld [vmem:[%s11 + $0x18] sm:$0xff]
    %v2593 = vld [vmem:[%s11 + $0x20] sm:$0xff]
    %2594 = vmatprep.subr.mxu0 0.0
    %v2595 = vand.u32 %v2589, 4294901760
    %2596 = vmatpush1.msra.mxu0 %v2595
    %2597 = vmatprep.subr.mxu0 0.0
    %v2598 = vand.u32 %v2590, 4294901760
    %2599 = vmatpush1.msra.mxu0 %v2598
    %2600 = vmatprep.subr.mxu0 0.0
    %v2601 = vand.u32 %v2591, 4294901760
    %2602 = vmatpush1.msra.mxu0 %v2601
    %2603 = vmatprep.subr.mxu0 0.0
    %v2604 = vand.u32 %v2592, 4294901760
    %2605 = vmatpush1.msra.mxu0 %v2604
    %2606 = vmatprep.subr.mxu0 0.0
    %v2607 = vand.u32 %v2593, 4294901760
    %2608 = vmatpush1.msra.mxu0 %v2607
    %2609 = vmatprep.subr.mxu0 0.0
    %2610 = vmatpush1.msra.mxu0 0.0
    %2611 = vmatprep.subr.mxu0 0.0
    %2612 = vmatpush1.msra.mxu0 0.0
    %2613 = vmatprep.subr.mxu0 0.0
    %2614 = vmatpush1.msra.mxu0 0.0
    %2615 = vmatprep.subr.mxu0 0.0
    %2616 = vmatpush1.msra.mxu0 0.0
    %2617 = vmatprep.subr.mxu0 0.0
    %2618 = vmatpush1.msra.mxu0 0.0
    %2619 = vmatprep.subr.mxu0 0.0
    %2620 = vmatpush1.msra.mxu0 0.0
    %2621 = vmatprep.subr.mxu0 0.0
    %2622 = vmatpush1.msra.mxu0 0.0
    %2623 = vmatprep.subr.mxu0 0.0
    %2624 = vmatpush1.msra.mxu0 0.0
    %2625 = vmatprep.subr.mxu0 0.0
    %2626 = vmatpush1.msra.mxu0 0.0
    %2627 = vmatprep.subr.mxu0 0.0
    %2628 = vmatpush1.msra.mxu0 0.0
    %2629 = vmatprep.subr.mxu0 0.0
    %2630 = vmatpush1.msra.mxu0 0.0
    %2631 = vmatprep.subr.mxu0 0.0
    %2632 = vmatpush1.msra.mxu0 0.0
    %2633 = vmatprep.subr.mxu0 0.0
    %2634 = vmatpush1.msra.mxu0 0.0
    %2635 = vmatprep.subr.mxu0 0.0
    %2636 = vmatpush1.msra.mxu0 0.0
    %2637 = vmatprep.subr.mxu0 0.0
    %2638 = vmatpush1.msra.mxu0 0.0
    %2639 = vmatprep.subr.mxu0 0.0
    %2640 = vmatpush1.msra.mxu0 0.0
    %2641 = vmatprep.subr.mxu0 0.0
    %2642 = vmatpush1.msra.mxu0 0.0
    %2643 = vmatprep.subr.mxu0 0.0
    %2644 = vmatpush1.msra.mxu0 0.0
    %2645 = vmatprep.subr.mxu0 0.0
    %2646 = vmatpush1.msra.mxu0 0.0
    %2647 = vmatprep.subr.mxu0 0.0
    %2648 = vmatpush1.msra.mxu0 0.0
    %2649 = vmatprep.subr.mxu0 0.0
    %2650 = vmatpush1.msra.mxu0 0.0
    %2651 = vmatprep.subr.mxu0 0.0
    %2652 = vmatpush1.msra.mxu0 0.0
    %2653 = vmatprep.subr.mxu0 0.0
    %2654 = vmatpush1.msra.mxu0 0.0
    %2655 = vmatprep.subr.mxu0 0.0
    %2656 = vmatpush1.msra.mxu0 0.0
    %2657 = vmatprep.subr.mxu0 0.0
    %2658 = vmatpush1.msra.mxu0 0.0
    %2659 = vmatprep.subr.mxu0 0.0
    %2660 = vmatpush1.msra.mxu0 0.0
    %2661 = vmatprep.subr.mxu0 0.0
    %2662 = vmatpush1.msra.mxu0 0.0
    %2663 = vmatprep.mubr.f32.mxu0 0.0
    %v2664 = vand.u32 %v1905, 4294901760
    %v2665 = vsub.f32 %v1905, %v2664
    %v2666 = vand.u32 %v2665, 4294901760
    %v2667 = vsub.f32 %v2665, %v2666
    %v2668 = vand.u32 %v2667, 4294901760
    %2669 = vmatmul.mubr.f32.gmra.mrb[0].mxu0 %v2668
    %v2670 = vpop.f32.mrb[0].mxu0
    %v2671 = vadd.f32 0.0, %v2670
    %v2672 = vpop.f32.mrb[0].mxu0
    %2673 = vmatprep.mubr.f32.mxu0 0.0
    %v2674 = vand.u32 %v1908, 4294901760
    %v2675 = vsub.f32 %v1908, %v2674
    %v2676 = vand.u32 %v2675, 4294901760
    %v2677 = vsub.f32 %v2675, %v2676
    %v2678 = vand.u32 %v2677, 4294901760
    %2679 = vmatmul.mubr.f32.gmra.mrb[0].mxu0 %v2678
    %v2680 = vpop.f32.mrb[0].mxu0
    %v2681 = vadd.f32 0.0, %v2680
    %v2682 = vpop.f32.mrb[0].mxu0
    %2683 = vmatprep.mubr.f32.mxu0 0.0
    %v2684 = vand.u32 %v1911, 4294901760
    %v2685 = vsub.f32 %v1911, %v2684
    %v2686 = vand.u32 %v2685, 4294901760
    %v2687 = vsub.f32 %v2685, %v2686
    %v2688 = vand.u32 %v2687, 4294901760
    %2689 = vmatmul.mubr.f32.gmra.mrb[0].mxu0 %v2688
    %v2690 = vpop.f32.mrb[0].mxu0
    %v2691 = vadd.f32 0.0, %v2690
    %v2692 = vpop.f32.mrb[0].mxu0
    %2693 = vmatprep.mubr.f32.mxu0 0.0
    %v2694 = vand.u32 %v1914, 4294901760
    %v2695 = vsub.f32 %v1914, %v2694
    %v2696 = vand.u32 %v2695, 4294901760
    %v2697 = vsub.f32 %v2695, %v2696
    %v2698 = vand.u32 %v2697, 4294901760
    %2699 = vmatmul.mubr.f32.gmra.mrb[0].mxu0 %v2698
    %v2700 = vpop.f32.mrb[0].mxu0
    %v2701 = vadd.f32 0.0, %v2700
    %v2702 = vpop.f32.mrb[0].mxu0
    %2703 = vmatprep.mubr.f32.mxu0 0.0
    %v2704 = vand.u32 %v1917, 4294901760
    %v2705 = vsub.f32 %v1917, %v2704
    %v2706 = vand.u32 %v2705, 4294901760
    %v2707 = vsub.f32 %v2705, %v2706
    %v2708 = vand.u32 %v2707, 4294901760
    %2709 = vmatmul.mubr.f32.gmra.mrb[0].mxu0 %v2708
    %v2710 = vpop.f32.mrb[0].mxu0
    %v2711 = vadd.f32 0.0, %v2710
    %v2712 = vpop.f32.mrb[0].mxu0
    %2713 = vdwg.mxu0
    %2714 = vmatprep.subr.mxu0 0.0
    %v2715 = vand.u32 %v2589, 4294901760
    %v2716 = vsub.f32 %v2589, %v2715
    %v2717 = vand.u32 %v2716, 4294901760
    %v2718 = vsub.f32 %v2716, %v2717
    %v2719 = vand.u32 %v2718, 4294901760
    %2720 = vmatpush1.msra.mxu0 %v2719
    %2721 = vmatprep.subr.mxu0 0.0
    %v2722 = vand.u32 %v2590, 4294901760
    %v2723 = vsub.f32 %v2590, %v2722
    %v2724 = vand.u32 %v2723, 4294901760
    %v2725 = vsub.f32 %v2723, %v2724
    %v2726 = vand.u32 %v2725, 4294901760
    %2727 = vmatpush1.msra.mxu0 %v2726
    %2728 = vmatprep.subr.mxu0 0.0
    %v2729 = vand.u32 %v2591, 4294901760
    %v2730 = vsub.f32 %v2591, %v2729
    %v2731 = vand.u32 %v2730, 4294901760
    %v2732 = vsub.f32 %v2730, %v2731
    %v2733 = vand.u32 %v2732, 4294901760
    %2734 = vmatpush1.msra.mxu0 %v2733
    %2735 = vmatprep.subr.mxu0 0.0
    %v2736 = vand.u32 %v2592, 4294901760
    %v2737 = vsub.f32 %v2592, %v2736
    %v2738 = vand.u32 %v2737, 4294901760
    %v2739 = vsub.f32 %v2737, %v2738
    %v2740 = vand.u32 %v2739, 4294901760
    %2741 = vmatpush1.msra.mxu0 %v2740
    %2742 = vmatprep.subr.mxu0 0.0
    %v2743 = vand.u32 %v2593, 4294901760
    %v2744 = vsub.f32 %v2593, %v2743
    %v2745 = vand.u32 %v2744, 4294901760
    %v2746 = vsub.f32 %v2744, %v2745
    %v2747 = vand.u32 %v2746, 4294901760
    %2748 = vmatpush1.msra.mxu0 %v2747
    %2749 = vmatprep.subr.mxu0 0.0
    %2750 = vmatpush1.msra.mxu0 0.0
    %2751 = vmatprep.subr.mxu0 0.0
    %2752 = vmatpush1.msra.mxu0 0.0
    %2753 = vmatprep.subr.mxu0 0.0
    %2754 = vmatpush1.msra.mxu0 0.0
    %2755 = vmatprep.subr.mxu0 0.0
    %2756 = vmatpush1.msra.mxu0 0.0
    %2757 = vmatprep.subr.mxu0 0.0
    %2758 = vmatpush1.msra.mxu0 0.0
    %2759 = vmatprep.subr.mxu0 0.0
    %2760 = vmatpush1.msra.mxu0 0.0
    %2761 = vmatprep.subr.mxu0 0.0
    %2762 = vmatpush1.msra.mxu0 0.0
    %2763 = vmatprep.subr.mxu0 0.0
    %2764 = vmatpush1.msra.mxu0 0.0
    %2765 = vmatprep.subr.mxu0 0.0
    %2766 = vmatpush1.msra.mxu0 0.0
    %2767 = vmatprep.subr.mxu0 0.0
    %2768 = vmatpush1.msra.mxu0 0.0
    %2769 = vmatprep.subr.mxu0 0.0
    %2770 = vmatpush1.msra.mxu0 0.0
    %2771 = vmatprep.subr.mxu0 0.0
    %2772 = vmatpush1.msra.mxu0 0.0
    %2773 = vmatprep.subr.mxu0 0.0
    %2774 = vmatpush1.msra.mxu0 0.0
    %2775 = vmatprep.subr.mxu0 0.0
    %2776 = vmatpush1.msra.mxu0 0.0
    %2777 = vmatprep.subr.mxu0 0.0
    %2778 = vmatpush1.msra.mxu0 0.0
    %2779 = vmatprep.subr.mxu0 0.0
    %2780 = vmatpush1.msra.mxu0 0.0
    %2781 = vmatprep.subr.mxu0 0.0
    %2782 = vmatpush1.msra.mxu0 0.0
    %2783 = vmatprep.subr.mxu0 0.0
    %2784 = vmatpush1.msra.mxu0 0.0
    %2785 = vmatprep.subr.mxu0 0.0
    %2786 = vmatpush1.msra.mxu0 0.0
    %2787 = vmatprep.subr.mxu0 0.0
    %2788 = vmatpush1.msra.mxu0 0.0
    %2789 = vmatprep.subr.mxu0 0.0
    %2790 = vmatpush1.msra.mxu0 0.0
    %2791 = vmatprep.subr.mxu0 0.0
    %2792 = vmatpush1.msra.mxu0 0.0
    %2793 = vmatprep.subr.mxu0 0.0
    %2794 = vmatpush1.msra.mxu0 0.0
    %2795 = vmatprep.subr.mxu0 0.0
    %2796 = vmatpush1.msra.mxu0 0.0
    %2797 = vmatprep.subr.mxu0 0.0
    %2798 = vmatpush1.msra.mxu0 0.0
    %2799 = vmatprep.subr.mxu0 0.0
    %2800 = vmatpush1.msra.mxu0 0.0
    %2801 = vmatprep.subr.mxu0 0.0
    %2802 = vmatpush1.msra.mxu0 0.0
    %2803 = vmatprep.mubr.f32.mxu0 0.0
    %v2804 = vand.u32 %v1905, 4294901760
    %2805 = vmatmul.mubr.f32.gmra.mrb[0].mxu0 %v2804
    %v2806 = vpop.f32.mrb[0].mxu0
    %v2807 = vadd.f32 %v2671, %v2806
    %v2808 = vpop.f32.mrb[0].mxu0
    %2809 = vmatprep.mubr.f32.mxu0 0.0
    %v2810 = vand.u32 %v1908, 4294901760
    %2811 = vmatmul.mubr.f32.gmra.mrb[0].mxu0 %v2810
    %v2812 = vpop.f32.mrb[0].mxu0
    %v2813 = vadd.f32 %v2681, %v2812
    %v2814 = vpop.f32.mrb[0].mxu0
    %2815 = vmatprep.mubr.f32.mxu0 0.0
    %v2816 = vand.u32 %v1911, 4294901760
    %2817 = vmatmul.mubr.f32.gmra.mrb[0].mxu0 %v2816
    %v2818 = vpop.f32.mrb[0].mxu0
    %v2819 = vadd.f32 %v2691, %v2818
    %v2820 = vpop.f32.mrb[0].mxu0
    %2821 = vmatprep.mubr.f32.mxu0 0.0
    %v2822 = vand.u32 %v1914, 4294901760
    %2823 = vmatmul.mubr.f32.gmra.mrb[0].mxu0 %v2822
    %v2824 = vpop.f32.mrb[0].mxu0
    %v2825 = vadd.f32 %v2701, %v2824
    %v2826 = vpop.f32.mrb[0].mxu0
    %2827 = vmatprep.mubr.f32.mxu0 0.0
    %v2828 = vand.u32 %v1917, 4294901760
    %2829 = vmatmul.mubr.f32.gmra.mrb[0].mxu0 %v2828
    %v2830 = vpop.f32.mrb[0].mxu0
    %v2831 = vadd.f32 %v2711, %v2830
    %v2832 = vpop.f32.mrb[0].mxu0
    %2833 = vdwg.mxu0
    %2834 = vmatprep.subr.mxu0 0.0
    %v2835 = vand.u32 %v2589, 4294901760
    %v2836 = vsub.f32 %v2589, %v2835
    %2837 = vmatpush1.msra.mxu0 %v2836
    %2838 = vmatprep.subr.mxu0 0.0
    %v2839 = vand.u32 %v2590, 4294901760
    %v2840 = vsub.f32 %v2590, %v2839
    %2841 = vmatpush1.msra.mxu0 %v2840
    %2842 = vmatprep.subr.mxu0 0.0
    %v2843 = vand.u32 %v2591, 4294901760
    %v2844 = vsub.f32 %v2591, %v2843
    %2845 = vmatpush1.msra.mxu0 %v2844
    %2846 = vmatprep.subr.mxu0 0.0
    %v2847 = vand.u32 %v2592, 4294901760
    %v2848 = vsub.f32 %v2592, %v2847
    %2849 = vmatpush1.msra.mxu0 %v2848
    %2850 = vmatprep.subr.mxu0 0.0
    %v2851 = vand.u32 %v2593, 4294901760
    %v2852 = vsub.f32 %v2593, %v2851
    %2853 = vmatpush1.msra.mxu0 %v2852
    %2854 = vmatprep.subr.mxu0 0.0
    %2855 = vmatpush1.msra.mxu0 0.0
    %2856 = vmatprep.subr.mxu0 0.0
    %2857 = vmatpush1.msra.mxu0 0.0
    %2858 = vmatprep.subr.mxu0 0.0
    %2859 = vmatpush1.msra.mxu0 0.0
    %2860 = vmatprep.subr.mxu0 0.0
    %2861 = vmatpush1.msra.mxu0 0.0
    %2862 = vmatprep.subr.mxu0 0.0
    %2863 = vmatpush1.msra.mxu0 0.0
    %2864 = vmatprep.subr.mxu0 0.0
    %2865 = vmatpush1.msra.mxu0 0.0
    %2866 = vmatprep.subr.mxu0 0.0
    %2867 = vmatpush1.msra.mxu0 0.0
    %2868 = vmatprep.subr.mxu0 0.0
    %2869 = vmatpush1.msra.mxu0 0.0
    %2870 = vmatprep.subr.mxu0 0.0
    %2871 = vmatpush1.msra.mxu0 0.0
    %2872 = vmatprep.subr.mxu0 0.0
    %2873 = vmatpush1.msra.mxu0 0.0
    %2874 = vmatprep.subr.mxu0 0.0
    %2875 = vmatpush1.msra.mxu0 0.0
    %2876 = vmatprep.subr.mxu0 0.0
    %2877 = vmatpush1.msra.mxu0 0.0
    %2878 = vmatprep.subr.mxu0 0.0
    %2879 = vmatpush1.msra.mxu0 0.0
    %2880 = vmatprep.subr.mxu0 0.0
    %2881 = vmatpush1.msra.mxu0 0.0
    %2882 = vmatprep.subr.mxu0 0.0
    %2883 = vmatpush1.msra.mxu0 0.0
    %2884 = vmatprep.subr.mxu0 0.0
    %2885 = vmatpush1.msra.mxu0 0.0
    %2886 = vmatprep.subr.mxu0 0.0
    %2887 = vmatpush1.msra.mxu0 0.0
    %2888 = vmatprep.subr.mxu0 0.0
    %2889 = vmatpush1.msra.mxu0 0.0
    %2890 = vmatprep.subr.mxu0 0.0
    %2891 = vmatpush1.msra.mxu0 0.0
    %2892 = vmatprep.subr.mxu0 0.0
    %2893 = vmatpush1.msra.mxu0 0.0
    %2894 = vmatprep.subr.mxu0 0.0
    %2895 = vmatpush1.msra.mxu0 0.0
    %2896 = vmatprep.subr.mxu0 0.0
    %2897 = vmatpush1.msra.mxu0 0.0
    %2898 = vmatprep.subr.mxu0 0.0
    %2899 = vmatpush1.msra.mxu0 0.0
    %2900 = vmatprep.subr.mxu0 0.0
    %2901 = vmatpush1.msra.mxu0 0.0
    %2902 = vmatprep.subr.mxu0 0.0
    %2903 = vmatpush1.msra.mxu0 0.0
    %2904 = vmatprep.subr.mxu0 0.0
    %2905 = vmatpush1.msra.mxu0 0.0
    %2906 = vmatprep.subr.mxu0 0.0
    %2907 = vmatpush1.msra.mxu0 0.0
    %2908 = vmatprep.mubr.f32.mxu0 0.0
    %v2909 = vand.u32 %v1905, 4294901760
    %v2910 = vsub.f32 %v1905, %v2909
    %2911 = vmatmul.mubr.f32.gmra.mrb[0].mxu0 %v2910
    %v2912 = vpop.f32.mrb[0].mxu0
    %v2913 = vadd.f32 %v2807, %v2912
    %v2914 = vpop.f32.mrb[0].mxu0
    %2915 = vmatprep.mubr.f32.mxu0 0.0
    %v2916 = vand.u32 %v1908, 4294901760
    %v2917 = vsub.f32 %v1908, %v2916
    %2918 = vmatmul.mubr.f32.gmra.mrb[0].mxu0 %v2917
    %v2919 = vpop.f32.mrb[0].mxu0
    %v2920 = vadd.f32 %v2813, %v2919
    %v2921 = vpop.f32.mrb[0].mxu0
    %2922 = vmatprep.mubr.f32.mxu0 0.0
    %v2923 = vand.u32 %v1911, 4294901760
    %v2924 = vsub.f32 %v1911, %v2923
    %2925 = vmatmul.mubr.f32.gmra.mrb[0].mxu0 %v2924
    %v2926 = vpop.f32.mrb[0].mxu0
    %v2927 = vadd.f32 %v2819, %v2926
    %v2928 = vpop.f32.mrb[0].mxu0
    %2929 = vmatprep.mubr.f32.mxu0 0.0
    %v2930 = vand.u32 %v1914, 4294901760
    %v2931 = vsub.f32 %v1914, %v2930
    %2932 = vmatmul.mubr.f32.gmra.mrb[0].mxu0 %v2931
    %v2933 = vpop.f32.mrb[0].mxu0
    %v2934 = vadd.f32 %v2825, %v2933
    %v2935 = vpop.f32.mrb[0].mxu0
    %2936 = vmatprep.mubr.f32.mxu0 0.0
    %v2937 = vand.u32 %v1917, 4294901760
    %v2938 = vsub.f32 %v1917, %v2937
    %2939 = vmatmul.mubr.f32.gmra.mrb[0].mxu0 %v2938
    %v2940 = vpop.f32.mrb[0].mxu0
    %v2941 = vadd.f32 %v2831, %v2940
    %v2942 = vpop.f32.mrb[0].mxu0
    %2943 = vdwg.mxu0
    %2944 = vmatprep.subr.mxu0 0.0
    %v2945 = vand.u32 %v2589, 4294901760
    %2946 = vmatpush1.msra.mxu0 %v2945
    %2947 = vmatprep.subr.mxu0 0.0
    %v2948 = vand.u32 %v2590, 4294901760
    %2949 = vmatpush1.msra.mxu0 %v2948
    %2950 = vmatprep.subr.mxu0 0.0
    %v2951 = vand.u32 %v2591, 4294901760
    %2952 = vmatpush1.msra.mxu0 %v2951
    %2953 = vmatprep.subr.mxu0 0.0
    %v2954 = vand.u32 %v2592, 4294901760
    %2955 = vmatpush1.msra.mxu0 %v2954
    %2956 = vmatprep.subr.mxu0 0.0
    %v2957 = vand.u32 %v2593, 4294901760
    %2958 = vmatpush1.msra.mxu0 %v2957
    %2959 = vmatprep.subr.mxu0 0.0
    %2960 = vmatpush1.msra.mxu0 0.0
    %2961 = vmatprep.subr.mxu0 0.0
    %2962 = vmatpush1.msra.mxu0 0.0
    %2963 = vmatprep.subr.mxu0 0.0
    %2964 = vmatpush1.msra.mxu0 0.0
    %2965 = vmatprep.subr.mxu0 0.0
    %2966 = vmatpush1.msra.mxu0 0.0
    %2967 = vmatprep.subr.mxu0 0.0
    %2968 = vmatpush1.msra.mxu0 0.0
    %2969 = vmatprep.subr.mxu0 0.0
    %2970 = vmatpush1.msra.mxu0 0.0
    %2971 = vmatprep.subr.mxu0 0.0
    %2972 = vmatpush1.msra.mxu0 0.0
    %2973 = vmatprep.subr.mxu0 0.0
    %2974 = vmatpush1.msra.mxu0 0.0
    %2975 = vmatprep.subr.mxu0 0.0
    %2976 = vmatpush1.msra.mxu0 0.0
    %2977 = vmatprep.subr.mxu0 0.0
    %2978 = vmatpush1.msra.mxu0 0.0
    %2979 = vmatprep.subr.mxu0 0.0
    %2980 = vmatpush1.msra.mxu0 0.0
    %2981 = vmatprep.subr.mxu0 0.0
    %2982 = vmatpush1.msra.mxu0 0.0
    %2983 = vmatprep.subr.mxu0 0.0
    %2984 = vmatpush1.msra.mxu0 0.0
    %2985 = vmatprep.subr.mxu0 0.0
    %2986 = vmatpush1.msra.mxu0 0.0
    %2987 = vmatprep.subr.mxu0 0.0
    %2988 = vmatpush1.msra.mxu0 0.0
    %2989 = vmatprep.subr.mxu0 0.0
    %2990 = vmatpush1.msra.mxu0 0.0
    %2991 = vmatprep.subr.mxu0 0.0
    %2992 = vmatpush1.msra.mxu0 0.0
    %2993 = vmatprep.subr.mxu0 0.0
    %2994 = vmatpush1.msra.mxu0 0.0
    %2995 = vmatprep.subr.mxu0 0.0
    %2996 = vmatpush1.msra.mxu0 0.0
    %2997 = vmatprep.subr.mxu0 0.0
    %2998 = vmatpush1.msra.mxu0 0.0
    %2999 = vmatprep.subr.mxu0 0.0
    %3000 = vmatpush1.msra.mxu0 0.0
    %3001 = vmatprep.subr.mxu0 0.0
    %3002 = vmatpush1.msra.mxu0 0.0
    %3003 = vmatprep.subr.mxu0 0.0
    %3004 = vmatpush1.msra.mxu0 0.0
    %3005 = vmatprep.subr.mxu0 0.0
    %3006 = vmatpush1.msra.mxu0 0.0
    %3007 = vmatprep.subr.mxu0 0.0
    %3008 = vmatpush1.msra.mxu0 0.0
    %3009 = vmatprep.subr.mxu0 0.0
    %3010 = vmatpush1.msra.mxu0 0.0
    %3011 = vmatprep.subr.mxu0 0.0
    %3012 = vmatpush1.msra.mxu0 0.0
    %3013 = vmatprep.mubr.f32.mxu0 0.0
    %v3014 = vand.u32 %v1905, 4294901760
    %v3015 = vsub.f32 %v1905, %v3014
    %v3016 = vand.u32 %v3015, 4294901760
    %3017 = vmatmul.mubr.f32.gmra.mrb[0].mxu0 %v3016
    %v3018 = vpop.f32.mrb[0].mxu0
    %v3019 = vadd.f32 %v2913, %v3018
    %v3020 = vpop.f32.mrb[0].mxu0
    %3021 = vmatprep.mubr.f32.mxu0 0.0
    %v3022 = vand.u32 %v1908, 4294901760
    %v3023 = vsub.f32 %v1908, %v3022
    %v3024 = vand.u32 %v3023, 4294901760
    %3025 = vmatmul.mubr.f32.gmra.mrb[0].mxu0 %v3024
    %v3026 = vpop.f32.mrb[0].mxu0
    %v3027 = vadd.f32 %v2920, %v3026
    %v3028 = vpop.f32.mrb[0].mxu0
    %3029 = vmatprep.mubr.f32.mxu0 0.0
    %v3030 = vand.u32 %v1911, 4294901760
    %v3031 = vsub.f32 %v1911, %v3030
    %v3032 = vand.u32 %v3031, 4294901760
    %3033 = vmatmul.mubr.f32.gmra.mrb[0].mxu0 %v3032
    %v3034 = vpop.f32.mrb[0].mxu0
    %v3035 = vadd.f32 %v2927, %v3034
    %v3036 = vpop.f32.mrb[0].mxu0
    %3037 = vmatprep.mubr.f32.mxu0 0.0
    %v3038 = vand.u32 %v1914, 4294901760
    %v3039 = vsub.f32 %v1914, %v3038
    %v3040 = vand.u32 %v3039, 4294901760
    %3041 = vmatmul.mubr.f32.gmra.mrb[0].mxu0 %v3040
    %v3042 = vpop.f32.mrb[0].mxu0
    %v3043 = vadd.f32 %v2934, %v3042
    %v3044 = vpop.f32.mrb[0].mxu0
    %3045 = vmatprep.mubr.f32.mxu0 0.0
    %v3046 = vand.u32 %v1917, 4294901760
    %v3047 = vsub.f32 %v1917, %v3046
    %v3048 = vand.u32 %v3047, 4294901760
    %3049 = vmatmul.mubr.f32.gmra.mrb[0].mxu0 %v3048
    %v3050 = vpop.f32.mrb[0].mxu0
    %v3051 = vadd.f32 %v2941, %v3050
    %v3052 = vpop.f32.mrb[0].mxu0
    %3053 = vdwg.mxu0
    %3054 = vmatprep.subr.mxu0 0.0
    %v3055 = vand.u32 %v2589, 4294901760
    %v3056 = vsub.f32 %v2589, %v3055
    %v3057 = vand.u32 %v3056, 4294901760
    %3058 = vmatpush1.msra.mxu0 %v3057
    %3059 = vmatprep.subr.mxu0 0.0
    %v3060 = vand.u32 %v2590, 4294901760
    %v3061 = vsub.f32 %v2590, %v3060
    %v3062 = vand.u32 %v3061, 4294901760
    %3063 = vmatpush1.msra.mxu0 %v3062
    %3064 = vmatprep.subr.mxu0 0.0
    %v3065 = vand.u32 %v2591, 4294901760
    %v3066 = vsub.f32 %v2591, %v3065
    %v3067 = vand.u32 %v3066, 4294901760
    %3068 = vmatpush1.msra.mxu0 %v3067
    %3069 = vmatprep.subr.mxu0 0.0
    %v3070 = vand.u32 %v2592, 4294901760
    %v3071 = vsub.f32 %v2592, %v3070
    %v3072 = vand.u32 %v3071, 4294901760
    %3073 = vmatpush1.msra.mxu0 %v3072
    %3074 = vmatprep.subr.mxu0 0.0
    %v3075 = vand.u32 %v2593, 4294901760
    %v3076 = vsub.f32 %v2593, %v3075
    %v3077 = vand.u32 %v3076, 4294901760
    %3078 = vmatpush1.msra.mxu0 %v3077
    %3079 = vmatprep.subr.mxu0 0.0
    %3080 = vmatpush1.msra.mxu0 0.0
    %3081 = vmatprep.subr.mxu0 0.0
    %3082 = vmatpush1.msra.mxu0 0.0
    %3083 = vmatprep.subr.mxu0 0.0
    %3084 = vmatpush1.msra.mxu0 0.0
    %3085 = vmatprep.subr.mxu0 0.0
    %3086 = vmatpush1.msra.mxu0 0.0
    %3087 = vmatprep.subr.mxu0 0.0
    %3088 = vmatpush1.msra.mxu0 0.0
    %3089 = vmatprep.subr.mxu0 0.0
    %3090 = vmatpush1.msra.mxu0 0.0
    %3091 = vmatprep.subr.mxu0 0.0
    %3092 = vmatpush1.msra.mxu0 0.0
    %3093 = vmatprep.subr.mxu0 0.0
    %3094 = vmatpush1.msra.mxu0 0.0
    %3095 = vmatprep.subr.mxu0 0.0
    %3096 = vmatpush1.msra.mxu0 0.0
    %3097 = vmatprep.subr.mxu0 0.0
    %3098 = vmatpush1.msra.mxu0 0.0
    %3099 = vmatprep.subr.mxu0 0.0
    %3100 = vmatpush1.msra.mxu0 0.0
    %3101 = vmatprep.subr.mxu0 0.0
    %3102 = vmatpush1.msra.mxu0 0.0
    %3103 = vmatprep.subr.mxu0 0.0
    %3104 = vmatpush1.msra.mxu0 0.0
    %3105 = vmatprep.subr.mxu0 0.0
    %3106 = vmatpush1.msra.mxu0 0.0
    %3107 = vmatprep.subr.mxu0 0.0
    %3108 = vmatpush1.msra.mxu0 0.0
    %3109 = vmatprep.subr.mxu0 0.0
    %3110 = vmatpush1.msra.mxu0 0.0
    %3111 = vmatprep.subr.mxu0 0.0
    %3112 = vmatpush1.msra.mxu0 0.0
    %3113 = vmatprep.subr.mxu0 0.0
    %3114 = vmatpush1.msra.mxu0 0.0
    %3115 = vmatprep.subr.mxu0 0.0
    %3116 = vmatpush1.msra.mxu0 0.0
    %3117 = vmatprep.subr.mxu0 0.0
    %3118 = vmatpush1.msra.mxu0 0.0
    %3119 = vmatprep.subr.mxu0 0.0
    %3120 = vmatpush1.msra.mxu0 0.0
    %3121 = vmatprep.subr.mxu0 0.0
    %3122 = vmatpush1.msra.mxu0 0.0
    %3123 = vmatprep.subr.mxu0 0.0
    %3124 = vmatpush1.msra.mxu0 0.0
    %3125 = vmatprep.subr.mxu0 0.0
    %3126 = vmatpush1.msra.mxu0 0.0
    %3127 = vmatprep.subr.mxu0 0.0
    %3128 = vmatpush1.msra.mxu0 0.0
    %3129 = vmatprep.subr.mxu0 0.0
    %3130 = vmatpush1.msra.mxu0 0.0
    %3131 = vmatprep.subr.mxu0 0.0
    %3132 = vmatpush1.msra.mxu0 0.0
    %3133 = vmatprep.mubr.f32.mxu0 0.0
    %v3134 = vand.u32 %v1905, 4294901760
    %3135 = vmatmul.mubr.f32.gmra.mrb[0].mxu0 %v3134
    %v3136 = vpop.f32.mrb[0].mxu0
    %v3137 = vadd.f32 %v3019, %v3136
    %v3138 = vpop.f32.mrb[0].mxu0
    %3139 = vmatprep.mubr.f32.mxu0 0.0
    %v3140 = vand.u32 %v1908, 4294901760
    %3141 = vmatmul.mubr.f32.gmra.mrb[0].mxu0 %v3140
    %v3142 = vpop.f32.mrb[0].mxu0
    %v3143 = vadd.f32 %v3027, %v3142
    %v3144 = vpop.f32.mrb[0].mxu0
    %3145 = vmatprep.mubr.f32.mxu0 0.0
    %v3146 = vand.u32 %v1911, 4294901760
    %3147 = vmatmul.mubr.f32.gmra.mrb[0].mxu0 %v3146
    %v3148 = vpop.f32.mrb[0].mxu0
    %v3149 = vadd.f32 %v3035, %v3148
    %v3150 = vpop.f32.mrb[0].mxu0
    %3151 = vmatprep.mubr.f32.mxu0 0.0
    %v3152 = vand.u32 %v1914, 4294901760
    %3153 = vmatmul.mubr.f32.gmra.mrb[0].mxu0 %v3152
    %v3154 = vpop.f32.mrb[0].mxu0
    %v3155 = vadd.f32 %v3043, %v3154
    %v3156 = vpop.f32.mrb[0].mxu0
    %3157 = vmatprep.mubr.f32.mxu0 0.0
    %v3158 = vand.u32 %v1917, 4294901760
    %3159 = vmatmul.mubr.f32.gmra.mrb[0].mxu0 %v3158
    %v3160 = vpop.f32.mrb[0].mxu0
    %v3161 = vadd.f32 %v3051, %v3160
    %v3162 = vpop.f32.mrb[0].mxu0
    %3163 = vdwg.mxu0
    %3164 = vmatprep.subr.mxu0 0.0
    %v3165 = vand.u32 %v2589, 4294901760
    %3166 = vmatpush1.msra.mxu0 %v3165
    %3167 = vmatprep.subr.mxu0 0.0
    %v3168 = vand.u32 %v2590, 4294901760
    %3169 = vmatpush1.msra.mxu0 %v3168
    %3170 = vmatprep.subr.mxu0 0.0
    %v3171 = vand.u32 %v2591, 4294901760
    %3172 = vmatpush1.msra.mxu0 %v3171
    %3173 = vmatprep.subr.mxu0 0.0
    %v3174 = vand.u32 %v2592, 4294901760
    %3175 = vmatpush1.msra.mxu0 %v3174
    %3176 = vmatprep.subr.mxu0 0.0
    %v3177 = vand.u32 %v2593, 4294901760
    %3178 = vmatpush1.msra.mxu0 %v3177
    %3179 = vmatprep.subr.mxu0 0.0
    %3180 = vmatpush1.msra.mxu0 0.0
    %3181 = vmatprep.subr.mxu0 0.0
    %3182 = vmatpush1.msra.mxu0 0.0
    %3183 = vmatprep.subr.mxu0 0.0
    %3184 = vmatpush1.msra.mxu0 0.0
    %3185 = vmatprep.subr.mxu0 0.0
    %3186 = vmatpush1.msra.mxu0 0.0
    %3187 = vmatprep.subr.mxu0 0.0
    %3188 = vmatpush1.msra.mxu0 0.0
    %3189 = vmatprep.subr.mxu0 0.0
    %3190 = vmatpush1.msra.mxu0 0.0
    %3191 = vmatprep.subr.mxu0 0.0
    %3192 = vmatpush1.msra.mxu0 0.0
    %3193 = vmatprep.subr.mxu0 0.0
    %3194 = vmatpush1.msra.mxu0 0.0
    %3195 = vmatprep.subr.mxu0 0.0
    %3196 = vmatpush1.msra.mxu0 0.0
    %3197 = vmatprep.subr.mxu0 0.0
    %3198 = vmatpush1.msra.mxu0 0.0
    %3199 = vmatprep.subr.mxu0 0.0
    %3200 = vmatpush1.msra.mxu0 0.0
    %3201 = vmatprep.subr.mxu0 0.0
    %3202 = vmatpush1.msra.mxu0 0.0
    %3203 = vmatprep.subr.mxu0 0.0
    %3204 = vmatpush1.msra.mxu0 0.0
    %3205 = vmatprep.subr.mxu0 0.0
    %3206 = vmatpush1.msra.mxu0 0.0
    %3207 = vmatprep.subr.mxu0 0.0
    %3208 = vmatpush1.msra.mxu0 0.0
    %3209 = vmatprep.subr.mxu0 0.0
    %3210 = vmatpush1.msra.mxu0 0.0
    %3211 = vmatprep.subr.mxu0 0.0
    %3212 = vmatpush1.msra.mxu0 0.0
    %3213 = vmatprep.subr.mxu0 0.0
    %3214 = vmatpush1.msra.mxu0 0.0
    %3215 = vmatprep.subr.mxu0 0.0
    %3216 = vmatpush1.msra.mxu0 0.0
    %3217 = vmatprep.subr.mxu0 0.0
    %3218 = vmatpush1.msra.mxu0 0.0
    %3219 = vmatprep.subr.mxu0 0.0
    %3220 = vmatpush1.msra.mxu0 0.0
    %3221 = vmatprep.subr.mxu0 0.0
    %3222 = vmatpush1.msra.mxu0 0.0
    %3223 = vmatprep.subr.mxu0 0.0
    %3224 = vmatpush1.msra.mxu0 0.0
    %3225 = vmatprep.subr.mxu0 0.0
    %3226 = vmatpush1.msra.mxu0 0.0
    %3227 = vmatprep.subr.mxu0 0.0
    %3228 = vmatpush1.msra.mxu0 0.0
    %3229 = vmatprep.subr.mxu0 0.0
    %3230 = vmatpush1.msra.mxu0 0.0
    %3231 = vmatprep.subr.mxu0 0.0
    %3232 = vmatpush1.msra.mxu0 0.0
    %3233 = vmatprep.mubr.f32.mxu0 0.0
    %v3234 = vand.u32 %v1905, 4294901760
    %3235 = vmatmul.mubr.f32.gmra.mrb[0].mxu0 %v3234
    %v3236 = vpop.f32.mrb[0].mxu0
    %v3237 = vadd.f32 %v3137, %v3236
    %v3238 = vpop.f32.mrb[0].mxu0
    %3239 = vmatprep.mubr.f32.mxu0 0.0
    %v3240 = vand.u32 %v1908, 4294901760
    %3241 = vmatmul.mubr.f32.gmra.mrb[0].mxu0 %v3240
    %v3242 = vpop.f32.mrb[0].mxu0
    %v3243 = vadd.f32 %v3143, %v3242
    %v3244 = vpop.f32.mrb[0].mxu0
    %3245 = vmatprep.mubr.f32.mxu0 0.0
    %v3246 = vand.u32 %v1911, 4294901760
    %3247 = vmatmul.mubr.f32.gmra.mrb[0].mxu0 %v3246
    %v3248 = vpop.f32.mrb[0].mxu0
    %v3249 = vadd.f32 %v3149, %v3248
    %v3250 = vpop.f32.mrb[0].mxu0
    %3251 = vmatprep.mubr.f32.mxu0 0.0
    %v3252 = vand.u32 %v1914, 4294901760
    %3253 = vmatmul.mubr.f32.gmra.mrb[0].mxu0 %v3252
    %v3254 = vpop.f32.mrb[0].mxu0
    %v3255 = vadd.f32 %v3155, %v3254
    %v3256 = vpop.f32.mrb[0].mxu0
    %3257 = vmatprep.mubr.f32.mxu0 0.0
    %v3258 = vand.u32 %v1917, 4294901760
    %3259 = vmatmul.mubr.f32.gmra.mrb[0].mxu0 %v3258
    %v3260 = vpop.f32.mrb[0].mxu0
    %v3261 = vadd.f32 %v3161, %v3260
    %v3262 = vpop.f32.mrb[0].mxu0
    %3263 = vdwg.mxu0
    %vm3264 = vcmp.eq.s32.totalorder %v1847, 0
    %vm3265 = vcmp.eq.s32.totalorder %v1848, 0
    %vm3266 = vcmp.eq.s32.totalorder %v1849, 0
    %vm3267 = vcmp.eq.s32.totalorder %v1850, 0
    %vm3268 = vcmp.eq.s32.totalorder %v1851, 0
    %v3269 = vsel %vm3264, 1.0, 0.0
    %v3270 = vsel %vm3265, 1.0, 0.0
    %v3271 = vsel %vm3266, 1.0, 0.0
    %v3272 = vsel %vm3267, 1.0, 0.0
    %v3273 = vsel %vm3268, 1.0, 0.0
    %vm3274 = vcmp.eq.s32.totalorder %v1853, 0
    %v3275 = vsel %vm3274, 1.0, 0.0
    %v3276 = vmul.f32 %v2562, %v3269
    %v3277 = vmul.f32 %v2568, %v3270
    %v3278 = vmul.f32 %v2574, %v3271
    %v3279 = vmul.f32 %v2580, %v3272
    %v3280 = vmul.f32 %v2586, %v3273
    %vm3281 = vcmask 269312
    %v3282 = vsel %vm3281, %v3276, 0.0
    %v3283 = vsel %vm3281, %v3277, 0.0
    %v3284 = vadd.f32 %v3282, %v3283
    %v3285 = vsel %vm3281, %v3278, 0.0
    %v3286 = vadd.f32 %v3284, %v3285
    %v3287 = vsel %vm3281, %v3279, 0.0
    %v3288 = vadd.f32 %v3286, %v3287
    %vm3289 = vcmask 262144
    %v3290 = vsel %vm3289, %v3280, 0.0
    %v3291 = vadd.f32 %v3288, %v3290
    %v3292 = vrot.slane %v3291, 4
    %v3293 = vadd.f32 %v3291, %v3292
    %v3294 = vrot.slane %v3293, 2
    %v3295 = vadd.f32 %v3293, %v3294
    %v3296 = vrot.slane %v3295, 1
    %v3297 = vadd.f32 %v3295, %v3296
    %v3298 = vmul.f32 %v3237, %v3269
    %v3299 = vmul.f32 %v3243, %v3270
    %v3300 = vmul.f32 %v3249, %v3271
    %v3301 = vmul.f32 %v3255, %v3272
    %v3302 = vmul.f32 %v3261, %v3273
    %vm3303 = vcmask 64512
    %v3304 = vsel %vm3303, %v3298, 0.0
    %v3305 = vsel %vm3303, %v3299, 0.0
    %v3306 = vadd.f32 %v3304, %v3305
    %v3307 = vsel %vm3303, %v3300, 0.0
    %v3308 = vadd.f32 %v3306, %v3307
    %v3309 = vsel %vm3303, %v3301, 0.0
    %v3310 = vadd.f32 %v3308, %v3309
    %vm3311 = vcmask 57344
    %v3312 = vsel %vm3311, %v3302, 0.0
    %v3313 = vadd.f32 %v3310, %v3312
    %v3314 = vrot.slane %v3313, 4
    %v3315 = vadd.f32 %v3313, %v3314
    %v3316 = vrot.slane %v3315, 2
    %v3317 = vadd.f32 %v3315, %v3316
    %v3318 = vrot.slane %v3317, 1
    %v3319 = vadd.f32 %v3317, %v3318
    %v3320 = vmul.f32 %v3297, %v3275
    %v3321 = vsel %vm3281, %v3320, 0.0
    %3322 = vadd.xlane.f32.xlu0 %v3321
    %v3323 = vpop.xlane.xlu0 %3322
    %v3324 = vrcp.pop %v3323
    %v3325 = vmul.f32 1.0, %v3324
    %v3326 = vmul.f32 %v2562, %v3275
    %v3327 = vmul.f32 %v2568, %v3275
    %v3328 = vmul.f32 %v2574, %v3275
    %v3329 = vmul.f32 %v2580, %v3275
    %v3330 = vmul.f32 %v2586, %v3275
    %v3331 = vsel %vm3281, %v3326, 0.0
    %3332 = vadd.xlane.f32.xlu0 %v3331
    %v3333 = vpop.xlane.xlu0 %3332
    %v3334 = vsel %vm3281, %v3327, 0.0
    %3335 = vadd.xlane.f32.xlu0 %v3334
    %v3336 = vpop.xlane.xlu0 %3335
    %v3337 = vsel %vm3281, %v3328, 0.0
    %3338 = vadd.xlane.f32.xlu0 %v3337
    %v3339 = vpop.xlane.xlu0 %3338
    %v3340 = vsel %vm3281, %v3329, 0.0
    %3341 = vadd.xlane.f32.xlu0 %v3340
    %v3342 = vpop.xlane.xlu0 %3341
    %v3343 = vsel %vm3289, %v3330, 0.0
    %3344 = vadd.xlane.f32.xlu0 %v3343
    %v3345 = vpop.xlane.xlu0 %3344
    %v3346 = vsub.f32 %v3333, %v3269
    %v3347 = vsub.f32 %v3336, %v3270
    %v3348 = vsub.f32 %v3339, %v3271
    %v3349 = vsub.f32 %v3342, %v3272
    %v3350 = vsub.f32 %v3345, %v3273
    %v3351 = vmul.f32 %v3297, %v3325
    %v3352 = vmul.f32 %v3346, %v3351
    %v3353 = vmul.f32 %v3347, %v3351
    %v3354 = vmul.f32 %v3348, %v3351
    %v3355 = vmul.f32 %v3349, %v3351
    %v3356 = vmul.f32 %v3350, %v3351
    %v3357 = vsub.f32 %v2562, %v3352
    %v3358 = vsub.f32 %v2568, %v3353
    %v3359 = vsub.f32 %v2574, %v3354
    %v3360 = vsub.f32 %v2580, %v3355
    %v3361 = vsub.f32 %v2586, %v3356
    %v3362 = vmul.f32 %v3319, %v3325
    %v3363 = vmul.f32 %v3346, %v3362
    %v3364 = vmul.f32 %v3347, %v3362
    %v3365 = vmul.f32 %v3348, %v3362
    %v3366 = vmul.f32 %v3349, %v3362
    %v3367 = vmul.f32 %v3350, %v3362
    %v3368 = vsub.f32 %v3237, %v3363
    %v3369 = vsub.f32 %v3243, %v3364
    %v3370 = vsub.f32 %v3249, %v3365
    %v3371 = vsub.f32 %v3255, %v3366
    %v3372 = vsub.f32 %v3261, %v3367
    %vm3373 = vcmp.eq.s32.totalorder %v1847, 1
    %vm3374 = vcmp.eq.s32.totalorder %v1848, 1
    %vm3375 = vcmp.eq.s32.totalorder %v1849, 1
    %vm3376 = vcmp.eq.s32.totalorder %v1850, 1
    %vm3377 = vcmp.eq.s32.totalorder %v1851, 1
    %v3378 = vsel %vm3373, 1.0, 0.0
    %v3379 = vsel %vm3374, 1.0, 0.0
    %v3380 = vsel %vm3375, 1.0, 0.0
    %v3381 = vsel %vm3376, 1.0, 0.0
    %v3382 = vsel %vm3377, 1.0, 0.0
    %vm3383 = vcmp.eq.s32.totalorder %v1853, 1
    %v3384 = vsel %vm3383, 1.0, 0.0
    %v3385 = vmul.f32 %v3357, %v3378
    %v3386 = vmul.f32 %v3358, %v3379
    %v3387 = vmul.f32 %v3359, %v3380
    %v3388 = vmul.f32 %v3360, %v3381
    %v3389 = vmul.f32 %v3361, %v3382
    %v3390 = vsel %vm3281, %v3385, 0.0
    %v3391 = vsel %vm3281, %v3386, 0.0
    %v3392 = vadd.f32 %v3390, %v3391
    %v3393 = vsel %vm3281, %v3387, 0.0
    %v3394 = vadd.f32 %v3392, %v3393
    %v3395 = vsel %vm3281, %v3388, 0.0
    %v3396 = vadd.f32 %v3394, %v3395
    %v3397 = vsel %vm3289, %v3389, 0.0
    %v3398 = vadd.f32 %v3396, %v3397
    %v3399 = vrot.slane %v3398, 4
    %v3400 = vadd.f32 %v3398, %v3399
    %v3401 = vrot.slane %v3400, 2
    %v3402 = vadd.f32 %v3400, %v3401
    %v3403 = vrot.slane %v3402, 1
    %v3404 = vadd.f32 %v3402, %v3403
    %v3405 = vmul.f32 %v3368, %v3378
    %v3406 = vmul.f32 %v3369, %v3379
    %v3407 = vmul.f32 %v3370, %v3380
    %v3408 = vmul.f32 %v3371, %v3381
    %v3409 = vmul.f32 %v3372, %v3382
    %v3410 = vsel %vm3303, %v3405, 0.0
    %v3411 = vsel %vm3303, %v3406, 0.0
    %v3412 = vadd.f32 %v3410, %v3411
    %v3413 = vsel %vm3303, %v3407, 0.0
    %v3414 = vadd.f32 %v3412, %v3413
    %v3415 = vsel %vm3303, %v3408, 0.0
    %v3416 = vadd.f32 %v3414, %v3415
    %v3417 = vsel %vm3311, %v3409, 0.0
    %v3418 = vadd.f32 %v3416, %v3417
    %v3419 = vrot.slane %v3418, 4
    %v3420 = vadd.f32 %v3418, %v3419
    %v3421 = vrot.slane %v3420, 2
    %v3422 = vadd.f32 %v3420, %v3421
    %v3423 = vrot.slane %v3422, 1
    %v3424 = vadd.f32 %v3422, %v3423
    %v3425 = vmul.f32 %v3404, %v3384
    %v3426 = vsel %vm3281, %v3425, 0.0
    %3427 = vadd.xlane.f32.xlu0 %v3426
    %v3428 = vpop.xlane.xlu0 %3427
    %v3429 = vrcp.pop %v3428
    %v3430 = vmul.f32 1.0, %v3429
    %v3431 = vmul.f32 %v3357, %v3384
    %v3432 = vmul.f32 %v3358, %v3384
    %v3433 = vmul.f32 %v3359, %v3384
    %v3434 = vmul.f32 %v3360, %v3384
    %v3435 = vmul.f32 %v3361, %v3384
    %v3436 = vsel %vm3281, %v3431, 0.0
    %3437 = vadd.xlane.f32.xlu0 %v3436
    %v3438 = vpop.xlane.xlu0 %3437
    %v3439 = vsel %vm3281, %v3432, 0.0
    %3440 = vadd.xlane.f32.xlu0 %v3439
    %v3441 = vpop.xlane.xlu0 %3440
    %v3442 = vsel %vm3281, %v3433, 0.0
    %3443 = vadd.xlane.f32.xlu0 %v3442
    %v3444 = vpop.xlane.xlu0 %3443
    %v3445 = vsel %vm3281, %v3434, 0.0
    %3446 = vadd.xlane.f32.xlu0 %v3445
    %v3447 = vpop.xlane.xlu0 %3446
    %v3448 = vsel %vm3289, %v3435, 0.0
    %3449 = vadd.xlane.f32.xlu0 %v3448
    %v3450 = vpop.xlane.xlu0 %3449
    %v3451 = vsub.f32 %v3438, %v3378
    %v3452 = vsub.f32 %v3441, %v3379
    %v3453 = vsub.f32 %v3444, %v3380
    %v3454 = vsub.f32 %v3447, %v3381
    %v3455 = vsub.f32 %v3450, %v3382
    %v3456 = vmul.f32 %v3404, %v3430
    %v3457 = vmul.f32 %v3451, %v3456
    %v3458 = vmul.f32 %v3452, %v3456
    %v3459 = vmul.f32 %v3453, %v3456
    %v3460 = vmul.f32 %v3454, %v3456
    %v3461 = vmul.f32 %v3455, %v3456
    %v3462 = vsub.f32 %v3357, %v3457
    %v3463 = vsub.f32 %v3358, %v3458
    %v3464 = vsub.f32 %v3359, %v3459
    %v3465 = vsub.f32 %v3360, %v3460
    %v3466 = vsub.f32 %v3361, %v3461
    %v3467 = vmul.f32 %v3424, %v3430
    %v3468 = vmul.f32 %v3451, %v3467
    %v3469 = vmul.f32 %v3452, %v3467
    %v3470 = vmul.f32 %v3453, %v3467
    %v3471 = vmul.f32 %v3454, %v3467
    %v3472 = vmul.f32 %v3455, %v3467
    %v3473 = vsub.f32 %v3368, %v3468
    %v3474 = vsub.f32 %v3369, %v3469
    %v3475 = vsub.f32 %v3370, %v3470
    %v3476 = vsub.f32 %v3371, %v3471
    %v3477 = vsub.f32 %v3372, %v3472
    %vm3478 = vcmp.eq.s32.totalorder %v1847, 2
    %vm3479 = vcmp.eq.s32.totalorder %v1848, 2
    %vm3480 = vcmp.eq.s32.totalorder %v1849, 2
    %vm3481 = vcmp.eq.s32.totalorder %v1850, 2
    %vm3482 = vcmp.eq.s32.totalorder %v1851, 2
    %v3483 = vsel %vm3478, 1.0, 0.0
    %v3484 = vsel %vm3479, 1.0, 0.0
    %v3485 = vsel %vm3480, 1.0, 0.0
    %v3486 = vsel %vm3481, 1.0, 0.0
    %v3487 = vsel %vm3482, 1.0, 0.0
    %vm3488 = vcmp.eq.s32.totalorder %v1853, 2
    %v3489 = vsel %vm3488, 1.0, 0.0
    %v3490 = vmul.f32 %v3462, %v3483
    %v3491 = vmul.f32 %v3463, %v3484
    %v3492 = vmul.f32 %v3464, %v3485
    %v3493 = vmul.f32 %v3465, %v3486
    %v3494 = vmul.f32 %v3466, %v3487
    %v3495 = vsel %vm3281, %v3490, 0.0
    %v3496 = vsel %vm3281, %v3491, 0.0
    %v3497 = vadd.f32 %v3495, %v3496
    %v3498 = vsel %vm3281, %v3492, 0.0
    %v3499 = vadd.f32 %v3497, %v3498
    %v3500 = vsel %vm3281, %v3493, 0.0
    %v3501 = vadd.f32 %v3499, %v3500
    %v3502 = vsel %vm3289, %v3494, 0.0
    %v3503 = vadd.f32 %v3501, %v3502
    %v3504 = vrot.slane %v3503, 4
    %v3505 = vadd.f32 %v3503, %v3504
    %v3506 = vrot.slane %v3505, 2
    %v3507 = vadd.f32 %v3505, %v3506
    %v3508 = vrot.slane %v3507, 1
    %v3509 = vadd.f32 %v3507, %v3508
    %v3510 = vmul.f32 %v3473, %v3483
    %v3511 = vmul.f32 %v3474, %v3484
    %v3512 = vmul.f32 %v3475, %v3485
    %v3513 = vmul.f32 %v3476, %v3486
    %v3514 = vmul.f32 %v3477, %v3487
    %v3515 = vsel %vm3303, %v3510, 0.0
    %v3516 = vsel %vm3303, %v3511, 0.0
    %v3517 = vadd.f32 %v3515, %v3516
    %v3518 = vsel %vm3303, %v3512, 0.0
    %v3519 = vadd.f32 %v3517, %v3518
    %v3520 = vsel %vm3303, %v3513, 0.0
    %v3521 = vadd.f32 %v3519, %v3520
    %v3522 = vsel %vm3311, %v3514, 0.0
    %v3523 = vadd.f32 %v3521, %v3522
    %v3524 = vrot.slane %v3523, 4
    %v3525 = vadd.f32 %v3523, %v3524
    %v3526 = vrot.slane %v3525, 2
    %v3527 = vadd.f32 %v3525, %v3526
    %v3528 = vrot.slane %v3527, 1
    %v3529 = vadd.f32 %v3527, %v3528
    %v3530 = vmul.f32 %v3509, %v3489
    %v3531 = vsel %vm3281, %v3530, 0.0
    %3532 = vadd.xlane.f32.xlu0 %v3531
    %v3533 = vpop.xlane.xlu0 %3532
    %v3534 = vrcp.pop %v3533
    %v3535 = vmul.f32 1.0, %v3534
    %v3536 = vmul.f32 %v3462, %v3489
    %v3537 = vmul.f32 %v3463, %v3489
    %v3538 = vmul.f32 %v3464, %v3489
    %v3539 = vmul.f32 %v3465, %v3489
    %v3540 = vmul.f32 %v3466, %v3489
    %v3541 = vsel %vm3281, %v3536, 0.0
    %3542 = vadd.xlane.f32.xlu0 %v3541
    %v3543 = vpop.xlane.xlu0 %3542
    %v3544 = vsel %vm3281, %v3537, 0.0
    %3545 = vadd.xlane.f32.xlu0 %v3544
    %v3546 = vpop.xlane.xlu0 %3545
    %v3547 = vsel %vm3281, %v3538, 0.0
    %3548 = vadd.xlane.f32.xlu0 %v3547
    %v3549 = vpop.xlane.xlu0 %3548
    %v3550 = vsel %vm3281, %v3539, 0.0
    %3551 = vadd.xlane.f32.xlu0 %v3550
    %v3552 = vpop.xlane.xlu0 %3551
    %v3553 = vsel %vm3289, %v3540, 0.0
    %3554 = vadd.xlane.f32.xlu0 %v3553
    %v3555 = vpop.xlane.xlu0 %3554
    %v3556 = vsub.f32 %v3543, %v3483
    %v3557 = vsub.f32 %v3546, %v3484
    %v3558 = vsub.f32 %v3549, %v3485
    %v3559 = vsub.f32 %v3552, %v3486
    %v3560 = vsub.f32 %v3555, %v3487
    %v3561 = vmul.f32 %v3509, %v3535
    %v3562 = vmul.f32 %v3556, %v3561
    %v3563 = vmul.f32 %v3557, %v3561
    %v3564 = vmul.f32 %v3558, %v3561
    %v3565 = vmul.f32 %v3559, %v3561
    %v3566 = vmul.f32 %v3560, %v3561
    %v3567 = vsub.f32 %v3462, %v3562
    %v3568 = vsub.f32 %v3463, %v3563
    %v3569 = vsub.f32 %v3464, %v3564
    %v3570 = vsub.f32 %v3465, %v3565
    %v3571 = vsub.f32 %v3466, %v3566
    %v3572 = vmul.f32 %v3529, %v3535
    %v3573 = vmul.f32 %v3556, %v3572
    %v3574 = vmul.f32 %v3557, %v3572
    %v3575 = vmul.f32 %v3558, %v3572
    %v3576 = vmul.f32 %v3559, %v3572
    %v3577 = vmul.f32 %v3560, %v3572
    %v3578 = vsub.f32 %v3473, %v3573
    %v3579 = vsub.f32 %v3474, %v3574
    %v3580 = vsub.f32 %v3475, %v3575
    %v3581 = vsub.f32 %v3476, %v3576
    %v3582 = vsub.f32 %v3477, %v3577
    %vm3583 = vcmp.eq.s32.totalorder %v1847, 3
    %vm3584 = vcmp.eq.s32.totalorder %v1848, 3
    %vm3585 = vcmp.eq.s32.totalorder %v1849, 3
    %vm3586 = vcmp.eq.s32.totalorder %v1850, 3
    %vm3587 = vcmp.eq.s32.totalorder %v1851, 3
    %v3588 = vsel %vm3583, 1.0, 0.0
    %v3589 = vsel %vm3584, 1.0, 0.0
    %v3590 = vsel %vm3585, 1.0, 0.0
    %v3591 = vsel %vm3586, 1.0, 0.0
    %v3592 = vsel %vm3587, 1.0, 0.0
    %vm3593 = vcmp.eq.s32.totalorder %v1853, 3
    %v3594 = vsel %vm3593, 1.0, 0.0
    %v3595 = vmul.f32 %v3567, %v3588
    %v3596 = vmul.f32 %v3568, %v3589
    %v3597 = vmul.f32 %v3569, %v3590
    %v3598 = vmul.f32 %v3570, %v3591
    %v3599 = vmul.f32 %v3571, %v3592
    %v3600 = vsel %vm3281, %v3595, 0.0
    %v3601 = vsel %vm3281, %v3596, 0.0
    %v3602 = vadd.f32 %v3600, %v3601
    %v3603 = vsel %vm3281, %v3597, 0.0
    %v3604 = vadd.f32 %v3602, %v3603
    %v3605 = vsel %vm3281, %v3598, 0.0
    %v3606 = vadd.f32 %v3604, %v3605
    %v3607 = vsel %vm3289, %v3599, 0.0
    %v3608 = vadd.f32 %v3606, %v3607
    %v3609 = vrot.slane %v3608, 4
    %v3610 = vadd.f32 %v3608, %v3609
    %v3611 = vrot.slane %v3610, 2
    %v3612 = vadd.f32 %v3610, %v3611
    %v3613 = vrot.slane %v3612, 1
    %v3614 = vadd.f32 %v3612, %v3613
    %v3615 = vmul.f32 %v3578, %v3588
    %v3616 = vmul.f32 %v3579, %v3589
    %v3617 = vmul.f32 %v3580, %v3590
    %v3618 = vmul.f32 %v3581, %v3591
    %v3619 = vmul.f32 %v3582, %v3592
    %v3620 = vsel %vm3303, %v3615, 0.0
    %v3621 = vsel %vm3303, %v3616, 0.0
    %v3622 = vadd.f32 %v3620, %v3621
    %v3623 = vsel %vm3303, %v3617, 0.0
    %v3624 = vadd.f32 %v3622, %v3623
    %v3625 = vsel %vm3303, %v3618, 0.0
    %v3626 = vadd.f32 %v3624, %v3625
    %v3627 = vsel %vm3311, %v3619, 0.0
    %v3628 = vadd.f32 %v3626, %v3627
    %v3629 = vrot.slane %v3628, 4
    %v3630 = vadd.f32 %v3628, %v3629
    %v3631 = vrot.slane %v3630, 2
    %v3632 = vadd.f32 %v3630, %v3631
    %v3633 = vrot.slane %v3632, 1
    %v3634 = vadd.f32 %v3632, %v3633
    %v3635 = vmul.f32 %v3614, %v3594
    %v3636 = vsel %vm3281, %v3635, 0.0
    %3637 = vadd.xlane.f32.xlu0 %v3636
    %v3638 = vpop.xlane.xlu0 %3637
    %v3639 = vrcp.pop %v3638
    %v3640 = vmul.f32 1.0, %v3639
    %v3641 = vmul.f32 %v3567, %v3594
    %v3642 = vmul.f32 %v3568, %v3594
    %v3643 = vmul.f32 %v3569, %v3594
    %v3644 = vmul.f32 %v3570, %v3594
    %v3645 = vmul.f32 %v3571, %v3594
    %v3646 = vsel %vm3281, %v3641, 0.0
    %3647 = vadd.xlane.f32.xlu0 %v3646
    %v3648 = vpop.xlane.xlu0 %3647
    %v3649 = vsel %vm3281, %v3642, 0.0
    %3650 = vadd.xlane.f32.xlu0 %v3649
    %v3651 = vpop.xlane.xlu0 %3650
    %v3652 = vsel %vm3281, %v3643, 0.0
    %3653 = vadd.xlane.f32.xlu0 %v3652
    %v3654 = vpop.xlane.xlu0 %3653
    %v3655 = vsel %vm3281, %v3644, 0.0
    %3656 = vadd.xlane.f32.xlu0 %v3655
    %v3657 = vpop.xlane.xlu0 %3656
    %v3658 = vsel %vm3289, %v3645, 0.0
    %3659 = vadd.xlane.f32.xlu0 %v3658
    %v3660 = vpop.xlane.xlu0 %3659
    %v3661 = vsub.f32 %v3648, %v3588
    %v3662 = vsub.f32 %v3651, %v3589
    %v3663 = vsub.f32 %v3654, %v3590
    %v3664 = vsub.f32 %v3657, %v3591
    %v3665 = vsub.f32 %v3660, %v3592
    %v3666 = vmul.f32 %v3614, %v3640
    %v3667 = vmul.f32 %v3661, %v3666
    %v3668 = vmul.f32 %v3662, %v3666
    %v3669 = vmul.f32 %v3663, %v3666
    %v3670 = vmul.f32 %v3664, %v3666
    %v3671 = vmul.f32 %v3665, %v3666
    %v3672 = vsub.f32 %v3567, %v3667
    %v3673 = vsub.f32 %v3568, %v3668
    %v3674 = vsub.f32 %v3569, %v3669
    %v3675 = vsub.f32 %v3570, %v3670
    %v3676 = vsub.f32 %v3571, %v3671
    %v3677 = vmul.f32 %v3634, %v3640
    %v3678 = vmul.f32 %v3661, %v3677
    %v3679 = vmul.f32 %v3662, %v3677
    %v3680 = vmul.f32 %v3663, %v3677
    %v3681 = vmul.f32 %v3664, %v3677
    %v3682 = vmul.f32 %v3665, %v3677
    %v3683 = vsub.f32 %v3578, %v3678
    %v3684 = vsub.f32 %v3579, %v3679
    %v3685 = vsub.f32 %v3580, %v3680
    %v3686 = vsub.f32 %v3581, %v3681
    %v3687 = vsub.f32 %v3582, %v3682
    %vm3688 = vcmp.eq.s32.totalorder %v1847, 4
    %vm3689 = vcmp.eq.s32.totalorder %v1848, 4
    %vm3690 = vcmp.eq.s32.totalorder %v1849, 4
    %vm3691 = vcmp.eq.s32.totalorder %v1850, 4
    %vm3692 = vcmp.eq.s32.totalorder %v1851, 4
    %v3693 = vsel %vm3688, 1.0, 0.0
    %v3694 = vsel %vm3689, 1.0, 0.0
    %v3695 = vsel %vm3690, 1.0, 0.0
    %v3696 = vsel %vm3691, 1.0, 0.0
    %v3697 = vsel %vm3692, 1.0, 0.0
    %vm3698 = vcmp.eq.s32.totalorder %v1853, 4
    %v3699 = vsel %vm3698, 1.0, 0.0
    %v3700 = vmul.f32 %v3672, %v3693
    %v3701 = vmul.f32 %v3673, %v3694
    %v3702 = vmul.f32 %v3674, %v3695
    %v3703 = vmul.f32 %v3675, %v3696
    %v3704 = vmul.f32 %v3676, %v3697
    %v3705 = vsel %vm3281, %v3700, 0.0
    %v3706 = vsel %vm3281, %v3701, 0.0
    %v3707 = vadd.f32 %v3705, %v3706
    %v3708 = vsel %vm3281, %v3702, 0.0
    %v3709 = vadd.f32 %v3707, %v3708
    %v3710 = vsel %vm3281, %v3703, 0.0
    %v3711 = vadd.f32 %v3709, %v3710
    %v3712 = vsel %vm3289, %v3704, 0.0
    %v3713 = vadd.f32 %v3711, %v3712
    %v3714 = vrot.slane %v3713, 4
    %v3715 = vadd.f32 %v3713, %v3714
    %v3716 = vrot.slane %v3715, 2
    %v3717 = vadd.f32 %v3715, %v3716
    %v3718 = vrot.slane %v3717, 1
    %v3719 = vadd.f32 %v3717, %v3718
    %v3720 = vmul.f32 %v3683, %v3693
    %v3721 = vmul.f32 %v3684, %v3694
    %v3722 = vmul.f32 %v3685, %v3695
    %v3723 = vmul.f32 %v3686, %v3696
    %v3724 = vmul.f32 %v3687, %v3697
    %v3725 = vsel %vm3303, %v3720, 0.0
    %v3726 = vsel %vm3303, %v3721, 0.0
    %v3727 = vadd.f32 %v3725, %v3726
    %v3728 = vsel %vm3303, %v3722, 0.0
    %v3729 = vadd.f32 %v3727, %v3728
    %v3730 = vsel %vm3303, %v3723, 0.0
    %v3731 = vadd.f32 %v3729, %v3730
    %v3732 = vsel %vm3311, %v3724, 0.0
    %v3733 = vadd.f32 %v3731, %v3732
    %v3734 = vrot.slane %v3733, 4
    %v3735 = vadd.f32 %v3733, %v3734
    %v3736 = vrot.slane %v3735, 2
    %v3737 = vadd.f32 %v3735, %v3736
    %v3738 = vrot.slane %v3737, 1
    %v3739 = vadd.f32 %v3737, %v3738
    %v3740 = vmul.f32 %v3719, %v3699
    %v3741 = vsel %vm3281, %v3740, 0.0
    %3742 = vadd.xlane.f32.xlu0 %v3741
    %v3743 = vpop.xlane.xlu0 %3742
    %v3744 = vrcp.pop %v3743
    %v3745 = vmul.f32 1.0, %v3744
    %v3746 = vmul.f32 %v3672, %v3699
    %v3747 = vmul.f32 %v3673, %v3699
    %v3748 = vmul.f32 %v3674, %v3699
    %v3749 = vmul.f32 %v3675, %v3699
    %v3750 = vmul.f32 %v3676, %v3699
    %v3751 = vsel %vm3281, %v3746, 0.0
    %3752 = vadd.xlane.f32.xlu0 %v3751
    %v3753 = vpop.xlane.xlu0 %3752
    %v3754 = vsel %vm3281, %v3747, 0.0
    %3755 = vadd.xlane.f32.xlu0 %v3754
    %v3756 = vpop.xlane.xlu0 %3755
    %v3757 = vsel %vm3281, %v3748, 0.0
    %3758 = vadd.xlane.f32.xlu0 %v3757
    %v3759 = vpop.xlane.xlu0 %3758
    %v3760 = vsel %vm3281, %v3749, 0.0
    %3761 = vadd.xlane.f32.xlu0 %v3760
    %v3762 = vpop.xlane.xlu0 %3761
    %v3763 = vsel %vm3289, %v3750, 0.0
    %3764 = vadd.xlane.f32.xlu0 %v3763
    %v3765 = vpop.xlane.xlu0 %3764
    %v3766 = vsub.f32 %v3753, %v3693
    %v3767 = vsub.f32 %v3756, %v3694
    %v3768 = vsub.f32 %v3759, %v3695
    %v3769 = vsub.f32 %v3762, %v3696
    %v3770 = vsub.f32 %v3765, %v3697
    %v3771 = vmul.f32 %v3719, %v3745
    %v3772 = vmul.f32 %v3766, %v3771
    %v3773 = vmul.f32 %v3767, %v3771
    %v3774 = vmul.f32 %v3768, %v3771
    %v3775 = vmul.f32 %v3769, %v3771
    %v3776 = vmul.f32 %v3770, %v3771
    %v3777 = vsub.f32 %v3672, %v3772
    %v3778 = vsub.f32 %v3673, %v3773
    %v3779 = vsub.f32 %v3674, %v3774
    %v3780 = vsub.f32 %v3675, %v3775
    %v3781 = vsub.f32 %v3676, %v3776
    %v3782 = vmul.f32 %v3739, %v3745
    %v3783 = vmul.f32 %v3766, %v3782
    %v3784 = vmul.f32 %v3767, %v3782
    %v3785 = vmul.f32 %v3768, %v3782
    %v3786 = vmul.f32 %v3769, %v3782
    %v3787 = vmul.f32 %v3770, %v3782
    %v3788 = vsub.f32 %v3683, %v3783
    %v3789 = vsub.f32 %v3684, %v3784
    %v3790 = vsub.f32 %v3685, %v3785
    %v3791 = vsub.f32 %v3686, %v3786
    %v3792 = vsub.f32 %v3687, %v3787
    %vm3793 = vcmp.eq.s32.totalorder %v1847, 5
    %vm3794 = vcmp.eq.s32.totalorder %v1848, 5
    %vm3795 = vcmp.eq.s32.totalorder %v1849, 5
    %vm3796 = vcmp.eq.s32.totalorder %v1850, 5
    %vm3797 = vcmp.eq.s32.totalorder %v1851, 5
    %v3798 = vsel %vm3793, 1.0, 0.0
    %v3799 = vsel %vm3794, 1.0, 0.0
    %v3800 = vsel %vm3795, 1.0, 0.0
    %v3801 = vsel %vm3796, 1.0, 0.0
    %v3802 = vsel %vm3797, 1.0, 0.0
    %vm3803 = vcmp.eq.s32.totalorder %v1853, 5
    %v3804 = vsel %vm3803, 1.0, 0.0
    %v3805 = vmul.f32 %v3777, %v3798
    %v3806 = vmul.f32 %v3778, %v3799
    %v3807 = vmul.f32 %v3779, %v3800
    %v3808 = vmul.f32 %v3780, %v3801
    %v3809 = vmul.f32 %v3781, %v3802
    %v3810 = vsel %vm3281, %v3805, 0.0
    %v3811 = vsel %vm3281, %v3806, 0.0
    %v3812 = vadd.f32 %v3810, %v3811
    %v3813 = vsel %vm3281, %v3807, 0.0
    %v3814 = vadd.f32 %v3812, %v3813
    %v3815 = vsel %vm3281, %v3808, 0.0
    %v3816 = vadd.f32 %v3814, %v3815
    %v3817 = vsel %vm3289, %v3809, 0.0
    %v3818 = vadd.f32 %v3816, %v3817
    %v3819 = vrot.slane %v3818, 4
    %v3820 = vadd.f32 %v3818, %v3819
    %v3821 = vrot.slane %v3820, 2
    %v3822 = vadd.f32 %v3820, %v3821
    %v3823 = vrot.slane %v3822, 1
    %v3824 = vadd.f32 %v3822, %v3823
    %v3825 = vmul.f32 %v3788, %v3798
    %v3826 = vmul.f32 %v3789, %v3799
    %v3827 = vmul.f32 %v3790, %v3800
    %v3828 = vmul.f32 %v3791, %v3801
    %v3829 = vmul.f32 %v3792, %v3802
    %v3830 = vsel %vm3303, %v3825, 0.0
    %v3831 = vsel %vm3303, %v3826, 0.0
    %v3832 = vadd.f32 %v3830, %v3831
    %v3833 = vsel %vm3303, %v3827, 0.0
    %v3834 = vadd.f32 %v3832, %v3833
    %v3835 = vsel %vm3303, %v3828, 0.0
    %v3836 = vadd.f32 %v3834, %v3835
    %v3837 = vsel %vm3311, %v3829, 0.0
    %v3838 = vadd.f32 %v3836, %v3837
    %v3839 = vrot.slane %v3838, 4
    %v3840 = vadd.f32 %v3838, %v3839
    %v3841 = vrot.slane %v3840, 2
    %v3842 = vadd.f32 %v3840, %v3841
    %v3843 = vrot.slane %v3842, 1
    %v3844 = vadd.f32 %v3842, %v3843
    %v3845 = vmul.f32 %v3824, %v3804
    %v3846 = vsel %vm3281, %v3845, 0.0
    %3847 = vadd.xlane.f32.xlu0 %v3846
    %v3848 = vpop.xlane.xlu0 %3847
    %v3849 = vrcp.pop %v3848
    %v3850 = vmul.f32 1.0, %v3849
    %v3851 = vmul.f32 %v3777, %v3804
    %v3852 = vmul.f32 %v3778, %v3804
    %v3853 = vmul.f32 %v3779, %v3804
    %v3854 = vmul.f32 %v3780, %v3804
    %v3855 = vmul.f32 %v3781, %v3804
    %v3856 = vsel %vm3281, %v3851, 0.0
    %3857 = vadd.xlane.f32.xlu0 %v3856
    %v3858 = vpop.xlane.xlu0 %3857
    %v3859 = vsel %vm3281, %v3852, 0.0
    %3860 = vadd.xlane.f32.xlu0 %v3859
    %v3861 = vpop.xlane.xlu0 %3860
    %v3862 = vsel %vm3281, %v3853, 0.0
    %3863 = vadd.xlane.f32.xlu0 %v3862
    %v3864 = vpop.xlane.xlu0 %3863
    %v3865 = vsel %vm3281, %v3854, 0.0
    %3866 = vadd.xlane.f32.xlu0 %v3865
    %v3867 = vpop.xlane.xlu0 %3866
    %v3868 = vsel %vm3289, %v3855, 0.0
    %3869 = vadd.xlane.f32.xlu0 %v3868
    %v3870 = vpop.xlane.xlu0 %3869
    %v3871 = vsub.f32 %v3858, %v3798
    %v3872 = vsub.f32 %v3861, %v3799
    %v3873 = vsub.f32 %v3864, %v3800
    %v3874 = vsub.f32 %v3867, %v3801
    %v3875 = vsub.f32 %v3870, %v3802
    %v3876 = vmul.f32 %v3824, %v3850
    %v3877 = vmul.f32 %v3871, %v3876
    %v3878 = vmul.f32 %v3872, %v3876
    %v3879 = vmul.f32 %v3873, %v3876
    %v3880 = vmul.f32 %v3874, %v3876
    %v3881 = vmul.f32 %v3875, %v3876
    %v3882 = vsub.f32 %v3777, %v3877
    %v3883 = vsub.f32 %v3778, %v3878
    %v3884 = vsub.f32 %v3779, %v3879
    %v3885 = vsub.f32 %v3780, %v3880
    %v3886 = vsub.f32 %v3781, %v3881
    %v3887 = vmul.f32 %v3844, %v3850
    %v3888 = vmul.f32 %v3871, %v3887
    %v3889 = vmul.f32 %v3872, %v3887
    %v3890 = vmul.f32 %v3873, %v3887
    %v3891 = vmul.f32 %v3874, %v3887
    %v3892 = vmul.f32 %v3875, %v3887
    %v3893 = vsub.f32 %v3788, %v3888
    %v3894 = vsub.f32 %v3789, %v3889
    %v3895 = vsub.f32 %v3790, %v3890
    %v3896 = vsub.f32 %v3791, %v3891
    %v3897 = vsub.f32 %v3792, %v3892
    %vm3898 = vcmp.eq.s32.totalorder %v1847, 6
    %vm3899 = vcmp.eq.s32.totalorder %v1848, 6
    %vm3900 = vcmp.eq.s32.totalorder %v1849, 6
    %vm3901 = vcmp.eq.s32.totalorder %v1850, 6
    %vm3902 = vcmp.eq.s32.totalorder %v1851, 6
    %v3903 = vsel %vm3898, 1.0, 0.0
    %v3904 = vsel %vm3899, 1.0, 0.0
    %v3905 = vsel %vm3900, 1.0, 0.0
    %v3906 = vsel %vm3901, 1.0, 0.0
    %v3907 = vsel %vm3902, 1.0, 0.0
    %vm3908 = vcmp.eq.s32.totalorder %v1853, 6
    %v3909 = vsel %vm3908, 1.0, 0.0
    %v3910 = vmul.f32 %v3882, %v3903
    %v3911 = vmul.f32 %v3883, %v3904
    %v3912 = vmul.f32 %v3884, %v3905
    %v3913 = vmul.f32 %v3885, %v3906
    %v3914 = vmul.f32 %v3886, %v3907
    %v3915 = vsel %vm3281, %v3910, 0.0
    %v3916 = vsel %vm3281, %v3911, 0.0
    %v3917 = vadd.f32 %v3915, %v3916
    %v3918 = vsel %vm3281, %v3912, 0.0
    %v3919 = vadd.f32 %v3917, %v3918
    %v3920 = vsel %vm3281, %v3913, 0.0
    %v3921 = vadd.f32 %v3919, %v3920
    %v3922 = vsel %vm3289, %v3914, 0.0
    %v3923 = vadd.f32 %v3921, %v3922
    %v3924 = vrot.slane %v3923, 4
    %v3925 = vadd.f32 %v3923, %v3924
    %v3926 = vrot.slane %v3925, 2
    %v3927 = vadd.f32 %v3925, %v3926
    %v3928 = vrot.slane %v3927, 1
    %v3929 = vadd.f32 %v3927, %v3928
    %v3930 = vmul.f32 %v3893, %v3903
    %v3931 = vmul.f32 %v3894, %v3904
    %v3932 = vmul.f32 %v3895, %v3905
    %v3933 = vmul.f32 %v3896, %v3906
    %v3934 = vmul.f32 %v3897, %v3907
    %v3935 = vsel %vm3303, %v3930, 0.0
    %v3936 = vsel %vm3303, %v3931, 0.0
    %v3937 = vadd.f32 %v3935, %v3936
    %v3938 = vsel %vm3303, %v3932, 0.0
    %v3939 = vadd.f32 %v3937, %v3938
    %v3940 = vsel %vm3303, %v3933, 0.0
    %v3941 = vadd.f32 %v3939, %v3940
    %v3942 = vsel %vm3311, %v3934, 0.0
    %v3943 = vadd.f32 %v3941, %v3942
    %v3944 = vrot.slane %v3943, 4
    %v3945 = vadd.f32 %v3943, %v3944
    %v3946 = vrot.slane %v3945, 2
    %v3947 = vadd.f32 %v3945, %v3946
    %v3948 = vrot.slane %v3947, 1
    %v3949 = vadd.f32 %v3947, %v3948
    %v3950 = vmul.f32 %v3929, %v3909
    %v3951 = vsel %vm3281, %v3950, 0.0
    %3952 = vadd.xlane.f32.xlu0 %v3951
    %v3953 = vpop.xlane.xlu0 %3952
    %v3954 = vrcp.pop %v3953
    %v3955 = vmul.f32 1.0, %v3954
    %v3956 = vmul.f32 %v3882, %v3909
    %v3957 = vmul.f32 %v3883, %v3909
    %v3958 = vmul.f32 %v3884, %v3909
    %v3959 = vmul.f32 %v3885, %v3909
    %v3960 = vmul.f32 %v3886, %v3909
    %v3961 = vsel %vm3281, %v3956, 0.0
    %3962 = vadd.xlane.f32.xlu0 %v3961
    %v3963 = vpop.xlane.xlu0 %3962
    %v3964 = vsel %vm3281, %v3957, 0.0
    %3965 = vadd.xlane.f32.xlu0 %v3964
    %v3966 = vpop.xlane.xlu0 %3965
    %v3967 = vsel %vm3281, %v3958, 0.0
    %3968 = vadd.xlane.f32.xlu0 %v3967
    %v3969 = vpop.xlane.xlu0 %3968
    %v3970 = vsel %vm3281, %v3959, 0.0
    %3971 = vadd.xlane.f32.xlu0 %v3970
    %v3972 = vpop.xlane.xlu0 %3971
    %v3973 = vsel %vm3289, %v3960, 0.0
    %3974 = vadd.xlane.f32.xlu0 %v3973
    %v3975 = vpop.xlane.xlu0 %3974
    %v3976 = vsub.f32 %v3963, %v3903
    %v3977 = vsub.f32 %v3966, %v3904
    %v3978 = vsub.f32 %v3969, %v3905
    %v3979 = vsub.f32 %v3972, %v3906
    %v3980 = vsub.f32 %v3975, %v3907
    %v3981 = vmul.f32 %v3929, %v3955
    %v3982 = vmul.f32 %v3976, %v3981
    %v3983 = vmul.f32 %v3977, %v3981
    %v3984 = vmul.f32 %v3978, %v3981
    %v3985 = vmul.f32 %v3979, %v3981
    %v3986 = vmul.f32 %v3980, %v3981
    %v3987 = vsub.f32 %v3882, %v3982
    %v3988 = vsub.f32 %v3883, %v3983
    %v3989 = vsub.f32 %v3884, %v3984
    %v3990 = vsub.f32 %v3885, %v3985
    %v3991 = vsub.f32 %v3886, %v3986
    %v3992 = vmul.f32 %v3949, %v3955
    %v3993 = vmul.f32 %v3976, %v3992
    %v3994 = vmul.f32 %v3977, %v3992
    %v3995 = vmul.f32 %v3978, %v3992
    %v3996 = vmul.f32 %v3979, %v3992
    %v3997 = vmul.f32 %v3980, %v3992
    %v3998 = vsub.f32 %v3893, %v3993
    %v3999 = vsub.f32 %v3894, %v3994
    %v4000 = vsub.f32 %v3895, %v3995
    %v4001 = vsub.f32 %v3896, %v3996
    %v4002 = vsub.f32 %v3897, %v3997
    %vm4003 = vcmp.eq.s32.totalorder %v1847, 7
    %vm4004 = vcmp.eq.s32.totalorder %v1848, 7
    %vm4005 = vcmp.eq.s32.totalorder %v1849, 7
    %vm4006 = vcmp.eq.s32.totalorder %v1850, 7
    %vm4007 = vcmp.eq.s32.totalorder %v1851, 7
    %v4008 = vsel %vm4003, 1.0, 0.0
    %v4009 = vsel %vm4004, 1.0, 0.0
    %v4010 = vsel %vm4005, 1.0, 0.0
    %v4011 = vsel %vm4006, 1.0, 0.0
    %v4012 = vsel %vm4007, 1.0, 0.0
    %vm4013 = vcmp.eq.s32.totalorder %v1853, 7
    %v4014 = vsel %vm4013, 1.0, 0.0
    %v4015 = vmul.f32 %v3987, %v4008
    %v4016 = vmul.f32 %v3988, %v4009
    %v4017 = vmul.f32 %v3989, %v4010
    %v4018 = vmul.f32 %v3990, %v4011
    %v4019 = vmul.f32 %v3991, %v4012
    %v4020 = vsel %vm3281, %v4015, 0.0
    %v4021 = vsel %vm3281, %v4016, 0.0
    %v4022 = vadd.f32 %v4020, %v4021
    %v4023 = vsel %vm3281, %v4017, 0.0
    %v4024 = vadd.f32 %v4022, %v4023
    %v4025 = vsel %vm3281, %v4018, 0.0
    %v4026 = vadd.f32 %v4024, %v4025
    %v4027 = vsel %vm3289, %v4019, 0.0
    %v4028 = vadd.f32 %v4026, %v4027
    %v4029 = vrot.slane %v4028, 4
    %v4030 = vadd.f32 %v4028, %v4029
    %v4031 = vrot.slane %v4030, 2
    %v4032 = vadd.f32 %v4030, %v4031
    %v4033 = vrot.slane %v4032, 1
    %v4034 = vadd.f32 %v4032, %v4033
    %v4035 = vmul.f32 %v3998, %v4008
    %v4036 = vmul.f32 %v3999, %v4009
    %v4037 = vmul.f32 %v4000, %v4010
    %v4038 = vmul.f32 %v4001, %v4011
    %v4039 = vmul.f32 %v4002, %v4012
    %v4040 = vsel %vm3303, %v4035, 0.0
    %v4041 = vsel %vm3303, %v4036, 0.0
    %v4042 = vadd.f32 %v4040, %v4041
    %v4043 = vsel %vm3303, %v4037, 0.0
    %v4044 = vadd.f32 %v4042, %v4043
    %v4045 = vsel %vm3303, %v4038, 0.0
    %v4046 = vadd.f32 %v4044, %v4045
    %v4047 = vsel %vm3311, %v4039, 0.0
    %v4048 = vadd.f32 %v4046, %v4047
    %v4049 = vrot.slane %v4048, 4
    %v4050 = vadd.f32 %v4048, %v4049
    %v4051 = vrot.slane %v4050, 2
    %v4052 = vadd.f32 %v4050, %v4051
    %v4053 = vrot.slane %v4052, 1
    %v4054 = vadd.f32 %v4052, %v4053
    %v4055 = vmul.f32 %v4034, %v4014
    %v4056 = vsel %vm3281, %v4055, 0.0
    %4057 = vadd.xlane.f32.xlu0 %v4056
    %v4058 = vpop.xlane.xlu0 %4057
    %v4059 = vrcp.pop %v4058
    %v4060 = vmul.f32 1.0, %v4059
    %v4061 = vmul.f32 %v3987, %v4014
    %v4062 = vmul.f32 %v3988, %v4014
    %v4063 = vmul.f32 %v3989, %v4014
    %v4064 = vmul.f32 %v3990, %v4014
    %v4065 = vmul.f32 %v3991, %v4014
    %v4066 = vsel %vm3281, %v4061, 0.0
    %4067 = vadd.xlane.f32.xlu0 %v4066
    %v4068 = vpop.xlane.xlu0 %4067
    %v4069 = vsel %vm3281, %v4062, 0.0
    %4070 = vadd.xlane.f32.xlu0 %v4069
    %v4071 = vpop.xlane.xlu0 %4070
    %v4072 = vsel %vm3281, %v4063, 0.0
    %4073 = vadd.xlane.f32.xlu0 %v4072
    %v4074 = vpop.xlane.xlu0 %4073
    %v4075 = vsel %vm3281, %v4064, 0.0
    %4076 = vadd.xlane.f32.xlu0 %v4075
    %v4077 = vpop.xlane.xlu0 %4076
    %v4078 = vsel %vm3289, %v4065, 0.0
    %4079 = vadd.xlane.f32.xlu0 %v4078
    %v4080 = vpop.xlane.xlu0 %4079
    %v4081 = vsub.f32 %v4068, %v4008
    %v4082 = vsub.f32 %v4071, %v4009
    %v4083 = vsub.f32 %v4074, %v4010
    %v4084 = vsub.f32 %v4077, %v4011
    %v4085 = vsub.f32 %v4080, %v4012
    %v4086 = vmul.f32 %v4034, %v4060
    %v4087 = vmul.f32 %v4081, %v4086
    %v4088 = vmul.f32 %v4082, %v4086
    %v4089 = vmul.f32 %v4083, %v4086
    %v4090 = vmul.f32 %v4084, %v4086
    %v4091 = vmul.f32 %v4085, %v4086
    %v4092 = vsub.f32 %v3987, %v4087
    %v4093 = vsub.f32 %v3988, %v4088
    %v4094 = vsub.f32 %v3989, %v4089
    %v4095 = vsub.f32 %v3990, %v4090
    %v4096 = vsub.f32 %v3991, %v4091
    %v4097 = vmul.f32 %v4054, %v4060
    %v4098 = vmul.f32 %v4081, %v4097
    %v4099 = vmul.f32 %v4082, %v4097
    %v4100 = vmul.f32 %v4083, %v4097
    %v4101 = vmul.f32 %v4084, %v4097
    %v4102 = vmul.f32 %v4085, %v4097
    %v4103 = vsub.f32 %v3998, %v4098
    %v4104 = vsub.f32 %v3999, %v4099
    %v4105 = vsub.f32 %v4000, %v4100
    %v4106 = vsub.f32 %v4001, %v4101
    %v4107 = vsub.f32 %v4002, %v4102
    %vm4108 = vcmp.eq.s32.totalorder %v1847, 8
    %vm4109 = vcmp.eq.s32.totalorder %v1848, 8
    %vm4110 = vcmp.eq.s32.totalorder %v1849, 8
    %vm4111 = vcmp.eq.s32.totalorder %v1850, 8
    %vm4112 = vcmp.eq.s32.totalorder %v1851, 8
    %v4113 = vsel %vm4108, 1.0, 0.0
    %v4114 = vsel %vm4109, 1.0, 0.0
    %v4115 = vsel %vm4110, 1.0, 0.0
    %v4116 = vsel %vm4111, 1.0, 0.0
    %v4117 = vsel %vm4112, 1.0, 0.0
    %vm4118 = vcmp.eq.s32.totalorder %v1853, 8
    %v4119 = vsel %vm4118, 1.0, 0.0
    %v4120 = vmul.f32 %v4092, %v4113
    %v4121 = vmul.f32 %v4093, %v4114
    %v4122 = vmul.f32 %v4094, %v4115
    %v4123 = vmul.f32 %v4095, %v4116
    %v4124 = vmul.f32 %v4096, %v4117
    %v4125 = vsel %vm3281, %v4120, 0.0
    %v4126 = vsel %vm3281, %v4121, 0.0
    %v4127 = vadd.f32 %v4125, %v4126
    %v4128 = vsel %vm3281, %v4122, 0.0
    %v4129 = vadd.f32 %v4127, %v4128
    %v4130 = vsel %vm3281, %v4123, 0.0
    %v4131 = vadd.f32 %v4129, %v4130
    %v4132 = vsel %vm3289, %v4124, 0.0
    %v4133 = vadd.f32 %v4131, %v4132
    %v4134 = vrot.slane %v4133, 4
    %v4135 = vadd.f32 %v4133, %v4134
    %v4136 = vrot.slane %v4135, 2
    %v4137 = vadd.f32 %v4135, %v4136
    %v4138 = vrot.slane %v4137, 1
    %v4139 = vadd.f32 %v4137, %v4138
    %v4140 = vmul.f32 %v4103, %v4113
    %v4141 = vmul.f32 %v4104, %v4114
    %v4142 = vmul.f32 %v4105, %v4115
    %v4143 = vmul.f32 %v4106, %v4116
    %v4144 = vmul.f32 %v4107, %v4117
    %v4145 = vsel %vm3303, %v4140, 0.0
    %v4146 = vsel %vm3303, %v4141, 0.0
    %v4147 = vadd.f32 %v4145, %v4146
    %v4148 = vsel %vm3303, %v4142, 0.0
    %v4149 = vadd.f32 %v4147, %v4148
    %v4150 = vsel %vm3303, %v4143, 0.0
    %v4151 = vadd.f32 %v4149, %v4150
    %v4152 = vsel %vm3311, %v4144, 0.0
    %v4153 = vadd.f32 %v4151, %v4152
    %v4154 = vrot.slane %v4153, 4
    %v4155 = vadd.f32 %v4153, %v4154
    %v4156 = vrot.slane %v4155, 2
    %v4157 = vadd.f32 %v4155, %v4156
    %v4158 = vrot.slane %v4157, 1
    %v4159 = vadd.f32 %v4157, %v4158
    %v4160 = vmul.f32 %v4139, %v4119
    %v4161 = vsel %vm3281, %v4160, 0.0
    %4162 = vadd.xlane.f32.xlu0 %v4161
    %v4163 = vpop.xlane.xlu0 %4162
    %v4164 = vrcp.pop %v4163
    %v4165 = vmul.f32 1.0, %v4164
    %v4166 = vmul.f32 %v4092, %v4119
    %v4167 = vmul.f32 %v4093, %v4119
    %v4168 = vmul.f32 %v4094, %v4119
    %v4169 = vmul.f32 %v4095, %v4119
    %v4170 = vmul.f32 %v4096, %v4119
    %v4171 = vsel %vm3281, %v4166, 0.0
    %4172 = vadd.xlane.f32.xlu0 %v4171
    %v4173 = vpop.xlane.xlu0 %4172
    %v4174 = vsel %vm3281, %v4167, 0.0
    %4175 = vadd.xlane.f32.xlu0 %v4174
    %v4176 = vpop.xlane.xlu0 %4175
    %v4177 = vsel %vm3281, %v4168, 0.0
    %4178 = vadd.xlane.f32.xlu0 %v4177
    %v4179 = vpop.xlane.xlu0 %4178
    %v4180 = vsel %vm3281, %v4169, 0.0
    %4181 = vadd.xlane.f32.xlu0 %v4180
    %v4182 = vpop.xlane.xlu0 %4181
    %v4183 = vsel %vm3289, %v4170, 0.0
    %4184 = vadd.xlane.f32.xlu0 %v4183
    %v4185 = vpop.xlane.xlu0 %4184
    %v4186 = vsub.f32 %v4173, %v4113
    %v4187 = vsub.f32 %v4176, %v4114
    %v4188 = vsub.f32 %v4179, %v4115
    %v4189 = vsub.f32 %v4182, %v4116
    %v4190 = vsub.f32 %v4185, %v4117
    %v4191 = vmul.f32 %v4139, %v4165
    %v4192 = vmul.f32 %v4186, %v4191
    %v4193 = vmul.f32 %v4187, %v4191
    %v4194 = vmul.f32 %v4188, %v4191
    %v4195 = vmul.f32 %v4189, %v4191
    %v4196 = vmul.f32 %v4190, %v4191
    %v4197 = vsub.f32 %v4092, %v4192
    %v4198 = vsub.f32 %v4093, %v4193
    %v4199 = vsub.f32 %v4094, %v4194
    %v4200 = vsub.f32 %v4095, %v4195
    %v4201 = vsub.f32 %v4096, %v4196
    %v4202 = vmul.f32 %v4159, %v4165
    %v4203 = vmul.f32 %v4186, %v4202
    %v4204 = vmul.f32 %v4187, %v4202
    %v4205 = vmul.f32 %v4188, %v4202
    %v4206 = vmul.f32 %v4189, %v4202
    %v4207 = vmul.f32 %v4190, %v4202
    %v4208 = vsub.f32 %v4103, %v4203
    %v4209 = vsub.f32 %v4104, %v4204
    %v4210 = vsub.f32 %v4105, %v4205
    %v4211 = vsub.f32 %v4106, %v4206
    %v4212 = vsub.f32 %v4107, %v4207
    %vm4213 = vcmp.eq.s32.totalorder %v1847, 9
    %vm4214 = vcmp.eq.s32.totalorder %v1848, 9
    %vm4215 = vcmp.eq.s32.totalorder %v1849, 9
    %vm4216 = vcmp.eq.s32.totalorder %v1850, 9
    %vm4217 = vcmp.eq.s32.totalorder %v1851, 9
    %v4218 = vsel %vm4213, 1.0, 0.0
    %v4219 = vsel %vm4214, 1.0, 0.0
    %v4220 = vsel %vm4215, 1.0, 0.0
    %v4221 = vsel %vm4216, 1.0, 0.0
    %v4222 = vsel %vm4217, 1.0, 0.0
    %vm4223 = vcmp.eq.s32.totalorder %v1853, 9
    %v4224 = vsel %vm4223, 1.0, 0.0
    %v4225 = vmul.f32 %v4197, %v4218
    %v4226 = vmul.f32 %v4198, %v4219
    %v4227 = vmul.f32 %v4199, %v4220
    %v4228 = vmul.f32 %v4200, %v4221
    %v4229 = vmul.f32 %v4201, %v4222
    %v4230 = vsel %vm3281, %v4225, 0.0
    %v4231 = vsel %vm3281, %v4226, 0.0
    %v4232 = vadd.f32 %v4230, %v4231
    %v4233 = vsel %vm3281, %v4227, 0.0
    %v4234 = vadd.f32 %v4232, %v4233
    %v4235 = vsel %vm3281, %v4228, 0.0
    %v4236 = vadd.f32 %v4234, %v4235
    %v4237 = vsel %vm3289, %v4229, 0.0
    %v4238 = vadd.f32 %v4236, %v4237
    %v4239 = vrot.slane %v4238, 4
    %v4240 = vadd.f32 %v4238, %v4239
    %v4241 = vrot.slane %v4240, 2
    %v4242 = vadd.f32 %v4240, %v4241
    %v4243 = vrot.slane %v4242, 1
    %v4244 = vadd.f32 %v4242, %v4243
    %v4245 = vmul.f32 %v4208, %v4218
    %v4246 = vmul.f32 %v4209, %v4219
    %v4247 = vmul.f32 %v4210, %v4220
    %v4248 = vmul.f32 %v4211, %v4221
    %v4249 = vmul.f32 %v4212, %v4222
    %v4250 = vsel %vm3303, %v4245, 0.0
    %v4251 = vsel %vm3303, %v4246, 0.0
    %v4252 = vadd.f32 %v4250, %v4251
    %v4253 = vsel %vm3303, %v4247, 0.0
    %v4254 = vadd.f32 %v4252, %v4253
    %v4255 = vsel %vm3303, %v4248, 0.0
    %v4256 = vadd.f32 %v4254, %v4255
    %v4257 = vsel %vm3311, %v4249, 0.0
    %v4258 = vadd.f32 %v4256, %v4257
    %v4259 = vrot.slane %v4258, 4
    %v4260 = vadd.f32 %v4258, %v4259
    %v4261 = vrot.slane %v4260, 2
    %v4262 = vadd.f32 %v4260, %v4261
    %v4263 = vrot.slane %v4262, 1
    %v4264 = vadd.f32 %v4262, %v4263
    %v4265 = vmul.f32 %v4244, %v4224
    %v4266 = vsel %vm3281, %v4265, 0.0
    %4267 = vadd.xlane.f32.xlu0 %v4266
    %v4268 = vpop.xlane.xlu0 %4267
    %v4269 = vrcp.pop %v4268
    %v4270 = vmul.f32 1.0, %v4269
    %v4271 = vmul.f32 %v4197, %v4224
    %v4272 = vmul.f32 %v4198, %v4224
    %v4273 = vmul.f32 %v4199, %v4224
    %v4274 = vmul.f32 %v4200, %v4224
    %v4275 = vmul.f32 %v4201, %v4224
    %v4276 = vsel %vm3281, %v4271, 0.0
    %4277 = vadd.xlane.f32.xlu0 %v4276
    %v4278 = vpop.xlane.xlu0 %4277
    %v4279 = vsel %vm3281, %v4272, 0.0
    %4280 = vadd.xlane.f32.xlu0 %v4279
    %v4281 = vpop.xlane.xlu0 %4280
    %v4282 = vsel %vm3281, %v4273, 0.0
    %4283 = vadd.xlane.f32.xlu0 %v4282
    %v4284 = vpop.xlane.xlu0 %4283
    %v4285 = vsel %vm3281, %v4274, 0.0
    %4286 = vadd.xlane.f32.xlu0 %v4285
    %v4287 = vpop.xlane.xlu0 %4286
    %v4288 = vsel %vm3289, %v4275, 0.0
    %4289 = vadd.xlane.f32.xlu0 %v4288
    %v4290 = vpop.xlane.xlu0 %4289
    %v4291 = vsub.f32 %v4278, %v4218
    %v4292 = vsub.f32 %v4281, %v4219
    %v4293 = vsub.f32 %v4284, %v4220
    %v4294 = vsub.f32 %v4287, %v4221
    %v4295 = vsub.f32 %v4290, %v4222
    %v4296 = vmul.f32 %v4244, %v4270
    %v4297 = vmul.f32 %v4291, %v4296
    %v4298 = vmul.f32 %v4292, %v4296
    %v4299 = vmul.f32 %v4293, %v4296
    %v4300 = vmul.f32 %v4294, %v4296
    %v4301 = vmul.f32 %v4295, %v4296
    %v4302 = vsub.f32 %v4197, %v4297
    %v4303 = vsub.f32 %v4198, %v4298
    %v4304 = vsub.f32 %v4199, %v4299
    %v4305 = vsub.f32 %v4200, %v4300
    %v4306 = vsub.f32 %v4201, %v4301
    %v4307 = vmul.f32 %v4264, %v4270
    %v4308 = vmul.f32 %v4291, %v4307
    %v4309 = vmul.f32 %v4292, %v4307
    %v4310 = vmul.f32 %v4293, %v4307
    %v4311 = vmul.f32 %v4294, %v4307
    %v4312 = vmul.f32 %v4295, %v4307
    %v4313 = vsub.f32 %v4208, %v4308
    %v4314 = vsub.f32 %v4209, %v4309
    %v4315 = vsub.f32 %v4210, %v4310
    %v4316 = vsub.f32 %v4211, %v4311
    %v4317 = vsub.f32 %v4212, %v4312
    %vm4318 = vcmp.eq.s32.totalorder %v1847, 10
    %vm4319 = vcmp.eq.s32.totalorder %v1848, 10
    %vm4320 = vcmp.eq.s32.totalorder %v1849, 10
    %vm4321 = vcmp.eq.s32.totalorder %v1850, 10
    %vm4322 = vcmp.eq.s32.totalorder %v1851, 10
    %v4323 = vsel %vm4318, 1.0, 0.0
    %v4324 = vsel %vm4319, 1.0, 0.0
    %v4325 = vsel %vm4320, 1.0, 0.0
    %v4326 = vsel %vm4321, 1.0, 0.0
    %v4327 = vsel %vm4322, 1.0, 0.0
    %vm4328 = vcmp.eq.s32.totalorder %v1853, 10
    %v4329 = vsel %vm4328, 1.0, 0.0
    %v4330 = vmul.f32 %v4302, %v4323
    %v4331 = vmul.f32 %v4303, %v4324
    %v4332 = vmul.f32 %v4304, %v4325
    %v4333 = vmul.f32 %v4305, %v4326
    %v4334 = vmul.f32 %v4306, %v4327
    %v4335 = vsel %vm3281, %v4330, 0.0
    %v4336 = vsel %vm3281, %v4331, 0.0
    %v4337 = vadd.f32 %v4335, %v4336
    %v4338 = vsel %vm3281, %v4332, 0.0
    %v4339 = vadd.f32 %v4337, %v4338
    %v4340 = vsel %vm3281, %v4333, 0.0
    %v4341 = vadd.f32 %v4339, %v4340
    %v4342 = vsel %vm3289, %v4334, 0.0
    %v4343 = vadd.f32 %v4341, %v4342
    %v4344 = vrot.slane %v4343, 4
    %v4345 = vadd.f32 %v4343, %v4344
    %v4346 = vrot.slane %v4345, 2
    %v4347 = vadd.f32 %v4345, %v4346
    %v4348 = vrot.slane %v4347, 1
    %v4349 = vadd.f32 %v4347, %v4348
    %v4350 = vmul.f32 %v4313, %v4323
    %v4351 = vmul.f32 %v4314, %v4324
    %v4352 = vmul.f32 %v4315, %v4325
    %v4353 = vmul.f32 %v4316, %v4326
    %v4354 = vmul.f32 %v4317, %v4327
    %v4355 = vsel %vm3303, %v4350, 0.0
    %v4356 = vsel %vm3303, %v4351, 0.0
    %v4357 = vadd.f32 %v4355, %v4356
    %v4358 = vsel %vm3303, %v4352, 0.0
    %v4359 = vadd.f32 %v4357, %v4358
    %v4360 = vsel %vm3303, %v4353, 0.0
    %v4361 = vadd.f32 %v4359, %v4360
    %v4362 = vsel %vm3311, %v4354, 0.0
    %v4363 = vadd.f32 %v4361, %v4362
    %v4364 = vrot.slane %v4363, 4
    %v4365 = vadd.f32 %v4363, %v4364
    %v4366 = vrot.slane %v4365, 2
    %v4367 = vadd.f32 %v4365, %v4366
    %v4368 = vrot.slane %v4367, 1
    %v4369 = vadd.f32 %v4367, %v4368
    %v4370 = vmul.f32 %v4349, %v4329
    %v4371 = vsel %vm3281, %v4370, 0.0
    %4372 = vadd.xlane.f32.xlu0 %v4371
    %v4373 = vpop.xlane.xlu0 %4372
    %v4374 = vrcp.pop %v4373
    %v4375 = vmul.f32 1.0, %v4374
    %v4376 = vmul.f32 %v4302, %v4329
    %v4377 = vmul.f32 %v4303, %v4329
    %v4378 = vmul.f32 %v4304, %v4329
    %v4379 = vmul.f32 %v4305, %v4329
    %v4380 = vmul.f32 %v4306, %v4329
    %v4381 = vsel %vm3281, %v4376, 0.0
    %4382 = vadd.xlane.f32.xlu0 %v4381
    %v4383 = vpop.xlane.xlu0 %4382
    %v4384 = vsel %vm3281, %v4377, 0.0
    %4385 = vadd.xlane.f32.xlu0 %v4384
    %v4386 = vpop.xlane.xlu0 %4385
    %v4387 = vsel %vm3281, %v4378, 0.0
    %4388 = vadd.xlane.f32.xlu0 %v4387
    %v4389 = vpop.xlane.xlu0 %4388
    %v4390 = vsel %vm3281, %v4379, 0.0
    %4391 = vadd.xlane.f32.xlu0 %v4390
    %v4392 = vpop.xlane.xlu0 %4391
    %v4393 = vsel %vm3289, %v4380, 0.0
    %4394 = vadd.xlane.f32.xlu0 %v4393
    %v4395 = vpop.xlane.xlu0 %4394
    %v4396 = vsub.f32 %v4383, %v4323
    %v4397 = vsub.f32 %v4386, %v4324
    %v4398 = vsub.f32 %v4389, %v4325
    %v4399 = vsub.f32 %v4392, %v4326
    %v4400 = vsub.f32 %v4395, %v4327
    %v4401 = vmul.f32 %v4349, %v4375
    %v4402 = vmul.f32 %v4396, %v4401
    %v4403 = vmul.f32 %v4397, %v4401
    %v4404 = vmul.f32 %v4398, %v4401
    %v4405 = vmul.f32 %v4399, %v4401
    %v4406 = vmul.f32 %v4400, %v4401
    %v4407 = vsub.f32 %v4302, %v4402
    %v4408 = vsub.f32 %v4303, %v4403
    %v4409 = vsub.f32 %v4304, %v4404
    %v4410 = vsub.f32 %v4305, %v4405
    %v4411 = vsub.f32 %v4306, %v4406
    %v4412 = vmul.f32 %v4369, %v4375
    %v4413 = vmul.f32 %v4396, %v4412
    %v4414 = vmul.f32 %v4397, %v4412
    %v4415 = vmul.f32 %v4398, %v4412
    %v4416 = vmul.f32 %v4399, %v4412
    %v4417 = vmul.f32 %v4400, %v4412
    %v4418 = vsub.f32 %v4313, %v4413
    %v4419 = vsub.f32 %v4314, %v4414
    %v4420 = vsub.f32 %v4315, %v4415
    %v4421 = vsub.f32 %v4316, %v4416
    %v4422 = vsub.f32 %v4317, %v4417
    %vm4423 = vcmp.eq.s32.totalorder %v1847, 11
    %vm4424 = vcmp.eq.s32.totalorder %v1848, 11
    %vm4425 = vcmp.eq.s32.totalorder %v1849, 11
    %vm4426 = vcmp.eq.s32.totalorder %v1850, 11
    %vm4427 = vcmp.eq.s32.totalorder %v1851, 11
    %v4428 = vsel %vm4423, 1.0, 0.0
    %v4429 = vsel %vm4424, 1.0, 0.0
    %v4430 = vsel %vm4425, 1.0, 0.0
    %v4431 = vsel %vm4426, 1.0, 0.0
    %v4432 = vsel %vm4427, 1.0, 0.0
    %vm4433 = vcmp.eq.s32.totalorder %v1853, 11
    %v4434 = vsel %vm4433, 1.0, 0.0
    %v4435 = vmul.f32 %v4407, %v4428
    %v4436 = vmul.f32 %v4408, %v4429
    %v4437 = vmul.f32 %v4409, %v4430
    %v4438 = vmul.f32 %v4410, %v4431
    %v4439 = vmul.f32 %v4411, %v4432
    %v4440 = vsel %vm3281, %v4435, 0.0
    %v4441 = vsel %vm3281, %v4436, 0.0
    %v4442 = vadd.f32 %v4440, %v4441
    %v4443 = vsel %vm3281, %v4437, 0.0
    %v4444 = vadd.f32 %v4442, %v4443
    %v4445 = vsel %vm3281, %v4438, 0.0
    %v4446 = vadd.f32 %v4444, %v4445
    %v4447 = vsel %vm3289, %v4439, 0.0
    %v4448 = vadd.f32 %v4446, %v4447
    %v4449 = vrot.slane %v4448, 4
    %v4450 = vadd.f32 %v4448, %v4449
    %v4451 = vrot.slane %v4450, 2
    %v4452 = vadd.f32 %v4450, %v4451
    %v4453 = vrot.slane %v4452, 1
    %v4454 = vadd.f32 %v4452, %v4453
    %v4455 = vmul.f32 %v4418, %v4428
    %v4456 = vmul.f32 %v4419, %v4429
    %v4457 = vmul.f32 %v4420, %v4430
    %v4458 = vmul.f32 %v4421, %v4431
    %v4459 = vmul.f32 %v4422, %v4432
    %v4460 = vsel %vm3303, %v4455, 0.0
    %v4461 = vsel %vm3303, %v4456, 0.0
    %v4462 = vadd.f32 %v4460, %v4461
    %v4463 = vsel %vm3303, %v4457, 0.0
    %v4464 = vadd.f32 %v4462, %v4463
    %v4465 = vsel %vm3303, %v4458, 0.0
    %v4466 = vadd.f32 %v4464, %v4465
    %v4467 = vsel %vm3311, %v4459, 0.0
    %v4468 = vadd.f32 %v4466, %v4467
    %v4469 = vrot.slane %v4468, 4
    %v4470 = vadd.f32 %v4468, %v4469
    %v4471 = vrot.slane %v4470, 2
    %v4472 = vadd.f32 %v4470, %v4471
    %v4473 = vrot.slane %v4472, 1
    %v4474 = vadd.f32 %v4472, %v4473
    %v4475 = vmul.f32 %v4454, %v4434
    %v4476 = vsel %vm3281, %v4475, 0.0
    %4477 = vadd.xlane.f32.xlu0 %v4476
    %v4478 = vpop.xlane.xlu0 %4477
    %v4479 = vrcp.pop %v4478
    %v4480 = vmul.f32 1.0, %v4479
    %v4481 = vmul.f32 %v4407, %v4434
    %v4482 = vmul.f32 %v4408, %v4434
    %v4483 = vmul.f32 %v4409, %v4434
    %v4484 = vmul.f32 %v4410, %v4434
    %v4485 = vmul.f32 %v4411, %v4434
    %v4486 = vsel %vm3281, %v4481, 0.0
    %4487 = vadd.xlane.f32.xlu0 %v4486
    %v4488 = vpop.xlane.xlu0 %4487
    %v4489 = vsel %vm3281, %v4482, 0.0
    %4490 = vadd.xlane.f32.xlu0 %v4489
    %v4491 = vpop.xlane.xlu0 %4490
    %v4492 = vsel %vm3281, %v4483, 0.0
    %4493 = vadd.xlane.f32.xlu0 %v4492
    %v4494 = vpop.xlane.xlu0 %4493
    %v4495 = vsel %vm3281, %v4484, 0.0
    %4496 = vadd.xlane.f32.xlu0 %v4495
    %v4497 = vpop.xlane.xlu0 %4496
    %v4498 = vsel %vm3289, %v4485, 0.0
    %4499 = vadd.xlane.f32.xlu0 %v4498
    %v4500 = vpop.xlane.xlu0 %4499
    %v4501 = vsub.f32 %v4488, %v4428
    %v4502 = vsub.f32 %v4491, %v4429
    %v4503 = vsub.f32 %v4494, %v4430
    %v4504 = vsub.f32 %v4497, %v4431
    %v4505 = vsub.f32 %v4500, %v4432
    %v4506 = vmul.f32 %v4454, %v4480
    %v4507 = vmul.f32 %v4501, %v4506
    %v4508 = vmul.f32 %v4502, %v4506
    %v4509 = vmul.f32 %v4503, %v4506
    %v4510 = vmul.f32 %v4504, %v4506
    %v4511 = vmul.f32 %v4505, %v4506
    %v4512 = vsub.f32 %v4407, %v4507
    %v4513 = vsub.f32 %v4408, %v4508
    %v4514 = vsub.f32 %v4409, %v4509
    %v4515 = vsub.f32 %v4410, %v4510
    %v4516 = vsub.f32 %v4411, %v4511
    %v4517 = vmul.f32 %v4474, %v4480
    %v4518 = vmul.f32 %v4501, %v4517
    %v4519 = vmul.f32 %v4502, %v4517
    %v4520 = vmul.f32 %v4503, %v4517
    %v4521 = vmul.f32 %v4504, %v4517
    %v4522 = vmul.f32 %v4505, %v4517
    %v4523 = vsub.f32 %v4418, %v4518
    %v4524 = vsub.f32 %v4419, %v4519
    %v4525 = vsub.f32 %v4420, %v4520
    %v4526 = vsub.f32 %v4421, %v4521
    %v4527 = vsub.f32 %v4422, %v4522
    %vm4528 = vcmp.eq.s32.totalorder %v1847, 12
    %vm4529 = vcmp.eq.s32.totalorder %v1848, 12
    %vm4530 = vcmp.eq.s32.totalorder %v1849, 12
    %vm4531 = vcmp.eq.s32.totalorder %v1850, 12
    %vm4532 = vcmp.eq.s32.totalorder %v1851, 12
    %v4533 = vsel %vm4528, 1.0, 0.0
    %v4534 = vsel %vm4529, 1.0, 0.0
    %v4535 = vsel %vm4530, 1.0, 0.0
    %v4536 = vsel %vm4531, 1.0, 0.0
    %v4537 = vsel %vm4532, 1.0, 0.0
    %vm4538 = vcmp.eq.s32.totalorder %v1853, 12
    %v4539 = vsel %vm4538, 1.0, 0.0
    %v4540 = vmul.f32 %v4512, %v4533
    %v4541 = vmul.f32 %v4513, %v4534
    %v4542 = vmul.f32 %v4514, %v4535
    %v4543 = vmul.f32 %v4515, %v4536
    %v4544 = vmul.f32 %v4516, %v4537
    %v4545 = vsel %vm3281, %v4540, 0.0
    %v4546 = vsel %vm3281, %v4541, 0.0
    %v4547 = vadd.f32 %v4545, %v4546
    %v4548 = vsel %vm3281, %v4542, 0.0
    %v4549 = vadd.f32 %v4547, %v4548
    %v4550 = vsel %vm3281, %v4543, 0.0
    %v4551 = vadd.f32 %v4549, %v4550
    %v4552 = vsel %vm3289, %v4544, 0.0
    %v4553 = vadd.f32 %v4551, %v4552
    %v4554 = vrot.slane %v4553, 4
    %v4555 = vadd.f32 %v4553, %v4554
    %v4556 = vrot.slane %v4555, 2
    %v4557 = vadd.f32 %v4555, %v4556
    %v4558 = vrot.slane %v4557, 1
    %v4559 = vadd.f32 %v4557, %v4558
    %v4560 = vmul.f32 %v4523, %v4533
    %v4561 = vmul.f32 %v4524, %v4534
    %v4562 = vmul.f32 %v4525, %v4535
    %v4563 = vmul.f32 %v4526, %v4536
    %v4564 = vmul.f32 %v4527, %v4537
    %v4565 = vsel %vm3303, %v4560, 0.0
    %v4566 = vsel %vm3303, %v4561, 0.0
    %v4567 = vadd.f32 %v4565, %v4566
    %v4568 = vsel %vm3303, %v4562, 0.0
    %v4569 = vadd.f32 %v4567, %v4568
    %v4570 = vsel %vm3303, %v4563, 0.0
    %v4571 = vadd.f32 %v4569, %v4570
    %v4572 = vsel %vm3311, %v4564, 0.0
    %v4573 = vadd.f32 %v4571, %v4572
    %v4574 = vrot.slane %v4573, 4
    %v4575 = vadd.f32 %v4573, %v4574
    %v4576 = vrot.slane %v4575, 2
    %v4577 = vadd.f32 %v4575, %v4576
    %v4578 = vrot.slane %v4577, 1
    %v4579 = vadd.f32 %v4577, %v4578
    %v4580 = vmul.f32 %v4559, %v4539
    %v4581 = vsel %vm3281, %v4580, 0.0
    %4582 = vadd.xlane.f32.xlu0 %v4581
    %v4583 = vpop.xlane.xlu0 %4582
    %v4584 = vrcp.pop %v4583
    %v4585 = vmul.f32 1.0, %v4584
    %v4586 = vmul.f32 %v4512, %v4539
    %v4587 = vmul.f32 %v4513, %v4539
    %v4588 = vmul.f32 %v4514, %v4539
    %v4589 = vmul.f32 %v4515, %v4539
    %v4590 = vmul.f32 %v4516, %v4539
    %v4591 = vsel %vm3281, %v4586, 0.0
    %4592 = vadd.xlane.f32.xlu0 %v4591
    %v4593 = vpop.xlane.xlu0 %4592
    %v4594 = vsel %vm3281, %v4587, 0.0
    %4595 = vadd.xlane.f32.xlu0 %v4594
    %v4596 = vpop.xlane.xlu0 %4595
    %v4597 = vsel %vm3281, %v4588, 0.0
    %4598 = vadd.xlane.f32.xlu0 %v4597
    %v4599 = vpop.xlane.xlu0 %4598
    %v4600 = vsel %vm3281, %v4589, 0.0
    %4601 = vadd.xlane.f32.xlu0 %v4600
    %v4602 = vpop.xlane.xlu0 %4601
    %v4603 = vsel %vm3289, %v4590, 0.0
    %4604 = vadd.xlane.f32.xlu0 %v4603
    %v4605 = vpop.xlane.xlu0 %4604
    %v4606 = vsub.f32 %v4593, %v4533
    %v4607 = vsub.f32 %v4596, %v4534
    %v4608 = vsub.f32 %v4599, %v4535
    %v4609 = vsub.f32 %v4602, %v4536
    %v4610 = vsub.f32 %v4605, %v4537
    %v4611 = vmul.f32 %v4559, %v4585
    %v4612 = vmul.f32 %v4606, %v4611
    %v4613 = vmul.f32 %v4607, %v4611
    %v4614 = vmul.f32 %v4608, %v4611
    %v4615 = vmul.f32 %v4609, %v4611
    %v4616 = vmul.f32 %v4610, %v4611
    %v4617 = vsub.f32 %v4512, %v4612
    %v4618 = vsub.f32 %v4513, %v4613
    %v4619 = vsub.f32 %v4514, %v4614
    %v4620 = vsub.f32 %v4515, %v4615
    %v4621 = vsub.f32 %v4516, %v4616
    %v4622 = vmul.f32 %v4579, %v4585
    %v4623 = vmul.f32 %v4606, %v4622
    %v4624 = vmul.f32 %v4607, %v4622
    %v4625 = vmul.f32 %v4608, %v4622
    %v4626 = vmul.f32 %v4609, %v4622
    %v4627 = vmul.f32 %v4610, %v4622
    %v4628 = vsub.f32 %v4523, %v4623
    %v4629 = vsub.f32 %v4524, %v4624
    %v4630 = vsub.f32 %v4525, %v4625
    %v4631 = vsub.f32 %v4526, %v4626
    %v4632 = vsub.f32 %v4527, %v4627
    %vm4633 = vcmp.eq.s32.totalorder %v1847, 13
    %vm4634 = vcmp.eq.s32.totalorder %v1848, 13
    %vm4635 = vcmp.eq.s32.totalorder %v1849, 13
    %vm4636 = vcmp.eq.s32.totalorder %v1850, 13
    %vm4637 = vcmp.eq.s32.totalorder %v1851, 13
    %v4638 = vsel %vm4633, 1.0, 0.0
    %v4639 = vsel %vm4634, 1.0, 0.0
    %v4640 = vsel %vm4635, 1.0, 0.0
    %v4641 = vsel %vm4636, 1.0, 0.0
    %v4642 = vsel %vm4637, 1.0, 0.0
    %vm4643 = vcmp.eq.s32.totalorder %v1853, 13
    %v4644 = vsel %vm4643, 1.0, 0.0
    %v4645 = vmul.f32 %v4617, %v4638
    %v4646 = vmul.f32 %v4618, %v4639
    %v4647 = vmul.f32 %v4619, %v4640
    %v4648 = vmul.f32 %v4620, %v4641
    %v4649 = vmul.f32 %v4621, %v4642
    %v4650 = vsel %vm3281, %v4645, 0.0
    %v4651 = vsel %vm3281, %v4646, 0.0
    %v4652 = vadd.f32 %v4650, %v4651
    %v4653 = vsel %vm3281, %v4647, 0.0
    %v4654 = vadd.f32 %v4652, %v4653
    %v4655 = vsel %vm3281, %v4648, 0.0
    %v4656 = vadd.f32 %v4654, %v4655
    %v4657 = vsel %vm3289, %v4649, 0.0
    %v4658 = vadd.f32 %v4656, %v4657
    %v4659 = vrot.slane %v4658, 4
    %v4660 = vadd.f32 %v4658, %v4659
    %v4661 = vrot.slane %v4660, 2
    %v4662 = vadd.f32 %v4660, %v4661
    %v4663 = vrot.slane %v4662, 1
    %v4664 = vadd.f32 %v4662, %v4663
    %v4665 = vmul.f32 %v4628, %v4638
    %v4666 = vmul.f32 %v4629, %v4639
    %v4667 = vmul.f32 %v4630, %v4640
    %v4668 = vmul.f32 %v4631, %v4641
    %v4669 = vmul.f32 %v4632, %v4642
    %v4670 = vsel %vm3303, %v4665, 0.0
    %v4671 = vsel %vm3303, %v4666, 0.0
    %v4672 = vadd.f32 %v4670, %v4671
    %v4673 = vsel %vm3303, %v4667, 0.0
    %v4674 = vadd.f32 %v4672, %v4673
    %v4675 = vsel %vm3303, %v4668, 0.0
    %v4676 = vadd.f32 %v4674, %v4675
    %v4677 = vsel %vm3311, %v4669, 0.0
    %v4678 = vadd.f32 %v4676, %v4677
    %v4679 = vrot.slane %v4678, 4
    %v4680 = vadd.f32 %v4678, %v4679
    %v4681 = vrot.slane %v4680, 2
    %v4682 = vadd.f32 %v4680, %v4681
    %v4683 = vrot.slane %v4682, 1
    %v4684 = vadd.f32 %v4682, %v4683
    %v4685 = vmul.f32 %v4664, %v4644
    %v4686 = vsel %vm3281, %v4685, 0.0
    %4687 = vadd.xlane.f32.xlu0 %v4686
    %v4688 = vpop.xlane.xlu0 %4687
    %v4689 = vrcp.pop %v4688
    %v4690 = vmul.f32 1.0, %v4689
    %v4691 = vmul.f32 %v4617, %v4644
    %v4692 = vmul.f32 %v4618, %v4644
    %v4693 = vmul.f32 %v4619, %v4644
    %v4694 = vmul.f32 %v4620, %v4644
    %v4695 = vmul.f32 %v4621, %v4644
    %v4696 = vsel %vm3281, %v4691, 0.0
    %4697 = vadd.xlane.f32.xlu0 %v4696
    %v4698 = vpop.xlane.xlu0 %4697
    %v4699 = vsel %vm3281, %v4692, 0.0
    %4700 = vadd.xlane.f32.xlu0 %v4699
    %v4701 = vpop.xlane.xlu0 %4700
    %v4702 = vsel %vm3281, %v4693, 0.0
    %4703 = vadd.xlane.f32.xlu0 %v4702
    %v4704 = vpop.xlane.xlu0 %4703
    %v4705 = vsel %vm3281, %v4694, 0.0
    %4706 = vadd.xlane.f32.xlu0 %v4705
    %v4707 = vpop.xlane.xlu0 %4706
    %v4708 = vsel %vm3289, %v4695, 0.0
    %4709 = vadd.xlane.f32.xlu0 %v4708
    %v4710 = vpop.xlane.xlu0 %4709
    %v4711 = vsub.f32 %v4698, %v4638
    %v4712 = vsub.f32 %v4701, %v4639
    %v4713 = vsub.f32 %v4704, %v4640
    %v4714 = vsub.f32 %v4707, %v4641
    %v4715 = vsub.f32 %v4710, %v4642
    %v4716 = vmul.f32 %v4664, %v4690
    %v4717 = vmul.f32 %v4711, %v4716
    %v4718 = vmul.f32 %v4712, %v4716
    %v4719 = vmul.f32 %v4713, %v4716
    %v4720 = vmul.f32 %v4714, %v4716
    %v4721 = vmul.f32 %v4715, %v4716
    %v4722 = vsub.f32 %v4617, %v4717
    %v4723 = vsub.f32 %v4618, %v4718
    %v4724 = vsub.f32 %v4619, %v4719
    %v4725 = vsub.f32 %v4620, %v4720
    %v4726 = vsub.f32 %v4621, %v4721
    %v4727 = vmul.f32 %v4684, %v4690
    %v4728 = vmul.f32 %v4711, %v4727
    %v4729 = vmul.f32 %v4712, %v4727
    %v4730 = vmul.f32 %v4713, %v4727
    %v4731 = vmul.f32 %v4714, %v4727
    %v4732 = vmul.f32 %v4715, %v4727
    %v4733 = vsub.f32 %v4628, %v4728
    %v4734 = vsub.f32 %v4629, %v4729
    %v4735 = vsub.f32 %v4630, %v4730
    %v4736 = vsub.f32 %v4631, %v4731
    %v4737 = vsub.f32 %v4632, %v4732
    %vm4738 = vcmp.eq.s32.totalorder %v1847, 14
    %vm4739 = vcmp.eq.s32.totalorder %v1848, 14
    %vm4740 = vcmp.eq.s32.totalorder %v1849, 14
    %vm4741 = vcmp.eq.s32.totalorder %v1850, 14
    %vm4742 = vcmp.eq.s32.totalorder %v1851, 14
    %v4743 = vsel %vm4738, 1.0, 0.0
    %v4744 = vsel %vm4739, 1.0, 0.0
    %v4745 = vsel %vm4740, 1.0, 0.0
    %v4746 = vsel %vm4741, 1.0, 0.0
    %v4747 = vsel %vm4742, 1.0, 0.0
    %vm4748 = vcmp.eq.s32.totalorder %v1853, 14
    %v4749 = vsel %vm4748, 1.0, 0.0
    %v4750 = vmul.f32 %v4722, %v4743
    %v4751 = vmul.f32 %v4723, %v4744
    %v4752 = vmul.f32 %v4724, %v4745
    %v4753 = vmul.f32 %v4725, %v4746
    %v4754 = vmul.f32 %v4726, %v4747
    %v4755 = vsel %vm3281, %v4750, 0.0
    %v4756 = vsel %vm3281, %v4751, 0.0
    %v4757 = vadd.f32 %v4755, %v4756
    %v4758 = vsel %vm3281, %v4752, 0.0
    %v4759 = vadd.f32 %v4757, %v4758
    %v4760 = vsel %vm3281, %v4753, 0.0
    %v4761 = vadd.f32 %v4759, %v4760
    %v4762 = vsel %vm3289, %v4754, 0.0
    %v4763 = vadd.f32 %v4761, %v4762
    %v4764 = vrot.slane %v4763, 4
    %v4765 = vadd.f32 %v4763, %v4764
    %v4766 = vrot.slane %v4765, 2
    %v4767 = vadd.f32 %v4765, %v4766
    %v4768 = vrot.slane %v4767, 1
    %v4769 = vadd.f32 %v4767, %v4768
    %v4770 = vmul.f32 %v4733, %v4743
    %v4771 = vmul.f32 %v4734, %v4744
    %v4772 = vmul.f32 %v4735, %v4745
    %v4773 = vmul.f32 %v4736, %v4746
    %v4774 = vmul.f32 %v4737, %v4747
    %v4775 = vsel %vm3303, %v4770, 0.0
    %v4776 = vsel %vm3303, %v4771, 0.0
    %v4777 = vadd.f32 %v4775, %v4776
    %v4778 = vsel %vm3303, %v4772, 0.0
    %v4779 = vadd.f32 %v4777, %v4778
    %v4780 = vsel %vm3303, %v4773, 0.0
    %v4781 = vadd.f32 %v4779, %v4780
    %v4782 = vsel %vm3311, %v4774, 0.0
    %v4783 = vadd.f32 %v4781, %v4782
    %v4784 = vrot.slane %v4783, 4
    %v4785 = vadd.f32 %v4783, %v4784
    %v4786 = vrot.slane %v4785, 2
    %v4787 = vadd.f32 %v4785, %v4786
    %v4788 = vrot.slane %v4787, 1
    %v4789 = vadd.f32 %v4787, %v4788
    %v4790 = vmul.f32 %v4769, %v4749
    %v4791 = vsel %vm3281, %v4790, 0.0
    %4792 = vadd.xlane.f32.xlu0 %v4791
    %v4793 = vpop.xlane.xlu0 %4792
    %v4794 = vrcp.pop %v4793
    %v4795 = vmul.f32 1.0, %v4794
    %v4796 = vmul.f32 %v4722, %v4749
    %v4797 = vmul.f32 %v4723, %v4749
    %v4798 = vmul.f32 %v4724, %v4749
    %v4799 = vmul.f32 %v4725, %v4749
    %v4800 = vmul.f32 %v4726, %v4749
    %v4801 = vsel %vm3281, %v4796, 0.0
    %4802 = vadd.xlane.f32.xlu0 %v4801
    %v4803 = vpop.xlane.xlu0 %4802
    %v4804 = vsel %vm3281, %v4797, 0.0
    %4805 = vadd.xlane.f32.xlu0 %v4804
    %v4806 = vpop.xlane.xlu0 %4805
    %v4807 = vsel %vm3281, %v4798, 0.0
    %4808 = vadd.xlane.f32.xlu0 %v4807
    %v4809 = vpop.xlane.xlu0 %4808
    %v4810 = vsel %vm3281, %v4799, 0.0
    %4811 = vadd.xlane.f32.xlu0 %v4810
    %v4812 = vpop.xlane.xlu0 %4811
    %v4813 = vsel %vm3289, %v4800, 0.0
    %4814 = vadd.xlane.f32.xlu0 %v4813
    %v4815 = vpop.xlane.xlu0 %4814
    %v4816 = vsub.f32 %v4803, %v4743
    %v4817 = vsub.f32 %v4806, %v4744
    %v4818 = vsub.f32 %v4809, %v4745
    %v4819 = vsub.f32 %v4812, %v4746
    %v4820 = vsub.f32 %v4815, %v4747
    %v4821 = vmul.f32 %v4769, %v4795
    %v4822 = vmul.f32 %v4816, %v4821
    %v4823 = vmul.f32 %v4817, %v4821
    %v4824 = vmul.f32 %v4818, %v4821
    %v4825 = vmul.f32 %v4819, %v4821
    %v4826 = vmul.f32 %v4820, %v4821
    %v4827 = vsub.f32 %v4722, %v4822
    %v4828 = vsub.f32 %v4723, %v4823
    %v4829 = vsub.f32 %v4724, %v4824
    %v4830 = vsub.f32 %v4725, %v4825
    %v4831 = vsub.f32 %v4726, %v4826
    %v4832 = vmul.f32 %v4789, %v4795
    %v4833 = vmul.f32 %v4816, %v4832
    %v4834 = vmul.f32 %v4817, %v4832
    %v4835 = vmul.f32 %v4818, %v4832
    %v4836 = vmul.f32 %v4819, %v4832
    %v4837 = vmul.f32 %v4820, %v4832
    %v4838 = vsub.f32 %v4733, %v4833
    %v4839 = vsub.f32 %v4734, %v4834
    %v4840 = vsub.f32 %v4735, %v4835
    %v4841 = vsub.f32 %v4736, %v4836
    %v4842 = vsub.f32 %v4737, %v4837
    %vm4843 = vcmp.eq.s32.totalorder %v1847, 15
    %vm4844 = vcmp.eq.s32.totalorder %v1848, 15
    %vm4845 = vcmp.eq.s32.totalorder %v1849, 15
    %vm4846 = vcmp.eq.s32.totalorder %v1850, 15
    %vm4847 = vcmp.eq.s32.totalorder %v1851, 15
    %v4848 = vsel %vm4843, 1.0, 0.0
    %v4849 = vsel %vm4844, 1.0, 0.0
    %v4850 = vsel %vm4845, 1.0, 0.0
    %v4851 = vsel %vm4846, 1.0, 0.0
    %v4852 = vsel %vm4847, 1.0, 0.0
    %vm4853 = vcmp.eq.s32.totalorder %v1853, 15
    %v4854 = vsel %vm4853, 1.0, 0.0
    %v4855 = vmul.f32 %v4827, %v4848
    %v4856 = vmul.f32 %v4828, %v4849
    %v4857 = vmul.f32 %v4829, %v4850
    %v4858 = vmul.f32 %v4830, %v4851
    %v4859 = vmul.f32 %v4831, %v4852
    %v4860 = vsel %vm3281, %v4855, 0.0
    %v4861 = vsel %vm3281, %v4856, 0.0
    %v4862 = vadd.f32 %v4860, %v4861
    %v4863 = vsel %vm3281, %v4857, 0.0
    %v4864 = vadd.f32 %v4862, %v4863
    %v4865 = vsel %vm3281, %v4858, 0.0
    %v4866 = vadd.f32 %v4864, %v4865
    %v4867 = vsel %vm3289, %v4859, 0.0
    %v4868 = vadd.f32 %v4866, %v4867
    %v4869 = vrot.slane %v4868, 4
    %v4870 = vadd.f32 %v4868, %v4869
    %v4871 = vrot.slane %v4870, 2
    %v4872 = vadd.f32 %v4870, %v4871
    %v4873 = vrot.slane %v4872, 1
    %v4874 = vadd.f32 %v4872, %v4873
    %v4875 = vmul.f32 %v4838, %v4848
    %v4876 = vmul.f32 %v4839, %v4849
    %v4877 = vmul.f32 %v4840, %v4850
    %v4878 = vmul.f32 %v4841, %v4851
    %v4879 = vmul.f32 %v4842, %v4852
    %v4880 = vsel %vm3303, %v4875, 0.0
    %v4881 = vsel %vm3303, %v4876, 0.0
    %v4882 = vadd.f32 %v4880, %v4881
    %v4883 = vsel %vm3303, %v4877, 0.0
    %v4884 = vadd.f32 %v4882, %v4883
    %v4885 = vsel %vm3303, %v4878, 0.0
    %v4886 = vadd.f32 %v4884, %v4885
    %v4887 = vsel %vm3311, %v4879, 0.0
    %v4888 = vadd.f32 %v4886, %v4887
    %v4889 = vrot.slane %v4888, 4
    %v4890 = vadd.f32 %v4888, %v4889
    %v4891 = vrot.slane %v4890, 2
    %v4892 = vadd.f32 %v4890, %v4891
    %v4893 = vrot.slane %v4892, 1
    %v4894 = vadd.f32 %v4892, %v4893
    %v4895 = vmul.f32 %v4874, %v4854
    %v4896 = vsel %vm3281, %v4895, 0.0
    %4897 = vadd.xlane.f32.xlu0 %v4896
    %v4898 = vpop.xlane.xlu0 %4897
    %v4899 = vrcp.pop %v4898
    %v4900 = vmul.f32 1.0, %v4899
    %v4901 = vmul.f32 %v4827, %v4854
    %v4902 = vmul.f32 %v4828, %v4854
    %v4903 = vmul.f32 %v4829, %v4854
    %v4904 = vmul.f32 %v4830, %v4854
    %v4905 = vmul.f32 %v4831, %v4854
    %v4906 = vsel %vm3281, %v4901, 0.0
    %4907 = vadd.xlane.f32.xlu0 %v4906
    %v4908 = vpop.xlane.xlu0 %4907
    %v4909 = vsel %vm3281, %v4902, 0.0
    %4910 = vadd.xlane.f32.xlu0 %v4909
    %v4911 = vpop.xlane.xlu0 %4910
    %v4912 = vsel %vm3281, %v4903, 0.0
    %4913 = vadd.xlane.f32.xlu0 %v4912
    %v4914 = vpop.xlane.xlu0 %4913
    %v4915 = vsel %vm3281, %v4904, 0.0
    %4916 = vadd.xlane.f32.xlu0 %v4915
    %v4917 = vpop.xlane.xlu0 %4916
    %v4918 = vsel %vm3289, %v4905, 0.0
    %4919 = vadd.xlane.f32.xlu0 %v4918
    %v4920 = vpop.xlane.xlu0 %4919
    %v4921 = vsub.f32 %v4908, %v4848
    %v4922 = vsub.f32 %v4911, %v4849
    %v4923 = vsub.f32 %v4914, %v4850
    %v4924 = vsub.f32 %v4917, %v4851
    %v4925 = vsub.f32 %v4920, %v4852
    %v4926 = vmul.f32 %v4874, %v4900
    %v4927 = vmul.f32 %v4921, %v4926
    %v4928 = vmul.f32 %v4922, %v4926
    %v4929 = vmul.f32 %v4923, %v4926
    %v4930 = vmul.f32 %v4924, %v4926
    %v4931 = vmul.f32 %v4925, %v4926
    %v4932 = vsub.f32 %v4827, %v4927
    %v4933 = vsub.f32 %v4828, %v4928
    %v4934 = vsub.f32 %v4829, %v4929
    %v4935 = vsub.f32 %v4830, %v4930
    %v4936 = vsub.f32 %v4831, %v4931
    %v4937 = vmul.f32 %v4894, %v4900
    %v4938 = vmul.f32 %v4921, %v4937
    %v4939 = vmul.f32 %v4922, %v4937
    %v4940 = vmul.f32 %v4923, %v4937
    %v4941 = vmul.f32 %v4924, %v4937
    %v4942 = vmul.f32 %v4925, %v4937
    %v4943 = vsub.f32 %v4838, %v4938
    %v4944 = vsub.f32 %v4839, %v4939
    %v4945 = vsub.f32 %v4840, %v4940
    %v4946 = vsub.f32 %v4841, %v4941
    %v4947 = vsub.f32 %v4842, %v4942
    %vm4948 = vcmp.eq.s32.totalorder %v1847, 16
    %vm4949 = vcmp.eq.s32.totalorder %v1848, 16
    %vm4950 = vcmp.eq.s32.totalorder %v1849, 16
    %vm4951 = vcmp.eq.s32.totalorder %v1850, 16
    %vm4952 = vcmp.eq.s32.totalorder %v1851, 16
    %v4953 = vsel %vm4948, 1.0, 0.0
    %v4954 = vsel %vm4949, 1.0, 0.0
    %v4955 = vsel %vm4950, 1.0, 0.0
    %v4956 = vsel %vm4951, 1.0, 0.0
    %v4957 = vsel %vm4952, 1.0, 0.0
    %vm4958 = vcmp.eq.s32.totalorder %v1853, 16
    %v4959 = vsel %vm4958, 1.0, 0.0
    %v4960 = vmul.f32 %v4932, %v4953
    %v4961 = vmul.f32 %v4933, %v4954
    %v4962 = vmul.f32 %v4934, %v4955
    %v4963 = vmul.f32 %v4935, %v4956
    %v4964 = vmul.f32 %v4936, %v4957
    %v4965 = vsel %vm3281, %v4960, 0.0
    %v4966 = vsel %vm3281, %v4961, 0.0
    %v4967 = vadd.f32 %v4965, %v4966
    %v4968 = vsel %vm3281, %v4962, 0.0
    %v4969 = vadd.f32 %v4967, %v4968
    %v4970 = vsel %vm3281, %v4963, 0.0
    %v4971 = vadd.f32 %v4969, %v4970
    %v4972 = vsel %vm3289, %v4964, 0.0
    %v4973 = vadd.f32 %v4971, %v4972
    %v4974 = vrot.slane %v4973, 4
    %v4975 = vadd.f32 %v4973, %v4974
    %v4976 = vrot.slane %v4975, 2
    %v4977 = vadd.f32 %v4975, %v4976
    %v4978 = vrot.slane %v4977, 1
    %v4979 = vadd.f32 %v4977, %v4978
    %v4980 = vmul.f32 %v4943, %v4953
    %v4981 = vmul.f32 %v4944, %v4954
    %v4982 = vmul.f32 %v4945, %v4955
    %v4983 = vmul.f32 %v4946, %v4956
    %v4984 = vmul.f32 %v4947, %v4957
    %v4985 = vsel %vm3303, %v4980, 0.0
    %v4986 = vsel %vm3303, %v4981, 0.0
    %v4987 = vadd.f32 %v4985, %v4986
    %v4988 = vsel %vm3303, %v4982, 0.0
    %v4989 = vadd.f32 %v4987, %v4988
    %v4990 = vsel %vm3303, %v4983, 0.0
    %v4991 = vadd.f32 %v4989, %v4990
    %v4992 = vsel %vm3311, %v4984, 0.0
    %v4993 = vadd.f32 %v4991, %v4992
    %v4994 = vrot.slane %v4993, 4
    %v4995 = vadd.f32 %v4993, %v4994
    %v4996 = vrot.slane %v4995, 2
    %v4997 = vadd.f32 %v4995, %v4996
    %v4998 = vrot.slane %v4997, 1
    %v4999 = vadd.f32 %v4997, %v4998
    %v5000 = vmul.f32 %v4979, %v4959
    %v5001 = vsel %vm3281, %v5000, 0.0
    %5002 = vadd.xlane.f32.xlu0 %v5001
    %v5003 = vpop.xlane.xlu0 %5002
    %v5004 = vrcp.pop %v5003
    %v5005 = vmul.f32 1.0, %v5004
    %v5006 = vmul.f32 %v4932, %v4959
    %v5007 = vmul.f32 %v4933, %v4959
    %v5008 = vmul.f32 %v4934, %v4959
    %v5009 = vmul.f32 %v4935, %v4959
    %v5010 = vmul.f32 %v4936, %v4959
    %v5011 = vsel %vm3281, %v5006, 0.0
    %5012 = vadd.xlane.f32.xlu0 %v5011
    %v5013 = vpop.xlane.xlu0 %5012
    %v5014 = vsel %vm3281, %v5007, 0.0
    %5015 = vadd.xlane.f32.xlu0 %v5014
    %v5016 = vpop.xlane.xlu0 %5015
    %v5017 = vsel %vm3281, %v5008, 0.0
    %5018 = vadd.xlane.f32.xlu0 %v5017
    %v5019 = vpop.xlane.xlu0 %5018
    %v5020 = vsel %vm3281, %v5009, 0.0
    %5021 = vadd.xlane.f32.xlu0 %v5020
    %v5022 = vpop.xlane.xlu0 %5021
    %v5023 = vsel %vm3289, %v5010, 0.0
    %5024 = vadd.xlane.f32.xlu0 %v5023
    %v5025 = vpop.xlane.xlu0 %5024
    %v5026 = vsub.f32 %v5013, %v4953
    %v5027 = vsub.f32 %v5016, %v4954
    %v5028 = vsub.f32 %v5019, %v4955
    %v5029 = vsub.f32 %v5022, %v4956
    %v5030 = vsub.f32 %v5025, %v4957
    %v5031 = vmul.f32 %v4979, %v5005
    %v5032 = vmul.f32 %v5026, %v5031
    %v5033 = vmul.f32 %v5027, %v5031
    %v5034 = vmul.f32 %v5028, %v5031
    %v5035 = vmul.f32 %v5029, %v5031
    %v5036 = vmul.f32 %v5030, %v5031
    %v5037 = vsub.f32 %v4932, %v5032
    %v5038 = vsub.f32 %v4933, %v5033
    %v5039 = vsub.f32 %v4934, %v5034
    %v5040 = vsub.f32 %v4935, %v5035
    %v5041 = vsub.f32 %v4936, %v5036
    %v5042 = vmul.f32 %v4999, %v5005
    %v5043 = vmul.f32 %v5026, %v5042
    %v5044 = vmul.f32 %v5027, %v5042
    %v5045 = vmul.f32 %v5028, %v5042
    %v5046 = vmul.f32 %v5029, %v5042
    %v5047 = vmul.f32 %v5030, %v5042
    %v5048 = vsub.f32 %v4943, %v5043
    %v5049 = vsub.f32 %v4944, %v5044
    %v5050 = vsub.f32 %v4945, %v5045
    %v5051 = vsub.f32 %v4946, %v5046
    %v5052 = vsub.f32 %v4947, %v5047
    %vm5053 = vcmp.eq.s32.totalorder %v1847, 17
    %vm5054 = vcmp.eq.s32.totalorder %v1848, 17
    %vm5055 = vcmp.eq.s32.totalorder %v1849, 17
    %vm5056 = vcmp.eq.s32.totalorder %v1850, 17
    %vm5057 = vcmp.eq.s32.totalorder %v1851, 17
    %v5058 = vsel %vm5053, 1.0, 0.0
    %v5059 = vsel %vm5054, 1.0, 0.0
    %v5060 = vsel %vm5055, 1.0, 0.0
    %v5061 = vsel %vm5056, 1.0, 0.0
    %v5062 = vsel %vm5057, 1.0, 0.0
    %vm5063 = vcmp.eq.s32.totalorder %v1853, 17
    %v5064 = vsel %vm5063, 1.0, 0.0
    %v5065 = vmul.f32 %v5037, %v5058
    %v5066 = vmul.f32 %v5038, %v5059
    %v5067 = vmul.f32 %v5039, %v5060
    %v5068 = vmul.f32 %v5040, %v5061
    %v5069 = vmul.f32 %v5041, %v5062
    %v5070 = vsel %vm3281, %v5065, 0.0
    %v5071 = vsel %vm3281, %v5066, 0.0
    %v5072 = vadd.f32 %v5070, %v5071
    %v5073 = vsel %vm3281, %v5067, 0.0
    %v5074 = vadd.f32 %v5072, %v5073
    %v5075 = vsel %vm3281, %v5068, 0.0
    %v5076 = vadd.f32 %v5074, %v5075
    %v5077 = vsel %vm3289, %v5069, 0.0
    %v5078 = vadd.f32 %v5076, %v5077
    %v5079 = vrot.slane %v5078, 4
    %v5080 = vadd.f32 %v5078, %v5079
    %v5081 = vrot.slane %v5080, 2
    %v5082 = vadd.f32 %v5080, %v5081
    %v5083 = vrot.slane %v5082, 1
    %v5084 = vadd.f32 %v5082, %v5083
    %v5085 = vmul.f32 %v5048, %v5058
    %v5086 = vmul.f32 %v5049, %v5059
    %v5087 = vmul.f32 %v5050, %v5060
    %v5088 = vmul.f32 %v5051, %v5061
    %v5089 = vmul.f32 %v5052, %v5062
    %v5090 = vsel %vm3303, %v5085, 0.0
    %v5091 = vsel %vm3303, %v5086, 0.0
    %v5092 = vadd.f32 %v5090, %v5091
    %v5093 = vsel %vm3303, %v5087, 0.0
    %v5094 = vadd.f32 %v5092, %v5093
    %v5095 = vsel %vm3303, %v5088, 0.0
    %v5096 = vadd.f32 %v5094, %v5095
    %v5097 = vsel %vm3311, %v5089, 0.0
    %v5098 = vadd.f32 %v5096, %v5097
    %v5099 = vrot.slane %v5098, 4
    %v5100 = vadd.f32 %v5098, %v5099
    %v5101 = vrot.slane %v5100, 2
    %v5102 = vadd.f32 %v5100, %v5101
    %v5103 = vrot.slane %v5102, 1
    %v5104 = vadd.f32 %v5102, %v5103
    %v5105 = vmul.f32 %v5084, %v5064
    %v5106 = vsel %vm3281, %v5105, 0.0
    %5107 = vadd.xlane.f32.xlu0 %v5106
    %v5108 = vpop.xlane.xlu0 %5107
    %v5109 = vrcp.pop %v5108
    %v5110 = vmul.f32 1.0, %v5109
    %v5111 = vmul.f32 %v5037, %v5064
    %v5112 = vmul.f32 %v5038, %v5064
    %v5113 = vmul.f32 %v5039, %v5064
    %v5114 = vmul.f32 %v5040, %v5064
    %v5115 = vmul.f32 %v5041, %v5064
    %v5116 = vsel %vm3281, %v5111, 0.0
    %5117 = vadd.xlane.f32.xlu0 %v5116
    %v5118 = vpop.xlane.xlu0 %5117
    %v5119 = vsel %vm3281, %v5112, 0.0
    %5120 = vadd.xlane.f32.xlu0 %v5119
    %v5121 = vpop.xlane.xlu0 %5120
    %v5122 = vsel %vm3281, %v5113, 0.0
    %5123 = vadd.xlane.f32.xlu0 %v5122
    %v5124 = vpop.xlane.xlu0 %5123
    %v5125 = vsel %vm3281, %v5114, 0.0
    %5126 = vadd.xlane.f32.xlu0 %v5125
    %v5127 = vpop.xlane.xlu0 %5126
    %v5128 = vsel %vm3289, %v5115, 0.0
    %5129 = vadd.xlane.f32.xlu0 %v5128
    %v5130 = vpop.xlane.xlu0 %5129
    %v5131 = vsub.f32 %v5118, %v5058
    %v5132 = vsub.f32 %v5121, %v5059
    %v5133 = vsub.f32 %v5124, %v5060
    %v5134 = vsub.f32 %v5127, %v5061
    %v5135 = vsub.f32 %v5130, %v5062
    %v5136 = vmul.f32 %v5084, %v5110
    %v5137 = vmul.f32 %v5131, %v5136
    %v5138 = vmul.f32 %v5132, %v5136
    %v5139 = vmul.f32 %v5133, %v5136
    %v5140 = vmul.f32 %v5134, %v5136
    %v5141 = vmul.f32 %v5135, %v5136
    %v5142 = vsub.f32 %v5037, %v5137
    %v5143 = vsub.f32 %v5038, %v5138
    %v5144 = vsub.f32 %v5039, %v5139
    %v5145 = vsub.f32 %v5040, %v5140
    %v5146 = vsub.f32 %v5041, %v5141
    %v5147 = vmul.f32 %v5104, %v5110
    %v5148 = vmul.f32 %v5131, %v5147
    %v5149 = vmul.f32 %v5132, %v5147
    %v5150 = vmul.f32 %v5133, %v5147
    %v5151 = vmul.f32 %v5134, %v5147
    %v5152 = vmul.f32 %v5135, %v5147
    %v5153 = vsub.f32 %v5048, %v5148
    %v5154 = vsub.f32 %v5049, %v5149
    %v5155 = vsub.f32 %v5050, %v5150
    %v5156 = vsub.f32 %v5051, %v5151
    %v5157 = vsub.f32 %v5052, %v5152
    %vm5158 = vcmp.eq.s32.totalorder %v1847, 18
    %vm5159 = vcmp.eq.s32.totalorder %v1848, 18
    %vm5160 = vcmp.eq.s32.totalorder %v1849, 18
    %vm5161 = vcmp.eq.s32.totalorder %v1850, 18
    %vm5162 = vcmp.eq.s32.totalorder %v1851, 18
    %v5163 = vsel %vm5158, 1.0, 0.0
    %v5164 = vsel %vm5159, 1.0, 0.0
    %v5165 = vsel %vm5160, 1.0, 0.0
    %v5166 = vsel %vm5161, 1.0, 0.0
    %v5167 = vsel %vm5162, 1.0, 0.0
    %vm5168 = vcmp.eq.s32.totalorder %v1853, 18
    %v5169 = vsel %vm5168, 1.0, 0.0
    %v5170 = vmul.f32 %v5142, %v5163
    %v5171 = vmul.f32 %v5143, %v5164
    %v5172 = vmul.f32 %v5144, %v5165
    %v5173 = vmul.f32 %v5145, %v5166
    %v5174 = vmul.f32 %v5146, %v5167
    %v5175 = vsel %vm3281, %v5170, 0.0
    %v5176 = vsel %vm3281, %v5171, 0.0
    %v5177 = vadd.f32 %v5175, %v5176
    %v5178 = vsel %vm3281, %v5172, 0.0
    %v5179 = vadd.f32 %v5177, %v5178
    %v5180 = vsel %vm3281, %v5173, 0.0
    %v5181 = vadd.f32 %v5179, %v5180
    %v5182 = vsel %vm3289, %v5174, 0.0
    %v5183 = vadd.f32 %v5181, %v5182
    %v5184 = vrot.slane %v5183, 4
    %v5185 = vadd.f32 %v5183, %v5184
    %v5186 = vrot.slane %v5185, 2
    %v5187 = vadd.f32 %v5185, %v5186
    %v5188 = vrot.slane %v5187, 1
    %v5189 = vadd.f32 %v5187, %v5188
    %v5190 = vmul.f32 %v5153, %v5163
    %v5191 = vmul.f32 %v5154, %v5164
    %v5192 = vmul.f32 %v5155, %v5165
    %v5193 = vmul.f32 %v5156, %v5166
    %v5194 = vmul.f32 %v5157, %v5167
    %v5195 = vsel %vm3303, %v5190, 0.0
    %v5196 = vsel %vm3303, %v5191, 0.0
    %v5197 = vadd.f32 %v5195, %v5196
    %v5198 = vsel %vm3303, %v5192, 0.0
    %v5199 = vadd.f32 %v5197, %v5198
    %v5200 = vsel %vm3303, %v5193, 0.0
    %v5201 = vadd.f32 %v5199, %v5200
    %v5202 = vsel %vm3311, %v5194, 0.0
    %v5203 = vadd.f32 %v5201, %v5202
    %v5204 = vrot.slane %v5203, 4
    %v5205 = vadd.f32 %v5203, %v5204
    %v5206 = vrot.slane %v5205, 2
    %v5207 = vadd.f32 %v5205, %v5206
    %v5208 = vrot.slane %v5207, 1
    %v5209 = vadd.f32 %v5207, %v5208
    %v5210 = vmul.f32 %v5189, %v5169
    %v5211 = vsel %vm3281, %v5210, 0.0
    %5212 = vadd.xlane.f32.xlu0 %v5211
    %v5213 = vpop.xlane.xlu0 %5212
    %v5214 = vrcp.pop %v5213
    %v5215 = vmul.f32 1.0, %v5214
    %v5216 = vmul.f32 %v5142, %v5169
    %v5217 = vmul.f32 %v5143, %v5169
    %v5218 = vmul.f32 %v5144, %v5169
    %v5219 = vmul.f32 %v5145, %v5169
    %v5220 = vmul.f32 %v5146, %v5169
    %v5221 = vsel %vm3281, %v5216, 0.0
    %5222 = vadd.xlane.f32.xlu0 %v5221
    %v5223 = vpop.xlane.xlu0 %5222
    %v5224 = vsel %vm3281, %v5217, 0.0
    %5225 = vadd.xlane.f32.xlu0 %v5224
    %v5226 = vpop.xlane.xlu0 %5225
    %v5227 = vsel %vm3281, %v5218, 0.0
    %5228 = vadd.xlane.f32.xlu0 %v5227
    %v5229 = vpop.xlane.xlu0 %5228
    %v5230 = vsel %vm3281, %v5219, 0.0
    %5231 = vadd.xlane.f32.xlu0 %v5230
    %v5232 = vpop.xlane.xlu0 %5231
    %v5233 = vsel %vm3289, %v5220, 0.0
    %5234 = vadd.xlane.f32.xlu0 %v5233
    %v5235 = vpop.xlane.xlu0 %5234
    %v5236 = vsub.f32 %v5223, %v5163
    %v5237 = vsub.f32 %v5226, %v5164
    %v5238 = vsub.f32 %v5229, %v5165
    %v5239 = vsub.f32 %v5232, %v5166
    %v5240 = vsub.f32 %v5235, %v5167
    %v5241 = vmul.f32 %v5189, %v5215
    %v5242 = vmul.f32 %v5236, %v5241
    %v5243 = vmul.f32 %v5237, %v5241
    %v5244 = vmul.f32 %v5238, %v5241
    %v5245 = vmul.f32 %v5239, %v5241
    %v5246 = vmul.f32 %v5240, %v5241
    %v5247 = vsub.f32 %v5142, %v5242
    %v5248 = vsub.f32 %v5143, %v5243
    %v5249 = vsub.f32 %v5144, %v5244
    %v5250 = vsub.f32 %v5145, %v5245
    %v5251 = vsub.f32 %v5146, %v5246
    %v5252 = vmul.f32 %v5209, %v5215
    %v5253 = vmul.f32 %v5236, %v5252
    %v5254 = vmul.f32 %v5237, %v5252
    %v5255 = vmul.f32 %v5238, %v5252
    %v5256 = vmul.f32 %v5239, %v5252
    %v5257 = vmul.f32 %v5240, %v5252
    %v5258 = vsub.f32 %v5153, %v5253
    %v5259 = vsub.f32 %v5154, %v5254
    %v5260 = vsub.f32 %v5155, %v5255
    %v5261 = vsub.f32 %v5156, %v5256
    %v5262 = vsub.f32 %v5157, %v5257
    %vm5263 = vcmp.eq.s32.totalorder %v1847, 19
    %vm5264 = vcmp.eq.s32.totalorder %v1848, 19
    %vm5265 = vcmp.eq.s32.totalorder %v1849, 19
    %vm5266 = vcmp.eq.s32.totalorder %v1850, 19
    %vm5267 = vcmp.eq.s32.totalorder %v1851, 19
    %v5268 = vsel %vm5263, 1.0, 0.0
    %v5269 = vsel %vm5264, 1.0, 0.0
    %v5270 = vsel %vm5265, 1.0, 0.0
    %v5271 = vsel %vm5266, 1.0, 0.0
    %v5272 = vsel %vm5267, 1.0, 0.0
    %vm5273 = vcmp.eq.s32.totalorder %v1853, 19
    %v5274 = vsel %vm5273, 1.0, 0.0
    %v5275 = vmul.f32 %v5247, %v5268
    %v5276 = vmul.f32 %v5248, %v5269
    %v5277 = vmul.f32 %v5249, %v5270
    %v5278 = vmul.f32 %v5250, %v5271
    %v5279 = vmul.f32 %v5251, %v5272
    %v5280 = vsel %vm3281, %v5275, 0.0
    %v5281 = vsel %vm3281, %v5276, 0.0
    %v5282 = vadd.f32 %v5280, %v5281
    %v5283 = vsel %vm3281, %v5277, 0.0
    %v5284 = vadd.f32 %v5282, %v5283
    %v5285 = vsel %vm3281, %v5278, 0.0
    %v5286 = vadd.f32 %v5284, %v5285
    %v5287 = vsel %vm3289, %v5279, 0.0
    %v5288 = vadd.f32 %v5286, %v5287
    %v5289 = vrot.slane %v5288, 4
    %v5290 = vadd.f32 %v5288, %v5289
    %v5291 = vrot.slane %v5290, 2
    %v5292 = vadd.f32 %v5290, %v5291
    %v5293 = vrot.slane %v5292, 1
    %v5294 = vadd.f32 %v5292, %v5293
    %v5295 = vmul.f32 %v5258, %v5268
    %v5296 = vmul.f32 %v5259, %v5269
    %v5297 = vmul.f32 %v5260, %v5270
    %v5298 = vmul.f32 %v5261, %v5271
    %v5299 = vmul.f32 %v5262, %v5272
    %v5300 = vsel %vm3303, %v5295, 0.0
    %v5301 = vsel %vm3303, %v5296, 0.0
    %v5302 = vadd.f32 %v5300, %v5301
    %v5303 = vsel %vm3303, %v5297, 0.0
    %v5304 = vadd.f32 %v5302, %v5303
    %v5305 = vsel %vm3303, %v5298, 0.0
    %v5306 = vadd.f32 %v5304, %v5305
    %v5307 = vsel %vm3311, %v5299, 0.0
    %v5308 = vadd.f32 %v5306, %v5307
    %v5309 = vrot.slane %v5308, 4
    %v5310 = vadd.f32 %v5308, %v5309
    %v5311 = vrot.slane %v5310, 2
    %v5312 = vadd.f32 %v5310, %v5311
    %v5313 = vrot.slane %v5312, 1
    %v5314 = vadd.f32 %v5312, %v5313
    %v5315 = vmul.f32 %v5294, %v5274
    %v5316 = vsel %vm3281, %v5315, 0.0
    %5317 = vadd.xlane.f32.xlu0 %v5316
    %v5318 = vpop.xlane.xlu0 %5317
    %v5319 = vrcp.pop %v5318
    %v5320 = vmul.f32 1.0, %v5319
    %v5321 = vmul.f32 %v5247, %v5274
    %v5322 = vmul.f32 %v5248, %v5274
    %v5323 = vmul.f32 %v5249, %v5274
    %v5324 = vmul.f32 %v5250, %v5274
    %v5325 = vmul.f32 %v5251, %v5274
    %v5326 = vsel %vm3281, %v5321, 0.0
    %5327 = vadd.xlane.f32.xlu0 %v5326
    %v5328 = vpop.xlane.xlu0 %5327
    %v5329 = vsel %vm3281, %v5322, 0.0
    %5330 = vadd.xlane.f32.xlu0 %v5329
    %v5331 = vpop.xlane.xlu0 %5330
    %v5332 = vsel %vm3281, %v5323, 0.0
    %5333 = vadd.xlane.f32.xlu0 %v5332
    %v5334 = vpop.xlane.xlu0 %5333
    %v5335 = vsel %vm3281, %v5324, 0.0
    %5336 = vadd.xlane.f32.xlu0 %v5335
    %v5337 = vpop.xlane.xlu0 %5336
    %v5338 = vsel %vm3289, %v5325, 0.0
    %5339 = vadd.xlane.f32.xlu0 %v5338
    %v5340 = vpop.xlane.xlu0 %5339
    %v5341 = vsub.f32 %v5328, %v5268
    %v5342 = vsub.f32 %v5331, %v5269
    %v5343 = vsub.f32 %v5334, %v5270
    %v5344 = vsub.f32 %v5337, %v5271
    %v5345 = vsub.f32 %v5340, %v5272
    %v5346 = vmul.f32 %v5294, %v5320
    %v5347 = vmul.f32 %v5341, %v5346
    %v5348 = vmul.f32 %v5342, %v5346
    %v5349 = vmul.f32 %v5343, %v5346
    %v5350 = vmul.f32 %v5344, %v5346
    %v5351 = vmul.f32 %v5345, %v5346
    %v5352 = vsub.f32 %v5247, %v5347
    %v5353 = vsub.f32 %v5248, %v5348
    %v5354 = vsub.f32 %v5249, %v5349
    %v5355 = vsub.f32 %v5250, %v5350
    %v5356 = vsub.f32 %v5251, %v5351
    %v5357 = vmul.f32 %v5314, %v5320
    %v5358 = vmul.f32 %v5341, %v5357
    %v5359 = vmul.f32 %v5342, %v5357
    %v5360 = vmul.f32 %v5343, %v5357
    %v5361 = vmul.f32 %v5344, %v5357
    %v5362 = vmul.f32 %v5345, %v5357
    %v5363 = vsub.f32 %v5258, %v5358
    %v5364 = vsub.f32 %v5259, %v5359
    %v5365 = vsub.f32 %v5260, %v5360
    %v5366 = vsub.f32 %v5261, %v5361
    %v5367 = vsub.f32 %v5262, %v5362
    %vm5368 = vcmp.eq.s32.totalorder %v1847, 20
    %vm5369 = vcmp.eq.s32.totalorder %v1848, 20
    %vm5370 = vcmp.eq.s32.totalorder %v1849, 20
    %vm5371 = vcmp.eq.s32.totalorder %v1850, 20
    %vm5372 = vcmp.eq.s32.totalorder %v1851, 20
    %v5373 = vsel %vm5368, 1.0, 0.0
    %v5374 = vsel %vm5369, 1.0, 0.0
    %v5375 = vsel %vm5370, 1.0, 0.0
    %v5376 = vsel %vm5371, 1.0, 0.0
    %v5377 = vsel %vm5372, 1.0, 0.0
    %vm5378 = vcmp.eq.s32.totalorder %v1853, 20
    %v5379 = vsel %vm5378, 1.0, 0.0
    %v5380 = vmul.f32 %v5352, %v5373
    %v5381 = vmul.f32 %v5353, %v5374
    %v5382 = vmul.f32 %v5354, %v5375
    %v5383 = vmul.f32 %v5355, %v5376
    %v5384 = vmul.f32 %v5356, %v5377
    %v5385 = vsel %vm3281, %v5380, 0.0
    %v5386 = vsel %vm3281, %v5381, 0.0
    %v5387 = vadd.f32 %v5385, %v5386
    %v5388 = vsel %vm3281, %v5382, 0.0
    %v5389 = vadd.f32 %v5387, %v5388
    %v5390 = vsel %vm3281, %v5383, 0.0
    %v5391 = vadd.f32 %v5389, %v5390
    %v5392 = vsel %vm3289, %v5384, 0.0
    %v5393 = vadd.f32 %v5391, %v5392
    %v5394 = vrot.slane %v5393, 4
    %v5395 = vadd.f32 %v5393, %v5394
    %v5396 = vrot.slane %v5395, 2
    %v5397 = vadd.f32 %v5395, %v5396
    %v5398 = vrot.slane %v5397, 1
    %v5399 = vadd.f32 %v5397, %v5398
    %v5400 = vmul.f32 %v5363, %v5373
    %v5401 = vmul.f32 %v5364, %v5374
    %v5402 = vmul.f32 %v5365, %v5375
    %v5403 = vmul.f32 %v5366, %v5376
    %v5404 = vmul.f32 %v5367, %v5377
    %v5405 = vsel %vm3303, %v5400, 0.0
    %v5406 = vsel %vm3303, %v5401, 0.0
    %v5407 = vadd.f32 %v5405, %v5406
    %v5408 = vsel %vm3303, %v5402, 0.0
    %v5409 = vadd.f32 %v5407, %v5408
    %v5410 = vsel %vm3303, %v5403, 0.0
    %v5411 = vadd.f32 %v5409, %v5410
    %v5412 = vsel %vm3311, %v5404, 0.0
    %v5413 = vadd.f32 %v5411, %v5412
    %v5414 = vrot.slane %v5413, 4
    %v5415 = vadd.f32 %v5413, %v5414
    %v5416 = vrot.slane %v5415, 2
    %v5417 = vadd.f32 %v5415, %v5416
    %v5418 = vrot.slane %v5417, 1
    %v5419 = vadd.f32 %v5417, %v5418
    %v5420 = vmul.f32 %v5399, %v5379
    %v5421 = vsel %vm3281, %v5420, 0.0
    %5422 = vadd.xlane.f32.xlu0 %v5421
    %v5423 = vpop.xlane.xlu0 %5422
    %v5424 = vrcp.pop %v5423
    %v5425 = vmul.f32 1.0, %v5424
    %v5426 = vmul.f32 %v5352, %v5379
    %v5427 = vmul.f32 %v5353, %v5379
    %v5428 = vmul.f32 %v5354, %v5379
    %v5429 = vmul.f32 %v5355, %v5379
    %v5430 = vmul.f32 %v5356, %v5379
    %v5431 = vsel %vm3281, %v5426, 0.0
    %5432 = vadd.xlane.f32.xlu0 %v5431
    %v5433 = vpop.xlane.xlu0 %5432
    %v5434 = vsel %vm3281, %v5427, 0.0
    %5435 = vadd.xlane.f32.xlu0 %v5434
    %v5436 = vpop.xlane.xlu0 %5435
    %v5437 = vsel %vm3281, %v5428, 0.0
    %5438 = vadd.xlane.f32.xlu0 %v5437
    %v5439 = vpop.xlane.xlu0 %5438
    %v5440 = vsel %vm3281, %v5429, 0.0
    %5441 = vadd.xlane.f32.xlu0 %v5440
    %v5442 = vpop.xlane.xlu0 %5441
    %v5443 = vsel %vm3289, %v5430, 0.0
    %5444 = vadd.xlane.f32.xlu0 %v5443
    %v5445 = vpop.xlane.xlu0 %5444
    %v5446 = vsub.f32 %v5433, %v5373
    %v5447 = vsub.f32 %v5436, %v5374
    %v5448 = vsub.f32 %v5439, %v5375
    %v5449 = vsub.f32 %v5442, %v5376
    %v5450 = vsub.f32 %v5445, %v5377
    %v5451 = vmul.f32 %v5399, %v5425
    %v5452 = vmul.f32 %v5446, %v5451
    %v5453 = vmul.f32 %v5447, %v5451
    %v5454 = vmul.f32 %v5448, %v5451
    %v5455 = vmul.f32 %v5449, %v5451
    %v5456 = vmul.f32 %v5450, %v5451
    %v5457 = vsub.f32 %v5352, %v5452
    %v5458 = vsub.f32 %v5353, %v5453
    %v5459 = vsub.f32 %v5354, %v5454
    %v5460 = vsub.f32 %v5355, %v5455
    %v5461 = vsub.f32 %v5356, %v5456
    %v5462 = vmul.f32 %v5419, %v5425
    %v5463 = vmul.f32 %v5446, %v5462
    %v5464 = vmul.f32 %v5447, %v5462
    %v5465 = vmul.f32 %v5448, %v5462
    %v5466 = vmul.f32 %v5449, %v5462
    %v5467 = vmul.f32 %v5450, %v5462
    %v5468 = vsub.f32 %v5363, %v5463
    %v5469 = vsub.f32 %v5364, %v5464
    %v5470 = vsub.f32 %v5365, %v5465
    %v5471 = vsub.f32 %v5366, %v5466
    %v5472 = vsub.f32 %v5367, %v5467
    %vm5473 = vcmp.eq.s32.totalorder %v1847, 21
    %vm5474 = vcmp.eq.s32.totalorder %v1848, 21
    %vm5475 = vcmp.eq.s32.totalorder %v1849, 21
    %vm5476 = vcmp.eq.s32.totalorder %v1850, 21
    %vm5477 = vcmp.eq.s32.totalorder %v1851, 21
    %v5478 = vsel %vm5473, 1.0, 0.0
    %v5479 = vsel %vm5474, 1.0, 0.0
    %v5480 = vsel %vm5475, 1.0, 0.0
    %v5481 = vsel %vm5476, 1.0, 0.0
    %v5482 = vsel %vm5477, 1.0, 0.0
    %vm5483 = vcmp.eq.s32.totalorder %v1853, 21
    %v5484 = vsel %vm5483, 1.0, 0.0
    %v5485 = vmul.f32 %v5457, %v5478
    %v5486 = vmul.f32 %v5458, %v5479
    %v5487 = vmul.f32 %v5459, %v5480
    %v5488 = vmul.f32 %v5460, %v5481
    %v5489 = vmul.f32 %v5461, %v5482
    %v5490 = vsel %vm3281, %v5485, 0.0
    %v5491 = vsel %vm3281, %v5486, 0.0
    %v5492 = vadd.f32 %v5490, %v5491
    %v5493 = vsel %vm3281, %v5487, 0.0
    %v5494 = vadd.f32 %v5492, %v5493
    %v5495 = vsel %vm3281, %v5488, 0.0
    %v5496 = vadd.f32 %v5494, %v5495
    %v5497 = vsel %vm3289, %v5489, 0.0
    %v5498 = vadd.f32 %v5496, %v5497
    %v5499 = vrot.slane %v5498, 4
    %v5500 = vadd.f32 %v5498, %v5499
    %v5501 = vrot.slane %v5500, 2
    %v5502 = vadd.f32 %v5500, %v5501
    %v5503 = vrot.slane %v5502, 1
    %v5504 = vadd.f32 %v5502, %v5503
    %v5505 = vmul.f32 %v5468, %v5478
    %v5506 = vmul.f32 %v5469, %v5479
    %v5507 = vmul.f32 %v5470, %v5480
    %v5508 = vmul.f32 %v5471, %v5481
    %v5509 = vmul.f32 %v5472, %v5482
    %v5510 = vsel %vm3303, %v5505, 0.0
    %v5511 = vsel %vm3303, %v5506, 0.0
    %v5512 = vadd.f32 %v5510, %v5511
    %v5513 = vsel %vm3303, %v5507, 0.0
    %v5514 = vadd.f32 %v5512, %v5513
    %v5515 = vsel %vm3303, %v5508, 0.0
    %v5516 = vadd.f32 %v5514, %v5515
    %v5517 = vsel %vm3311, %v5509, 0.0
    %v5518 = vadd.f32 %v5516, %v5517
    %v5519 = vrot.slane %v5518, 4
    %v5520 = vadd.f32 %v5518, %v5519
    %v5521 = vrot.slane %v5520, 2
    %v5522 = vadd.f32 %v5520, %v5521
    %v5523 = vrot.slane %v5522, 1
    %v5524 = vadd.f32 %v5522, %v5523
    %v5525 = vmul.f32 %v5504, %v5484
    %v5526 = vsel %vm3281, %v5525, 0.0
    %5527 = vadd.xlane.f32.xlu0 %v5526
    %v5528 = vpop.xlane.xlu0 %5527
    %v5529 = vrcp.pop %v5528
    %v5530 = vmul.f32 1.0, %v5529
    %v5531 = vmul.f32 %v5457, %v5484
    %v5532 = vmul.f32 %v5458, %v5484
    %v5533 = vmul.f32 %v5459, %v5484
    %v5534 = vmul.f32 %v5460, %v5484
    %v5535 = vmul.f32 %v5461, %v5484
    %v5536 = vsel %vm3281, %v5531, 0.0
    %5537 = vadd.xlane.f32.xlu0 %v5536
    %v5538 = vpop.xlane.xlu0 %5537
    %v5539 = vsel %vm3281, %v5532, 0.0
    %5540 = vadd.xlane.f32.xlu0 %v5539
    %v5541 = vpop.xlane.xlu0 %5540
    %v5542 = vsel %vm3281, %v5533, 0.0
    %5543 = vadd.xlane.f32.xlu0 %v5542
    %v5544 = vpop.xlane.xlu0 %5543
    %v5545 = vsel %vm3281, %v5534, 0.0
    %5546 = vadd.xlane.f32.xlu0 %v5545
    %v5547 = vpop.xlane.xlu0 %5546
    %v5548 = vsel %vm3289, %v5535, 0.0
    %5549 = vadd.xlane.f32.xlu0 %v5548
    %v5550 = vpop.xlane.xlu0 %5549
    %v5551 = vsub.f32 %v5538, %v5478
    %v5552 = vsub.f32 %v5541, %v5479
    %v5553 = vsub.f32 %v5544, %v5480
    %v5554 = vsub.f32 %v5547, %v5481
    %v5555 = vsub.f32 %v5550, %v5482
    %v5556 = vmul.f32 %v5504, %v5530
    %v5557 = vmul.f32 %v5551, %v5556
    %v5558 = vmul.f32 %v5552, %v5556
    %v5559 = vmul.f32 %v5553, %v5556
    %v5560 = vmul.f32 %v5554, %v5556
    %v5561 = vmul.f32 %v5555, %v5556
    %v5562 = vsub.f32 %v5457, %v5557
    %v5563 = vsub.f32 %v5458, %v5558
    %v5564 = vsub.f32 %v5459, %v5559
    %v5565 = vsub.f32 %v5460, %v5560
    %v5566 = vsub.f32 %v5461, %v5561
    %v5567 = vmul.f32 %v5524, %v5530
    %v5568 = vmul.f32 %v5551, %v5567
    %v5569 = vmul.f32 %v5552, %v5567
    %v5570 = vmul.f32 %v5553, %v5567
    %v5571 = vmul.f32 %v5554, %v5567
    %v5572 = vmul.f32 %v5555, %v5567
    %v5573 = vsub.f32 %v5468, %v5568
    %v5574 = vsub.f32 %v5469, %v5569
    %v5575 = vsub.f32 %v5470, %v5570
    %v5576 = vsub.f32 %v5471, %v5571
    %v5577 = vsub.f32 %v5472, %v5572
    %vm5578 = vcmp.eq.s32.totalorder %v1847, 22
    %vm5579 = vcmp.eq.s32.totalorder %v1848, 22
    %vm5580 = vcmp.eq.s32.totalorder %v1849, 22
    %vm5581 = vcmp.eq.s32.totalorder %v1850, 22
    %vm5582 = vcmp.eq.s32.totalorder %v1851, 22
    %v5583 = vsel %vm5578, 1.0, 0.0
    %v5584 = vsel %vm5579, 1.0, 0.0
    %v5585 = vsel %vm5580, 1.0, 0.0
    %v5586 = vsel %vm5581, 1.0, 0.0
    %v5587 = vsel %vm5582, 1.0, 0.0
    %vm5588 = vcmp.eq.s32.totalorder %v1853, 22
    %v5589 = vsel %vm5588, 1.0, 0.0
    %v5590 = vmul.f32 %v5562, %v5583
    %v5591 = vmul.f32 %v5563, %v5584
    %v5592 = vmul.f32 %v5564, %v5585
    %v5593 = vmul.f32 %v5565, %v5586
    %v5594 = vmul.f32 %v5566, %v5587
    %v5595 = vsel %vm3281, %v5590, 0.0
    %v5596 = vsel %vm3281, %v5591, 0.0
    %v5597 = vadd.f32 %v5595, %v5596
    %v5598 = vsel %vm3281, %v5592, 0.0
    %v5599 = vadd.f32 %v5597, %v5598
    %v5600 = vsel %vm3281, %v5593, 0.0
    %v5601 = vadd.f32 %v5599, %v5600
    %v5602 = vsel %vm3289, %v5594, 0.0
    %v5603 = vadd.f32 %v5601, %v5602
    %v5604 = vrot.slane %v5603, 4
    %v5605 = vadd.f32 %v5603, %v5604
    %v5606 = vrot.slane %v5605, 2
    %v5607 = vadd.f32 %v5605, %v5606
    %v5608 = vrot.slane %v5607, 1
    %v5609 = vadd.f32 %v5607, %v5608
    %v5610 = vmul.f32 %v5573, %v5583
    %v5611 = vmul.f32 %v5574, %v5584
    %v5612 = vmul.f32 %v5575, %v5585
    %v5613 = vmul.f32 %v5576, %v5586
    %v5614 = vmul.f32 %v5577, %v5587
    %v5615 = vsel %vm3303, %v5610, 0.0
    %v5616 = vsel %vm3303, %v5611, 0.0
    %v5617 = vadd.f32 %v5615, %v5616
    %v5618 = vsel %vm3303, %v5612, 0.0
    %v5619 = vadd.f32 %v5617, %v5618
    %v5620 = vsel %vm3303, %v5613, 0.0
    %v5621 = vadd.f32 %v5619, %v5620
    %v5622 = vsel %vm3311, %v5614, 0.0
    %v5623 = vadd.f32 %v5621, %v5622
    %v5624 = vrot.slane %v5623, 4
    %v5625 = vadd.f32 %v5623, %v5624
    %v5626 = vrot.slane %v5625, 2
    %v5627 = vadd.f32 %v5625, %v5626
    %v5628 = vrot.slane %v5627, 1
    %v5629 = vadd.f32 %v5627, %v5628
    %v5630 = vmul.f32 %v5609, %v5589
    %v5631 = vsel %vm3281, %v5630, 0.0
    %5632 = vadd.xlane.f32.xlu0 %v5631
    %v5633 = vpop.xlane.xlu0 %5632
    %v5634 = vrcp.pop %v5633
    %v5635 = vmul.f32 1.0, %v5634
    %v5636 = vmul.f32 %v5562, %v5589
    %v5637 = vmul.f32 %v5563, %v5589
    %v5638 = vmul.f32 %v5564, %v5589
    %v5639 = vmul.f32 %v5565, %v5589
    %v5640 = vmul.f32 %v5566, %v5589
    %v5641 = vsel %vm3281, %v5636, 0.0
    %5642 = vadd.xlane.f32.xlu0 %v5641
    %v5643 = vpop.xlane.xlu0 %5642
    %v5644 = vsel %vm3281, %v5637, 0.0
    %5645 = vadd.xlane.f32.xlu0 %v5644
    %v5646 = vpop.xlane.xlu0 %5645
    %v5647 = vsel %vm3281, %v5638, 0.0
    %5648 = vadd.xlane.f32.xlu0 %v5647
    %v5649 = vpop.xlane.xlu0 %5648
    %v5650 = vsel %vm3281, %v5639, 0.0
    %5651 = vadd.xlane.f32.xlu0 %v5650
    %v5652 = vpop.xlane.xlu0 %5651
    %v5653 = vsel %vm3289, %v5640, 0.0
    %5654 = vadd.xlane.f32.xlu0 %v5653
    %v5655 = vpop.xlane.xlu0 %5654
    %v5656 = vsub.f32 %v5643, %v5583
    %v5657 = vsub.f32 %v5646, %v5584
    %v5658 = vsub.f32 %v5649, %v5585
    %v5659 = vsub.f32 %v5652, %v5586
    %v5660 = vsub.f32 %v5655, %v5587
    %v5661 = vmul.f32 %v5609, %v5635
    %v5662 = vmul.f32 %v5656, %v5661
    %v5663 = vmul.f32 %v5657, %v5661
    %v5664 = vmul.f32 %v5658, %v5661
    %v5665 = vmul.f32 %v5659, %v5661
    %v5666 = vmul.f32 %v5660, %v5661
    %v5667 = vsub.f32 %v5562, %v5662
    %v5668 = vsub.f32 %v5563, %v5663
    %v5669 = vsub.f32 %v5564, %v5664
    %v5670 = vsub.f32 %v5565, %v5665
    %v5671 = vsub.f32 %v5566, %v5666
    %v5672 = vmul.f32 %v5629, %v5635
    %v5673 = vmul.f32 %v5656, %v5672
    %v5674 = vmul.f32 %v5657, %v5672
    %v5675 = vmul.f32 %v5658, %v5672
    %v5676 = vmul.f32 %v5659, %v5672
    %v5677 = vmul.f32 %v5660, %v5672
    %v5678 = vsub.f32 %v5573, %v5673
    %v5679 = vsub.f32 %v5574, %v5674
    %v5680 = vsub.f32 %v5575, %v5675
    %v5681 = vsub.f32 %v5576, %v5676
    %v5682 = vsub.f32 %v5577, %v5677
    %vm5683 = vcmp.eq.s32.totalorder %v1847, 23
    %vm5684 = vcmp.eq.s32.totalorder %v1848, 23
    %vm5685 = vcmp.eq.s32.totalorder %v1849, 23
    %vm5686 = vcmp.eq.s32.totalorder %v1850, 23
    %vm5687 = vcmp.eq.s32.totalorder %v1851, 23
    %v5688 = vsel %vm5683, 1.0, 0.0
    %v5689 = vsel %vm5684, 1.0, 0.0
    %v5690 = vsel %vm5685, 1.0, 0.0
    %v5691 = vsel %vm5686, 1.0, 0.0
    %v5692 = vsel %vm5687, 1.0, 0.0
    %vm5693 = vcmp.eq.s32.totalorder %v1853, 23
    %v5694 = vsel %vm5693, 1.0, 0.0
    %v5695 = vmul.f32 %v5667, %v5688
    %v5696 = vmul.f32 %v5668, %v5689
    %v5697 = vmul.f32 %v5669, %v5690
    %v5698 = vmul.f32 %v5670, %v5691
    %v5699 = vmul.f32 %v5671, %v5692
    %v5700 = vsel %vm3281, %v5695, 0.0
    %v5701 = vsel %vm3281, %v5696, 0.0
    %v5702 = vadd.f32 %v5700, %v5701
    %v5703 = vsel %vm3281, %v5697, 0.0
    %v5704 = vadd.f32 %v5702, %v5703
    %v5705 = vsel %vm3281, %v5698, 0.0
    %v5706 = vadd.f32 %v5704, %v5705
    %v5707 = vsel %vm3289, %v5699, 0.0
    %v5708 = vadd.f32 %v5706, %v5707
    %v5709 = vrot.slane %v5708, 4
    %v5710 = vadd.f32 %v5708, %v5709
    %v5711 = vrot.slane %v5710, 2
    %v5712 = vadd.f32 %v5710, %v5711
    %v5713 = vrot.slane %v5712, 1
    %v5714 = vadd.f32 %v5712, %v5713
    %v5715 = vmul.f32 %v5678, %v5688
    %v5716 = vmul.f32 %v5679, %v5689
    %v5717 = vmul.f32 %v5680, %v5690
    %v5718 = vmul.f32 %v5681, %v5691
    %v5719 = vmul.f32 %v5682, %v5692
    %v5720 = vsel %vm3303, %v5715, 0.0
    %v5721 = vsel %vm3303, %v5716, 0.0
    %v5722 = vadd.f32 %v5720, %v5721
    %v5723 = vsel %vm3303, %v5717, 0.0
    %v5724 = vadd.f32 %v5722, %v5723
    %v5725 = vsel %vm3303, %v5718, 0.0
    %v5726 = vadd.f32 %v5724, %v5725
    %v5727 = vsel %vm3311, %v5719, 0.0
    %v5728 = vadd.f32 %v5726, %v5727
    %v5729 = vrot.slane %v5728, 4
    %v5730 = vadd.f32 %v5728, %v5729
    %v5731 = vrot.slane %v5730, 2
    %v5732 = vadd.f32 %v5730, %v5731
    %v5733 = vrot.slane %v5732, 1
    %v5734 = vadd.f32 %v5732, %v5733
    %v5735 = vmul.f32 %v5714, %v5694
    %v5736 = vsel %vm3281, %v5735, 0.0
    %5737 = vadd.xlane.f32.xlu0 %v5736
    %v5738 = vpop.xlane.xlu0 %5737
    %v5739 = vrcp.pop %v5738
    %v5740 = vmul.f32 1.0, %v5739
    %v5741 = vmul.f32 %v5667, %v5694
    %v5742 = vmul.f32 %v5668, %v5694
    %v5743 = vmul.f32 %v5669, %v5694
    %v5744 = vmul.f32 %v5670, %v5694
    %v5745 = vmul.f32 %v5671, %v5694
    %v5746 = vsel %vm3281, %v5741, 0.0
    %5747 = vadd.xlane.f32.xlu0 %v5746
    %v5748 = vpop.xlane.xlu0 %5747
    %v5749 = vsel %vm3281, %v5742, 0.0
    %5750 = vadd.xlane.f32.xlu0 %v5749
    %v5751 = vpop.xlane.xlu0 %5750
    %v5752 = vsel %vm3281, %v5743, 0.0
    %5753 = vadd.xlane.f32.xlu0 %v5752
    %v5754 = vpop.xlane.xlu0 %5753
    %v5755 = vsel %vm3281, %v5744, 0.0
    %5756 = vadd.xlane.f32.xlu0 %v5755
    %v5757 = vpop.xlane.xlu0 %5756
    %v5758 = vsel %vm3289, %v5745, 0.0
    %5759 = vadd.xlane.f32.xlu0 %v5758
    %v5760 = vpop.xlane.xlu0 %5759
    %v5761 = vsub.f32 %v5748, %v5688
    %v5762 = vsub.f32 %v5751, %v5689
    %v5763 = vsub.f32 %v5754, %v5690
    %v5764 = vsub.f32 %v5757, %v5691
    %v5765 = vsub.f32 %v5760, %v5692
    %v5766 = vmul.f32 %v5714, %v5740
    %v5767 = vmul.f32 %v5761, %v5766
    %v5768 = vmul.f32 %v5762, %v5766
    %v5769 = vmul.f32 %v5763, %v5766
    %v5770 = vmul.f32 %v5764, %v5766
    %v5771 = vmul.f32 %v5765, %v5766
    %v5772 = vsub.f32 %v5667, %v5767
    %v5773 = vsub.f32 %v5668, %v5768
    %v5774 = vsub.f32 %v5669, %v5769
    %v5775 = vsub.f32 %v5670, %v5770
    %v5776 = vsub.f32 %v5671, %v5771
    %v5777 = vmul.f32 %v5734, %v5740
    %v5778 = vmul.f32 %v5761, %v5777
    %v5779 = vmul.f32 %v5762, %v5777
    %v5780 = vmul.f32 %v5763, %v5777
    %v5781 = vmul.f32 %v5764, %v5777
    %v5782 = vmul.f32 %v5765, %v5777
    %v5783 = vsub.f32 %v5678, %v5778
    %v5784 = vsub.f32 %v5679, %v5779
    %v5785 = vsub.f32 %v5680, %v5780
    %v5786 = vsub.f32 %v5681, %v5781
    %v5787 = vsub.f32 %v5682, %v5782
    %vm5788 = vcmp.eq.s32.totalorder %v1847, 24
    %vm5789 = vcmp.eq.s32.totalorder %v1848, 24
    %vm5790 = vcmp.eq.s32.totalorder %v1849, 24
    %vm5791 = vcmp.eq.s32.totalorder %v1850, 24
    %vm5792 = vcmp.eq.s32.totalorder %v1851, 24
    %v5793 = vsel %vm5788, 1.0, 0.0
    %v5794 = vsel %vm5789, 1.0, 0.0
    %v5795 = vsel %vm5790, 1.0, 0.0
    %v5796 = vsel %vm5791, 1.0, 0.0
    %v5797 = vsel %vm5792, 1.0, 0.0
    %vm5798 = vcmp.eq.s32.totalorder %v1853, 24
    %v5799 = vsel %vm5798, 1.0, 0.0
    %v5800 = vmul.f32 %v5772, %v5793
    %v5801 = vmul.f32 %v5773, %v5794
    %v5802 = vmul.f32 %v5774, %v5795
    %v5803 = vmul.f32 %v5775, %v5796
    %v5804 = vmul.f32 %v5776, %v5797
    %v5805 = vsel %vm3281, %v5800, 0.0
    %v5806 = vsel %vm3281, %v5801, 0.0
    %v5807 = vadd.f32 %v5805, %v5806
    %v5808 = vsel %vm3281, %v5802, 0.0
    %v5809 = vadd.f32 %v5807, %v5808
    %v5810 = vsel %vm3281, %v5803, 0.0
    %v5811 = vadd.f32 %v5809, %v5810
    %v5812 = vsel %vm3289, %v5804, 0.0
    %v5813 = vadd.f32 %v5811, %v5812
    %v5814 = vrot.slane %v5813, 4
    %v5815 = vadd.f32 %v5813, %v5814
    %v5816 = vrot.slane %v5815, 2
    %v5817 = vadd.f32 %v5815, %v5816
    %v5818 = vrot.slane %v5817, 1
    %v5819 = vadd.f32 %v5817, %v5818
    %v5820 = vmul.f32 %v5783, %v5793
    %v5821 = vmul.f32 %v5784, %v5794
    %v5822 = vmul.f32 %v5785, %v5795
    %v5823 = vmul.f32 %v5786, %v5796
    %v5824 = vmul.f32 %v5787, %v5797
    %v5825 = vsel %vm3303, %v5820, 0.0
    %v5826 = vsel %vm3303, %v5821, 0.0
    %v5827 = vadd.f32 %v5825, %v5826
    %v5828 = vsel %vm3303, %v5822, 0.0
    %v5829 = vadd.f32 %v5827, %v5828
    %v5830 = vsel %vm3303, %v5823, 0.0
    %v5831 = vadd.f32 %v5829, %v5830
    %v5832 = vsel %vm3311, %v5824, 0.0
    %v5833 = vadd.f32 %v5831, %v5832
    %v5834 = vrot.slane %v5833, 4
    %v5835 = vadd.f32 %v5833, %v5834
    %v5836 = vrot.slane %v5835, 2
    %v5837 = vadd.f32 %v5835, %v5836
    %v5838 = vrot.slane %v5837, 1
    %v5839 = vadd.f32 %v5837, %v5838
    %v5840 = vmul.f32 %v5819, %v5799
    %v5841 = vsel %vm3281, %v5840, 0.0
    %5842 = vadd.xlane.f32.xlu0 %v5841
    %v5843 = vpop.xlane.xlu0 %5842
    %v5844 = vrcp.pop %v5843
    %v5845 = vmul.f32 1.0, %v5844
    %v5846 = vmul.f32 %v5772, %v5799
    %v5847 = vmul.f32 %v5773, %v5799
    %v5848 = vmul.f32 %v5774, %v5799
    %v5849 = vmul.f32 %v5775, %v5799
    %v5850 = vmul.f32 %v5776, %v5799
    %v5851 = vsel %vm3281, %v5846, 0.0
    %5852 = vadd.xlane.f32.xlu0 %v5851
    %v5853 = vpop.xlane.xlu0 %5852
    %v5854 = vsel %vm3281, %v5847, 0.0
    %5855 = vadd.xlane.f32.xlu0 %v5854
    %v5856 = vpop.xlane.xlu0 %5855
    %v5857 = vsel %vm3281, %v5848, 0.0
    %5858 = vadd.xlane.f32.xlu0 %v5857
    %v5859 = vpop.xlane.xlu0 %5858
    %v5860 = vsel %vm3281, %v5849, 0.0
    %5861 = vadd.xlane.f32.xlu0 %v5860
    %v5862 = vpop.xlane.xlu0 %5861
    %v5863 = vsel %vm3289, %v5850, 0.0
    %5864 = vadd.xlane.f32.xlu0 %v5863
    %v5865 = vpop.xlane.xlu0 %5864
    %v5866 = vsub.f32 %v5853, %v5793
    %v5867 = vsub.f32 %v5856, %v5794
    %v5868 = vsub.f32 %v5859, %v5795
    %v5869 = vsub.f32 %v5862, %v5796
    %v5870 = vsub.f32 %v5865, %v5797
    %v5871 = vmul.f32 %v5819, %v5845
    %v5872 = vmul.f32 %v5866, %v5871
    %v5873 = vmul.f32 %v5867, %v5871
    %v5874 = vmul.f32 %v5868, %v5871
    %v5875 = vmul.f32 %v5869, %v5871
    %v5876 = vmul.f32 %v5870, %v5871
    %v5877 = vsub.f32 %v5772, %v5872
    %v5878 = vsub.f32 %v5773, %v5873
    %v5879 = vsub.f32 %v5774, %v5874
    %v5880 = vsub.f32 %v5775, %v5875
    %v5881 = vsub.f32 %v5776, %v5876
    %v5882 = vmul.f32 %v5839, %v5845
    %v5883 = vmul.f32 %v5866, %v5882
    %v5884 = vmul.f32 %v5867, %v5882
    %v5885 = vmul.f32 %v5868, %v5882
    %v5886 = vmul.f32 %v5869, %v5882
    %v5887 = vmul.f32 %v5870, %v5882
    %v5888 = vsub.f32 %v5783, %v5883
    %v5889 = vsub.f32 %v5784, %v5884
    %v5890 = vsub.f32 %v5785, %v5885
    %v5891 = vsub.f32 %v5786, %v5886
    %v5892 = vsub.f32 %v5787, %v5887
    %vm5893 = vcmp.eq.s32.totalorder %v1847, 25
    %vm5894 = vcmp.eq.s32.totalorder %v1848, 25
    %vm5895 = vcmp.eq.s32.totalorder %v1849, 25
    %vm5896 = vcmp.eq.s32.totalorder %v1850, 25
    %vm5897 = vcmp.eq.s32.totalorder %v1851, 25
    %v5898 = vsel %vm5893, 1.0, 0.0
    %v5899 = vsel %vm5894, 1.0, 0.0
    %v5900 = vsel %vm5895, 1.0, 0.0
    %v5901 = vsel %vm5896, 1.0, 0.0
    %v5902 = vsel %vm5897, 1.0, 0.0
    %vm5903 = vcmp.eq.s32.totalorder %v1853, 25
    %v5904 = vsel %vm5903, 1.0, 0.0
    %v5905 = vmul.f32 %v5877, %v5898
    %v5906 = vmul.f32 %v5878, %v5899
    %v5907 = vmul.f32 %v5879, %v5900
    %v5908 = vmul.f32 %v5880, %v5901
    %v5909 = vmul.f32 %v5881, %v5902
    %v5910 = vsel %vm3281, %v5905, 0.0
    %v5911 = vsel %vm3281, %v5906, 0.0
    %v5912 = vadd.f32 %v5910, %v5911
    %v5913 = vsel %vm3281, %v5907, 0.0
    %v5914 = vadd.f32 %v5912, %v5913
    %v5915 = vsel %vm3281, %v5908, 0.0
    %v5916 = vadd.f32 %v5914, %v5915
    %v5917 = vsel %vm3289, %v5909, 0.0
    %v5918 = vadd.f32 %v5916, %v5917
    %v5919 = vrot.slane %v5918, 4
    %v5920 = vadd.f32 %v5918, %v5919
    %v5921 = vrot.slane %v5920, 2
    %v5922 = vadd.f32 %v5920, %v5921
    %v5923 = vrot.slane %v5922, 1
    %v5924 = vadd.f32 %v5922, %v5923
    %v5925 = vmul.f32 %v5888, %v5898
    %v5926 = vmul.f32 %v5889, %v5899
    %v5927 = vmul.f32 %v5890, %v5900
    %v5928 = vmul.f32 %v5891, %v5901
    %v5929 = vmul.f32 %v5892, %v5902
    %v5930 = vsel %vm3303, %v5925, 0.0
    %v5931 = vsel %vm3303, %v5926, 0.0
    %v5932 = vadd.f32 %v5930, %v5931
    %v5933 = vsel %vm3303, %v5927, 0.0
    %v5934 = vadd.f32 %v5932, %v5933
    %v5935 = vsel %vm3303, %v5928, 0.0
    %v5936 = vadd.f32 %v5934, %v5935
    %v5937 = vsel %vm3311, %v5929, 0.0
    %v5938 = vadd.f32 %v5936, %v5937
    %v5939 = vrot.slane %v5938, 4
    %v5940 = vadd.f32 %v5938, %v5939
    %v5941 = vrot.slane %v5940, 2
    %v5942 = vadd.f32 %v5940, %v5941
    %v5943 = vrot.slane %v5942, 1
    %v5944 = vadd.f32 %v5942, %v5943
    %v5945 = vmul.f32 %v5924, %v5904
    %v5946 = vsel %vm3281, %v5945, 0.0
    %5947 = vadd.xlane.f32.xlu0 %v5946
    %v5948 = vpop.xlane.xlu0 %5947
    %v5949 = vrcp.pop %v5948
    %v5950 = vmul.f32 1.0, %v5949
    %v5951 = vmul.f32 %v5877, %v5904
    %v5952 = vmul.f32 %v5878, %v5904
    %v5953 = vmul.f32 %v5879, %v5904
    %v5954 = vmul.f32 %v5880, %v5904
    %v5955 = vmul.f32 %v5881, %v5904
    %v5956 = vsel %vm3281, %v5951, 0.0
    %5957 = vadd.xlane.f32.xlu0 %v5956
    %v5958 = vpop.xlane.xlu0 %5957
    %v5959 = vsel %vm3281, %v5952, 0.0
    %5960 = vadd.xlane.f32.xlu0 %v5959
    %v5961 = vpop.xlane.xlu0 %5960
    %v5962 = vsel %vm3281, %v5953, 0.0
    %5963 = vadd.xlane.f32.xlu0 %v5962
    %v5964 = vpop.xlane.xlu0 %5963
    %v5965 = vsel %vm3281, %v5954, 0.0
    %5966 = vadd.xlane.f32.xlu0 %v5965
    %v5967 = vpop.xlane.xlu0 %5966
    %v5968 = vsel %vm3289, %v5955, 0.0
    %5969 = vadd.xlane.f32.xlu0 %v5968
    %v5970 = vpop.xlane.xlu0 %5969
    %v5971 = vsub.f32 %v5958, %v5898
    %v5972 = vsub.f32 %v5961, %v5899
    %v5973 = vsub.f32 %v5964, %v5900
    %v5974 = vsub.f32 %v5967, %v5901
    %v5975 = vsub.f32 %v5970, %v5902
    %v5976 = vmul.f32 %v5924, %v5950
    %v5977 = vmul.f32 %v5971, %v5976
    %v5978 = vmul.f32 %v5972, %v5976
    %v5979 = vmul.f32 %v5973, %v5976
    %v5980 = vmul.f32 %v5974, %v5976
    %v5981 = vmul.f32 %v5975, %v5976
    %v5982 = vsub.f32 %v5877, %v5977
    %v5983 = vsub.f32 %v5878, %v5978
    %v5984 = vsub.f32 %v5879, %v5979
    %v5985 = vsub.f32 %v5880, %v5980
    %v5986 = vsub.f32 %v5881, %v5981
    %v5987 = vmul.f32 %v5944, %v5950
    %v5988 = vmul.f32 %v5971, %v5987
    %v5989 = vmul.f32 %v5972, %v5987
    %v5990 = vmul.f32 %v5973, %v5987
    %v5991 = vmul.f32 %v5974, %v5987
    %v5992 = vmul.f32 %v5975, %v5987
    %v5993 = vsub.f32 %v5888, %v5988
    %v5994 = vsub.f32 %v5889, %v5989
    %v5995 = vsub.f32 %v5890, %v5990
    %v5996 = vsub.f32 %v5891, %v5991
    %v5997 = vsub.f32 %v5892, %v5992
    %vm5998 = vcmp.eq.s32.totalorder %v1847, 26
    %vm5999 = vcmp.eq.s32.totalorder %v1848, 26
    %vm6000 = vcmp.eq.s32.totalorder %v1849, 26
    %vm6001 = vcmp.eq.s32.totalorder %v1850, 26
    %vm6002 = vcmp.eq.s32.totalorder %v1851, 26
    %v6003 = vsel %vm5998, 1.0, 0.0
    %v6004 = vsel %vm5999, 1.0, 0.0
    %v6005 = vsel %vm6000, 1.0, 0.0
    %v6006 = vsel %vm6001, 1.0, 0.0
    %v6007 = vsel %vm6002, 1.0, 0.0
    %vm6008 = vcmp.eq.s32.totalorder %v1853, 26
    %v6009 = vsel %vm6008, 1.0, 0.0
    %v6010 = vmul.f32 %v5982, %v6003
    %v6011 = vmul.f32 %v5983, %v6004
    %v6012 = vmul.f32 %v5984, %v6005
    %v6013 = vmul.f32 %v5985, %v6006
    %v6014 = vmul.f32 %v5986, %v6007
    %v6015 = vsel %vm3281, %v6010, 0.0
    %v6016 = vsel %vm3281, %v6011, 0.0
    %v6017 = vadd.f32 %v6015, %v6016
    %v6018 = vsel %vm3281, %v6012, 0.0
    %v6019 = vadd.f32 %v6017, %v6018
    %v6020 = vsel %vm3281, %v6013, 0.0
    %v6021 = vadd.f32 %v6019, %v6020
    %v6022 = vsel %vm3289, %v6014, 0.0
    %v6023 = vadd.f32 %v6021, %v6022
    %v6024 = vrot.slane %v6023, 4
    %v6025 = vadd.f32 %v6023, %v6024
    %v6026 = vrot.slane %v6025, 2
    %v6027 = vadd.f32 %v6025, %v6026
    %v6028 = vrot.slane %v6027, 1
    %v6029 = vadd.f32 %v6027, %v6028
    %v6030 = vmul.f32 %v5993, %v6003
    %v6031 = vmul.f32 %v5994, %v6004
    %v6032 = vmul.f32 %v5995, %v6005
    %v6033 = vmul.f32 %v5996, %v6006
    %v6034 = vmul.f32 %v5997, %v6007
    %v6035 = vsel %vm3303, %v6030, 0.0
    %v6036 = vsel %vm3303, %v6031, 0.0
    %v6037 = vadd.f32 %v6035, %v6036
    %v6038 = vsel %vm3303, %v6032, 0.0
    %v6039 = vadd.f32 %v6037, %v6038
    %v6040 = vsel %vm3303, %v6033, 0.0
    %v6041 = vadd.f32 %v6039, %v6040
    %v6042 = vsel %vm3311, %v6034, 0.0
    %v6043 = vadd.f32 %v6041, %v6042
    %v6044 = vrot.slane %v6043, 4
    %v6045 = vadd.f32 %v6043, %v6044
    %v6046 = vrot.slane %v6045, 2
    %v6047 = vadd.f32 %v6045, %v6046
    %v6048 = vrot.slane %v6047, 1
    %v6049 = vadd.f32 %v6047, %v6048
    %v6050 = vmul.f32 %v6029, %v6009
    %v6051 = vsel %vm3281, %v6050, 0.0
    %6052 = vadd.xlane.f32.xlu0 %v6051
    %v6053 = vpop.xlane.xlu0 %6052
    %v6054 = vrcp.pop %v6053
    %v6055 = vmul.f32 1.0, %v6054
    %v6056 = vmul.f32 %v5982, %v6009
    %v6057 = vmul.f32 %v5983, %v6009
    %v6058 = vmul.f32 %v5984, %v6009
    %v6059 = vmul.f32 %v5985, %v6009
    %v6060 = vmul.f32 %v5986, %v6009
    %v6061 = vsel %vm3281, %v6056, 0.0
    %6062 = vadd.xlane.f32.xlu0 %v6061
    %v6063 = vpop.xlane.xlu0 %6062
    %v6064 = vsel %vm3281, %v6057, 0.0
    %6065 = vadd.xlane.f32.xlu0 %v6064
    %v6066 = vpop.xlane.xlu0 %6065
    %v6067 = vsel %vm3281, %v6058, 0.0
    %6068 = vadd.xlane.f32.xlu0 %v6067
    %v6069 = vpop.xlane.xlu0 %6068
    %v6070 = vsel %vm3281, %v6059, 0.0
    %6071 = vadd.xlane.f32.xlu0 %v6070
    %v6072 = vpop.xlane.xlu0 %6071
    %v6073 = vsel %vm3289, %v6060, 0.0
    %6074 = vadd.xlane.f32.xlu0 %v6073
    %v6075 = vpop.xlane.xlu0 %6074
    %v6076 = vsub.f32 %v6063, %v6003
    %v6077 = vsub.f32 %v6066, %v6004
    %v6078 = vsub.f32 %v6069, %v6005
    %v6079 = vsub.f32 %v6072, %v6006
    %v6080 = vsub.f32 %v6075, %v6007
    %v6081 = vmul.f32 %v6029, %v6055
    %v6082 = vmul.f32 %v6076, %v6081
    %v6083 = vmul.f32 %v6077, %v6081
    %v6084 = vmul.f32 %v6078, %v6081
    %v6085 = vmul.f32 %v6079, %v6081
    %v6086 = vmul.f32 %v6080, %v6081
    %v6087 = vsub.f32 %v5982, %v6082
    %v6088 = vsub.f32 %v5983, %v6083
    %v6089 = vsub.f32 %v5984, %v6084
    %v6090 = vsub.f32 %v5985, %v6085
    %v6091 = vsub.f32 %v5986, %v6086
    %v6092 = vmul.f32 %v6049, %v6055
    %v6093 = vmul.f32 %v6076, %v6092
    %v6094 = vmul.f32 %v6077, %v6092
    %v6095 = vmul.f32 %v6078, %v6092
    %v6096 = vmul.f32 %v6079, %v6092
    %v6097 = vmul.f32 %v6080, %v6092
    %v6098 = vsub.f32 %v5993, %v6093
    %v6099 = vsub.f32 %v5994, %v6094
    %v6100 = vsub.f32 %v5995, %v6095
    %v6101 = vsub.f32 %v5996, %v6096
    %v6102 = vsub.f32 %v5997, %v6097
    %vm6103 = vcmp.eq.s32.totalorder %v1847, 27
    %vm6104 = vcmp.eq.s32.totalorder %v1848, 27
    %vm6105 = vcmp.eq.s32.totalorder %v1849, 27
    %vm6106 = vcmp.eq.s32.totalorder %v1850, 27
    %vm6107 = vcmp.eq.s32.totalorder %v1851, 27
    %v6108 = vsel %vm6103, 1.0, 0.0
    %v6109 = vsel %vm6104, 1.0, 0.0
    %v6110 = vsel %vm6105, 1.0, 0.0
    %v6111 = vsel %vm6106, 1.0, 0.0
    %v6112 = vsel %vm6107, 1.0, 0.0
    %vm6113 = vcmp.eq.s32.totalorder %v1853, 27
    %v6114 = vsel %vm6113, 1.0, 0.0
    %v6115 = vmul.f32 %v6087, %v6108
    %v6116 = vmul.f32 %v6088, %v6109
    %v6117 = vmul.f32 %v6089, %v6110
    %v6118 = vmul.f32 %v6090, %v6111
    %v6119 = vmul.f32 %v6091, %v6112
    %v6120 = vsel %vm3281, %v6115, 0.0
    %v6121 = vsel %vm3281, %v6116, 0.0
    %v6122 = vadd.f32 %v6120, %v6121
    %v6123 = vsel %vm3281, %v6117, 0.0
    %v6124 = vadd.f32 %v6122, %v6123
    %v6125 = vsel %vm3281, %v6118, 0.0
    %v6126 = vadd.f32 %v6124, %v6125
    %v6127 = vsel %vm3289, %v6119, 0.0
    %v6128 = vadd.f32 %v6126, %v6127
    %v6129 = vrot.slane %v6128, 4
    %v6130 = vadd.f32 %v6128, %v6129
    %v6131 = vrot.slane %v6130, 2
    %v6132 = vadd.f32 %v6130, %v6131
    %v6133 = vrot.slane %v6132, 1
    %v6134 = vadd.f32 %v6132, %v6133
    %v6135 = vmul.f32 %v6098, %v6108
    %v6136 = vmul.f32 %v6099, %v6109
    %v6137 = vmul.f32 %v6100, %v6110
    %v6138 = vmul.f32 %v6101, %v6111
    %v6139 = vmul.f32 %v6102, %v6112
    %v6140 = vsel %vm3303, %v6135, 0.0
    %v6141 = vsel %vm3303, %v6136, 0.0
    %v6142 = vadd.f32 %v6140, %v6141
    %v6143 = vsel %vm3303, %v6137, 0.0
    %v6144 = vadd.f32 %v6142, %v6143
    %v6145 = vsel %vm3303, %v6138, 0.0
    %v6146 = vadd.f32 %v6144, %v6145
    %v6147 = vsel %vm3311, %v6139, 0.0
    %v6148 = vadd.f32 %v6146, %v6147
    %v6149 = vrot.slane %v6148, 4
    %v6150 = vadd.f32 %v6148, %v6149
    %v6151 = vrot.slane %v6150, 2
    %v6152 = vadd.f32 %v6150, %v6151
    %v6153 = vrot.slane %v6152, 1
    %v6154 = vadd.f32 %v6152, %v6153
    %v6155 = vmul.f32 %v6134, %v6114
    %v6156 = vsel %vm3281, %v6155, 0.0
    %6157 = vadd.xlane.f32.xlu0 %v6156
    %v6158 = vpop.xlane.xlu0 %6157
    %v6159 = vrcp.pop %v6158
    %v6160 = vmul.f32 1.0, %v6159
    %v6161 = vmul.f32 %v6087, %v6114
    %v6162 = vmul.f32 %v6088, %v6114
    %v6163 = vmul.f32 %v6089, %v6114
    %v6164 = vmul.f32 %v6090, %v6114
    %v6165 = vmul.f32 %v6091, %v6114
    %v6166 = vsel %vm3281, %v6161, 0.0
    %6167 = vadd.xlane.f32.xlu0 %v6166
    %v6168 = vpop.xlane.xlu0 %6167
    %v6169 = vsel %vm3281, %v6162, 0.0
    %6170 = vadd.xlane.f32.xlu0 %v6169
    %v6171 = vpop.xlane.xlu0 %6170
    %v6172 = vsel %vm3281, %v6163, 0.0
    %6173 = vadd.xlane.f32.xlu0 %v6172
    %v6174 = vpop.xlane.xlu0 %6173
    %v6175 = vsel %vm3281, %v6164, 0.0
    %6176 = vadd.xlane.f32.xlu0 %v6175
    %v6177 = vpop.xlane.xlu0 %6176
    %v6178 = vsel %vm3289, %v6165, 0.0
    %6179 = vadd.xlane.f32.xlu0 %v6178
    %v6180 = vpop.xlane.xlu0 %6179
    %v6181 = vsub.f32 %v6168, %v6108
    %v6182 = vsub.f32 %v6171, %v6109
    %v6183 = vsub.f32 %v6174, %v6110
    %v6184 = vsub.f32 %v6177, %v6111
    %v6185 = vsub.f32 %v6180, %v6112
    %v6186 = vmul.f32 %v6134, %v6160
    %v6187 = vmul.f32 %v6181, %v6186
    %v6188 = vmul.f32 %v6182, %v6186
    %v6189 = vmul.f32 %v6183, %v6186
    %v6190 = vmul.f32 %v6184, %v6186
    %v6191 = vmul.f32 %v6185, %v6186
    %v6192 = vsub.f32 %v6087, %v6187
    %v6193 = vsub.f32 %v6088, %v6188
    %v6194 = vsub.f32 %v6089, %v6189
    %v6195 = vsub.f32 %v6090, %v6190
    %v6196 = vsub.f32 %v6091, %v6191
    %v6197 = vmul.f32 %v6154, %v6160
    %v6198 = vmul.f32 %v6181, %v6197
    %v6199 = vmul.f32 %v6182, %v6197
    %v6200 = vmul.f32 %v6183, %v6197
    %v6201 = vmul.f32 %v6184, %v6197
    %v6202 = vmul.f32 %v6185, %v6197
    %v6203 = vsub.f32 %v6098, %v6198
    %v6204 = vsub.f32 %v6099, %v6199
    %v6205 = vsub.f32 %v6100, %v6200
    %v6206 = vsub.f32 %v6101, %v6201
    %v6207 = vsub.f32 %v6102, %v6202
    %vm6208 = vcmp.eq.s32.totalorder %v1847, 28
    %vm6209 = vcmp.eq.s32.totalorder %v1848, 28
    %vm6210 = vcmp.eq.s32.totalorder %v1849, 28
    %vm6211 = vcmp.eq.s32.totalorder %v1850, 28
    %vm6212 = vcmp.eq.s32.totalorder %v1851, 28
    %v6213 = vsel %vm6208, 1.0, 0.0
    %v6214 = vsel %vm6209, 1.0, 0.0
    %v6215 = vsel %vm6210, 1.0, 0.0
    %v6216 = vsel %vm6211, 1.0, 0.0
    %v6217 = vsel %vm6212, 1.0, 0.0
    %vm6218 = vcmp.eq.s32.totalorder %v1853, 28
    %v6219 = vsel %vm6218, 1.0, 0.0
    %v6220 = vmul.f32 %v6192, %v6213
    %v6221 = vmul.f32 %v6193, %v6214
    %v6222 = vmul.f32 %v6194, %v6215
    %v6223 = vmul.f32 %v6195, %v6216
    %v6224 = vmul.f32 %v6196, %v6217
    %v6225 = vsel %vm3281, %v6220, 0.0
    %v6226 = vsel %vm3281, %v6221, 0.0
    %v6227 = vadd.f32 %v6225, %v6226
    %v6228 = vsel %vm3281, %v6222, 0.0
    %v6229 = vadd.f32 %v6227, %v6228
    %v6230 = vsel %vm3281, %v6223, 0.0
    %v6231 = vadd.f32 %v6229, %v6230
    %v6232 = vsel %vm3289, %v6224, 0.0
    %v6233 = vadd.f32 %v6231, %v6232
    %v6234 = vrot.slane %v6233, 4
    %v6235 = vadd.f32 %v6233, %v6234
    %v6236 = vrot.slane %v6235, 2
    %v6237 = vadd.f32 %v6235, %v6236
    %v6238 = vrot.slane %v6237, 1
    %v6239 = vadd.f32 %v6237, %v6238
    %v6240 = vmul.f32 %v6203, %v6213
    %v6241 = vmul.f32 %v6204, %v6214
    %v6242 = vmul.f32 %v6205, %v6215
    %v6243 = vmul.f32 %v6206, %v6216
    %v6244 = vmul.f32 %v6207, %v6217
    %v6245 = vsel %vm3303, %v6240, 0.0
    %v6246 = vsel %vm3303, %v6241, 0.0
    %v6247 = vadd.f32 %v6245, %v6246
    %v6248 = vsel %vm3303, %v6242, 0.0
    %v6249 = vadd.f32 %v6247, %v6248
    %v6250 = vsel %vm3303, %v6243, 0.0
    %v6251 = vadd.f32 %v6249, %v6250
    %v6252 = vsel %vm3311, %v6244, 0.0
    %v6253 = vadd.f32 %v6251, %v6252
    %v6254 = vrot.slane %v6253, 4
    %v6255 = vadd.f32 %v6253, %v6254
    %v6256 = vrot.slane %v6255, 2
    %v6257 = vadd.f32 %v6255, %v6256
    %v6258 = vrot.slane %v6257, 1
    %v6259 = vadd.f32 %v6257, %v6258
    %v6260 = vmul.f32 %v6239, %v6219
    %v6261 = vsel %vm3281, %v6260, 0.0
    %6262 = vadd.xlane.f32.xlu0 %v6261
    %v6263 = vpop.xlane.xlu0 %6262
    %v6264 = vrcp.pop %v6263
    %v6265 = vmul.f32 1.0, %v6264
    %v6266 = vmul.f32 %v6192, %v6219
    %v6267 = vmul.f32 %v6193, %v6219
    %v6268 = vmul.f32 %v6194, %v6219
    %v6269 = vmul.f32 %v6195, %v6219
    %v6270 = vmul.f32 %v6196, %v6219
    %v6271 = vsel %vm3281, %v6266, 0.0
    %6272 = vadd.xlane.f32.xlu0 %v6271
    %v6273 = vpop.xlane.xlu0 %6272
    %v6274 = vsel %vm3281, %v6267, 0.0
    %6275 = vadd.xlane.f32.xlu0 %v6274
    %v6276 = vpop.xlane.xlu0 %6275
    %v6277 = vsel %vm3281, %v6268, 0.0
    %6278 = vadd.xlane.f32.xlu0 %v6277
    %v6279 = vpop.xlane.xlu0 %6278
    %v6280 = vsel %vm3281, %v6269, 0.0
    %6281 = vadd.xlane.f32.xlu0 %v6280
    %v6282 = vpop.xlane.xlu0 %6281
    %v6283 = vsel %vm3289, %v6270, 0.0
    %6284 = vadd.xlane.f32.xlu0 %v6283
    %v6285 = vpop.xlane.xlu0 %6284
    %v6286 = vsub.f32 %v6273, %v6213
    %v6287 = vsub.f32 %v6276, %v6214
    %v6288 = vsub.f32 %v6279, %v6215
    %v6289 = vsub.f32 %v6282, %v6216
    %v6290 = vsub.f32 %v6285, %v6217
    %v6291 = vmul.f32 %v6239, %v6265
    %v6292 = vmul.f32 %v6286, %v6291
    %v6293 = vmul.f32 %v6287, %v6291
    %v6294 = vmul.f32 %v6288, %v6291
    %v6295 = vmul.f32 %v6289, %v6291
    %v6296 = vmul.f32 %v6290, %v6291
    %v6297 = vsub.f32 %v6192, %v6292
    %v6298 = vsub.f32 %v6193, %v6293
    %v6299 = vsub.f32 %v6194, %v6294
    %v6300 = vsub.f32 %v6195, %v6295
    %v6301 = vsub.f32 %v6196, %v6296
    %v6302 = vmul.f32 %v6259, %v6265
    %v6303 = vmul.f32 %v6286, %v6302
    %v6304 = vmul.f32 %v6287, %v6302
    %v6305 = vmul.f32 %v6288, %v6302
    %v6306 = vmul.f32 %v6289, %v6302
    %v6307 = vmul.f32 %v6290, %v6302
    %v6308 = vsub.f32 %v6203, %v6303
    %v6309 = vsub.f32 %v6204, %v6304
    %v6310 = vsub.f32 %v6205, %v6305
    %v6311 = vsub.f32 %v6206, %v6306
    %v6312 = vsub.f32 %v6207, %v6307
    %vm6313 = vcmp.eq.s32.totalorder %v1847, 29
    %vm6314 = vcmp.eq.s32.totalorder %v1848, 29
    %vm6315 = vcmp.eq.s32.totalorder %v1849, 29
    %vm6316 = vcmp.eq.s32.totalorder %v1850, 29
    %vm6317 = vcmp.eq.s32.totalorder %v1851, 29
    %v6318 = vsel %vm6313, 1.0, 0.0
    %v6319 = vsel %vm6314, 1.0, 0.0
    %v6320 = vsel %vm6315, 1.0, 0.0
    %v6321 = vsel %vm6316, 1.0, 0.0
    %v6322 = vsel %vm6317, 1.0, 0.0
    %vm6323 = vcmp.eq.s32.totalorder %v1853, 29
    %v6324 = vsel %vm6323, 1.0, 0.0
    %v6325 = vmul.f32 %v6297, %v6318
    %v6326 = vmul.f32 %v6298, %v6319
    %v6327 = vmul.f32 %v6299, %v6320
    %v6328 = vmul.f32 %v6300, %v6321
    %v6329 = vmul.f32 %v6301, %v6322
    %v6330 = vsel %vm3281, %v6325, 0.0
    %v6331 = vsel %vm3281, %v6326, 0.0
    %v6332 = vadd.f32 %v6330, %v6331
    %v6333 = vsel %vm3281, %v6327, 0.0
    %v6334 = vadd.f32 %v6332, %v6333
    %v6335 = vsel %vm3281, %v6328, 0.0
    %v6336 = vadd.f32 %v6334, %v6335
    %v6337 = vsel %vm3289, %v6329, 0.0
    %v6338 = vadd.f32 %v6336, %v6337
    %v6339 = vrot.slane %v6338, 4
    %v6340 = vadd.f32 %v6338, %v6339
    %v6341 = vrot.slane %v6340, 2
    %v6342 = vadd.f32 %v6340, %v6341
    %v6343 = vrot.slane %v6342, 1
    %v6344 = vadd.f32 %v6342, %v6343
    %v6345 = vmul.f32 %v6308, %v6318
    %v6346 = vmul.f32 %v6309, %v6319
    %v6347 = vmul.f32 %v6310, %v6320
    %v6348 = vmul.f32 %v6311, %v6321
    %v6349 = vmul.f32 %v6312, %v6322
    %v6350 = vsel %vm3303, %v6345, 0.0
    %v6351 = vsel %vm3303, %v6346, 0.0
    %v6352 = vadd.f32 %v6350, %v6351
    %v6353 = vsel %vm3303, %v6347, 0.0
    %v6354 = vadd.f32 %v6352, %v6353
    %v6355 = vsel %vm3303, %v6348, 0.0
    %v6356 = vadd.f32 %v6354, %v6355
    %v6357 = vsel %vm3311, %v6349, 0.0
    %v6358 = vadd.f32 %v6356, %v6357
    %v6359 = vrot.slane %v6358, 4
    %v6360 = vadd.f32 %v6358, %v6359
    %v6361 = vrot.slane %v6360, 2
    %v6362 = vadd.f32 %v6360, %v6361
    %v6363 = vrot.slane %v6362, 1
    %v6364 = vadd.f32 %v6362, %v6363
    %v6365 = vmul.f32 %v6344, %v6324
    %v6366 = vsel %vm3281, %v6365, 0.0
    %6367 = vadd.xlane.f32.xlu0 %v6366
    %v6368 = vpop.xlane.xlu0 %6367
    %v6369 = vrcp.pop %v6368
    %v6370 = vmul.f32 1.0, %v6369
    %v6371 = vmul.f32 %v6297, %v6324
    %v6372 = vmul.f32 %v6298, %v6324
    %v6373 = vmul.f32 %v6299, %v6324
    %v6374 = vmul.f32 %v6300, %v6324
    %v6375 = vmul.f32 %v6301, %v6324
    %v6376 = vsel %vm3281, %v6371, 0.0
    %6377 = vadd.xlane.f32.xlu0 %v6376
    %v6378 = vpop.xlane.xlu0 %6377
    %v6379 = vsel %vm3281, %v6372, 0.0
    %6380 = vadd.xlane.f32.xlu0 %v6379
    %v6381 = vpop.xlane.xlu0 %6380
    %v6382 = vsel %vm3281, %v6373, 0.0
    %6383 = vadd.xlane.f32.xlu0 %v6382
    %v6384 = vpop.xlane.xlu0 %6383
    %v6385 = vsel %vm3281, %v6374, 0.0
    %6386 = vadd.xlane.f32.xlu0 %v6385
    %v6387 = vpop.xlane.xlu0 %6386
    %v6388 = vsel %vm3289, %v6375, 0.0
    %6389 = vadd.xlane.f32.xlu0 %v6388
    %v6390 = vpop.xlane.xlu0 %6389
    %v6391 = vsub.f32 %v6378, %v6318
    %v6392 = vsub.f32 %v6381, %v6319
    %v6393 = vsub.f32 %v6384, %v6320
    %v6394 = vsub.f32 %v6387, %v6321
    %v6395 = vsub.f32 %v6390, %v6322
    %v6396 = vmul.f32 %v6344, %v6370
    %v6397 = vmul.f32 %v6391, %v6396
    %v6398 = vmul.f32 %v6392, %v6396
    %v6399 = vmul.f32 %v6393, %v6396
    %v6400 = vmul.f32 %v6394, %v6396
    %v6401 = vmul.f32 %v6395, %v6396
    %v6402 = vsub.f32 %v6297, %v6397
    %v6403 = vsub.f32 %v6298, %v6398
    %v6404 = vsub.f32 %v6299, %v6399
    %v6405 = vsub.f32 %v6300, %v6400
    %v6406 = vsub.f32 %v6301, %v6401
    %v6407 = vmul.f32 %v6364, %v6370
    %v6408 = vmul.f32 %v6391, %v6407
    %v6409 = vmul.f32 %v6392, %v6407
    %v6410 = vmul.f32 %v6393, %v6407
    %v6411 = vmul.f32 %v6394, %v6407
    %v6412 = vmul.f32 %v6395, %v6407
    %v6413 = vsub.f32 %v6308, %v6408
    %v6414 = vsub.f32 %v6309, %v6409
    %v6415 = vsub.f32 %v6310, %v6410
    %v6416 = vsub.f32 %v6311, %v6411
    %v6417 = vsub.f32 %v6312, %v6412
    %vm6418 = vcmp.eq.s32.totalorder %v1847, 30
    %vm6419 = vcmp.eq.s32.totalorder %v1848, 30
    %vm6420 = vcmp.eq.s32.totalorder %v1849, 30
    %vm6421 = vcmp.eq.s32.totalorder %v1850, 30
    %vm6422 = vcmp.eq.s32.totalorder %v1851, 30
    %v6423 = vsel %vm6418, 1.0, 0.0
    %v6424 = vsel %vm6419, 1.0, 0.0
    %v6425 = vsel %vm6420, 1.0, 0.0
    %v6426 = vsel %vm6421, 1.0, 0.0
    %v6427 = vsel %vm6422, 1.0, 0.0
    %vm6428 = vcmp.eq.s32.totalorder %v1853, 30
    %v6429 = vsel %vm6428, 1.0, 0.0
    %v6430 = vmul.f32 %v6402, %v6423
    %v6431 = vmul.f32 %v6403, %v6424
    %v6432 = vmul.f32 %v6404, %v6425
    %v6433 = vmul.f32 %v6405, %v6426
    %v6434 = vmul.f32 %v6406, %v6427
    %v6435 = vsel %vm3281, %v6430, 0.0
    %v6436 = vsel %vm3281, %v6431, 0.0
    %v6437 = vadd.f32 %v6435, %v6436
    %v6438 = vsel %vm3281, %v6432, 0.0
    %v6439 = vadd.f32 %v6437, %v6438
    %v6440 = vsel %vm3281, %v6433, 0.0
    %v6441 = vadd.f32 %v6439, %v6440
    %v6442 = vsel %vm3289, %v6434, 0.0
    %v6443 = vadd.f32 %v6441, %v6442
    %v6444 = vrot.slane %v6443, 4
    %v6445 = vadd.f32 %v6443, %v6444
    %v6446 = vrot.slane %v6445, 2
    %v6447 = vadd.f32 %v6445, %v6446
    %v6448 = vrot.slane %v6447, 1
    %v6449 = vadd.f32 %v6447, %v6448
    %v6450 = vmul.f32 %v6413, %v6423
    %v6451 = vmul.f32 %v6414, %v6424
    %v6452 = vmul.f32 %v6415, %v6425
    %v6453 = vmul.f32 %v6416, %v6426
    %v6454 = vmul.f32 %v6417, %v6427
    %v6455 = vsel %vm3303, %v6450, 0.0
    %v6456 = vsel %vm3303, %v6451, 0.0
    %v6457 = vadd.f32 %v6455, %v6456
    %v6458 = vsel %vm3303, %v6452, 0.0
    %v6459 = vadd.f32 %v6457, %v6458
    %v6460 = vsel %vm3303, %v6453, 0.0
    %v6461 = vadd.f32 %v6459, %v6460
    %v6462 = vsel %vm3311, %v6454, 0.0
    %v6463 = vadd.f32 %v6461, %v6462
    %v6464 = vrot.slane %v6463, 4
    %v6465 = vadd.f32 %v6463, %v6464
    %v6466 = vrot.slane %v6465, 2
    %v6467 = vadd.f32 %v6465, %v6466
    %v6468 = vrot.slane %v6467, 1
    %v6469 = vadd.f32 %v6467, %v6468
    %v6470 = vmul.f32 %v6449, %v6429
    %v6471 = vsel %vm3281, %v6470, 0.0
    %6472 = vadd.xlane.f32.xlu0 %v6471
    %v6473 = vpop.xlane.xlu0 %6472
    %v6474 = vrcp.pop %v6473
    %v6475 = vmul.f32 1.0, %v6474
    %v6476 = vmul.f32 %v6402, %v6429
    %v6477 = vmul.f32 %v6403, %v6429
    %v6478 = vmul.f32 %v6404, %v6429
    %v6479 = vmul.f32 %v6405, %v6429
    %v6480 = vmul.f32 %v6406, %v6429
    %v6481 = vsel %vm3281, %v6476, 0.0
    %6482 = vadd.xlane.f32.xlu0 %v6481
    %v6483 = vpop.xlane.xlu0 %6482
    %v6484 = vsel %vm3281, %v6477, 0.0
    %6485 = vadd.xlane.f32.xlu0 %v6484
    %v6486 = vpop.xlane.xlu0 %6485
    %v6487 = vsel %vm3281, %v6478, 0.0
    %6488 = vadd.xlane.f32.xlu0 %v6487
    %v6489 = vpop.xlane.xlu0 %6488
    %v6490 = vsel %vm3281, %v6479, 0.0
    %6491 = vadd.xlane.f32.xlu0 %v6490
    %v6492 = vpop.xlane.xlu0 %6491
    %v6493 = vsel %vm3289, %v6480, 0.0
    %6494 = vadd.xlane.f32.xlu0 %v6493
    %v6495 = vpop.xlane.xlu0 %6494
    %v6496 = vsub.f32 %v6483, %v6423
    %v6497 = vsub.f32 %v6486, %v6424
    %v6498 = vsub.f32 %v6489, %v6425
    %v6499 = vsub.f32 %v6492, %v6426
    %v6500 = vsub.f32 %v6495, %v6427
    %v6501 = vmul.f32 %v6449, %v6475
    %v6502 = vmul.f32 %v6496, %v6501
    %v6503 = vmul.f32 %v6497, %v6501
    %v6504 = vmul.f32 %v6498, %v6501
    %v6505 = vmul.f32 %v6499, %v6501
    %v6506 = vmul.f32 %v6500, %v6501
    %v6507 = vsub.f32 %v6402, %v6502
    %v6508 = vsub.f32 %v6403, %v6503
    %v6509 = vsub.f32 %v6404, %v6504
    %v6510 = vsub.f32 %v6405, %v6505
    %v6511 = vsub.f32 %v6406, %v6506
    %v6512 = vmul.f32 %v6469, %v6475
    %v6513 = vmul.f32 %v6496, %v6512
    %v6514 = vmul.f32 %v6497, %v6512
    %v6515 = vmul.f32 %v6498, %v6512
    %v6516 = vmul.f32 %v6499, %v6512
    %v6517 = vmul.f32 %v6500, %v6512
    %v6518 = vsub.f32 %v6413, %v6513
    %v6519 = vsub.f32 %v6414, %v6514
    %v6520 = vsub.f32 %v6415, %v6515
    %v6521 = vsub.f32 %v6416, %v6516
    %v6522 = vsub.f32 %v6417, %v6517
    %vm6523 = vcmp.eq.s32.totalorder %v1847, 31
    %vm6524 = vcmp.eq.s32.totalorder %v1848, 31
    %vm6525 = vcmp.eq.s32.totalorder %v1849, 31
    %vm6526 = vcmp.eq.s32.totalorder %v1850, 31
    %vm6527 = vcmp.eq.s32.totalorder %v1851, 31
    %v6528 = vsel %vm6523, 1.0, 0.0
    %v6529 = vsel %vm6524, 1.0, 0.0
    %v6530 = vsel %vm6525, 1.0, 0.0
    %v6531 = vsel %vm6526, 1.0, 0.0
    %v6532 = vsel %vm6527, 1.0, 0.0
    %vm6533 = vcmp.eq.s32.totalorder %v1853, 31
    %v6534 = vsel %vm6533, 1.0, 0.0
    %v6535 = vmul.f32 %v6507, %v6528
    %v6536 = vmul.f32 %v6508, %v6529
    %v6537 = vmul.f32 %v6509, %v6530
    %v6538 = vmul.f32 %v6510, %v6531
    %v6539 = vmul.f32 %v6511, %v6532
    %v6540 = vsel %vm3281, %v6535, 0.0
    %v6541 = vsel %vm3281, %v6536, 0.0
    %v6542 = vadd.f32 %v6540, %v6541
    %v6543 = vsel %vm3281, %v6537, 0.0
    %v6544 = vadd.f32 %v6542, %v6543
    %v6545 = vsel %vm3281, %v6538, 0.0
    %v6546 = vadd.f32 %v6544, %v6545
    %v6547 = vsel %vm3289, %v6539, 0.0
    %v6548 = vadd.f32 %v6546, %v6547
    %v6549 = vrot.slane %v6548, 4
    %v6550 = vadd.f32 %v6548, %v6549
    %v6551 = vrot.slane %v6550, 2
    %v6552 = vadd.f32 %v6550, %v6551
    %v6553 = vrot.slane %v6552, 1
    %v6554 = vadd.f32 %v6552, %v6553
    %v6555 = vmul.f32 %v6518, %v6528
    %v6556 = vmul.f32 %v6519, %v6529
    %v6557 = vmul.f32 %v6520, %v6530
    %v6558 = vmul.f32 %v6521, %v6531
    %v6559 = vmul.f32 %v6522, %v6532
    %v6560 = vsel %vm3303, %v6555, 0.0
    %v6561 = vsel %vm3303, %v6556, 0.0
    %v6562 = vadd.f32 %v6560, %v6561
    %v6563 = vsel %vm3303, %v6557, 0.0
    %v6564 = vadd.f32 %v6562, %v6563
    %v6565 = vsel %vm3303, %v6558, 0.0
    %v6566 = vadd.f32 %v6564, %v6565
    %v6567 = vsel %vm3311, %v6559, 0.0
    %v6568 = vadd.f32 %v6566, %v6567
    %v6569 = vrot.slane %v6568, 4
    %v6570 = vadd.f32 %v6568, %v6569
    %v6571 = vrot.slane %v6570, 2
    %v6572 = vadd.f32 %v6570, %v6571
    %v6573 = vrot.slane %v6572, 1
    %v6574 = vadd.f32 %v6572, %v6573
    %v6575 = vmul.f32 %v6554, %v6534
    %v6576 = vsel %vm3281, %v6575, 0.0
    %6577 = vadd.xlane.f32.xlu0 %v6576
    %v6578 = vpop.xlane.xlu0 %6577
    %v6579 = vrcp.pop %v6578
    %v6580 = vmul.f32 1.0, %v6579
    %v6581 = vmul.f32 %v6507, %v6534
    %v6582 = vmul.f32 %v6508, %v6534
    %v6583 = vmul.f32 %v6509, %v6534
    %v6584 = vmul.f32 %v6510, %v6534
    %v6585 = vmul.f32 %v6511, %v6534
    %v6586 = vsel %vm3281, %v6581, 0.0
    %6587 = vadd.xlane.f32.xlu0 %v6586
    %v6588 = vpop.xlane.xlu0 %6587
    %v6589 = vsel %vm3281, %v6582, 0.0
    %6590 = vadd.xlane.f32.xlu0 %v6589
    %v6591 = vpop.xlane.xlu0 %6590
    %v6592 = vsel %vm3281, %v6583, 0.0
    %6593 = vadd.xlane.f32.xlu0 %v6592
    %v6594 = vpop.xlane.xlu0 %6593
    %v6595 = vsel %vm3281, %v6584, 0.0
    %6596 = vadd.xlane.f32.xlu0 %v6595
    %v6597 = vpop.xlane.xlu0 %6596
    %v6598 = vsel %vm3289, %v6585, 0.0
    %6599 = vadd.xlane.f32.xlu0 %v6598
    %v6600 = vpop.xlane.xlu0 %6599
    %v6601 = vsub.f32 %v6588, %v6528
    %v6602 = vsub.f32 %v6591, %v6529
    %v6603 = vsub.f32 %v6594, %v6530
    %v6604 = vsub.f32 %v6597, %v6531
    %v6605 = vsub.f32 %v6600, %v6532
    %v6606 = vmul.f32 %v6554, %v6580
    %v6607 = vmul.f32 %v6601, %v6606
    %v6608 = vmul.f32 %v6602, %v6606
    %v6609 = vmul.f32 %v6603, %v6606
    %v6610 = vmul.f32 %v6604, %v6606
    %v6611 = vmul.f32 %v6605, %v6606
    %v6612 = vsub.f32 %v6507, %v6607
    %v6613 = vsub.f32 %v6508, %v6608
    %v6614 = vsub.f32 %v6509, %v6609
    %v6615 = vsub.f32 %v6510, %v6610
    %v6616 = vsub.f32 %v6511, %v6611
    %v6617 = vmul.f32 %v6574, %v6580
    %v6618 = vmul.f32 %v6601, %v6617
    %v6619 = vmul.f32 %v6602, %v6617
    %v6620 = vmul.f32 %v6603, %v6617
    %v6621 = vmul.f32 %v6604, %v6617
    %v6622 = vmul.f32 %v6605, %v6617
    %v6623 = vsub.f32 %v6518, %v6618
    %v6624 = vsub.f32 %v6519, %v6619
    %v6625 = vsub.f32 %v6520, %v6620
    %v6626 = vsub.f32 %v6521, %v6621
    %v6627 = vsub.f32 %v6522, %v6622
    %vm6628 = vcmp.eq.s32.totalorder %v1847, 32
    %vm6629 = vcmp.eq.s32.totalorder %v1848, 32
    %vm6630 = vcmp.eq.s32.totalorder %v1849, 32
    %vm6631 = vcmp.eq.s32.totalorder %v1850, 32
    %vm6632 = vcmp.eq.s32.totalorder %v1851, 32
    %v6633 = vsel %vm6628, 1.0, 0.0
    %v6634 = vsel %vm6629, 1.0, 0.0
    %v6635 = vsel %vm6630, 1.0, 0.0
    %v6636 = vsel %vm6631, 1.0, 0.0
    %v6637 = vsel %vm6632, 1.0, 0.0
    %vm6638 = vcmp.eq.s32.totalorder %v1853, 32
    %v6639 = vsel %vm6638, 1.0, 0.0
    %v6640 = vmul.f32 %v6612, %v6633
    %v6641 = vmul.f32 %v6613, %v6634
    %v6642 = vmul.f32 %v6614, %v6635
    %v6643 = vmul.f32 %v6615, %v6636
    %v6644 = vmul.f32 %v6616, %v6637
    %v6645 = vsel %vm3281, %v6640, 0.0
    %v6646 = vsel %vm3281, %v6641, 0.0
    %v6647 = vadd.f32 %v6645, %v6646
    %v6648 = vsel %vm3281, %v6642, 0.0
    %v6649 = vadd.f32 %v6647, %v6648
    %v6650 = vsel %vm3281, %v6643, 0.0
    %v6651 = vadd.f32 %v6649, %v6650
    %v6652 = vsel %vm3289, %v6644, 0.0
    %v6653 = vadd.f32 %v6651, %v6652
    %v6654 = vrot.slane %v6653, 4
    %v6655 = vadd.f32 %v6653, %v6654
    %v6656 = vrot.slane %v6655, 2
    %v6657 = vadd.f32 %v6655, %v6656
    %v6658 = vrot.slane %v6657, 1
    %v6659 = vadd.f32 %v6657, %v6658
    %v6660 = vmul.f32 %v6623, %v6633
    %v6661 = vmul.f32 %v6624, %v6634
    %v6662 = vmul.f32 %v6625, %v6635
    %v6663 = vmul.f32 %v6626, %v6636
    %v6664 = vmul.f32 %v6627, %v6637
    %v6665 = vsel %vm3303, %v6660, 0.0
    %v6666 = vsel %vm3303, %v6661, 0.0
    %v6667 = vadd.f32 %v6665, %v6666
    %v6668 = vsel %vm3303, %v6662, 0.0
    %v6669 = vadd.f32 %v6667, %v6668
    %v6670 = vsel %vm3303, %v6663, 0.0
    %v6671 = vadd.f32 %v6669, %v6670
    %v6672 = vsel %vm3311, %v6664, 0.0
    %v6673 = vadd.f32 %v6671, %v6672
    %v6674 = vrot.slane %v6673, 4
    %v6675 = vadd.f32 %v6673, %v6674
    %v6676 = vrot.slane %v6675, 2
    %v6677 = vadd.f32 %v6675, %v6676
    %v6678 = vrot.slane %v6677, 1
    %v6679 = vadd.f32 %v6677, %v6678
    %v6680 = vmul.f32 %v6659, %v6639
    %v6681 = vsel %vm3281, %v6680, 0.0
    %6682 = vadd.xlane.f32.xlu0 %v6681
    %v6683 = vpop.xlane.xlu0 %6682
    %v6684 = vrcp.pop %v6683
    %v6685 = vmul.f32 1.0, %v6684
    %v6686 = vmul.f32 %v6612, %v6639
    %v6687 = vmul.f32 %v6613, %v6639
    %v6688 = vmul.f32 %v6614, %v6639
    %v6689 = vmul.f32 %v6615, %v6639
    %v6690 = vmul.f32 %v6616, %v6639
    %v6691 = vsel %vm3281, %v6686, 0.0
    %6692 = vadd.xlane.f32.xlu0 %v6691
    %v6693 = vpop.xlane.xlu0 %6692
    %v6694 = vsel %vm3281, %v6687, 0.0
    %6695 = vadd.xlane.f32.xlu0 %v6694
    %v6696 = vpop.xlane.xlu0 %6695
    %v6697 = vsel %vm3281, %v6688, 0.0
    %6698 = vadd.xlane.f32.xlu0 %v6697
    %v6699 = vpop.xlane.xlu0 %6698
    %v6700 = vsel %vm3281, %v6689, 0.0
    %6701 = vadd.xlane.f32.xlu0 %v6700
    %v6702 = vpop.xlane.xlu0 %6701
    %v6703 = vsel %vm3289, %v6690, 0.0
    %6704 = vadd.xlane.f32.xlu0 %v6703
    %v6705 = vpop.xlane.xlu0 %6704
    %v6706 = vsub.f32 %v6693, %v6633
    %v6707 = vsub.f32 %v6696, %v6634
    %v6708 = vsub.f32 %v6699, %v6635
    %v6709 = vsub.f32 %v6702, %v6636
    %v6710 = vsub.f32 %v6705, %v6637
    %v6711 = vmul.f32 %v6679, %v6685
    %v6712 = vmul.f32 %v6706, %v6711
    %v6713 = vmul.f32 %v6707, %v6711
    %v6714 = vmul.f32 %v6708, %v6711
    %v6715 = vmul.f32 %v6709, %v6711
    %v6716 = vmul.f32 %v6710, %v6711
    %v6717 = vsub.f32 %v6623, %v6712
    %v6718 = vsub.f32 %v6624, %v6713
    %v6719 = vsub.f32 %v6625, %v6714
    %v6720 = vsub.f32 %v6626, %v6715
    %v6721 = vsub.f32 %v6627, %v6716
    %v6722 = vsel %vm1382, %v1840, 1.0
    %v6724 = vsel %vm3281, %v6722, 0
    %vm6726 = vcmask 1040384
    %v6728 = vsel %vm6726, %v6721, 0
    %6730 = vmatprep.subr.mxu0 0.0
    %6731 = vmatpush1.msra.mxu0 %v6717
    %6732 = vmatprep.subr.mxu0 0.0
    %6733 = vmatpush1.msra.mxu0 %v6718
    %6734 = vmatprep.subr.mxu0 0.0
    %6735 = vmatpush1.msra.mxu0 %v6719
    %6736 = vmatprep.subr.mxu0 0.0
    %6737 = vmatpush1.msra.mxu0 %v6720
    %6738 = vmatprep.subr.mxu0 0.0
    %6739 = vmatpush1.msra.mxu0 %v6728
    %6740 = vmatprep.subr.mxu0 0.0
    %6741 = vmatpush1.msra.mxu0 0.0
    %6742 = vmatprep.subr.mxu0 0.0
    %6743 = vmatpush1.msra.mxu0 0.0
    %6744 = vmatprep.subr.mxu0 0.0
    %6745 = vmatpush1.msra.mxu0 0.0
    %6746 = vmatprep.subr.mxu0 0.0
    %6747 = vmatpush1.msra.mxu0 0.0
    %6748 = vmatprep.subr.mxu0 0.0
    %6749 = vmatpush1.msra.mxu0 0.0
    %6750 = vmatprep.subr.mxu0 0.0
    %6751 = vmatpush1.msra.mxu0 0.0
    %6752 = vmatprep.subr.mxu0 0.0
    %6753 = vmatpush1.msra.mxu0 0.0
    %6754 = vmatprep.subr.mxu0 0.0
    %6755 = vmatpush1.msra.mxu0 0.0
    %6756 = vmatprep.subr.mxu0 0.0
    %6757 = vmatpush1.msra.mxu0 0.0
    %6758 = vmatprep.subr.mxu0 0.0
    %6759 = vmatpush1.msra.mxu0 0.0
    %6760 = vmatprep.subr.mxu0 0.0
    %6761 = vmatpush1.msra.mxu0 0.0
    %6762 = vmatprep.subr.mxu0 0.0
    %6763 = vmatpush1.msra.mxu0 0.0
    %6764 = vmatprep.subr.mxu0 0.0
    %6765 = vmatpush1.msra.mxu0 0.0
    %6766 = vmatprep.subr.mxu0 0.0
    %6767 = vmatpush1.msra.mxu0 0.0
    %6768 = vmatprep.subr.mxu0 0.0
    %6769 = vmatpush1.msra.mxu0 0.0
    %6770 = vmatprep.subr.mxu0 0.0
    %6771 = vmatpush1.msra.mxu0 0.0
    %6772 = vmatprep.subr.mxu0 0.0
    %6773 = vmatpush1.msra.mxu0 0.0
    %6774 = vmatprep.subr.mxu0 0.0
    %6775 = vmatpush1.msra.mxu0 0.0
    %6776 = vmatprep.subr.mxu0 0.0
    %6777 = vmatpush1.msra.mxu0 0.0
    %6778 = vmatprep.subr.mxu0 0.0
    %6779 = vmatpush1.msra.mxu0 0.0
    %6780 = vmatprep.subr.mxu0 0.0
    %6781 = vmatpush1.msra.mxu0 0.0
    %6782 = vmatprep.subr.mxu0 0.0
    %6783 = vmatpush1.msra.mxu0 0.0
    %6784 = vmatprep.subr.mxu0 0.0
    %6785 = vmatpush1.msra.mxu0 0.0
    %6786 = vmatprep.subr.mxu0 0.0
    %6787 = vmatpush1.msra.mxu0 0.0
    %6788 = vmatprep.subr.mxu0 0.0
    %6789 = vmatpush1.msra.mxu0 0.0
    %6790 = vmatprep.subr.mxu0 0.0
    %6791 = vmatpush1.msra.mxu0 0.0
    %6792 = vmatprep.subr.mxu0 0.0
    %6793 = vmatpush1.msra.mxu0 0.0
    %6794 = vmatprep.mubr.f32.mxu0 0.0
    %6795 = vmatmul.mubr.f32.gmra.mrb[0].mxu0 %v6724
    %v6796 = vpop.f32.mrb[0].mxu0
    %v6797 = vadd.f32 0.0, %v6796
    %v6798 = vpop.f32.mrb[0].mxu0
    %6799 = vdwg.mxu0
    %6800 = vst.msk [vmem:[#allocation3] sm:$0xff] %vm3303, %v6797
    // Predicated region
    $region50: #{tpu_custom_call.1} parent=1 // pred_check
      _
    $region51: #{tpu_custom_call.1} parent=1 // pred_check_branch
      %6802 = sbr.rel (0) target = $region53
    $region52: #{tpu_custom_call.1} parent=1 // pred_region
      %s6804 = ssub.s32 128, 128
      %6805 = vsyncadd [#allocation4], %s6804
      %s6807 = sshll.u32 [#allocation3], 4
      %s6808 = int_to_ptr.vmem [resolvable:$true] %s6807
      %6810 = dma.vmem_to_hbm [thread:$0]  %s6808, 128, %s12, [#allocation4]
    $region53: #{tpu_custom_call.1} parent=1 // pred_fallthru
      _
    // Predicated region
    $region54: #{tpu_custom_call.1} parent=1 // pred_check
      _
    $region55: #{tpu_custom_call.1} parent=1 // pred_check_branch
      %6812 = sbr.rel (0) target = $region57
    $region56: #{tpu_custom_call.1} parent=1 // pred_region
      %6813 = dma.done [#allocation4], 128
    $region57: #{tpu_custom_call.1} parent=1 // pred_fallthru
      _
    %6814 = vsyncpa [#allocation4], 1

</llo_original>
